<compile_context>
chip_gen: v7x
topology: tpu7x:2x2x1
jax: 0.10.0
libtpu: 0.0.40
codegen_flags: <defaults>
</compile_context>

<pallas_src>
import jax
import jax.numpy as jnp
from jax import lax
from jax.experimental import pallas as pl
from jax.experimental.pallas import tpu as pltpu


def hmm_forward_kernel(obs_ref, logbT_ref, prior_ref, at_ref, out_ref):
    # obs_ref   : (T, B) int32, SMEM   observation symbol per (time, batch)
    # logbT_ref : (M, N) f32,  VMEM   log emission probs, row = symbol
    # prior_ref : (1, N) f32,  VMEM   log state priors
    # at_ref    : (N, N) f32,  VMEM   exp(log_A)^T  (A[i,j]=p(state_i|state_j))
    # out_ref   : (B, T) f32,  VMEM   logsumexp over states of log_alpha
    B, T = out_ref.shape

    a_t = at_ref[...]        # hoisted: exp(log_A)^T, reused every step
    prior = prior_ref[...]   # (1, N)

    def emission(t):
        # E_t[b, :] = log_B[:, obs[b, t]]  ==  log_B^T[obs[t, b], :]
        rows = [logbT_ref[pl.ds(obs_ref[t, b], 1), :] for b in range(B)]
        return jnp.concatenate(rows, axis=0)                      # (B, N)

    def lse_states(x):
        # logsumexp over the state (lane) axis, keepdims -> (B, 1)
        m = jnp.max(x, axis=-1, keepdims=True)
        return m + jnp.log(jnp.sum(jnp.exp(x - m), axis=-1, keepdims=True))

    # ---- t = 0 -------------------------------------------------------------
    log_alpha = emission(0) + prior                               # (B, N)
    out_ref[:, pl.ds(0, 1)] = lse_states(log_alpha)

    # ---- t = 1 .. T-1 : fully unrolled (T small & static) ------------------
    for t in range(1, T):
        e_t = emission(t)
        # log-domain matvec on the MXU (safe: log_A <= 0, max-shift on alpha):
        #   trans[b,i] = m[b] + log( sum_j exp(log_alpha[b,j]-m[b]) * A[i,j] )
        m = jnp.max(log_alpha, axis=-1, keepdims=True)            # (B, 1)
        p = jnp.exp(log_alpha - m)                                # (B, N)
        s = jnp.dot(p, a_t,
                    precision=lax.Precision.HIGHEST,
                    preferred_element_type=jnp.float32)           # (B, N)
        log_alpha = e_t + m + jnp.log(s)                          # (B, N)
        out_ref[:, pl.ds(t, 1)] = lse_states(log_alpha)


def weather_forecast_forward(obs, transition_logits, emission_logits, prior_logits):
    """obs: int32 (B, T) observation symbols in [0, M)."""
    B, T = obs.shape
    N, M = emission_logits.shape

    # Normalization (glue, matches F.log_softmax in the reference HMM):
    log_a = jax.nn.log_softmax(transition_logits, axis=0)         # (N, N)
    log_b = jax.nn.log_softmax(emission_logits, axis=1)           # (N, M)
    log_priors = jax.nn.log_softmax(prior_logits)                 # (N,)

    a_t = jnp.exp(log_a).T.astype(jnp.float32)                    # (N, N) = A^T
    log_bT = log_b.T.astype(jnp.float32)                          # (M, N)
    priors = log_priors[None, :].astype(jnp.float32)              # (1, N)
    obs_tb = obs.T.astype(jnp.int32)                              # (T, B)
    # TODO(synk): for large B/T add a ("parallel","arbitrary") grid over
    # (B tiles, T chunks) with a VMEM log_alpha scratch and bf16 MXU inputs.

    out = pl.pallas_call(
        hmm_forward_kernel,
        out_shape=jax.ShapeDtypeStruct((B, T), jnp.float32),
        in_specs=[
            pl.BlockSpec(memory_space=pltpu.MemorySpace.SMEM),    # obs (T,B)
            pl.BlockSpec(memory_space=pltpu.MemorySpace.VMEM),    # log_B^T
            pl.BlockSpec(memory_space=pltpu.MemorySpace.VMEM),    # priors
            pl.BlockSpec(memory_space=pltpu.MemorySpace.VMEM),    # exp(log_A)^T
        ],
        out_specs=pl.BlockSpec(memory_space=pltpu.MemorySpace.VMEM),
    )(obs_tb, log_bT, priors, a_t)
    return out


def _reference(obs, transition_logits, emission_logits, prior_logits):
    """Pure-JAX reference for the same HMM forward pass (direct logsumexp)."""
    B, T = obs.shape
    log_a = jax.nn.log_softmax(transition_logits, axis=0)
    log_b = jax.nn.log_softmax(emission_logits, axis=1)
    log_priors = jax.nn.log_softmax(prior_logits)
    e = jnp.take(log_b.T, obs, axis=0)                            # (B, T, N)

    log_alpha = e[:, 0, :] + log_priors[None, :]
    outs = [jax.scipy.special.logsumexp(log_alpha, axis=-1)]
    for t in range(1, T):
        trans = jax.scipy.special.logsumexp(
            log_alpha[:, None, :] + log_a[None, :, :], axis=-1)
        log_alpha = e[:, t, :] + trans
        outs.append(jax.scipy.special.logsumexp(log_alpha, axis=-1))
    return jnp.stack(outs, axis=1)


if __name__ == "__main__":
    # Small deterministic setup: N=8 hidden states, M=16 symbols (= seq length), batch=4.
    feature_number = 8    # N
    state_number = 16     # M (also sequence length, per the module's loop bound)
    batch = 4

    key = jax.random.PRNGKey(0)
    k_trans, k_emit, k_prior, k_obs = jax.random.split(key, 4)

    transition_logits = jax.random.normal(k_trans, (feature_number, feature_number), jnp.float32)
    emission_logits = jax.random.normal(k_emit, (feature_number, state_number), jnp.float32)
    prior_logits = jax.random.normal(k_prior, (feature_number,), jnp.float32)
    obs = jax.random.randint(k_obs, (batch, state_number), 0, state_number, jnp.int32)

    out = weather_forecast_forward(obs, transition_logits, emission_logits, prior_logits)
    out = jax.block_until_ready(out)

    ref = _reference(obs, transition_logits, emission_logits, prior_logits)
    assert out.shape == (batch, state_number)
    assert jnp.allclose(out, ref, atol=1e-3, rtol=1e-3), (out, ref)

    print("KERNEL_OK")
</pallas_src>

<mosaic_0001>
module attributes {stable_mosaic.version = 11 : i64} {
  func.func @hmm_forward_kernel(%arg0: memref<16x4xi32, #tpu.memory_space<smem>>, %arg1: memref<16x8xf32, #tpu.memory_space<vmem>>, %arg2: memref<1x8xf32, #tpu.memory_space<vmem>>, %arg3: memref<8x8xf32, #tpu.memory_space<vmem>>, %arg4: memref<4x16xf32, #tpu.memory_space<vmem>>) attributes {dimension_semantics = [], scalar_prefetch = 0 : i64, scratch_operands = 0 : i64, tpu.core_type = #tpu.core_type<tc>} {
    %c0 = arith.constant 0 : index
    %c0_0 = arith.constant 0 : index
    %0 = vector.load %arg3[%c0, %c0_0] : memref<8x8xf32, #tpu.memory_space<vmem>>, vector<8x8xf32>
    %c0_1 = arith.constant 0 : index
    %c0_2 = arith.constant 0 : index
    %1 = vector.load %arg2[%c0_1, %c0_2] : memref<1x8xf32, #tpu.memory_space<vmem>>, vector<1x8xf32>
    %c0_3 = arith.constant 0 : index
    %c0_4 = arith.constant 0 : index
    %2 = memref.load %arg0[%c0_3, %c0_4] : memref<16x4xi32, #tpu.memory_space<smem>>
    %3 = arith.index_cast %2 : i32 to index
    %c0_5 = arith.constant 0 : index
    %4 = vector.load %arg1[%3, %c0_5] : memref<16x8xf32, #tpu.memory_space<vmem>>, vector<1x8xf32>
    %c0_6 = arith.constant 0 : index
    %c1 = arith.constant 1 : index
    %5 = memref.load %arg0[%c0_6, %c1] : memref<16x4xi32, #tpu.memory_space<smem>>
    %6 = arith.index_cast %5 : i32 to index
    %c0_7 = arith.constant 0 : index
    %7 = vector.load %arg1[%6, %c0_7] : memref<16x8xf32, #tpu.memory_space<vmem>>, vector<1x8xf32>
    %c0_8 = arith.constant 0 : index
    %c2 = arith.constant 2 : index
    %8 = memref.load %arg0[%c0_8, %c2] : memref<16x4xi32, #tpu.memory_space<smem>>
    %9 = arith.index_cast %8 : i32 to index
    %c0_9 = arith.constant 0 : index
    %10 = vector.load %arg1[%9, %c0_9] : memref<16x8xf32, #tpu.memory_space<vmem>>, vector<1x8xf32>
    %c0_10 = arith.constant 0 : index
    %c3 = arith.constant 3 : index
    %11 = memref.load %arg0[%c0_10, %c3] : memref<16x4xi32, #tpu.memory_space<smem>>
    %12 = arith.index_cast %11 : i32 to index
    %c0_11 = arith.constant 0 : index
    %13 = vector.load %arg1[%12, %c0_11] : memref<16x8xf32, #tpu.memory_space<vmem>>, vector<1x8xf32>
    %14 = tpu.concatenate %4, %7, %10, %13 in 0 : vector<1x8xf32>, vector<1x8xf32>, vector<1x8xf32>, vector<1x8xf32> -> vector<4x8xf32>
    %15 = vector.broadcast %1 : vector<1x8xf32> to vector<4x8xf32>
    %16 = arith.addf %14, %15 : vector<4x8xf32>
    %cst = arith.constant dense<0xFF800000> : vector<4xf32>
    %17 = vector.multi_reduction <maximumf>, %16, %cst [1] : vector<4x8xf32> to vector<4xf32>
    %18 = vector.shape_cast %17 : vector<4xf32> to vector<4x1xf32>
    %19 = vector.broadcast %18 : vector<4x1xf32> to vector<4x8xf32>
    %20 = arith.subf %16, %19 : vector<4x8xf32>
    %21 = math.exp %20 : vector<4x8xf32>
    %cst_12 = arith.constant dense<0.000000e+00> : vector<4xf32>
    %22 = vector.multi_reduction <add>, %21, %cst_12 [1] : vector<4x8xf32> to vector<4xf32>
    %23 = vector.shape_cast %22 : vector<4xf32> to vector<4x1xf32>
    %24 = math.log %23 : vector<4x1xf32>
    %25 = arith.addf %18, %24 : vector<4x1xf32>
    %c0_13 = arith.constant 0 : index
    %c0_14 = arith.constant 0 : index
    %26 = vector.load %arg4[%c0_13, %c0_14] : memref<4x16xf32, #tpu.memory_space<vmem>>, vector<4x1xf32>
    tpu.vector_store %arg4[%c0_13, %c0_14], %25 {strides = array<i32>} : memref<4x16xf32, #tpu.memory_space<vmem>>, vector<4x1xf32>,
    %c1_15 = arith.constant 1 : index
    %c0_16 = arith.constant 0 : index
    %27 = memref.load %arg0[%c1_15, %c0_16] : memref<16x4xi32, #tpu.memory_space<smem>>
    %28 = arith.index_cast %27 : i32 to index
    %c0_17 = arith.constant 0 : index
    %29 = vector.load %arg1[%28, %c0_17] : memref<16x8xf32, #tpu.memory_space<vmem>>, vector<1x8xf32>
    %c1_18 = arith.constant 1 : index
    %c1_19 = arith.constant 1 : index
    %30 = memref.load %arg0[%c1_18, %c1_19] : memref<16x4xi32, #tpu.memory_space<smem>>
    %31 = arith.index_cast %30 : i32 to index
    %c0_20 = arith.constant 0 : index
    %32 = vector.load %arg1[%31, %c0_20] : memref<16x8xf32, #tpu.memory_space<vmem>>, vector<1x8xf32>
    %c1_21 = arith.constant 1 : index
    %c2_22 = arith.constant 2 : index
    %33 = memref.load %arg0[%c1_21, %c2_22] : memref<16x4xi32, #tpu.memory_space<smem>>
    %34 = arith.index_cast %33 : i32 to index
    %c0_23 = arith.constant 0 : index
    %35 = vector.load %arg1[%34, %c0_23] : memref<16x8xf32, #tpu.memory_space<vmem>>, vector<1x8xf32>
    %c1_24 = arith.constant 1 : index
    %c3_25 = arith.constant 3 : index
    %36 = memref.load %arg0[%c1_24, %c3_25] : memref<16x4xi32, #tpu.memory_space<smem>>
    %37 = arith.index_cast %36 : i32 to index
    %c0_26 = arith.constant 0 : index
    %38 = vector.load %arg1[%37, %c0_26] : memref<16x8xf32, #tpu.memory_space<vmem>>, vector<1x8xf32>
    %39 = tpu.concatenate %29, %32, %35, %38 in 0 : vector<1x8xf32>, vector<1x8xf32>, vector<1x8xf32>, vector<1x8xf32> -> vector<4x8xf32>
    %cst_27 = arith.constant dense<0xFF800000> : vector<4xf32>
    %40 = vector.multi_reduction <maximumf>, %16, %cst_27 [1] : vector<4x8xf32> to vector<4xf32>
    %41 = vector.shape_cast %40 : vector<4xf32> to vector<4x1xf32>
    %42 = vector.broadcast %41 : vector<4x1xf32> to vector<4x8xf32>
    %43 = arith.subf %16, %42 : vector<4x8xf32>
    %44 = math.exp %43 : vector<4x8xf32>
    %cst_28 = arith.constant dense<0.000000e+00> : vector<4x8xf32>
    %45 = tpu.matmul %44, %0, %cst_28 {dimension_numbers = #tpu.dot_dimension_numbers<[1], [0], [0], [1], [0, 0, 1, 1], [], []>, precision = #tpu.contract_precision<fp32>} : vector<4x8xf32>, vector<8x8xf32>, vector<4x8xf32> -> vector<4x8xf32>
    %46 = vector.broadcast %41 : vector<4x1xf32> to vector<4x8xf32>
    %47 = arith.addf %39, %46 : vector<4x8xf32>
    %48 = math.log %45 : vector<4x8xf32>
    %49 = arith.addf %47, %48 : vector<4x8xf32>
    %cst_29 = arith.constant dense<0xFF800000> : vector<4xf32>
    %50 = vector.multi_reduction <maximumf>, %49, %cst_29 [1] : vector<4x8xf32> to vector<4xf32>
    %51 = vector.shape_cast %50 : vector<4xf32> to vector<4x1xf32>
    %52 = vector.broadcast %51 : vector<4x1xf32> to vector<4x8xf32>
    %53 = arith.subf %49, %52 : vector<4x8xf32>
    %54 = math.exp %53 : vector<4x8xf32>
    %cst_30 = arith.constant dense<0.000000e+00> : vector<4xf32>
    %55 = vector.multi_reduction <add>, %54, %cst_30 [1] : vector<4x8xf32> to vector<4xf32>
    %56 = vector.shape_cast %55 : vector<4xf32> to vector<4x1xf32>
    %57 = math.log %56 : vector<4x1xf32>
    %58 = arith.addf %51, %57 : vector<4x1xf32>
    %c0_31 = arith.constant 0 : index
    %c1_32 = arith.constant 1 : index
    %59 = vector.load %arg4[%c0_31, %c1_32] : memref<4x16xf32, #tpu.memory_space<vmem>>, vector<4x1xf32>
    tpu.vector_store %arg4[%c0_31, %c1_32], %58 {strides = array<i32>} : memref<4x16xf32, #tpu.memory_space<vmem>>, vector<4x1xf32>,
    %c2_33 = arith.constant 2 : index
    %c0_34 = arith.constant 0 : index
    %60 = memref.load %arg0[%c2_33, %c0_34] : memref<16x4xi32, #tpu.memory_space<smem>>
    %61 = arith.index_cast %60 : i32 to index
    %c0_35 = arith.constant 0 : index
    %62 = vector.load %arg1[%61, %c0_35] : memref<16x8xf32, #tpu.memory_space<vmem>>, vector<1x8xf32>
    %c2_36 = arith.constant 2 : index
    %c1_37 = arith.constant 1 : index
    %63 = memref.load %arg0[%c2_36, %c1_37] : memref<16x4xi32, #tpu.memory_space<smem>>
    %64 = arith.index_cast %63 : i32 to index
    %c0_38 = arith.constant 0 : index
    %65 = vector.load %arg1[%64, %c0_38] : memref<16x8xf32, #tpu.memory_space<vmem>>, vector<1x8xf32>
    %c2_39 = arith.constant 2 : index
    %c2_40 = arith.constant 2 : index
    %66 = memref.load %arg0[%c2_39, %c2_40] : memref<16x4xi32, #tpu.memory_space<smem>>
    %67 = arith.index_cast %66 : i32 to index
    %c0_41 = arith.constant 0 : index
    %68 = vector.load %arg1[%67, %c0_41] : memref<16x8xf32, #tpu.memory_space<vmem>>, vector<1x8xf32>
    %c2_42 = arith.constant 2 : index
    %c3_43 = arith.constant 3 : index
    %69 = memref.load %arg0[%c2_42, %c3_43] : memref<16x4xi32, #tpu.memory_space<smem>>
    %70 = arith.index_cast %69 : i32 to index
    %c0_44 = arith.constant 0 : index
    %71 = vector.load %arg1[%70, %c0_44] : memref<16x8xf32, #tpu.memory_space<vmem>>, vector<1x8xf32>
    %72 = tpu.concatenate %62, %65, %68, %71 in 0 : vector<1x8xf32>, vector<1x8xf32>, vector<1x8xf32>, vector<1x8xf32> -> vector<4x8xf32>
    %cst_45 = arith.constant dense<0xFF800000> : vector<4xf32>
    %73 = vector.multi_reduction <maximumf>, %49, %cst_45 [1] : vector<4x8xf32> to vector<4xf32>
    %74 = vector.shape_cast %73 : vector<4xf32> to vector<4x1xf32>
    %75 = vector.broadcast %74 : vector<4x1xf32> to vector<4x8xf32>
    %76 = arith.subf %49, %75 : vector<4x8xf32>
    %77 = math.exp %76 : vector<4x8xf32>
    %cst_46 = arith.constant dense<0.000000e+00> : vector<4x8xf32>
    %78 = tpu.matmul %77, %0, %cst_46 {dimension_numbers = #tpu.dot_dimension_numbers<[1], [0], [0], [1], [0, 0, 1, 1], [], []>, precision = #tpu.contract_precision<fp32>} : vector<4x8xf32>, vector<8x8xf32>, vector<4x8xf32> -> vector<4x8xf32>
    %79 = vector.broadcast %74 : vector<4x1xf32> to vector<4x8xf32>
    %80 = arith.addf %72, %79 : vector<4x8xf32>
    %81 = math.log %78 : vector<4x8xf32>
    %82 = arith.addf %80, %81 : vector<4x8xf32>
    %cst_47 = arith.constant dense<0xFF800000> : vector<4xf32>
    %83 = vector.multi_reduction <maximumf>, %82, %cst_47 [1] : vector<4x8xf32> to vector<4xf32>
    %84 = vector.shape_cast %83 : vector<4xf32> to vector<4x1xf32>
    %85 = vector.broadcast %84 : vector<4x1xf32> to vector<4x8xf32>
    %86 = arith.subf %82, %85 : vector<4x8xf32>
    %87 = math.exp %86 : vector<4x8xf32>
    %cst_48 = arith.constant dense<0.000000e+00> : vector<4xf32>
    %88 = vector.multi_reduction <add>, %87, %cst_48 [1] : vector<4x8xf32> to vector<4xf32>
    %89 = vector.shape_cast %88 : vector<4xf32> to vector<4x1xf32>
    %90 = math.log %89 : vector<4x1xf32>
    %91 = arith.addf %84, %90 : vector<4x1xf32>
    %c0_49 = arith.constant 0 : index
    %c2_50 = arith.constant 2 : index
    %92 = vector.load %arg4[%c0_49, %c2_50] : memref<4x16xf32, #tpu.memory_space<vmem>>, vector<4x1xf32>
    tpu.vector_store %arg4[%c0_49, %c2_50], %91 {strides = array<i32>} : memref<4x16xf32, #tpu.memory_space<vmem>>, vector<4x1xf32>,
    %c3_51 = arith.constant 3 : index
    %c0_52 = arith.constant 0 : index
    %93 = memref.load %arg0[%c3_51, %c0_52] : memref<16x4xi32, #tpu.memory_space<smem>>
    %94 = arith.index_cast %93 : i32 to index
    %c0_53 = arith.constant 0 : index
    %95 = vector.load %arg1[%94, %c0_53] : memref<16x8xf32, #tpu.memory_space<vmem>>, vector<1x8xf32>
    %c3_54 = arith.constant 3 : index
    %c1_55 = arith.constant 1 : index
    %96 = memref.load %arg0[%c3_54, %c1_55] : memref<16x4xi32, #tpu.memory_space<smem>>
    %97 = arith.index_cast %96 : i32 to index
    %c0_56 = arith.constant 0 : index
    %98 = vector.load %arg1[%97, %c0_56] : memref<16x8xf32, #tpu.memory_space<vmem>>, vector<1x8xf32>
    %c3_57 = arith.constant 3 : index
    %c2_58 = arith.constant 2 : index
    %99 = memref.load %arg0[%c3_57, %c2_58] : memref<16x4xi32, #tpu.memory_space<smem>>
    %100 = arith.index_cast %99 : i32 to index
    %c0_59 = arith.constant 0 : index
    %101 = vector.load %arg1[%100, %c0_59] : memref<16x8xf32, #tpu.memory_space<vmem>>, vector<1x8xf32>
    %c3_60 = arith.constant 3 : index
    %c3_61 = arith.constant 3 : index
    %102 = memref.load %arg0[%c3_60, %c3_61] : memref<16x4xi32, #tpu.memory_space<smem>>
    %103 = arith.index_cast %102 : i32 to index
    %c0_62 = arith.constant 0 : index
    %104 = vector.load %arg1[%103, %c0_62] : memref<16x8xf32, #tpu.memory_space<vmem>>, vector<1x8xf32>
    %105 = tpu.concatenate %95, %98, %101, %104 in 0 : vector<1x8xf32>, vector<1x8xf32>, vector<1x8xf32>, vector<1x8xf32> -> vector<4x8xf32>
    %cst_63 = arith.constant dense<0xFF800000> : vector<4xf32>
    %106 = vector.multi_reduction <maximumf>, %82, %cst_63 [1] : vector<4x8xf32> to vector<4xf32>
    %107 = vector.shape_cast %106 : vector<4xf32> to vector<4x1xf32>
    %108 = vector.broadcast %107 : vector<4x1xf32> to vector<4x8xf32>
    %109 = arith.subf %82, %108 : vector<4x8xf32>
    %110 = math.exp %109 : vector<4x8xf32>
    %cst_64 = arith.constant dense<0.000000e+00> : vector<4x8xf32>
    %111 = tpu.matmul %110, %0, %cst_64 {dimension_numbers = #tpu.dot_dimension_numbers<[1], [0], [0], [1], [0, 0, 1, 1], [], []>, precision = #tpu.contract_precision<fp32>} : vector<4x8xf32>, vector<8x8xf32>, vector<4x8xf32> -> vector<4x8xf32>
    %112 = vector.broadcast %107 : vector<4x1xf32> to vector<4x8xf32>
    %113 = arith.addf %105, %112 : vector<4x8xf32>
    %114 = math.log %111 : vector<4x8xf32>
    %115 = arith.addf %113, %114 : vector<4x8xf32>
    %cst_65 = arith.constant dense<0xFF800000> : vector<4xf32>
    %116 = vector.multi_reduction <maximumf>, %115, %cst_65 [1] : vector<4x8xf32> to vector<4xf32>
    %117 = vector.shape_cast %116 : vector<4xf32> to vector<4x1xf32>
    %118 = vector.broadcast %117 : vector<4x1xf32> to vector<4x8xf32>
    %119 = arith.subf %115, %118 : vector<4x8xf32>
    %120 = math.exp %119 : vector<4x8xf32>
    %cst_66 = arith.constant dense<0.000000e+00> : vector<4xf32>
    %121 = vector.multi_reduction <add>, %120, %cst_66 [1] : vector<4x8xf32> to vector<4xf32>
    %122 = vector.shape_cast %121 : vector<4xf32> to vector<4x1xf32>
    %123 = math.log %122 : vector<4x1xf32>
    %124 = arith.addf %117, %123 : vector<4x1xf32>
    %c0_67 = arith.constant 0 : index
    %c3_68 = arith.constant 3 : index
    %125 = vector.load %arg4[%c0_67, %c3_68] : memref<4x16xf32, #tpu.memory_space<vmem>>, vector<4x1xf32>
    tpu.vector_store %arg4[%c0_67, %c3_68], %124 {strides = array<i32>} : memref<4x16xf32, #tpu.memory_space<vmem>>, vector<4x1xf32>,
    %c4 = arith.constant 4 : index
    %c0_69 = arith.constant 0 : index
    %126 = memref.load %arg0[%c4, %c0_69] : memref<16x4xi32, #tpu.memory_space<smem>>
    %127 = arith.index_cast %126 : i32 to index
    %c0_70 = arith.constant 0 : index
    %128 = vector.load %arg1[%127, %c0_70] : memref<16x8xf32, #tpu.memory_space<vmem>>, vector<1x8xf32>
    %c4_71 = arith.constant 4 : index
    %c1_72 = arith.constant 1 : index
    %129 = memref.load %arg0[%c4_71, %c1_72] : memref<16x4xi32, #tpu.memory_space<smem>>
    %130 = arith.index_cast %129 : i32 to index
    %c0_73 = arith.constant 0 : index
    %131 = vector.load %arg1[%130, %c0_73] : memref<16x8xf32, #tpu.memory_space<vmem>>, vector<1x8xf32>
    %c4_74 = arith.constant 4 : index
    %c2_75 = arith.constant 2 : index
    %132 = memref.load %arg0[%c4_74, %c2_75] : memref<16x4xi32, #tpu.memory_space<smem>>
    %133 = arith.index_cast %132 : i32 to index
    %c0_76 = arith.constant 0 : index
    %134 = vector.load %arg1[%133, %c0_76] : memref<16x8xf32, #tpu.memory_space<vmem>>, vector<1x8xf32>
    %c4_77 = arith.constant 4 : index
    %c3_78 = arith.constant 3 : index
    %135 = memref.load %arg0[%c4_77, %c3_78] : memref<16x4xi32, #tpu.memory_space<smem>>
    %136 = arith.index_cast %135 : i32 to index
    %c0_79 = arith.constant 0 : index
    %137 = vector.load %arg1[%136, %c0_79] : memref<16x8xf32, #tpu.memory_space<vmem>>, vector<1x8xf32>
    %138 = tpu.concatenate %128, %131, %134, %137 in 0 : vector<1x8xf32>, vector<1x8xf32>, vector<1x8xf32>, vector<1x8xf32> -> vector<4x8xf32>
    %cst_80 = arith.constant dense<0xFF800000> : vector<4xf32>
    %139 = vector.multi_reduction <maximumf>, %115, %cst_80 [1] : vector<4x8xf32> to vector<4xf32>
    %140 = vector.shape_cast %139 : vector<4xf32> to vector<4x1xf32>
    %141 = vector.broadcast %140 : vector<4x1xf32> to vector<4x8xf32>
    %142 = arith.subf %115, %141 : vector<4x8xf32>
    %143 = math.exp %142 : vector<4x8xf32>
    %cst_81 = arith.constant dense<0.000000e+00> : vector<4x8xf32>
    %144 = tpu.matmul %143, %0, %cst_81 {dimension_numbers = #tpu.dot_dimension_numbers<[1], [0], [0], [1], [0, 0, 1, 1], [], []>, precision = #tpu.contract_precision<fp32>} : vector<4x8xf32>, vector<8x8xf32>, vector<4x8xf32> -> vector<4x8xf32>
    %145 = vector.broadcast %140 : vector<4x1xf32> to vector<4x8xf32>
    %146 = arith.addf %138, %145 : vector<4x8xf32>
    %147 = math.log %144 : vector<4x8xf32>
    %148 = arith.addf %146, %147 : vector<4x8xf32>
    %cst_82 = arith.constant dense<0xFF800000> : vector<4xf32>
    %149 = vector.multi_reduction <maximumf>, %148, %cst_82 [1] : vector<4x8xf32> to vector<4xf32>
    %150 = vector.shape_cast %149 : vector<4xf32> to vector<4x1xf32>
    %151 = vector.broadcast %150 : vector<4x1xf32> to vector<4x8xf32>
    %152 = arith.subf %148, %151 : vector<4x8xf32>
    %153 = math.exp %152 : vector<4x8xf32>
    %cst_83 = arith.constant dense<0.000000e+00> : vector<4xf32>
    %154 = vector.multi_reduction <add>, %153, %cst_83 [1] : vector<4x8xf32> to vector<4xf32>
    %155 = vector.shape_cast %154 : vector<4xf32> to vector<4x1xf32>
    %156 = math.log %155 : vector<4x1xf32>
    %157 = arith.addf %150, %156 : vector<4x1xf32>
    %c0_84 = arith.constant 0 : index
    %c4_85 = arith.constant 4 : index
    %158 = vector.load %arg4[%c0_84, %c4_85] : memref<4x16xf32, #tpu.memory_space<vmem>>, vector<4x1xf32>
    tpu.vector_store %arg4[%c0_84, %c4_85], %157 {strides = array<i32>} : memref<4x16xf32, #tpu.memory_space<vmem>>, vector<4x1xf32>,
    %c5 = arith.constant 5 : index
    %c0_86 = arith.constant 0 : index
    %159 = memref.load %arg0[%c5, %c0_86] : memref<16x4xi32, #tpu.memory_space<smem>>
    %160 = arith.index_cast %159 : i32 to index
    %c0_87 = arith.constant 0 : index
    %161 = vector.load %arg1[%160, %c0_87] : memref<16x8xf32, #tpu.memory_space<vmem>>, vector<1x8xf32>
    %c5_88 = arith.constant 5 : index
    %c1_89 = arith.constant 1 : index
    %162 = memref.load %arg0[%c5_88, %c1_89] : memref<16x4xi32, #tpu.memory_space<smem>>
    %163 = arith.index_cast %162 : i32 to index
    %c0_90 = arith.constant 0 : index
    %164 = vector.load %arg1[%163, %c0_90] : memref<16x8xf32, #tpu.memory_space<vmem>>, vector<1x8xf32>
    %c5_91 = arith.constant 5 : index
    %c2_92 = arith.constant 2 : index
    %165 = memref.load %arg0[%c5_91, %c2_92] : memref<16x4xi32, #tpu.memory_space<smem>>
    %166 = arith.index_cast %165 : i32 to index
    %c0_93 = arith.constant 0 : index
    %167 = vector.load %arg1[%166, %c0_93] : memref<16x8xf32, #tpu.memory_space<vmem>>, vector<1x8xf32>
    %c5_94 = arith.constant 5 : index
    %c3_95 = arith.constant 3 : index
    %168 = memref.load %arg0[%c5_94, %c3_95] : memref<16x4xi32, #tpu.memory_space<smem>>
    %169 = arith.index_cast %168 : i32 to index
    %c0_96 = arith.constant 0 : index
    %170 = vector.load %arg1[%169, %c0_96] : memref<16x8xf32, #tpu.memory_space<vmem>>, vector<1x8xf32>
    %171 = tpu.concatenate %161, %164, %167, %170 in 0 : vector<1x8xf32>, vector<1x8xf32>, vector<1x8xf32>, vector<1x8xf32> -> vector<4x8xf32>
    %cst_97 = arith.constant dense<0xFF800000> : vector<4xf32>
    %172 = vector.multi_reduction <maximumf>, %148, %cst_97 [1] : vector<4x8xf32> to vector<4xf32>
    %173 = vector.shape_cast %172 : vector<4xf32> to vector<4x1xf32>
    %174 = vector.broadcast %173 : vector<4x1xf32> to vector<4x8xf32>
    %175 = arith.subf %148, %174 : vector<4x8xf32>
    %176 = math.exp %175 : vector<4x8xf32>
    %cst_98 = arith.constant dense<0.000000e+00> : vector<4x8xf32>
    %177 = tpu.matmul %176, %0, %cst_98 {dimension_numbers = #tpu.dot_dimension_numbers<[1], [0], [0], [1], [0, 0, 1, 1], [], []>, precision = #tpu.contract_precision<fp32>} : vector<4x8xf32>, vector<8x8xf32>, vector<4x8xf32> -> vector<4x8xf32>
    %178 = vector.broadcast %173 : vector<4x1xf32> to vector<4x8xf32>
    %179 = arith.addf %171, %178 : vector<4x8xf32>
    %180 = math.log %177 : vector<4x8xf32>
    %181 = arith.addf %179, %180 : vector<4x8xf32>
    %cst_99 = arith.constant dense<0xFF800000> : vector<4xf32>
    %182 = vector.multi_reduction <maximumf>, %181, %cst_99 [1] : vector<4x8xf32> to vector<4xf32>
    %183 = vector.shape_cast %182 : vector<4xf32> to vector<4x1xf32>
    %184 = vector.broadcast %183 : vector<4x1xf32> to vector<4x8xf32>
    %185 = arith.subf %181, %184 : vector<4x8xf32>
    %186 = math.exp %185 : vector<4x8xf32>
    %cst_100 = arith.constant dense<0.000000e+00> : vector<4xf32>
    %187 = vector.multi_reduction <add>, %186, %cst_100 [1] : vector<4x8xf32> to vector<4xf32>
    %188 = vector.shape_cast %187 : vector<4xf32> to vector<4x1xf32>
    %189 = math.log %188 : vector<4x1xf32>
    %190 = arith.addf %183, %189 : vector<4x1xf32>
    %c0_101 = arith.constant 0 : index
    %c5_102 = arith.constant 5 : index
    %191 = vector.load %arg4[%c0_101, %c5_102] : memref<4x16xf32, #tpu.memory_space<vmem>>, vector<4x1xf32>
    tpu.vector_store %arg4[%c0_101, %c5_102], %190 {strides = array<i32>} : memref<4x16xf32, #tpu.memory_space<vmem>>, vector<4x1xf32>,
    %c6 = arith.constant 6 : index
    %c0_103 = arith.constant 0 : index
    %192 = memref.load %arg0[%c6, %c0_103] : memref<16x4xi32, #tpu.memory_space<smem>>
    %193 = arith.index_cast %192 : i32 to index
    %c0_104 = arith.constant 0 : index
    %194 = vector.load %arg1[%193, %c0_104] : memref<16x8xf32, #tpu.memory_space<vmem>>, vector<1x8xf32>
    %c6_105 = arith.constant 6 : index
    %c1_106 = arith.constant 1 : index
    %195 = memref.load %arg0[%c6_105, %c1_106] : memref<16x4xi32, #tpu.memory_space<smem>>
    %196 = arith.index_cast %195 : i32 to index
    %c0_107 = arith.constant 0 : index
    %197 = vector.load %arg1[%196, %c0_107] : memref<16x8xf32, #tpu.memory_space<vmem>>, vector<1x8xf32>
    %c6_108 = arith.constant 6 : index
    %c2_109 = arith.constant 2 : index
    %198 = memref.load %arg0[%c6_108, %c2_109] : memref<16x4xi32, #tpu.memory_space<smem>>
    %199 = arith.index_cast %198 : i32 to index
    %c0_110 = arith.constant 0 : index
    %200 = vector.load %arg1[%199, %c0_110] : memref<16x8xf32, #tpu.memory_space<vmem>>, vector<1x8xf32>
    %c6_111 = arith.constant 6 : index
    %c3_112 = arith.constant 3 : index
    %201 = memref.load %arg0[%c6_111, %c3_112] : memref<16x4xi32, #tpu.memory_space<smem>>
    %202 = arith.index_cast %201 : i32 to index
    %c0_113 = arith.constant 0 : index
    %203 = vector.load %arg1[%202, %c0_113] : memref<16x8xf32, #tpu.memory_space<vmem>>, vector<1x8xf32>
    %204 = tpu.concatenate %194, %197, %200, %203 in 0 : vector<1x8xf32>, vector<1x8xf32>, vector<1x8xf32>, vector<1x8xf32> -> vector<4x8xf32>
    %cst_114 = arith.constant dense<0xFF800000> : vector<4xf32>
    %205 = vector.multi_reduction <maximumf>, %181, %cst_114 [1] : vector<4x8xf32> to vector<4xf32>
    %206 = vector.shape_cast %205 : vector<4xf32> to vector<4x1xf32>
    %207 = vector.broadcast %206 : vector<4x1xf32> to vector<4x8xf32>
    %208 = arith.subf %181, %207 : vector<4x8xf32>
    %209 = math.exp %208 : vector<4x8xf32>
    %cst_115 = arith.constant dense<0.000000e+00> : vector<4x8xf32>
    %210 = tpu.matmul %209, %0, %cst_115 {dimension_numbers = #tpu.dot_dimension_numbers<[1], [0], [0], [1], [0, 0, 1, 1], [], []>, precision = #tpu.contract_precision<fp32>} : vector<4x8xf32>, vector<8x8xf32>, vector<4x8xf32> -> vector<4x8xf32>
    %211 = vector.broadcast %206 : vector<4x1xf32> to vector<4x8xf32>
    %212 = arith.addf %204, %211 : vector<4x8xf32>
    %213 = math.log %210 : vector<4x8xf32>
    %214 = arith.addf %212, %213 : vector<4x8xf32>
    %cst_116 = arith.constant dense<0xFF800000> : vector<4xf32>
    %215 = vector.multi_reduction <maximumf>, %214, %cst_116 [1] : vector<4x8xf32> to vector<4xf32>
    %216 = vector.shape_cast %215 : vector<4xf32> to vector<4x1xf32>
    %217 = vector.broadcast %216 : vector<4x1xf32> to vector<4x8xf32>
    %218 = arith.subf %214, %217 : vector<4x8xf32>
    %219 = math.exp %218 : vector<4x8xf32>
    %cst_117 = arith.constant dense<0.000000e+00> : vector<4xf32>
    %220 = vector.multi_reduction <add>, %219, %cst_117 [1] : vector<4x8xf32> to vector<4xf32>
    %221 = vector.shape_cast %220 : vector<4xf32> to vector<4x1xf32>
    %222 = math.log %221 : vector<4x1xf32>
    %223 = arith.addf %216, %222 : vector<4x1xf32>
    %c0_118 = arith.constant 0 : index
    %c6_119 = arith.constant 6 : index
    %224 = vector.load %arg4[%c0_118, %c6_119] : memref<4x16xf32, #tpu.memory_space<vmem>>, vector<4x1xf32>
    tpu.vector_store %arg4[%c0_118, %c6_119], %223 {strides = array<i32>} : memref<4x16xf32, #tpu.memory_space<vmem>>, vector<4x1xf32>,
    %c7 = arith.constant 7 : index
    %c0_120 = arith.constant 0 : index
    %225 = memref.load %arg0[%c7, %c0_120] : memref<16x4xi32, #tpu.memory_space<smem>>
    %226 = arith.index_cast %225 : i32 to index
    %c0_121 = arith.constant 0 : index
    %227 = vector.load %arg1[%226, %c0_121] : memref<16x8xf32, #tpu.memory_space<vmem>>, vector<1x8xf32>
    %c7_122 = arith.constant 7 : index
    %c1_123 = arith.constant 1 : index
    %228 = memref.load %arg0[%c7_122, %c1_123] : memref<16x4xi32, #tpu.memory_space<smem>>
    %229 = arith.index_cast %228 : i32 to index
    %c0_124 = arith.constant 0 : index
    %230 = vector.load %arg1[%229, %c0_124] : memref<16x8xf32, #tpu.memory_space<vmem>>, vector<1x8xf32>
    %c7_125 = arith.constant 7 : index
    %c2_126 = arith.constant 2 : index
    %231 = memref.load %arg0[%c7_125, %c2_126] : memref<16x4xi32, #tpu.memory_space<smem>>
    %232 = arith.index_cast %231 : i32 to index
    %c0_127 = arith.constant 0 : index
    %233 = vector.load %arg1[%232, %c0_127] : memref<16x8xf32, #tpu.memory_space<vmem>>, vector<1x8xf32>
    %c7_128 = arith.constant 7 : index
    %c3_129 = arith.constant 3 : index
    %234 = memref.load %arg0[%c7_128, %c3_129] : memref<16x4xi32, #tpu.memory_space<smem>>
    %235 = arith.index_cast %234 : i32 to index
    %c0_130 = arith.constant 0 : index
    %236 = vector.load %arg1[%235, %c0_130] : memref<16x8xf32, #tpu.memory_space<vmem>>, vector<1x8xf32>
    %237 = tpu.concatenate %227, %230, %233, %236 in 0 : vector<1x8xf32>, vector<1x8xf32>, vector<1x8xf32>, vector<1x8xf32> -> vector<4x8xf32>
    %cst_131 = arith.constant dense<0xFF800000> : vector<4xf32>
    %238 = vector.multi_reduction <maximumf>, %214, %cst_131 [1] : vector<4x8xf32> to vector<4xf32>
    %239 = vector.shape_cast %238 : vector<4xf32> to vector<4x1xf32>
    %240 = vector.broadcast %239 : vector<4x1xf32> to vector<4x8xf32>
    %241 = arith.subf %214, %240 : vector<4x8xf32>
    %242 = math.exp %241 : vector<4x8xf32>
    %cst_132 = arith.constant dense<0.000000e+00> : vector<4x8xf32>
    %243 = tpu.matmul %242, %0, %cst_132 {dimension_numbers = #tpu.dot_dimension_numbers<[1], [0], [0], [1], [0, 0, 1, 1], [], []>, precision = #tpu.contract_precision<fp32>} : vector<4x8xf32>, vector<8x8xf32>, vector<4x8xf32> -> vector<4x8xf32>
    %244 = vector.broadcast %239 : vector<4x1xf32> to vector<4x8xf32>
    %245 = arith.addf %237, %244 : vector<4x8xf32>
    %246 = math.log %243 : vector<4x8xf32>
    %247 = arith.addf %245, %246 : vector<4x8xf32>
    %cst_133 = arith.constant dense<0xFF800000> : vector<4xf32>
    %248 = vector.multi_reduction <maximumf>, %247, %cst_133 [1] : vector<4x8xf32> to vector<4xf32>
    %249 = vector.shape_cast %248 : vector<4xf32> to vector<4x1xf32>
    %250 = vector.broadcast %249 : vector<4x1xf32> to vector<4x8xf32>
    %251 = arith.subf %247, %250 : vector<4x8xf32>
    %252 = math.exp %251 : vector<4x8xf32>
    %cst_134 = arith.constant dense<0.000000e+00> : vector<4xf32>
    %253 = vector.multi_reduction <add>, %252, %cst_134 [1] : vector<4x8xf32> to vector<4xf32>
    %254 = vector.shape_cast %253 : vector<4xf32> to vector<4x1xf32>
    %255 = math.log %254 : vector<4x1xf32>
    %256 = arith.addf %249, %255 : vector<4x1xf32>
    %c0_135 = arith.constant 0 : index
    %c7_136 = arith.constant 7 : index
    %257 = vector.load %arg4[%c0_135, %c7_136] : memref<4x16xf32, #tpu.memory_space<vmem>>, vector<4x1xf32>
    tpu.vector_store %arg4[%c0_135, %c7_136], %256 {strides = array<i32>} : memref<4x16xf32, #tpu.memory_space<vmem>>, vector<4x1xf32>,
    %c8 = arith.constant 8 : index
    %c0_137 = arith.constant 0 : index
    %258 = memref.load %arg0[%c8, %c0_137] : memref<16x4xi32, #tpu.memory_space<smem>>
    %259 = arith.index_cast %258 : i32 to index
    %c0_138 = arith.constant 0 : index
    %260 = vector.load %arg1[%259, %c0_138] : memref<16x8xf32, #tpu.memory_space<vmem>>, vector<1x8xf32>
    %c8_139 = arith.constant 8 : index
    %c1_140 = arith.constant 1 : index
    %261 = memref.load %arg0[%c8_139, %c1_140] : memref<16x4xi32, #tpu.memory_space<smem>>
    %262 = arith.index_cast %261 : i32 to index
    %c0_141 = arith.constant 0 : index
    %263 = vector.load %arg1[%262, %c0_141] : memref<16x8xf32, #tpu.memory_space<vmem>>, vector<1x8xf32>
    %c8_142 = arith.constant 8 : index
    %c2_143 = arith.constant 2 : index
    %264 = memref.load %arg0[%c8_142, %c2_143] : memref<16x4xi32, #tpu.memory_space<smem>>
    %265 = arith.index_cast %264 : i32 to index
    %c0_144 = arith.constant 0 : index
    %266 = vector.load %arg1[%265, %c0_144] : memref<16x8xf32, #tpu.memory_space<vmem>>, vector<1x8xf32>
    %c8_145 = arith.constant 8 : index
    %c3_146 = arith.constant 3 : index
    %267 = memref.load %arg0[%c8_145, %c3_146] : memref<16x4xi32, #tpu.memory_space<smem>>
    %268 = arith.index_cast %267 : i32 to index
    %c0_147 = arith.constant 0 : index
    %269 = vector.load %arg1[%268, %c0_147] : memref<16x8xf32, #tpu.memory_space<vmem>>, vector<1x8xf32>
    %270 = tpu.concatenate %260, %263, %266, %269 in 0 : vector<1x8xf32>, vector<1x8xf32>, vector<1x8xf32>, vector<1x8xf32> -> vector<4x8xf32>
    %cst_148 = arith.constant dense<0xFF800000> : vector<4xf32>
    %271 = vector.multi_reduction <maximumf>, %247, %cst_148 [1] : vector<4x8xf32> to vector<4xf32>
    %272 = vector.shape_cast %271 : vector<4xf32> to vector<4x1xf32>
    %273 = vector.broadcast %272 : vector<4x1xf32> to vector<4x8xf32>
    %274 = arith.subf %247, %273 : vector<4x8xf32>
    %275 = math.exp %274 : vector<4x8xf32>
    %cst_149 = arith.constant dense<0.000000e+00> : vector<4x8xf32>
    %276 = tpu.matmul %275, %0, %cst_149 {dimension_numbers = #tpu.dot_dimension_numbers<[1], [0], [0], [1], [0, 0, 1, 1], [], []>, precision = #tpu.contract_precision<fp32>} : vector<4x8xf32>, vector<8x8xf32>, vector<4x8xf32> -> vector<4x8xf32>
    %277 = vector.broadcast %272 : vector<4x1xf32> to vector<4x8xf32>
    %278 = arith.addf %270, %277 : vector<4x8xf32>
    %279 = math.log %276 : vector<4x8xf32>
    %280 = arith.addf %278, %279 : vector<4x8xf32>
    %cst_150 = arith.constant dense<0xFF800000> : vector<4xf32>
    %281 = vector.multi_reduction <maximumf>, %280, %cst_150 [1] : vector<4x8xf32> to vector<4xf32>
    %282 = vector.shape_cast %281 : vector<4xf32> to vector<4x1xf32>
    %283 = vector.broadcast %282 : vector<4x1xf32> to vector<4x8xf32>
    %284 = arith.subf %280, %283 : vector<4x8xf32>
    %285 = math.exp %284 : vector<4x8xf32>
    %cst_151 = arith.constant dense<0.000000e+00> : vector<4xf32>
    %286 = vector.multi_reduction <add>, %285, %cst_151 [1] : vector<4x8xf32> to vector<4xf32>
    %287 = vector.shape_cast %286 : vector<4xf32> to vector<4x1xf32>
    %288 = math.log %287 : vector<4x1xf32>
    %289 = arith.addf %282, %288 : vector<4x1xf32>
    %c0_152 = arith.constant 0 : index
    %c8_153 = arith.constant 8 : index
    %290 = vector.load %arg4[%c0_152, %c8_153] : memref<4x16xf32, #tpu.memory_space<vmem>>, vector<4x1xf32>
    tpu.vector_store %arg4[%c0_152, %c8_153], %289 {strides = array<i32>} : memref<4x16xf32, #tpu.memory_space<vmem>>, vector<4x1xf32>,
    %c9 = arith.constant 9 : index
    %c0_154 = arith.constant 0 : index
    %291 = memref.load %arg0[%c9, %c0_154] : memref<16x4xi32, #tpu.memory_space<smem>>
    %292 = arith.index_cast %291 : i32 to index
    %c0_155 = arith.constant 0 : index
    %293 = vector.load %arg1[%292, %c0_155] : memref<16x8xf32, #tpu.memory_space<vmem>>, vector<1x8xf32>
    %c9_156 = arith.constant 9 : index
    %c1_157 = arith.constant 1 : index
    %294 = memref.load %arg0[%c9_156, %c1_157] : memref<16x4xi32, #tpu.memory_space<smem>>
    %295 = arith.index_cast %294 : i32 to index
    %c0_158 = arith.constant 0 : index
    %296 = vector.load %arg1[%295, %c0_158] : memref<16x8xf32, #tpu.memory_space<vmem>>, vector<1x8xf32>
    %c9_159 = arith.constant 9 : index
    %c2_160 = arith.constant 2 : index
    %297 = memref.load %arg0[%c9_159, %c2_160] : memref<16x4xi32, #tpu.memory_space<smem>>
    %298 = arith.index_cast %297 : i32 to index
    %c0_161 = arith.constant 0 : index
    %299 = vector.load %arg1[%298, %c0_161] : memref<16x8xf32, #tpu.memory_space<vmem>>, vector<1x8xf32>
    %c9_162 = arith.constant 9 : index
    %c3_163 = arith.constant 3 : index
    %300 = memref.load %arg0[%c9_162, %c3_163] : memref<16x4xi32, #tpu.memory_space<smem>>
    %301 = arith.index_cast %300 : i32 to index
    %c0_164 = arith.constant 0 : index
    %302 = vector.load %arg1[%301, %c0_164] : memref<16x8xf32, #tpu.memory_space<vmem>>, vector<1x8xf32>
    %303 = tpu.concatenate %293, %296, %299, %302 in 0 : vector<1x8xf32>, vector<1x8xf32>, vector<1x8xf32>, vector<1x8xf32> -> vector<4x8xf32>
    %cst_165 = arith.constant dense<0xFF800000> : vector<4xf32>
    %304 = vector.multi_reduction <maximumf>, %280, %cst_165 [1] : vector<4x8xf32> to vector<4xf32>
    %305 = vector.shape_cast %304 : vector<4xf32> to vector<4x1xf32>
    %306 = vector.broadcast %305 : vector<4x1xf32> to vector<4x8xf32>
    %307 = arith.subf %280, %306 : vector<4x8xf32>
    %308 = math.exp %307 : vector<4x8xf32>
    %cst_166 = arith.constant dense<0.000000e+00> : vector<4x8xf32>
    %309 = tpu.matmul %308, %0, %cst_166 {dimension_numbers = #tpu.dot_dimension_numbers<[1], [0], [0], [1], [0, 0, 1, 1], [], []>, precision = #tpu.contract_precision<fp32>} : vector<4x8xf32>, vector<8x8xf32>, vector<4x8xf32> -> vector<4x8xf32>
    %310 = vector.broadcast %305 : vector<4x1xf32> to vector<4x8xf32>
    %311 = arith.addf %303, %310 : vector<4x8xf32>
    %312 = math.log %309 : vector<4x8xf32>
    %313 = arith.addf %311, %312 : vector<4x8xf32>
    %cst_167 = arith.constant dense<0xFF800000> : vector<4xf32>
    %314 = vector.multi_reduction <maximumf>, %313, %cst_167 [1] : vector<4x8xf32> to vector<4xf32>
    %315 = vector.shape_cast %314 : vector<4xf32> to vector<4x1xf32>
    %316 = vector.broadcast %315 : vector<4x1xf32> to vector<4x8xf32>
    %317 = arith.subf %313, %316 : vector<4x8xf32>
    %318 = math.exp %317 : vector<4x8xf32>
    %cst_168 = arith.constant dense<0.000000e+00> : vector<4xf32>
    %319 = vector.multi_reduction <add>, %318, %cst_168 [1] : vector<4x8xf32> to vector<4xf32>
    %320 = vector.shape_cast %319 : vector<4xf32> to vector<4x1xf32>
    %321 = math.log %320 : vector<4x1xf32>
    %322 = arith.addf %315, %321 : vector<4x1xf32>
    %c0_169 = arith.constant 0 : index
    %c9_170 = arith.constant 9 : index
    %323 = vector.load %arg4[%c0_169, %c9_170] : memref<4x16xf32, #tpu.memory_space<vmem>>, vector<4x1xf32>
    tpu.vector_store %arg4[%c0_169, %c9_170], %322 {strides = array<i32>} : memref<4x16xf32, #tpu.memory_space<vmem>>, vector<4x1xf32>,
    %c10 = arith.constant 10 : index
    %c0_171 = arith.constant 0 : index
    %324 = memref.load %arg0[%c10, %c0_171] : memref<16x4xi32, #tpu.memory_space<smem>>
    %325 = arith.index_cast %324 : i32 to index
    %c0_172 = arith.constant 0 : index
    %326 = vector.load %arg1[%325, %c0_172] : memref<16x8xf32, #tpu.memory_space<vmem>>, vector<1x8xf32>
    %c10_173 = arith.constant 10 : index
    %c1_174 = arith.constant 1 : index
    %327 = memref.load %arg0[%c10_173, %c1_174] : memref<16x4xi32, #tpu.memory_space<smem>>
    %328 = arith.index_cast %327 : i32 to index
    %c0_175 = arith.constant 0 : index
    %329 = vector.load %arg1[%328, %c0_175] : memref<16x8xf32, #tpu.memory_space<vmem>>, vector<1x8xf32>
    %c10_176 = arith.constant 10 : index
    %c2_177 = arith.constant 2 : index
    %330 = memref.load %arg0[%c10_176, %c2_177] : memref<16x4xi32, #tpu.memory_space<smem>>
    %331 = arith.index_cast %330 : i32 to index
    %c0_178 = arith.constant 0 : index
    %332 = vector.load %arg1[%331, %c0_178] : memref<16x8xf32, #tpu.memory_space<vmem>>, vector<1x8xf32>
    %c10_179 = arith.constant 10 : index
    %c3_180 = arith.constant 3 : index
    %333 = memref.load %arg0[%c10_179, %c3_180] : memref<16x4xi32, #tpu.memory_space<smem>>
    %334 = arith.index_cast %333 : i32 to index
    %c0_181 = arith.constant 0 : index
    %335 = vector.load %arg1[%334, %c0_181] : memref<16x8xf32, #tpu.memory_space<vmem>>, vector<1x8xf32>
    %336 = tpu.concatenate %326, %329, %332, %335 in 0 : vector<1x8xf32>, vector<1x8xf32>, vector<1x8xf32>, vector<1x8xf32> -> vector<4x8xf32>
    %cst_182 = arith.constant dense<0xFF800000> : vector<4xf32>
    %337 = vector.multi_reduction <maximumf>, %313, %cst_182 [1] : vector<4x8xf32> to vector<4xf32>
    %338 = vector.shape_cast %337 : vector<4xf32> to vector<4x1xf32>
    %339 = vector.broadcast %338 : vector<4x1xf32> to vector<4x8xf32>
    %340 = arith.subf %313, %339 : vector<4x8xf32>
    %341 = math.exp %340 : vector<4x8xf32>
    %cst_183 = arith.constant dense<0.000000e+00> : vector<4x8xf32>
    %342 = tpu.matmul %341, %0, %cst_183 {dimension_numbers = #tpu.dot_dimension_numbers<[1], [0], [0], [1], [0, 0, 1, 1], [], []>, precision = #tpu.contract_precision<fp32>} : vector<4x8xf32>, vector<8x8xf32>, vector<4x8xf32> -> vector<4x8xf32>
    %343 = vector.broadcast %338 : vector<4x1xf32> to vector<4x8xf32>
    %344 = arith.addf %336, %343 : vector<4x8xf32>
    %345 = math.log %342 : vector<4x8xf32>
    %346 = arith.addf %344, %345 : vector<4x8xf32>
    %cst_184 = arith.constant dense<0xFF800000> : vector<4xf32>
    %347 = vector.multi_reduction <maximumf>, %346, %cst_184 [1] : vector<4x8xf32> to vector<4xf32>
    %348 = vector.shape_cast %347 : vector<4xf32> to vector<4x1xf32>
    %349 = vector.broadcast %348 : vector<4x1xf32> to vector<4x8xf32>
    %350 = arith.subf %346, %349 : vector<4x8xf32>
    %351 = math.exp %350 : vector<4x8xf32>
    %cst_185 = arith.constant dense<0.000000e+00> : vector<4xf32>
    %352 = vector.multi_reduction <add>, %351, %cst_185 [1] : vector<4x8xf32> to vector<4xf32>
    %353 = vector.shape_cast %352 : vector<4xf32> to vector<4x1xf32>
    %354 = math.log %353 : vector<4x1xf32>
    %355 = arith.addf %348, %354 : vector<4x1xf32>
    %c0_186 = arith.constant 0 : index
    %c10_187 = arith.constant 10 : index
    %356 = vector.load %arg4[%c0_186, %c10_187] : memref<4x16xf32, #tpu.memory_space<vmem>>, vector<4x1xf32>
    tpu.vector_store %arg4[%c0_186, %c10_187], %355 {strides = array<i32>} : memref<4x16xf32, #tpu.memory_space<vmem>>, vector<4x1xf32>,
    %c11 = arith.constant 11 : index
    %c0_188 = arith.constant 0 : index
    %357 = memref.load %arg0[%c11, %c0_188] : memref<16x4xi32, #tpu.memory_space<smem>>
    %358 = arith.index_cast %357 : i32 to index
    %c0_189 = arith.constant 0 : index
    %359 = vector.load %arg1[%358, %c0_189] : memref<16x8xf32, #tpu.memory_space<vmem>>, vector<1x8xf32>
    %c11_190 = arith.constant 11 : index
    %c1_191 = arith.constant 1 : index
    %360 = memref.load %arg0[%c11_190, %c1_191] : memref<16x4xi32, #tpu.memory_space<smem>>
    %361 = arith.index_cast %360 : i32 to index
    %c0_192 = arith.constant 0 : index
    %362 = vector.load %arg1[%361, %c0_192] : memref<16x8xf32, #tpu.memory_space<vmem>>, vector<1x8xf32>
    %c11_193 = arith.constant 11 : index
    %c2_194 = arith.constant 2 : index
    %363 = memref.load %arg0[%c11_193, %c2_194] : memref<16x4xi32, #tpu.memory_space<smem>>
    %364 = arith.index_cast %363 : i32 to index
    %c0_195 = arith.constant 0 : index
    %365 = vector.load %arg1[%364, %c0_195] : memref<16x8xf32, #tpu.memory_space<vmem>>, vector<1x8xf32>
    %c11_196 = arith.constant 11 : index
    %c3_197 = arith.constant 3 : index
    %366 = memref.load %arg0[%c11_196, %c3_197] : memref<16x4xi32, #tpu.memory_space<smem>>
    %367 = arith.index_cast %366 : i32 to index
    %c0_198 = arith.constant 0 : index
    %368 = vector.load %arg1[%367, %c0_198] : memref<16x8xf32, #tpu.memory_space<vmem>>, vector<1x8xf32>
    %369 = tpu.concatenate %359, %362, %365, %368 in 0 : vector<1x8xf32>, vector<1x8xf32>, vector<1x8xf32>, vector<1x8xf32> -> vector<4x8xf32>
    %cst_199 = arith.constant dense<0xFF800000> : vector<4xf32>
    %370 = vector.multi_reduction <maximumf>, %346, %cst_199 [1] : vector<4x8xf32> to vector<4xf32>
    %371 = vector.shape_cast %370 : vector<4xf32> to vector<4x1xf32>
    %372 = vector.broadcast %371 : vector<4x1xf32> to vector<4x8xf32>
    %373 = arith.subf %346, %372 : vector<4x8xf32>
    %374 = math.exp %373 : vector<4x8xf32>
    %cst_200 = arith.constant dense<0.000000e+00> : vector<4x8xf32>
    %375 = tpu.matmul %374, %0, %cst_200 {dimension_numbers = #tpu.dot_dimension_numbers<[1], [0], [0], [1], [0, 0, 1, 1], [], []>, precision = #tpu.contract_precision<fp32>} : vector<4x8xf32>, vector<8x8xf32>, vector<4x8xf32> -> vector<4x8xf32>
    %376 = vector.broadcast %371 : vector<4x1xf32> to vector<4x8xf32>
    %377 = arith.addf %369, %376 : vector<4x8xf32>
    %378 = math.log %375 : vector<4x8xf32>
    %379 = arith.addf %377, %378 : vector<4x8xf32>
    %cst_201 = arith.constant dense<0xFF800000> : vector<4xf32>
    %380 = vector.multi_reduction <maximumf>, %379, %cst_201 [1] : vector<4x8xf32> to vector<4xf32>
    %381 = vector.shape_cast %380 : vector<4xf32> to vector<4x1xf32>
    %382 = vector.broadcast %381 : vector<4x1xf32> to vector<4x8xf32>
    %383 = arith.subf %379, %382 : vector<4x8xf32>
    %384 = math.exp %383 : vector<4x8xf32>
    %cst_202 = arith.constant dense<0.000000e+00> : vector<4xf32>
    %385 = vector.multi_reduction <add>, %384, %cst_202 [1] : vector<4x8xf32> to vector<4xf32>
    %386 = vector.shape_cast %385 : vector<4xf32> to vector<4x1xf32>
    %387 = math.log %386 : vector<4x1xf32>
    %388 = arith.addf %381, %387 : vector<4x1xf32>
    %c0_203 = arith.constant 0 : index
    %c11_204 = arith.constant 11 : index
    %389 = vector.load %arg4[%c0_203, %c11_204] : memref<4x16xf32, #tpu.memory_space<vmem>>, vector<4x1xf32>
    tpu.vector_store %arg4[%c0_203, %c11_204], %388 {strides = array<i32>} : memref<4x16xf32, #tpu.memory_space<vmem>>, vector<4x1xf32>,
    %c12 = arith.constant 12 : index
    %c0_205 = arith.constant 0 : index
    %390 = memref.load %arg0[%c12, %c0_205] : memref<16x4xi32, #tpu.memory_space<smem>>
    %391 = arith.index_cast %390 : i32 to index
    %c0_206 = arith.constant 0 : index
    %392 = vector.load %arg1[%391, %c0_206] : memref<16x8xf32, #tpu.memory_space<vmem>>, vector<1x8xf32>
    %c12_207 = arith.constant 12 : index
    %c1_208 = arith.constant 1 : index
    %393 = memref.load %arg0[%c12_207, %c1_208] : memref<16x4xi32, #tpu.memory_space<smem>>
    %394 = arith.index_cast %393 : i32 to index
    %c0_209 = arith.constant 0 : index
    %395 = vector.load %arg1[%394, %c0_209] : memref<16x8xf32, #tpu.memory_space<vmem>>, vector<1x8xf32>
    %c12_210 = arith.constant 12 : index
    %c2_211 = arith.constant 2 : index
    %396 = memref.load %arg0[%c12_210, %c2_211] : memref<16x4xi32, #tpu.memory_space<smem>>
    %397 = arith.index_cast %396 : i32 to index
    %c0_212 = arith.constant 0 : index
    %398 = vector.load %arg1[%397, %c0_212] : memref<16x8xf32, #tpu.memory_space<vmem>>, vector<1x8xf32>
    %c12_213 = arith.constant 12 : index
    %c3_214 = arith.constant 3 : index
    %399 = memref.load %arg0[%c12_213, %c3_214] : memref<16x4xi32, #tpu.memory_space<smem>>
    %400 = arith.index_cast %399 : i32 to index
    %c0_215 = arith.constant 0 : index
    %401 = vector.load %arg1[%400, %c0_215] : memref<16x8xf32, #tpu.memory_space<vmem>>, vector<1x8xf32>
    %402 = tpu.concatenate %392, %395, %398, %401 in 0 : vector<1x8xf32>, vector<1x8xf32>, vector<1x8xf32>, vector<1x8xf32> -> vector<4x8xf32>
    %cst_216 = arith.constant dense<0xFF800000> : vector<4xf32>
    %403 = vector.multi_reduction <maximumf>, %379, %cst_216 [1] : vector<4x8xf32> to vector<4xf32>
    %404 = vector.shape_cast %403 : vector<4xf32> to vector<4x1xf32>
    %405 = vector.broadcast %404 : vector<4x1xf32> to vector<4x8xf32>
    %406 = arith.subf %379, %405 : vector<4x8xf32>
    %407 = math.exp %406 : vector<4x8xf32>
    %cst_217 = arith.constant dense<0.000000e+00> : vector<4x8xf32>
    %408 = tpu.matmul %407, %0, %cst_217 {dimension_numbers = #tpu.dot_dimension_numbers<[1], [0], [0], [1], [0, 0, 1, 1], [], []>, precision = #tpu.contract_precision<fp32>} : vector<4x8xf32>, vector<8x8xf32>, vector<4x8xf32> -> vector<4x8xf32>
    %409 = vector.broadcast %404 : vector<4x1xf32> to vector<4x8xf32>
    %410 = arith.addf %402, %409 : vector<4x8xf32>
    %411 = math.log %408 : vector<4x8xf32>
    %412 = arith.addf %410, %411 : vector<4x8xf32>
    %cst_218 = arith.constant dense<0xFF800000> : vector<4xf32>
    %413 = vector.multi_reduction <maximumf>, %412, %cst_218 [1] : vector<4x8xf32> to vector<4xf32>
    %414 = vector.shape_cast %413 : vector<4xf32> to vector<4x1xf32>
    %415 = vector.broadcast %414 : vector<4x1xf32> to vector<4x8xf32>
    %416 = arith.subf %412, %415 : vector<4x8xf32>
    %417 = math.exp %416 : vector<4x8xf32>
    %cst_219 = arith.constant dense<0.000000e+00> : vector<4xf32>
    %418 = vector.multi_reduction <add>, %417, %cst_219 [1] : vector<4x8xf32> to vector<4xf32>
    %419 = vector.shape_cast %418 : vector<4xf32> to vector<4x1xf32>
    %420 = math.log %419 : vector<4x1xf32>
    %421 = arith.addf %414, %420 : vector<4x1xf32>
    %c0_220 = arith.constant 0 : index
    %c12_221 = arith.constant 12 : index
    %422 = vector.load %arg4[%c0_220, %c12_221] : memref<4x16xf32, #tpu.memory_space<vmem>>, vector<4x1xf32>
    tpu.vector_store %arg4[%c0_220, %c12_221], %421 {strides = array<i32>} : memref<4x16xf32, #tpu.memory_space<vmem>>, vector<4x1xf32>,
    %c13 = arith.constant 13 : index
    %c0_222 = arith.constant 0 : index
    %423 = memref.load %arg0[%c13, %c0_222] : memref<16x4xi32, #tpu.memory_space<smem>>
    %424 = arith.index_cast %423 : i32 to index
    %c0_223 = arith.constant 0 : index
    %425 = vector.load %arg1[%424, %c0_223] : memref<16x8xf32, #tpu.memory_space<vmem>>, vector<1x8xf32>
    %c13_224 = arith.constant 13 : index
    %c1_225 = arith.constant 1 : index
    %426 = memref.load %arg0[%c13_224, %c1_225] : memref<16x4xi32, #tpu.memory_space<smem>>
    %427 = arith.index_cast %426 : i32 to index
    %c0_226 = arith.constant 0 : index
    %428 = vector.load %arg1[%427, %c0_226] : memref<16x8xf32, #tpu.memory_space<vmem>>, vector<1x8xf32>
    %c13_227 = arith.constant 13 : index
    %c2_228 = arith.constant 2 : index
    %429 = memref.load %arg0[%c13_227, %c2_228] : memref<16x4xi32, #tpu.memory_space<smem>>
    %430 = arith.index_cast %429 : i32 to index
    %c0_229 = arith.constant 0 : index
    %431 = vector.load %arg1[%430, %c0_229] : memref<16x8xf32, #tpu.memory_space<vmem>>, vector<1x8xf32>
    %c13_230 = arith.constant 13 : index
    %c3_231 = arith.constant 3 : index
    %432 = memref.load %arg0[%c13_230, %c3_231] : memref<16x4xi32, #tpu.memory_space<smem>>
    %433 = arith.index_cast %432 : i32 to index
    %c0_232 = arith.constant 0 : index
    %434 = vector.load %arg1[%433, %c0_232] : memref<16x8xf32, #tpu.memory_space<vmem>>, vector<1x8xf32>
    %435 = tpu.concatenate %425, %428, %431, %434 in 0 : vector<1x8xf32>, vector<1x8xf32>, vector<1x8xf32>, vector<1x8xf32> -> vector<4x8xf32>
    %cst_233 = arith.constant dense<0xFF800000> : vector<4xf32>
    %436 = vector.multi_reduction <maximumf>, %412, %cst_233 [1] : vector<4x8xf32> to vector<4xf32>
    %437 = vector.shape_cast %436 : vector<4xf32> to vector<4x1xf32>
    %438 = vector.broadcast %437 : vector<4x1xf32> to vector<4x8xf32>
    %439 = arith.subf %412, %438 : vector<4x8xf32>
    %440 = math.exp %439 : vector<4x8xf32>
    %cst_234 = arith.constant dense<0.000000e+00> : vector<4x8xf32>
    %441 = tpu.matmul %440, %0, %cst_234 {dimension_numbers = #tpu.dot_dimension_numbers<[1], [0], [0], [1], [0, 0, 1, 1], [], []>, precision = #tpu.contract_precision<fp32>} : vector<4x8xf32>, vector<8x8xf32>, vector<4x8xf32> -> vector<4x8xf32>
    %442 = vector.broadcast %437 : vector<4x1xf32> to vector<4x8xf32>
    %443 = arith.addf %435, %442 : vector<4x8xf32>
    %444 = math.log %441 : vector<4x8xf32>
    %445 = arith.addf %443, %444 : vector<4x8xf32>
    %cst_235 = arith.constant dense<0xFF800000> : vector<4xf32>
    %446 = vector.multi_reduction <maximumf>, %445, %cst_235 [1] : vector<4x8xf32> to vector<4xf32>
    %447 = vector.shape_cast %446 : vector<4xf32> to vector<4x1xf32>
    %448 = vector.broadcast %447 : vector<4x1xf32> to vector<4x8xf32>
    %449 = arith.subf %445, %448 : vector<4x8xf32>
    %450 = math.exp %449 : vector<4x8xf32>
    %cst_236 = arith.constant dense<0.000000e+00> : vector<4xf32>
    %451 = vector.multi_reduction <add>, %450, %cst_236 [1] : vector<4x8xf32> to vector<4xf32>
    %452 = vector.shape_cast %451 : vector<4xf32> to vector<4x1xf32>
    %453 = math.log %452 : vector<4x1xf32>
    %454 = arith.addf %447, %453 : vector<4x1xf32>
    %c0_237 = arith.constant 0 : index
    %c13_238 = arith.constant 13 : index
    %455 = vector.load %arg4[%c0_237, %c13_238] : memref<4x16xf32, #tpu.memory_space<vmem>>, vector<4x1xf32>
    tpu.vector_store %arg4[%c0_237, %c13_238], %454 {strides = array<i32>} : memref<4x16xf32, #tpu.memory_space<vmem>>, vector<4x1xf32>,
    %c14 = arith.constant 14 : index
    %c0_239 = arith.constant 0 : index
    %456 = memref.load %arg0[%c14, %c0_239] : memref<16x4xi32, #tpu.memory_space<smem>>
    %457 = arith.index_cast %456 : i32 to index
    %c0_240 = arith.constant 0 : index
    %458 = vector.load %arg1[%457, %c0_240] : memref<16x8xf32, #tpu.memory_space<vmem>>, vector<1x8xf32>
    %c14_241 = arith.constant 14 : index
    %c1_242 = arith.constant 1 : index
    %459 = memref.load %arg0[%c14_241, %c1_242] : memref<16x4xi32, #tpu.memory_space<smem>>
    %460 = arith.index_cast %459 : i32 to index
    %c0_243 = arith.constant 0 : index
    %461 = vector.load %arg1[%460, %c0_243] : memref<16x8xf32, #tpu.memory_space<vmem>>, vector<1x8xf32>
    %c14_244 = arith.constant 14 : index
    %c2_245 = arith.constant 2 : index
    %462 = memref.load %arg0[%c14_244, %c2_245] : memref<16x4xi32, #tpu.memory_space<smem>>
    %463 = arith.index_cast %462 : i32 to index
    %c0_246 = arith.constant 0 : index
    %464 = vector.load %arg1[%463, %c0_246] : memref<16x8xf32, #tpu.memory_space<vmem>>, vector<1x8xf32>
    %c14_247 = arith.constant 14 : index
    %c3_248 = arith.constant 3 : index
    %465 = memref.load %arg0[%c14_247, %c3_248] : memref<16x4xi32, #tpu.memory_space<smem>>
    %466 = arith.index_cast %465 : i32 to index
    %c0_249 = arith.constant 0 : index
    %467 = vector.load %arg1[%466, %c0_249] : memref<16x8xf32, #tpu.memory_space<vmem>>, vector<1x8xf32>
    %468 = tpu.concatenate %458, %461, %464, %467 in 0 : vector<1x8xf32>, vector<1x8xf32>, vector<1x8xf32>, vector<1x8xf32> -> vector<4x8xf32>
    %cst_250 = arith.constant dense<0xFF800000> : vector<4xf32>
    %469 = vector.multi_reduction <maximumf>, %445, %cst_250 [1] : vector<4x8xf32> to vector<4xf32>
    %470 = vector.shape_cast %469 : vector<4xf32> to vector<4x1xf32>
    %471 = vector.broadcast %470 : vector<4x1xf32> to vector<4x8xf32>
    %472 = arith.subf %445, %471 : vector<4x8xf32>
    %473 = math.exp %472 : vector<4x8xf32>
    %cst_251 = arith.constant dense<0.000000e+00> : vector<4x8xf32>
    %474 = tpu.matmul %473, %0, %cst_251 {dimension_numbers = #tpu.dot_dimension_numbers<[1], [0], [0], [1], [0, 0, 1, 1], [], []>, precision = #tpu.contract_precision<fp32>} : vector<4x8xf32>, vector<8x8xf32>, vector<4x8xf32> -> vector<4x8xf32>
    %475 = vector.broadcast %470 : vector<4x1xf32> to vector<4x8xf32>
    %476 = arith.addf %468, %475 : vector<4x8xf32>
    %477 = math.log %474 : vector<4x8xf32>
    %478 = arith.addf %476, %477 : vector<4x8xf32>
    %cst_252 = arith.constant dense<0xFF800000> : vector<4xf32>
    %479 = vector.multi_reduction <maximumf>, %478, %cst_252 [1] : vector<4x8xf32> to vector<4xf32>
    %480 = vector.shape_cast %479 : vector<4xf32> to vector<4x1xf32>
    %481 = vector.broadcast %480 : vector<4x1xf32> to vector<4x8xf32>
    %482 = arith.subf %478, %481 : vector<4x8xf32>
    %483 = math.exp %482 : vector<4x8xf32>
    %cst_253 = arith.constant dense<0.000000e+00> : vector<4xf32>
    %484 = vector.multi_reduction <add>, %483, %cst_253 [1] : vector<4x8xf32> to vector<4xf32>
    %485 = vector.shape_cast %484 : vector<4xf32> to vector<4x1xf32>
    %486 = math.log %485 : vector<4x1xf32>
    %487 = arith.addf %480, %486 : vector<4x1xf32>
    %c0_254 = arith.constant 0 : index
    %c14_255 = arith.constant 14 : index
    %488 = vector.load %arg4[%c0_254, %c14_255] : memref<4x16xf32, #tpu.memory_space<vmem>>, vector<4x1xf32>
    tpu.vector_store %arg4[%c0_254, %c14_255], %487 {strides = array<i32>} : memref<4x16xf32, #tpu.memory_space<vmem>>, vector<4x1xf32>,
    %c15 = arith.constant 15 : index
    %c0_256 = arith.constant 0 : index
    %489 = memref.load %arg0[%c15, %c0_256] : memref<16x4xi32, #tpu.memory_space<smem>>
    %490 = arith.index_cast %489 : i32 to index
    %c0_257 = arith.constant 0 : index
    %491 = vector.load %arg1[%490, %c0_257] : memref<16x8xf32, #tpu.memory_space<vmem>>, vector<1x8xf32>
    %c15_258 = arith.constant 15 : index
    %c1_259 = arith.constant 1 : index
    %492 = memref.load %arg0[%c15_258, %c1_259] : memref<16x4xi32, #tpu.memory_space<smem>>
    %493 = arith.index_cast %492 : i32 to index
    %c0_260 = arith.constant 0 : index
    %494 = vector.load %arg1[%493, %c0_260] : memref<16x8xf32, #tpu.memory_space<vmem>>, vector<1x8xf32>
    %c15_261 = arith.constant 15 : index
    %c2_262 = arith.constant 2 : index
    %495 = memref.load %arg0[%c15_261, %c2_262] : memref<16x4xi32, #tpu.memory_space<smem>>
    %496 = arith.index_cast %495 : i32 to index
    %c0_263 = arith.constant 0 : index
    %497 = vector.load %arg1[%496, %c0_263] : memref<16x8xf32, #tpu.memory_space<vmem>>, vector<1x8xf32>
    %c15_264 = arith.constant 15 : index
    %c3_265 = arith.constant 3 : index
    %498 = memref.load %arg0[%c15_264, %c3_265] : memref<16x4xi32, #tpu.memory_space<smem>>
    %499 = arith.index_cast %498 : i32 to index
    %c0_266 = arith.constant 0 : index
    %500 = vector.load %arg1[%499, %c0_266] : memref<16x8xf32, #tpu.memory_space<vmem>>, vector<1x8xf32>
    %501 = tpu.concatenate %491, %494, %497, %500 in 0 : vector<1x8xf32>, vector<1x8xf32>, vector<1x8xf32>, vector<1x8xf32> -> vector<4x8xf32>
    %cst_267 = arith.constant dense<0xFF800000> : vector<4xf32>
    %502 = vector.multi_reduction <maximumf>, %478, %cst_267 [1] : vector<4x8xf32> to vector<4xf32>
    %503 = vector.shape_cast %502 : vector<4xf32> to vector<4x1xf32>
    %504 = vector.broadcast %503 : vector<4x1xf32> to vector<4x8xf32>
    %505 = arith.subf %478, %504 : vector<4x8xf32>
    %506 = math.exp %505 : vector<4x8xf32>
    %cst_268 = arith.constant dense<0.000000e+00> : vector<4x8xf32>
    %507 = tpu.matmul %506, %0, %cst_268 {dimension_numbers = #tpu.dot_dimension_numbers<[1], [0], [0], [1], [0, 0, 1, 1], [], []>, precision = #tpu.contract_precision<fp32>} : vector<4x8xf32>, vector<8x8xf32>, vector<4x8xf32> -> vector<4x8xf32>
    %508 = vector.broadcast %503 : vector<4x1xf32> to vector<4x8xf32>
    %509 = arith.addf %501, %508 : vector<4x8xf32>
    %510 = math.log %507 : vector<4x8xf32>
    %511 = arith.addf %509, %510 : vector<4x8xf32>
    %cst_269 = arith.constant dense<0xFF800000> : vector<4xf32>
    %512 = vector.multi_reduction <maximumf>, %511, %cst_269 [1] : vector<4x8xf32> to vector<4xf32>
    %513 = vector.shape_cast %512 : vector<4xf32> to vector<4x1xf32>
    %514 = vector.broadcast %513 : vector<4x1xf32> to vector<4x8xf32>
    %515 = arith.subf %511, %514 : vector<4x8xf32>
    %516 = math.exp %515 : vector<4x8xf32>
    %cst_270 = arith.constant dense<0.000000e+00> : vector<4xf32>
    %517 = vector.multi_reduction <add>, %516, %cst_270 [1] : vector<4x8xf32> to vector<4xf32>
    %518 = vector.shape_cast %517 : vector<4xf32> to vector<4x1xf32>
    %519 = math.log %518 : vector<4x1xf32>
    %520 = arith.addf %513, %519 : vector<4x1xf32>
    %c0_271 = arith.constant 0 : index
    %c15_272 = arith.constant 15 : index
    %521 = vector.load %arg4[%c0_271, %c15_272] : memref<4x16xf32, #tpu.memory_space<vmem>>, vector<4x1xf32>
    tpu.vector_store %arg4[%c0_271, %c15_272], %520 {strides = array<i32>} : memref<4x16xf32, #tpu.memory_space<vmem>>, vector<4x1xf32>,
    return
  }
}

</mosaic_0001>

<llo_original>
// kernel: tpu_custom_call.1
$region0: #{tpu_custom_call.1}
  #allocation0 [shape = 'u32[]', space=smem, size = 0x4, offset = 0x4, fixed_abs, tag = 'smem constant byte address 0x4 - core index']
  #allocation1 [shape = 'u32[144,128]{1,0:T(1,128)}', space=vmem, size = 0x12000, scoped, tag = 'internal scratch']
  %s0 = inlined_call_operand.vmem [shape: s32[16,4], index: 0, kind: input, shape index: {}]
  %s1 = inlined_call_operand.vmem [shape: f32[16,8], index: 1, kind: input, shape index: {}]
  %s2 = inlined_call_operand.vmem [shape: f32[1,8], index: 2, kind: input, shape index: {}]
  %s3 = inlined_call_operand.vmem [shape: f32[8,8], index: 3, kind: input, shape index: {}]
  %s4 = inlined_call_operand.hbm [shape: f32[4,16], index: 4, kind: output, shape index: {}]
  %s5 = sld [smem:[#allocation0]]
  $region30: #{tpu_custom_call.1} parent=0
    _
  %s7 = ssub.s32 1, %s5
  %s8 = scalar_select 0, %s7, %s5
  $region1: #{tpu_custom_call.1} parent=0
    #allocation2 [shape = 'u8[8192]{0}', space=smem, size = 0x2000, scoped, tag = 'input window, operand 0, single buffered']
    #allocation3 [shape = 's32[1]{0}', space=sflag, size = 0x4, scoped, tag = 'scoped memory for tpu_custom_call.1']
    #allocation4 [shape = 's32[1]{0}', space=sflag, size = 0x4, scoped, tag = 'scoped memory for tpu_custom_call.1']
    #allocation5 [shape = 'u8[2048]{0}', space=vmem, size = 0x800, scoped, tag = 'output window, operand 0, single buffered']
    %9 = vsyncpa [#allocation4], 0
    %10 = vsyncpa [#allocation3], 0
    // Predicated region
    $region2: #{tpu_custom_call.1} parent=1 // pred_check
      _
    $region3: #{tpu_custom_call.1} parent=1 // pred_check_branch
      %12 = sbr.rel (0) target = $region5
    $region4: #{tpu_custom_call.1} parent=1 // pred_region
      %s14 = ssub.s32 256, 256
      %15 = vsyncadd [#allocation4], %s14
      %s16 = sshll.u32 %s0, 4
      %s17 = int_to_ptr.vmem [resolvable:$true] %s16
      %22 = dma.vmem_to_smem %s17, 256, [#allocation2], [#allocation4], 128, 128, 8
    $region5: #{tpu_custom_call.1} parent=1 // pred_fallthru
      _
    // Predicated region
    $region6: #{tpu_custom_call.1} parent=1 // pred_check
      _
    $region7: #{tpu_custom_call.1} parent=1 // pred_check_branch
      %24 = sbr.rel (0) target = $region9
    $region8: #{tpu_custom_call.1} parent=1 // pred_region
      _
    $region9: #{tpu_custom_call.1} parent=1 // pred_fallthru
      _
    // Predicated region
    $region10: #{tpu_custom_call.1} parent=1 // pred_check
      _
    $region11: #{tpu_custom_call.1} parent=1 // pred_check_branch
      %26 = sbr.rel (0) target = $region13
    $region12: #{tpu_custom_call.1} parent=1 // pred_region
      _
    $region13: #{tpu_custom_call.1} parent=1 // pred_fallthru
      _
    // Predicated region
    $region14: #{tpu_custom_call.1} parent=1 // pred_check
      _
    $region15: #{tpu_custom_call.1} parent=1 // pred_check_branch
      %28 = sbr.rel (0) target = $region17
    $region16: #{tpu_custom_call.1} parent=1 // pred_region
      _
    $region17: #{tpu_custom_call.1} parent=1 // pred_fallthru
      _
    // Predicated region
    $region18: #{tpu_custom_call.1} parent=1 // pred_check
      _
    $region19: #{tpu_custom_call.1} parent=1 // pred_check_branch
      %30 = sbr.rel (0) target = $region21
    $region20: #{tpu_custom_call.1} parent=1 // pred_region
      %31 = dma.done [#allocation4], 256
    $region21: #{tpu_custom_call.1} parent=1 // pred_fallthru
      _
    %32 = sfence
    %v33 = vld [vmem:[%s3] sm:$0xff]
    %v34 = vld [vmem:[%s2] sm:$0x1]
    %s35 = sld [smem:[#allocation2]]
    %s36 = scalar_lea.vmem %s1, %s35
    %v37 = vld [vmem:[%s36] sm:$0x1]
    %s38 = sld [smem:[#allocation2 + $0x1]]
    %s39 = scalar_lea.vmem %s1, %s38
    %v40 = vld [vmem:[%s39] sm:$0x1]
    %s41 = sld [smem:[#allocation2 + $0x2]]
    %s42 = scalar_lea.vmem %s1, %s41
    %v43 = vld [vmem:[%s42] sm:$0x1]
    %s44 = sld [smem:[#allocation2 + $0x3]]
    %s45 = scalar_lea.vmem %s1, %s44
    %v46 = vld [vmem:[%s45] sm:$0x1]
    %v48 = vrot.slane %v40, 7
    %v51 = vrot.slane %v43, 6
    %v54 = vrot.slane %v46, 5
    %vm56 = vcmask 1040384
    %v57 = vsel %vm56, %v37, %v48
    %vm58 = vcmask 1041408
    %v59 = vsel %vm58, %v57, %v51
    %vm60 = vcmask 1042432
    %v61 = vsel %vm60, %v59, %v54
    %v63 = vlaneseq
    %v64 = vshrl.u32 %v63, 7
    %v65 = vsub.s32 0, %v64
    %v66 = vrot.slane %v34, %v65
    %v68 = vadd.f32 %v61, %v66
    %vm69 = vcmask 60416
    %v70 = vsel %vm69, %v68, -inf
    %71 = vmax.xlane.f32.xlu0 %v70
    %v72 = vpop.xlane.xlu0 %71
    %v73 = vsub.f32 %v68, %v72
    %v74 = vmul.f32 %v73, 1.442695
    %v75 = vpow.pop %v74
    %v76 = vsel %vm69, %v75, 0.0
    %77 = vadd.xlane.f32.xlu0 %v76
    %v78 = vpop.xlane.xlu0 %77
    %v79 = vlog2.pop %v78
    %v80 = vmul.f32 %v79, 0.6931472
    %v81 = vadd.f32 %v72, %v80
    %vm82 = vcmask 3072
    %83 = vst.msk [vmem:[#allocation5] sm:$0xf] %vm82, %v81
    %s84 = sld [smem:[#allocation2 + $0x80]]
    %s85 = scalar_lea.vmem %s1, %s84
    %v86 = vld [vmem:[%s85] sm:$0x1]
    %s87 = sld [smem:[#allocation2 + $0x81]]
    %s88 = scalar_lea.vmem %s1, %s87
    %v89 = vld [vmem:[%s88] sm:$0x1]
    %s90 = sld [smem:[#allocation2 + $0x82]]
    %s91 = scalar_lea.vmem %s1, %s90
    %v92 = vld [vmem:[%s91] sm:$0x1]
    %s93 = sld [smem:[#allocation2 + $0x83]]
    %s94 = scalar_lea.vmem %s1, %s93
    %v95 = vld [vmem:[%s94] sm:$0x1]
    %v97 = vrot.slane %v89, 7
    %v100 = vrot.slane %v92, 6
    %v103 = vrot.slane %v95, 5
    %v105 = vsel %vm56, %v86, %v97
    %v106 = vsel %vm58, %v105, %v100
    %v107 = vsel %vm60, %v106, %v103
    %vm108 = vcmask 64512
    %v110 = vsel %vm108, %v75, 0
    %112 = vmatprep.subr.mxu0 0.0
    %v113 = vand.u32 %v33, 4294901760
    %114 = vmatpush1.msra.mxu0 %v113
    %115 = vmatprep.subr.mxu0 0.0
    %116 = vmatpush1.msra.mxu0 0.0
    %117 = vmatprep.subr.mxu0 0.0
    %118 = vmatpush1.msra.mxu0 0.0
    %119 = vmatprep.subr.mxu0 0.0
    %120 = vmatpush1.msra.mxu0 0.0
    %121 = vmatprep.subr.mxu0 0.0
    %122 = vmatpush1.msra.mxu0 0.0
    %123 = vmatprep.subr.mxu0 0.0
    %124 = vmatpush1.msra.mxu0 0.0
    %125 = vmatprep.subr.mxu0 0.0
    %126 = vmatpush1.msra.mxu0 0.0
    %127 = vmatprep.subr.mxu0 0.0
    %128 = vmatpush1.msra.mxu0 0.0
    %129 = vmatprep.subr.mxu0 0.0
    %130 = vmatpush1.msra.mxu0 0.0
    %131 = vmatprep.subr.mxu0 0.0
    %132 = vmatpush1.msra.mxu0 0.0
    %133 = vmatprep.subr.mxu0 0.0
    %134 = vmatpush1.msra.mxu0 0.0
    %135 = vmatprep.subr.mxu0 0.0
    %136 = vmatpush1.msra.mxu0 0.0
    %137 = vmatprep.subr.mxu0 0.0
    %138 = vmatpush1.msra.mxu0 0.0
    %139 = vmatprep.subr.mxu0 0.0
    %140 = vmatpush1.msra.mxu0 0.0
    %141 = vmatprep.subr.mxu0 0.0
    %142 = vmatpush1.msra.mxu0 0.0
    %143 = vmatprep.subr.mxu0 0.0
    %144 = vmatpush1.msra.mxu0 0.0
    %145 = vmatprep.subr.mxu0 0.0
    %146 = vmatpush1.msra.mxu0 0.0
    %147 = vmatprep.subr.mxu0 0.0
    %148 = vmatpush1.msra.mxu0 0.0
    %149 = vmatprep.subr.mxu0 0.0
    %150 = vmatpush1.msra.mxu0 0.0
    %151 = vmatprep.subr.mxu0 0.0
    %152 = vmatpush1.msra.mxu0 0.0
    %153 = vmatprep.subr.mxu0 0.0
    %154 = vmatpush1.msra.mxu0 0.0
    %155 = vmatprep.subr.mxu0 0.0
    %156 = vmatpush1.msra.mxu0 0.0
    %157 = vmatprep.subr.mxu0 0.0
    %158 = vmatpush1.msra.mxu0 0.0
    %159 = vmatprep.subr.mxu0 0.0
    %160 = vmatpush1.msra.mxu0 0.0
    %161 = vmatprep.subr.mxu0 0.0
    %162 = vmatpush1.msra.mxu0 0.0
    %163 = vmatprep.subr.mxu0 0.0
    %164 = vmatpush1.msra.mxu0 0.0
    %165 = vmatprep.subr.mxu0 0.0
    %166 = vmatpush1.msra.mxu0 0.0
    %167 = vmatprep.subr.mxu0 0.0
    %168 = vmatpush1.msra.mxu0 0.0
    %169 = vmatprep.subr.mxu0 0.0
    %170 = vmatpush1.msra.mxu0 0.0
    %171 = vmatprep.subr.mxu0 0.0
    %172 = vmatpush1.msra.mxu0 0.0
    %173 = vmatprep.subr.mxu0 0.0
    %174 = vmatpush1.msra.mxu0 0.0
    %175 = vmatprep.subr.mxu0 0.0
    %176 = vmatpush1.msra.mxu0 0.0
    %177 = vmatprep.mubr.f32.mxu0 0.0
    %v178 = vand.u32 %v110, 4294901760
    %v179 = vsub.f32 %v110, %v178
    %v180 = vand.u32 %v179, 4294901760
    %v181 = vsub.f32 %v179, %v180
    %v182 = vand.u32 %v181, 4294901760
    %183 = vmatmul.mubr.f32.gmra.mrb[0].mxu0 %v182
    %v184 = vpop.f32.mrb[0].mxu0
    %v185 = vadd.f32 0.0, %v184
    %v186 = vpop.f32.mrb[0].mxu0
    %187 = vdwg.mxu0
    %188 = vmatprep.subr.mxu0 0.0
    %v189 = vand.u32 %v33, 4294901760
    %v190 = vsub.f32 %v33, %v189
    %v191 = vand.u32 %v190, 4294901760
    %v192 = vsub.f32 %v190, %v191
    %v193 = vand.u32 %v192, 4294901760
    %194 = vmatpush1.msra.mxu0 %v193
    %195 = vmatprep.subr.mxu0 0.0
    %196 = vmatpush1.msra.mxu0 0.0
    %197 = vmatprep.subr.mxu0 0.0
    %198 = vmatpush1.msra.mxu0 0.0
    %199 = vmatprep.subr.mxu0 0.0
    %200 = vmatpush1.msra.mxu0 0.0
    %201 = vmatprep.subr.mxu0 0.0
    %202 = vmatpush1.msra.mxu0 0.0
    %203 = vmatprep.subr.mxu0 0.0
    %204 = vmatpush1.msra.mxu0 0.0
    %205 = vmatprep.subr.mxu0 0.0
    %206 = vmatpush1.msra.mxu0 0.0
    %207 = vmatprep.subr.mxu0 0.0
    %208 = vmatpush1.msra.mxu0 0.0
    %209 = vmatprep.subr.mxu0 0.0
    %210 = vmatpush1.msra.mxu0 0.0
    %211 = vmatprep.subr.mxu0 0.0
    %212 = vmatpush1.msra.mxu0 0.0
    %213 = vmatprep.subr.mxu0 0.0
    %214 = vmatpush1.msra.mxu0 0.0
    %215 = vmatprep.subr.mxu0 0.0
    %216 = vmatpush1.msra.mxu0 0.0
    %217 = vmatprep.subr.mxu0 0.0
    %218 = vmatpush1.msra.mxu0 0.0
    %219 = vmatprep.subr.mxu0 0.0
    %220 = vmatpush1.msra.mxu0 0.0
    %221 = vmatprep.subr.mxu0 0.0
    %222 = vmatpush1.msra.mxu0 0.0
    %223 = vmatprep.subr.mxu0 0.0
    %224 = vmatpush1.msra.mxu0 0.0
    %225 = vmatprep.subr.mxu0 0.0
    %226 = vmatpush1.msra.mxu0 0.0
    %227 = vmatprep.subr.mxu0 0.0
    %228 = vmatpush1.msra.mxu0 0.0
    %229 = vmatprep.subr.mxu0 0.0
    %230 = vmatpush1.msra.mxu0 0.0
    %231 = vmatprep.subr.mxu0 0.0
    %232 = vmatpush1.msra.mxu0 0.0
    %233 = vmatprep.subr.mxu0 0.0
    %234 = vmatpush1.msra.mxu0 0.0
    %235 = vmatprep.subr.mxu0 0.0
    %236 = vmatpush1.msra.mxu0 0.0
    %237 = vmatprep.subr.mxu0 0.0
    %238 = vmatpush1.msra.mxu0 0.0
    %239 = vmatprep.subr.mxu0 0.0
    %240 = vmatpush1.msra.mxu0 0.0
    %241 = vmatprep.subr.mxu0 0.0
    %242 = vmatpush1.msra.mxu0 0.0
    %243 = vmatprep.subr.mxu0 0.0
    %244 = vmatpush1.msra.mxu0 0.0
    %245 = vmatprep.subr.mxu0 0.0
    %246 = vmatpush1.msra.mxu0 0.0
    %247 = vmatprep.subr.mxu0 0.0
    %248 = vmatpush1.msra.mxu0 0.0
    %249 = vmatprep.subr.mxu0 0.0
    %250 = vmatpush1.msra.mxu0 0.0
    %251 = vmatprep.subr.mxu0 0.0
    %252 = vmatpush1.msra.mxu0 0.0
    %253 = vmatprep.subr.mxu0 0.0
    %254 = vmatpush1.msra.mxu0 0.0
    %255 = vmatprep.subr.mxu0 0.0
    %256 = vmatpush1.msra.mxu0 0.0
    %257 = vmatprep.mubr.f32.mxu0 0.0
    %v258 = vand.u32 %v110, 4294901760
    %259 = vmatmul.mubr.f32.gmra.mrb[0].mxu0 %v258
    %v260 = vpop.f32.mrb[0].mxu0
    %v261 = vadd.f32 %v185, %v260
    %v262 = vpop.f32.mrb[0].mxu0
    %263 = vdwg.mxu0
    %264 = vmatprep.subr.mxu0 0.0
    %v265 = vand.u32 %v33, 4294901760
    %v266 = vsub.f32 %v33, %v265
    %267 = vmatpush1.msra.mxu0 %v266
    %268 = vmatprep.subr.mxu0 0.0
    %269 = vmatpush1.msra.mxu0 0.0
    %270 = vmatprep.subr.mxu0 0.0
    %271 = vmatpush1.msra.mxu0 0.0
    %272 = vmatprep.subr.mxu0 0.0
    %273 = vmatpush1.msra.mxu0 0.0
    %274 = vmatprep.subr.mxu0 0.0
    %275 = vmatpush1.msra.mxu0 0.0
    %276 = vmatprep.subr.mxu0 0.0
    %277 = vmatpush1.msra.mxu0 0.0
    %278 = vmatprep.subr.mxu0 0.0
    %279 = vmatpush1.msra.mxu0 0.0
    %280 = vmatprep.subr.mxu0 0.0
    %281 = vmatpush1.msra.mxu0 0.0
    %282 = vmatprep.subr.mxu0 0.0
    %283 = vmatpush1.msra.mxu0 0.0
    %284 = vmatprep.subr.mxu0 0.0
    %285 = vmatpush1.msra.mxu0 0.0
    %286 = vmatprep.subr.mxu0 0.0
    %287 = vmatpush1.msra.mxu0 0.0
    %288 = vmatprep.subr.mxu0 0.0
    %289 = vmatpush1.msra.mxu0 0.0
    %290 = vmatprep.subr.mxu0 0.0
    %291 = vmatpush1.msra.mxu0 0.0
    %292 = vmatprep.subr.mxu0 0.0
    %293 = vmatpush1.msra.mxu0 0.0
    %294 = vmatprep.subr.mxu0 0.0
    %295 = vmatpush1.msra.mxu0 0.0
    %296 = vmatprep.subr.mxu0 0.0
    %297 = vmatpush1.msra.mxu0 0.0
    %298 = vmatprep.subr.mxu0 0.0
    %299 = vmatpush1.msra.mxu0 0.0
    %300 = vmatprep.subr.mxu0 0.0
    %301 = vmatpush1.msra.mxu0 0.0
    %302 = vmatprep.subr.mxu0 0.0
    %303 = vmatpush1.msra.mxu0 0.0
    %304 = vmatprep.subr.mxu0 0.0
    %305 = vmatpush1.msra.mxu0 0.0
    %306 = vmatprep.subr.mxu0 0.0
    %307 = vmatpush1.msra.mxu0 0.0
    %308 = vmatprep.subr.mxu0 0.0
    %309 = vmatpush1.msra.mxu0 0.0
    %310 = vmatprep.subr.mxu0 0.0
    %311 = vmatpush1.msra.mxu0 0.0
    %312 = vmatprep.subr.mxu0 0.0
    %313 = vmatpush1.msra.mxu0 0.0
    %314 = vmatprep.subr.mxu0 0.0
    %315 = vmatpush1.msra.mxu0 0.0
    %316 = vmatprep.subr.mxu0 0.0
    %317 = vmatpush1.msra.mxu0 0.0
    %318 = vmatprep.subr.mxu0 0.0
    %319 = vmatpush1.msra.mxu0 0.0
    %320 = vmatprep.subr.mxu0 0.0
    %321 = vmatpush1.msra.mxu0 0.0
    %322 = vmatprep.subr.mxu0 0.0
    %323 = vmatpush1.msra.mxu0 0.0
    %324 = vmatprep.subr.mxu0 0.0
    %325 = vmatpush1.msra.mxu0 0.0
    %326 = vmatprep.subr.mxu0 0.0
    %327 = vmatpush1.msra.mxu0 0.0
    %328 = vmatprep.subr.mxu0 0.0
    %329 = vmatpush1.msra.mxu0 0.0
    %330 = vmatprep.mubr.f32.mxu0 0.0
    %v331 = vand.u32 %v110, 4294901760
    %v332 = vsub.f32 %v110, %v331
    %333 = vmatmul.mubr.f32.gmra.mrb[0].mxu0 %v332
    %v334 = vpop.f32.mrb[0].mxu0
    %v335 = vadd.f32 %v261, %v334
    %v336 = vpop.f32.mrb[0].mxu0
    %337 = vdwg.mxu0
    %338 = vmatprep.subr.mxu0 0.0
    %v339 = vand.u32 %v33, 4294901760
    %340 = vmatpush1.msra.mxu0 %v339
    %341 = vmatprep.subr.mxu0 0.0
    %342 = vmatpush1.msra.mxu0 0.0
    %343 = vmatprep.subr.mxu0 0.0
    %344 = vmatpush1.msra.mxu0 0.0
    %345 = vmatprep.subr.mxu0 0.0
    %346 = vmatpush1.msra.mxu0 0.0
    %347 = vmatprep.subr.mxu0 0.0
    %348 = vmatpush1.msra.mxu0 0.0
    %349 = vmatprep.subr.mxu0 0.0
    %350 = vmatpush1.msra.mxu0 0.0
    %351 = vmatprep.subr.mxu0 0.0
    %352 = vmatpush1.msra.mxu0 0.0
    %353 = vmatprep.subr.mxu0 0.0
    %354 = vmatpush1.msra.mxu0 0.0
    %355 = vmatprep.subr.mxu0 0.0
    %356 = vmatpush1.msra.mxu0 0.0
    %357 = vmatprep.subr.mxu0 0.0
    %358 = vmatpush1.msra.mxu0 0.0
    %359 = vmatprep.subr.mxu0 0.0
    %360 = vmatpush1.msra.mxu0 0.0
    %361 = vmatprep.subr.mxu0 0.0
    %362 = vmatpush1.msra.mxu0 0.0
    %363 = vmatprep.subr.mxu0 0.0
    %364 = vmatpush1.msra.mxu0 0.0
    %365 = vmatprep.subr.mxu0 0.0
    %366 = vmatpush1.msra.mxu0 0.0
    %367 = vmatprep.subr.mxu0 0.0
    %368 = vmatpush1.msra.mxu0 0.0
    %369 = vmatprep.subr.mxu0 0.0
    %370 = vmatpush1.msra.mxu0 0.0
    %371 = vmatprep.subr.mxu0 0.0
    %372 = vmatpush1.msra.mxu0 0.0
    %373 = vmatprep.subr.mxu0 0.0
    %374 = vmatpush1.msra.mxu0 0.0
    %375 = vmatprep.subr.mxu0 0.0
    %376 = vmatpush1.msra.mxu0 0.0
    %377 = vmatprep.subr.mxu0 0.0
    %378 = vmatpush1.msra.mxu0 0.0
    %379 = vmatprep.subr.mxu0 0.0
    %380 = vmatpush1.msra.mxu0 0.0
    %381 = vmatprep.subr.mxu0 0.0
    %382 = vmatpush1.msra.mxu0 0.0
    %383 = vmatprep.subr.mxu0 0.0
    %384 = vmatpush1.msra.mxu0 0.0
    %385 = vmatprep.subr.mxu0 0.0
    %386 = vmatpush1.msra.mxu0 0.0
    %387 = vmatprep.subr.mxu0 0.0
    %388 = vmatpush1.msra.mxu0 0.0
    %389 = vmatprep.subr.mxu0 0.0
    %390 = vmatpush1.msra.mxu0 0.0
    %391 = vmatprep.subr.mxu0 0.0
    %392 = vmatpush1.msra.mxu0 0.0
    %393 = vmatprep.subr.mxu0 0.0
    %394 = vmatpush1.msra.mxu0 0.0
    %395 = vmatprep.subr.mxu0 0.0
    %396 = vmatpush1.msra.mxu0 0.0
    %397 = vmatprep.subr.mxu0 0.0
    %398 = vmatpush1.msra.mxu0 0.0
    %399 = vmatprep.subr.mxu0 0.0
    %400 = vmatpush1.msra.mxu0 0.0
    %401 = vmatprep.subr.mxu0 0.0
    %402 = vmatpush1.msra.mxu0 0.0
    %403 = vmatprep.mubr.f32.mxu0 0.0
    %v404 = vand.u32 %v110, 4294901760
    %v405 = vsub.f32 %v110, %v404
    %v406 = vand.u32 %v405, 4294901760
    %407 = vmatmul.mubr.f32.gmra.mrb[0].mxu0 %v406
    %v408 = vpop.f32.mrb[0].mxu0
    %v409 = vadd.f32 %v335, %v408
    %v410 = vpop.f32.mrb[0].mxu0
    %411 = vdwg.mxu0
    %412 = vmatprep.subr.mxu0 0.0
    %v413 = vand.u32 %v33, 4294901760
    %v414 = vsub.f32 %v33, %v413
    %v415 = vand.u32 %v414, 4294901760
    %416 = vmatpush1.msra.mxu0 %v415
    %417 = vmatprep.subr.mxu0 0.0
    %418 = vmatpush1.msra.mxu0 0.0
    %419 = vmatprep.subr.mxu0 0.0
    %420 = vmatpush1.msra.mxu0 0.0
    %421 = vmatprep.subr.mxu0 0.0
    %422 = vmatpush1.msra.mxu0 0.0
    %423 = vmatprep.subr.mxu0 0.0
    %424 = vmatpush1.msra.mxu0 0.0
    %425 = vmatprep.subr.mxu0 0.0
    %426 = vmatpush1.msra.mxu0 0.0
    %427 = vmatprep.subr.mxu0 0.0
    %428 = vmatpush1.msra.mxu0 0.0
    %429 = vmatprep.subr.mxu0 0.0
    %430 = vmatpush1.msra.mxu0 0.0
    %431 = vmatprep.subr.mxu0 0.0
    %432 = vmatpush1.msra.mxu0 0.0
    %433 = vmatprep.subr.mxu0 0.0
    %434 = vmatpush1.msra.mxu0 0.0
    %435 = vmatprep.subr.mxu0 0.0
    %436 = vmatpush1.msra.mxu0 0.0
    %437 = vmatprep.subr.mxu0 0.0
    %438 = vmatpush1.msra.mxu0 0.0
    %439 = vmatprep.subr.mxu0 0.0
    %440 = vmatpush1.msra.mxu0 0.0
    %441 = vmatprep.subr.mxu0 0.0
    %442 = vmatpush1.msra.mxu0 0.0
    %443 = vmatprep.subr.mxu0 0.0
    %444 = vmatpush1.msra.mxu0 0.0
    %445 = vmatprep.subr.mxu0 0.0
    %446 = vmatpush1.msra.mxu0 0.0
    %447 = vmatprep.subr.mxu0 0.0
    %448 = vmatpush1.msra.mxu0 0.0
    %449 = vmatprep.subr.mxu0 0.0
    %450 = vmatpush1.msra.mxu0 0.0
    %451 = vmatprep.subr.mxu0 0.0
    %452 = vmatpush1.msra.mxu0 0.0
    %453 = vmatprep.subr.mxu0 0.0
    %454 = vmatpush1.msra.mxu0 0.0
    %455 = vmatprep.subr.mxu0 0.0
    %456 = vmatpush1.msra.mxu0 0.0
    %457 = vmatprep.subr.mxu0 0.0
    %458 = vmatpush1.msra.mxu0 0.0
    %459 = vmatprep.subr.mxu0 0.0
    %460 = vmatpush1.msra.mxu0 0.0
    %461 = vmatprep.subr.mxu0 0.0
    %462 = vmatpush1.msra.mxu0 0.0
    %463 = vmatprep.subr.mxu0 0.0
    %464 = vmatpush1.msra.mxu0 0.0
    %465 = vmatprep.subr.mxu0 0.0
    %466 = vmatpush1.msra.mxu0 0.0
    %467 = vmatprep.subr.mxu0 0.0
    %468 = vmatpush1.msra.mxu0 0.0
    %469 = vmatprep.subr.mxu0 0.0
    %470 = vmatpush1.msra.mxu0 0.0
    %471 = vmatprep.subr.mxu0 0.0
    %472 = vmatpush1.msra.mxu0 0.0
    %473 = vmatprep.subr.mxu0 0.0
    %474 = vmatpush1.msra.mxu0 0.0
    %475 = vmatprep.subr.mxu0 0.0
    %476 = vmatpush1.msra.mxu0 0.0
    %477 = vmatprep.subr.mxu0 0.0
    %478 = vmatpush1.msra.mxu0 0.0
    %479 = vmatprep.mubr.f32.mxu0 0.0
    %v480 = vand.u32 %v110, 4294901760
    %481 = vmatmul.mubr.f32.gmra.mrb[0].mxu0 %v480
    %v482 = vpop.f32.mrb[0].mxu0
    %v483 = vadd.f32 %v409, %v482
    %v484 = vpop.f32.mrb[0].mxu0
    %485 = vdwg.mxu0
    %486 = vmatprep.subr.mxu0 0.0
    %v487 = vand.u32 %v33, 4294901760
    %488 = vmatpush1.msra.mxu0 %v487
    %489 = vmatprep.subr.mxu0 0.0
    %490 = vmatpush1.msra.mxu0 0.0
    %491 = vmatprep.subr.mxu0 0.0
    %492 = vmatpush1.msra.mxu0 0.0
    %493 = vmatprep.subr.mxu0 0.0
    %494 = vmatpush1.msra.mxu0 0.0
    %495 = vmatprep.subr.mxu0 0.0
    %496 = vmatpush1.msra.mxu0 0.0
    %497 = vmatprep.subr.mxu0 0.0
    %498 = vmatpush1.msra.mxu0 0.0
    %499 = vmatprep.subr.mxu0 0.0
    %500 = vmatpush1.msra.mxu0 0.0
    %501 = vmatprep.subr.mxu0 0.0
    %502 = vmatpush1.msra.mxu0 0.0
    %503 = vmatprep.subr.mxu0 0.0
    %504 = vmatpush1.msra.mxu0 0.0
    %505 = vmatprep.subr.mxu0 0.0
    %506 = vmatpush1.msra.mxu0 0.0
    %507 = vmatprep.subr.mxu0 0.0
    %508 = vmatpush1.msra.mxu0 0.0
    %509 = vmatprep.subr.mxu0 0.0
    %510 = vmatpush1.msra.mxu0 0.0
    %511 = vmatprep.subr.mxu0 0.0
    %512 = vmatpush1.msra.mxu0 0.0
    %513 = vmatprep.subr.mxu0 0.0
    %514 = vmatpush1.msra.mxu0 0.0
    %515 = vmatprep.subr.mxu0 0.0
    %516 = vmatpush1.msra.mxu0 0.0
    %517 = vmatprep.subr.mxu0 0.0
    %518 = vmatpush1.msra.mxu0 0.0
    %519 = vmatprep.subr.mxu0 0.0
    %520 = vmatpush1.msra.mxu0 0.0
    %521 = vmatprep.subr.mxu0 0.0
    %522 = vmatpush1.msra.mxu0 0.0
    %523 = vmatprep.subr.mxu0 0.0
    %524 = vmatpush1.msra.mxu0 0.0
    %525 = vmatprep.subr.mxu0 0.0
    %526 = vmatpush1.msra.mxu0 0.0
    %527 = vmatprep.subr.mxu0 0.0
    %528 = vmatpush1.msra.mxu0 0.0
    %529 = vmatprep.subr.mxu0 0.0
    %530 = vmatpush1.msra.mxu0 0.0
    %531 = vmatprep.subr.mxu0 0.0
    %532 = vmatpush1.msra.mxu0 0.0
    %533 = vmatprep.subr.mxu0 0.0
    %534 = vmatpush1.msra.mxu0 0.0
    %535 = vmatprep.subr.mxu0 0.0
    %536 = vmatpush1.msra.mxu0 0.0
    %537 = vmatprep.subr.mxu0 0.0
    %538 = vmatpush1.msra.mxu0 0.0
    %539 = vmatprep.subr.mxu0 0.0
    %540 = vmatpush1.msra.mxu0 0.0
    %541 = vmatprep.subr.mxu0 0.0
    %542 = vmatpush1.msra.mxu0 0.0
    %543 = vmatprep.subr.mxu0 0.0
    %544 = vmatpush1.msra.mxu0 0.0
    %545 = vmatprep.subr.mxu0 0.0
    %546 = vmatpush1.msra.mxu0 0.0
    %547 = vmatprep.subr.mxu0 0.0
    %548 = vmatpush1.msra.mxu0 0.0
    %549 = vmatprep.subr.mxu0 0.0
    %550 = vmatpush1.msra.mxu0 0.0
    %551 = vmatprep.mubr.f32.mxu0 0.0
    %v552 = vand.u32 %v110, 4294901760
    %553 = vmatmul.mubr.f32.gmra.mrb[0].mxu0 %v552
    %v554 = vpop.f32.mrb[0].mxu0
    %v555 = vadd.f32 %v483, %v554
    %v556 = vpop.f32.mrb[0].mxu0
    %557 = vdwg.mxu0
    %v558 = vadd.f32 %v107, %v72
    %v559 = vlog2.pop %v555
    %v560 = vmul.f32 %v559, 0.6931472
    %v561 = vadd.f32 %v558, %v560
    %v562 = vsel %vm69, %v561, -inf
    %563 = vmax.xlane.f32.xlu0 %v562
    %v564 = vpop.xlane.xlu0 %563
    %v565 = vsub.f32 %v561, %v564
    %v566 = vmul.f32 %v565, 1.442695
    %v567 = vpow.pop %v566
    %v568 = vsel %vm69, %v567, 0.0
    %569 = vadd.xlane.f32.xlu0 %v568
    %v570 = vpop.xlane.xlu0 %569
    %v571 = vlog2.pop %v570
    %v572 = vmul.f32 %v571, 0.6931472
    %v573 = vadd.f32 %v564, %v572
    %vm574 = vcmask 11272
    %575 = vst.msk [vmem:[#allocation5] sm:$0xf] %vm574, %v573
    %s576 = sld [smem:[#allocation2 + $0x100]]
    %s577 = scalar_lea.vmem %s1, %s576
    %v578 = vld [vmem:[%s577] sm:$0x1]
    %s579 = sld [smem:[#allocation2 + $0x101]]
    %s580 = scalar_lea.vmem %s1, %s579
    %v581 = vld [vmem:[%s580] sm:$0x1]
    %s582 = sld [smem:[#allocation2 + $0x102]]
    %s583 = scalar_lea.vmem %s1, %s582
    %v584 = vld [vmem:[%s583] sm:$0x1]
    %s585 = sld [smem:[#allocation2 + $0x103]]
    %s586 = scalar_lea.vmem %s1, %s585
    %v587 = vld [vmem:[%s586] sm:$0x1]
    %v589 = vrot.slane %v581, 7
    %v592 = vrot.slane %v584, 6
    %v595 = vrot.slane %v587, 5
    %v597 = vsel %vm56, %v578, %v589
    %v598 = vsel %vm58, %v597, %v592
    %v599 = vsel %vm60, %v598, %v595
    %v601 = vsel %vm108, %v567, 0
    %603 = vmatprep.subr.mxu0 0.0
    %v604 = vand.u32 %v33, 4294901760
    %605 = vmatpush1.msra.mxu0 %v604
    %606 = vmatprep.subr.mxu0 0.0
    %607 = vmatpush1.msra.mxu0 0.0
    %608 = vmatprep.subr.mxu0 0.0
    %609 = vmatpush1.msra.mxu0 0.0
    %610 = vmatprep.subr.mxu0 0.0
    %611 = vmatpush1.msra.mxu0 0.0
    %612 = vmatprep.subr.mxu0 0.0
    %613 = vmatpush1.msra.mxu0 0.0
    %614 = vmatprep.subr.mxu0 0.0
    %615 = vmatpush1.msra.mxu0 0.0
    %616 = vmatprep.subr.mxu0 0.0
    %617 = vmatpush1.msra.mxu0 0.0
    %618 = vmatprep.subr.mxu0 0.0
    %619 = vmatpush1.msra.mxu0 0.0
    %620 = vmatprep.subr.mxu0 0.0
    %621 = vmatpush1.msra.mxu0 0.0
    %622 = vmatprep.subr.mxu0 0.0
    %623 = vmatpush1.msra.mxu0 0.0
    %624 = vmatprep.subr.mxu0 0.0
    %625 = vmatpush1.msra.mxu0 0.0
    %626 = vmatprep.subr.mxu0 0.0
    %627 = vmatpush1.msra.mxu0 0.0
    %628 = vmatprep.subr.mxu0 0.0
    %629 = vmatpush1.msra.mxu0 0.0
    %630 = vmatprep.subr.mxu0 0.0
    %631 = vmatpush1.msra.mxu0 0.0
    %632 = vmatprep.subr.mxu0 0.0
    %633 = vmatpush1.msra.mxu0 0.0
    %634 = vmatprep.subr.mxu0 0.0
    %635 = vmatpush1.msra.mxu0 0.0
    %636 = vmatprep.subr.mxu0 0.0
    %637 = vmatpush1.msra.mxu0 0.0
    %638 = vmatprep.subr.mxu0 0.0
    %639 = vmatpush1.msra.mxu0 0.0
    %640 = vmatprep.subr.mxu0 0.0
    %641 = vmatpush1.msra.mxu0 0.0
    %642 = vmatprep.subr.mxu0 0.0
    %643 = vmatpush1.msra.mxu0 0.0
    %644 = vmatprep.subr.mxu0 0.0
    %645 = vmatpush1.msra.mxu0 0.0
    %646 = vmatprep.subr.mxu0 0.0
    %647 = vmatpush1.msra.mxu0 0.0
    %648 = vmatprep.subr.mxu0 0.0
    %649 = vmatpush1.msra.mxu0 0.0
    %650 = vmatprep.subr.mxu0 0.0
    %651 = vmatpush1.msra.mxu0 0.0
    %652 = vmatprep.subr.mxu0 0.0
    %653 = vmatpush1.msra.mxu0 0.0
    %654 = vmatprep.subr.mxu0 0.0
    %655 = vmatpush1.msra.mxu0 0.0
    %656 = vmatprep.subr.mxu0 0.0
    %657 = vmatpush1.msra.mxu0 0.0
    %658 = vmatprep.subr.mxu0 0.0
    %659 = vmatpush1.msra.mxu0 0.0
    %660 = vmatprep.subr.mxu0 0.0
    %661 = vmatpush1.msra.mxu0 0.0
    %662 = vmatprep.subr.mxu0 0.0
    %663 = vmatpush1.msra.mxu0 0.0
    %664 = vmatprep.subr.mxu0 0.0
    %665 = vmatpush1.msra.mxu0 0.0
    %666 = vmatprep.subr.mxu0 0.0
    %667 = vmatpush1.msra.mxu0 0.0
    %668 = vmatprep.mubr.f32.mxu0 0.0
    %v669 = vand.u32 %v601, 4294901760
    %v670 = vsub.f32 %v601, %v669
    %v671 = vand.u32 %v670, 4294901760
    %v672 = vsub.f32 %v670, %v671
    %v673 = vand.u32 %v672, 4294901760
    %674 = vmatmul.mubr.f32.gmra.mrb[0].mxu0 %v673
    %v675 = vpop.f32.mrb[0].mxu0
    %v676 = vadd.f32 0.0, %v675
    %v677 = vpop.f32.mrb[0].mxu0
    %678 = vdwg.mxu0
    %679 = vmatprep.subr.mxu0 0.0
    %v680 = vand.u32 %v33, 4294901760
    %v681 = vsub.f32 %v33, %v680
    %v682 = vand.u32 %v681, 4294901760
    %v683 = vsub.f32 %v681, %v682
    %v684 = vand.u32 %v683, 4294901760
    %685 = vmatpush1.msra.mxu0 %v684
    %686 = vmatprep.subr.mxu0 0.0
    %687 = vmatpush1.msra.mxu0 0.0
    %688 = vmatprep.subr.mxu0 0.0
    %689 = vmatpush1.msra.mxu0 0.0
    %690 = vmatprep.subr.mxu0 0.0
    %691 = vmatpush1.msra.mxu0 0.0
    %692 = vmatprep.subr.mxu0 0.0
    %693 = vmatpush1.msra.mxu0 0.0
    %694 = vmatprep.subr.mxu0 0.0
    %695 = vmatpush1.msra.mxu0 0.0
    %696 = vmatprep.subr.mxu0 0.0
    %697 = vmatpush1.msra.mxu0 0.0
    %698 = vmatprep.subr.mxu0 0.0
    %699 = vmatpush1.msra.mxu0 0.0
    %700 = vmatprep.subr.mxu0 0.0
    %701 = vmatpush1.msra.mxu0 0.0
    %702 = vmatprep.subr.mxu0 0.0
    %703 = vmatpush1.msra.mxu0 0.0
    %704 = vmatprep.subr.mxu0 0.0
    %705 = vmatpush1.msra.mxu0 0.0
    %706 = vmatprep.subr.mxu0 0.0
    %707 = vmatpush1.msra.mxu0 0.0
    %708 = vmatprep.subr.mxu0 0.0
    %709 = vmatpush1.msra.mxu0 0.0
    %710 = vmatprep.subr.mxu0 0.0
    %711 = vmatpush1.msra.mxu0 0.0
    %712 = vmatprep.subr.mxu0 0.0
    %713 = vmatpush1.msra.mxu0 0.0
    %714 = vmatprep.subr.mxu0 0.0
    %715 = vmatpush1.msra.mxu0 0.0
    %716 = vmatprep.subr.mxu0 0.0
    %717 = vmatpush1.msra.mxu0 0.0
    %718 = vmatprep.subr.mxu0 0.0
    %719 = vmatpush1.msra.mxu0 0.0
    %720 = vmatprep.subr.mxu0 0.0
    %721 = vmatpush1.msra.mxu0 0.0
    %722 = vmatprep.subr.mxu0 0.0
    %723 = vmatpush1.msra.mxu0 0.0
    %724 = vmatprep.subr.mxu0 0.0
    %725 = vmatpush1.msra.mxu0 0.0
    %726 = vmatprep.subr.mxu0 0.0
    %727 = vmatpush1.msra.mxu0 0.0
    %728 = vmatprep.subr.mxu0 0.0
    %729 = vmatpush1.msra.mxu0 0.0
    %730 = vmatprep.subr.mxu0 0.0
    %731 = vmatpush1.msra.mxu0 0.0
    %732 = vmatprep.subr.mxu0 0.0
    %733 = vmatpush1.msra.mxu0 0.0
    %734 = vmatprep.subr.mxu0 0.0
    %735 = vmatpush1.msra.mxu0 0.0
    %736 = vmatprep.subr.mxu0 0.0
    %737 = vmatpush1.msra.mxu0 0.0
    %738 = vmatprep.subr.mxu0 0.0
    %739 = vmatpush1.msra.mxu0 0.0
    %740 = vmatprep.subr.mxu0 0.0
    %741 = vmatpush1.msra.mxu0 0.0
    %742 = vmatprep.subr.mxu0 0.0
    %743 = vmatpush1.msra.mxu0 0.0
    %744 = vmatprep.subr.mxu0 0.0
    %745 = vmatpush1.msra.mxu0 0.0
    %746 = vmatprep.subr.mxu0 0.0
    %747 = vmatpush1.msra.mxu0 0.0
    %748 = vmatprep.mubr.f32.mxu0 0.0
    %v749 = vand.u32 %v601, 4294901760
    %750 = vmatmul.mubr.f32.gmra.mrb[0].mxu0 %v749
    %v751 = vpop.f32.mrb[0].mxu0
    %v752 = vadd.f32 %v676, %v751
    %v753 = vpop.f32.mrb[0].mxu0
    %754 = vdwg.mxu0
    %755 = vmatprep.subr.mxu0 0.0
    %v756 = vand.u32 %v33, 4294901760
    %v757 = vsub.f32 %v33, %v756
    %758 = vmatpush1.msra.mxu0 %v757
    %759 = vmatprep.subr.mxu0 0.0
    %760 = vmatpush1.msra.mxu0 0.0
    %761 = vmatprep.subr.mxu0 0.0
    %762 = vmatpush1.msra.mxu0 0.0
    %763 = vmatprep.subr.mxu0 0.0
    %764 = vmatpush1.msra.mxu0 0.0
    %765 = vmatprep.subr.mxu0 0.0
    %766 = vmatpush1.msra.mxu0 0.0
    %767 = vmatprep.subr.mxu0 0.0
    %768 = vmatpush1.msra.mxu0 0.0
    %769 = vmatprep.subr.mxu0 0.0
    %770 = vmatpush1.msra.mxu0 0.0
    %771 = vmatprep.subr.mxu0 0.0
    %772 = vmatpush1.msra.mxu0 0.0
    %773 = vmatprep.subr.mxu0 0.0
    %774 = vmatpush1.msra.mxu0 0.0
    %775 = vmatprep.subr.mxu0 0.0
    %776 = vmatpush1.msra.mxu0 0.0
    %777 = vmatprep.subr.mxu0 0.0
    %778 = vmatpush1.msra.mxu0 0.0
    %779 = vmatprep.subr.mxu0 0.0
    %780 = vmatpush1.msra.mxu0 0.0
    %781 = vmatprep.subr.mxu0 0.0
    %782 = vmatpush1.msra.mxu0 0.0
    %783 = vmatprep.subr.mxu0 0.0
    %784 = vmatpush1.msra.mxu0 0.0
    %785 = vmatprep.subr.mxu0 0.0
    %786 = vmatpush1.msra.mxu0 0.0
    %787 = vmatprep.subr.mxu0 0.0
    %788 = vmatpush1.msra.mxu0 0.0
    %789 = vmatprep.subr.mxu0 0.0
    %790 = vmatpush1.msra.mxu0 0.0
    %791 = vmatprep.subr.mxu0 0.0
    %792 = vmatpush1.msra.mxu0 0.0
    %793 = vmatprep.subr.mxu0 0.0
    %794 = vmatpush1.msra.mxu0 0.0
    %795 = vmatprep.subr.mxu0 0.0
    %796 = vmatpush1.msra.mxu0 0.0
    %797 = vmatprep.subr.mxu0 0.0
    %798 = vmatpush1.msra.mxu0 0.0
    %799 = vmatprep.subr.mxu0 0.0
    %800 = vmatpush1.msra.mxu0 0.0
    %801 = vmatprep.subr.mxu0 0.0
    %802 = vmatpush1.msra.mxu0 0.0
    %803 = vmatprep.subr.mxu0 0.0
    %804 = vmatpush1.msra.mxu0 0.0
    %805 = vmatprep.subr.mxu0 0.0
    %806 = vmatpush1.msra.mxu0 0.0
    %807 = vmatprep.subr.mxu0 0.0
    %808 = vmatpush1.msra.mxu0 0.0
    %809 = vmatprep.subr.mxu0 0.0
    %810 = vmatpush1.msra.mxu0 0.0
    %811 = vmatprep.subr.mxu0 0.0
    %812 = vmatpush1.msra.mxu0 0.0
    %813 = vmatprep.subr.mxu0 0.0
    %814 = vmatpush1.msra.mxu0 0.0
    %815 = vmatprep.subr.mxu0 0.0
    %816 = vmatpush1.msra.mxu0 0.0
    %817 = vmatprep.subr.mxu0 0.0
    %818 = vmatpush1.msra.mxu0 0.0
    %819 = vmatprep.subr.mxu0 0.0
    %820 = vmatpush1.msra.mxu0 0.0
    %821 = vmatprep.mubr.f32.mxu0 0.0
    %v822 = vand.u32 %v601, 4294901760
    %v823 = vsub.f32 %v601, %v822
    %824 = vmatmul.mubr.f32.gmra.mrb[0].mxu0 %v823
    %v825 = vpop.f32.mrb[0].mxu0
    %v826 = vadd.f32 %v752, %v825
    %v827 = vpop.f32.mrb[0].mxu0
    %828 = vdwg.mxu0
    %829 = vmatprep.subr.mxu0 0.0
    %v830 = vand.u32 %v33, 4294901760
    %831 = vmatpush1.msra.mxu0 %v830
    %832 = vmatprep.subr.mxu0 0.0
    %833 = vmatpush1.msra.mxu0 0.0
    %834 = vmatprep.subr.mxu0 0.0
    %835 = vmatpush1.msra.mxu0 0.0
    %836 = vmatprep.subr.mxu0 0.0
    %837 = vmatpush1.msra.mxu0 0.0
    %838 = vmatprep.subr.mxu0 0.0
    %839 = vmatpush1.msra.mxu0 0.0
    %840 = vmatprep.subr.mxu0 0.0
    %841 = vmatpush1.msra.mxu0 0.0
    %842 = vmatprep.subr.mxu0 0.0
    %843 = vmatpush1.msra.mxu0 0.0
    %844 = vmatprep.subr.mxu0 0.0
    %845 = vmatpush1.msra.mxu0 0.0
    %846 = vmatprep.subr.mxu0 0.0
    %847 = vmatpush1.msra.mxu0 0.0
    %848 = vmatprep.subr.mxu0 0.0
    %849 = vmatpush1.msra.mxu0 0.0
    %850 = vmatprep.subr.mxu0 0.0
    %851 = vmatpush1.msra.mxu0 0.0
    %852 = vmatprep.subr.mxu0 0.0
    %853 = vmatpush1.msra.mxu0 0.0
    %854 = vmatprep.subr.mxu0 0.0
    %855 = vmatpush1.msra.mxu0 0.0
    %856 = vmatprep.subr.mxu0 0.0
    %857 = vmatpush1.msra.mxu0 0.0
    %858 = vmatprep.subr.mxu0 0.0
    %859 = vmatpush1.msra.mxu0 0.0
    %860 = vmatprep.subr.mxu0 0.0
    %861 = vmatpush1.msra.mxu0 0.0
    %862 = vmatprep.subr.mxu0 0.0
    %863 = vmatpush1.msra.mxu0 0.0
    %864 = vmatprep.subr.mxu0 0.0
    %865 = vmatpush1.msra.mxu0 0.0
    %866 = vmatprep.subr.mxu0 0.0
    %867 = vmatpush1.msra.mxu0 0.0
    %868 = vmatprep.subr.mxu0 0.0
    %869 = vmatpush1.msra.mxu0 0.0
    %870 = vmatprep.subr.mxu0 0.0
    %871 = vmatpush1.msra.mxu0 0.0
    %872 = vmatprep.subr.mxu0 0.0
    %873 = vmatpush1.msra.mxu0 0.0
    %874 = vmatprep.subr.mxu0 0.0
    %875 = vmatpush1.msra.mxu0 0.0
    %876 = vmatprep.subr.mxu0 0.0
    %877 = vmatpush1.msra.mxu0 0.0
    %878 = vmatprep.subr.mxu0 0.0
    %879 = vmatpush1.msra.mxu0 0.0
    %880 = vmatprep.subr.mxu0 0.0
    %881 = vmatpush1.msra.mxu0 0.0
    %882 = vmatprep.subr.mxu0 0.0
    %883 = vmatpush1.msra.mxu0 0.0
    %884 = vmatprep.subr.mxu0 0.0
    %885 = vmatpush1.msra.mxu0 0.0
    %886 = vmatprep.subr.mxu0 0.0
    %887 = vmatpush1.msra.mxu0 0.0
    %888 = vmatprep.subr.mxu0 0.0
    %889 = vmatpush1.msra.mxu0 0.0
    %890 = vmatprep.subr.mxu0 0.0
    %891 = vmatpush1.msra.mxu0 0.0
    %892 = vmatprep.subr.mxu0 0.0
    %893 = vmatpush1.msra.mxu0 0.0
    %894 = vmatprep.mubr.f32.mxu0 0.0
    %v895 = vand.u32 %v601, 4294901760
    %v896 = vsub.f32 %v601, %v895
    %v897 = vand.u32 %v896, 4294901760
    %898 = vmatmul.mubr.f32.gmra.mrb[0].mxu0 %v897
    %v899 = vpop.f32.mrb[0].mxu0
    %v900 = vadd.f32 %v826, %v899
    %v901 = vpop.f32.mrb[0].mxu0
    %902 = vdwg.mxu0
    %903 = vmatprep.subr.mxu0 0.0
    %v904 = vand.u32 %v33, 4294901760
    %v905 = vsub.f32 %v33, %v904
    %v906 = vand.u32 %v905, 4294901760
    %907 = vmatpush1.msra.mxu0 %v906
    %908 = vmatprep.subr.mxu0 0.0
    %909 = vmatpush1.msra.mxu0 0.0
    %910 = vmatprep.subr.mxu0 0.0
    %911 = vmatpush1.msra.mxu0 0.0
    %912 = vmatprep.subr.mxu0 0.0
    %913 = vmatpush1.msra.mxu0 0.0
    %914 = vmatprep.subr.mxu0 0.0
    %915 = vmatpush1.msra.mxu0 0.0
    %916 = vmatprep.subr.mxu0 0.0
    %917 = vmatpush1.msra.mxu0 0.0
    %918 = vmatprep.subr.mxu0 0.0
    %919 = vmatpush1.msra.mxu0 0.0
    %920 = vmatprep.subr.mxu0 0.0
    %921 = vmatpush1.msra.mxu0 0.0
    %922 = vmatprep.subr.mxu0 0.0
    %923 = vmatpush1.msra.mxu0 0.0
    %924 = vmatprep.subr.mxu0 0.0
    %925 = vmatpush1.msra.mxu0 0.0
    %926 = vmatprep.subr.mxu0 0.0
    %927 = vmatpush1.msra.mxu0 0.0
    %928 = vmatprep.subr.mxu0 0.0
    %929 = vmatpush1.msra.mxu0 0.0
    %930 = vmatprep.subr.mxu0 0.0
    %931 = vmatpush1.msra.mxu0 0.0
    %932 = vmatprep.subr.mxu0 0.0
    %933 = vmatpush1.msra.mxu0 0.0
    %934 = vmatprep.subr.mxu0 0.0
    %935 = vmatpush1.msra.mxu0 0.0
    %936 = vmatprep.subr.mxu0 0.0
    %937 = vmatpush1.msra.mxu0 0.0
    %938 = vmatprep.subr.mxu0 0.0
    %939 = vmatpush1.msra.mxu0 0.0
    %940 = vmatprep.subr.mxu0 0.0
    %941 = vmatpush1.msra.mxu0 0.0
    %942 = vmatprep.subr.mxu0 0.0
    %943 = vmatpush1.msra.mxu0 0.0
    %944 = vmatprep.subr.mxu0 0.0
    %945 = vmatpush1.msra.mxu0 0.0
    %946 = vmatprep.subr.mxu0 0.0
    %947 = vmatpush1.msra.mxu0 0.0
    %948 = vmatprep.subr.mxu0 0.0
    %949 = vmatpush1.msra.mxu0 0.0
    %950 = vmatprep.subr.mxu0 0.0
    %951 = vmatpush1.msra.mxu0 0.0
    %952 = vmatprep.subr.mxu0 0.0
    %953 = vmatpush1.msra.mxu0 0.0
    %954 = vmatprep.subr.mxu0 0.0
    %955 = vmatpush1.msra.mxu0 0.0
    %956 = vmatprep.subr.mxu0 0.0
    %957 = vmatpush1.msra.mxu0 0.0
    %958 = vmatprep.subr.mxu0 0.0
    %959 = vmatpush1.msra.mxu0 0.0
    %960 = vmatprep.subr.mxu0 0.0
    %961 = vmatpush1.msra.mxu0 0.0
    %962 = vmatprep.subr.mxu0 0.0
    %963 = vmatpush1.msra.mxu0 0.0
    %964 = vmatprep.subr.mxu0 0.0
    %965 = vmatpush1.msra.mxu0 0.0
    %966 = vmatprep.subr.mxu0 0.0
    %967 = vmatpush1.msra.mxu0 0.0
    %968 = vmatprep.subr.mxu0 0.0
    %969 = vmatpush1.msra.mxu0 0.0
    %970 = vmatprep.mubr.f32.mxu0 0.0
    %v971 = vand.u32 %v601, 4294901760
    %972 = vmatmul.mubr.f32.gmra.mrb[0].mxu0 %v971
    %v973 = vpop.f32.mrb[0].mxu0
    %v974 = vadd.f32 %v900, %v973
    %v975 = vpop.f32.mrb[0].mxu0
    %976 = vdwg.mxu0
    %977 = vmatprep.subr.mxu0 0.0
    %v978 = vand.u32 %v33, 4294901760
    %979 = vmatpush1.msra.mxu0 %v978
    %980 = vmatprep.subr.mxu0 0.0
    %981 = vmatpush1.msra.mxu0 0.0
    %982 = vmatprep.subr.mxu0 0.0
    %983 = vmatpush1.msra.mxu0 0.0
    %984 = vmatprep.subr.mxu0 0.0
    %985 = vmatpush1.msra.mxu0 0.0
    %986 = vmatprep.subr.mxu0 0.0
    %987 = vmatpush1.msra.mxu0 0.0
    %988 = vmatprep.subr.mxu0 0.0
    %989 = vmatpush1.msra.mxu0 0.0
    %990 = vmatprep.subr.mxu0 0.0
    %991 = vmatpush1.msra.mxu0 0.0
    %992 = vmatprep.subr.mxu0 0.0
    %993 = vmatpush1.msra.mxu0 0.0
    %994 = vmatprep.subr.mxu0 0.0
    %995 = vmatpush1.msra.mxu0 0.0
    %996 = vmatprep.subr.mxu0 0.0
    %997 = vmatpush1.msra.mxu0 0.0
    %998 = vmatprep.subr.mxu0 0.0
    %999 = vmatpush1.msra.mxu0 0.0
    %1000 = vmatprep.subr.mxu0 0.0
    %1001 = vmatpush1.msra.mxu0 0.0
    %1002 = vmatprep.subr.mxu0 0.0
    %1003 = vmatpush1.msra.mxu0 0.0
    %1004 = vmatprep.subr.mxu0 0.0
    %1005 = vmatpush1.msra.mxu0 0.0
    %1006 = vmatprep.subr.mxu0 0.0
    %1007 = vmatpush1.msra.mxu0 0.0
    %1008 = vmatprep.subr.mxu0 0.0
    %1009 = vmatpush1.msra.mxu0 0.0
    %1010 = vmatprep.subr.mxu0 0.0
    %1011 = vmatpush1.msra.mxu0 0.0
    %1012 = vmatprep.subr.mxu0 0.0
    %1013 = vmatpush1.msra.mxu0 0.0
    %1014 = vmatprep.subr.mxu0 0.0
    %1015 = vmatpush1.msra.mxu0 0.0
    %1016 = vmatprep.subr.mxu0 0.0
    %1017 = vmatpush1.msra.mxu0 0.0
    %1018 = vmatprep.subr.mxu0 0.0
    %1019 = vmatpush1.msra.mxu0 0.0
    %1020 = vmatprep.subr.mxu0 0.0
    %1021 = vmatpush1.msra.mxu0 0.0
    %1022 = vmatprep.subr.mxu0 0.0
    %1023 = vmatpush1.msra.mxu0 0.0
    %1024 = vmatprep.subr.mxu0 0.0
    %1025 = vmatpush1.msra.mxu0 0.0
    %1026 = vmatprep.subr.mxu0 0.0
    %1027 = vmatpush1.msra.mxu0 0.0
    %1028 = vmatprep.subr.mxu0 0.0
    %1029 = vmatpush1.msra.mxu0 0.0
    %1030 = vmatprep.subr.mxu0 0.0
    %1031 = vmatpush1.msra.mxu0 0.0
    %1032 = vmatprep.subr.mxu0 0.0
    %1033 = vmatpush1.msra.mxu0 0.0
    %1034 = vmatprep.subr.mxu0 0.0
    %1035 = vmatpush1.msra.mxu0 0.0
    %1036 = vmatprep.subr.mxu0 0.0
    %1037 = vmatpush1.msra.mxu0 0.0
    %1038 = vmatprep.subr.mxu0 0.0
    %1039 = vmatpush1.msra.mxu0 0.0
    %1040 = vmatprep.subr.mxu0 0.0
    %1041 = vmatpush1.msra.mxu0 0.0
    %1042 = vmatprep.mubr.f32.mxu0 0.0
    %v1043 = vand.u32 %v601, 4294901760
    %1044 = vmatmul.mubr.f32.gmra.mrb[0].mxu0 %v1043
    %v1045 = vpop.f32.mrb[0].mxu0
    %v1046 = vadd.f32 %v974, %v1045
    %v1047 = vpop.f32.mrb[0].mxu0
    %1048 = vdwg.mxu0
    %v1049 = vadd.f32 %v599, %v564
    %v1050 = vlog2.pop %v1046
    %v1051 = vmul.f32 %v1050, 0.6931472
    %v1052 = vadd.f32 %v1049, %v1051
    %v1053 = vsel %vm69, %v1052, -inf
    %1054 = vmax.xlane.f32.xlu0 %v1053
    %v1055 = vpop.xlane.xlu0 %1054
    %v1056 = vsub.f32 %v1052, %v1055
    %v1057 = vmul.f32 %v1056, 1.442695
    %v1058 = vpow.pop %v1057
    %v1059 = vsel %vm69, %v1058, 0.0
    %1060 = vadd.xlane.f32.xlu0 %v1059
    %v1061 = vpop.xlane.xlu0 %1060
    %v1062 = vlog2.pop %v1061
    %v1063 = vmul.f32 %v1062, 0.6931472
    %v1064 = vadd.f32 %v1055, %v1063
    %vm1065 = vcmask 19472
    %1066 = vst.msk [vmem:[#allocation5] sm:$0xf] %vm1065, %v1064
    %s1067 = sld [smem:[#allocation2 + $0x180]]
    %s1068 = scalar_lea.vmem %s1, %s1067
    %v1069 = vld [vmem:[%s1068] sm:$0x1]
    %s1070 = sld [smem:[#allocation2 + $0x181]]
    %s1071 = scalar_lea.vmem %s1, %s1070
    %v1072 = vld [vmem:[%s1071] sm:$0x1]
    %s1073 = sld [smem:[#allocation2 + $0x182]]
    %s1074 = scalar_lea.vmem %s1, %s1073
    %v1075 = vld [vmem:[%s1074] sm:$0x1]
    %s1076 = sld [smem:[#allocation2 + $0x183]]
    %s1077 = scalar_lea.vmem %s1, %s1076
    %v1078 = vld [vmem:[%s1077] sm:$0x1]
    %v1080 = vrot.slane %v1072, 7
    %v1083 = vrot.slane %v1075, 6
    %v1086 = vrot.slane %v1078, 5
    %v1088 = vsel %vm56, %v1069, %v1080
    %v1089 = vsel %vm58, %v1088, %v1083
    %v1090 = vsel %vm60, %v1089, %v1086
    %v1092 = vsel %vm108, %v1058, 0
    %1094 = vmatprep.subr.mxu0 0.0
    %v1095 = vand.u32 %v33, 4294901760
    %1096 = vmatpush1.msra.mxu0 %v1095
    %1097 = vmatprep.subr.mxu0 0.0
    %1098 = vmatpush1.msra.mxu0 0.0
    %1099 = vmatprep.subr.mxu0 0.0
    %1100 = vmatpush1.msra.mxu0 0.0
    %1101 = vmatprep.subr.mxu0 0.0
    %1102 = vmatpush1.msra.mxu0 0.0
    %1103 = vmatprep.subr.mxu0 0.0
    %1104 = vmatpush1.msra.mxu0 0.0
    %1105 = vmatprep.subr.mxu0 0.0
    %1106 = vmatpush1.msra.mxu0 0.0
    %1107 = vmatprep.subr.mxu0 0.0
    %1108 = vmatpush1.msra.mxu0 0.0
    %1109 = vmatprep.subr.mxu0 0.0
    %1110 = vmatpush1.msra.mxu0 0.0
    %1111 = vmatprep.subr.mxu0 0.0
    %1112 = vmatpush1.msra.mxu0 0.0
    %1113 = vmatprep.subr.mxu0 0.0
    %1114 = vmatpush1.msra.mxu0 0.0
    %1115 = vmatprep.subr.mxu0 0.0
    %1116 = vmatpush1.msra.mxu0 0.0
    %1117 = vmatprep.subr.mxu0 0.0
    %1118 = vmatpush1.msra.mxu0 0.0
    %1119 = vmatprep.subr.mxu0 0.0
    %1120 = vmatpush1.msra.mxu0 0.0
    %1121 = vmatprep.subr.mxu0 0.0
    %1122 = vmatpush1.msra.mxu0 0.0
    %1123 = vmatprep.subr.mxu0 0.0
    %1124 = vmatpush1.msra.mxu0 0.0
    %1125 = vmatprep.subr.mxu0 0.0
    %1126 = vmatpush1.msra.mxu0 0.0
    %1127 = vmatprep.subr.mxu0 0.0
    %1128 = vmatpush1.msra.mxu0 0.0
    %1129 = vmatprep.subr.mxu0 0.0
    %1130 = vmatpush1.msra.mxu0 0.0
    %1131 = vmatprep.subr.mxu0 0.0
    %1132 = vmatpush1.msra.mxu0 0.0
    %1133 = vmatprep.subr.mxu0 0.0
    %1134 = vmatpush1.msra.mxu0 0.0
    %1135 = vmatprep.subr.mxu0 0.0
    %1136 = vmatpush1.msra.mxu0 0.0
    %1137 = vmatprep.subr.mxu0 0.0
    %1138 = vmatpush1.msra.mxu0 0.0
    %1139 = vmatprep.subr.mxu0 0.0
    %1140 = vmatpush1.msra.mxu0 0.0
    %1141 = vmatprep.subr.mxu0 0.0
    %1142 = vmatpush1.msra.mxu0 0.0
    %1143 = vmatprep.subr.mxu0 0.0
    %1144 = vmatpush1.msra.mxu0 0.0
    %1145 = vmatprep.subr.mxu0 0.0
    %1146 = vmatpush1.msra.mxu0 0.0
    %1147 = vmatprep.subr.mxu0 0.0
    %1148 = vmatpush1.msra.mxu0 0.0
    %1149 = vmatprep.subr.mxu0 0.0
    %1150 = vmatpush1.msra.mxu0 0.0
    %1151 = vmatprep.subr.mxu0 0.0
    %1152 = vmatpush1.msra.mxu0 0.0
    %1153 = vmatprep.subr.mxu0 0.0
    %1154 = vmatpush1.msra.mxu0 0.0
    %1155 = vmatprep.subr.mxu0 0.0
    %1156 = vmatpush1.msra.mxu0 0.0
    %1157 = vmatprep.subr.mxu0 0.0
    %1158 = vmatpush1.msra.mxu0 0.0
    %1159 = vmatprep.mubr.f32.mxu0 0.0
    %v1160 = vand.u32 %v1092, 4294901760
    %v1161 = vsub.f32 %v1092, %v1160
    %v1162 = vand.u32 %v1161, 4294901760
    %v1163 = vsub.f32 %v1161, %v1162
    %v1164 = vand.u32 %v1163, 4294901760
    %1165 = vmatmul.mubr.f32.gmra.mrb[0].mxu0 %v1164
    %v1166 = vpop.f32.mrb[0].mxu0
    %v1167 = vadd.f32 0.0, %v1166
    %v1168 = vpop.f32.mrb[0].mxu0
    %1169 = vdwg.mxu0
    %1170 = vmatprep.subr.mxu0 0.0
    %v1171 = vand.u32 %v33, 4294901760
    %v1172 = vsub.f32 %v33, %v1171
    %v1173 = vand.u32 %v1172, 4294901760
    %v1174 = vsub.f32 %v1172, %v1173
    %v1175 = vand.u32 %v1174, 4294901760
    %1176 = vmatpush1.msra.mxu0 %v1175
    %1177 = vmatprep.subr.mxu0 0.0
    %1178 = vmatpush1.msra.mxu0 0.0
    %1179 = vmatprep.subr.mxu0 0.0
    %1180 = vmatpush1.msra.mxu0 0.0
    %1181 = vmatprep.subr.mxu0 0.0
    %1182 = vmatpush1.msra.mxu0 0.0
    %1183 = vmatprep.subr.mxu0 0.0
    %1184 = vmatpush1.msra.mxu0 0.0
    %1185 = vmatprep.subr.mxu0 0.0
    %1186 = vmatpush1.msra.mxu0 0.0
    %1187 = vmatprep.subr.mxu0 0.0
    %1188 = vmatpush1.msra.mxu0 0.0
    %1189 = vmatprep.subr.mxu0 0.0
    %1190 = vmatpush1.msra.mxu0 0.0
    %1191 = vmatprep.subr.mxu0 0.0
    %1192 = vmatpush1.msra.mxu0 0.0
    %1193 = vmatprep.subr.mxu0 0.0
    %1194 = vmatpush1.msra.mxu0 0.0
    %1195 = vmatprep.subr.mxu0 0.0
    %1196 = vmatpush1.msra.mxu0 0.0
    %1197 = vmatprep.subr.mxu0 0.0
    %1198 = vmatpush1.msra.mxu0 0.0
    %1199 = vmatprep.subr.mxu0 0.0
    %1200 = vmatpush1.msra.mxu0 0.0
    %1201 = vmatprep.subr.mxu0 0.0
    %1202 = vmatpush1.msra.mxu0 0.0
    %1203 = vmatprep.subr.mxu0 0.0
    %1204 = vmatpush1.msra.mxu0 0.0
    %1205 = vmatprep.subr.mxu0 0.0
    %1206 = vmatpush1.msra.mxu0 0.0
    %1207 = vmatprep.subr.mxu0 0.0
    %1208 = vmatpush1.msra.mxu0 0.0
    %1209 = vmatprep.subr.mxu0 0.0
    %1210 = vmatpush1.msra.mxu0 0.0
    %1211 = vmatprep.subr.mxu0 0.0
    %1212 = vmatpush1.msra.mxu0 0.0
    %1213 = vmatprep.subr.mxu0 0.0
    %1214 = vmatpush1.msra.mxu0 0.0
    %1215 = vmatprep.subr.mxu0 0.0
    %1216 = vmatpush1.msra.mxu0 0.0
    %1217 = vmatprep.subr.mxu0 0.0
    %1218 = vmatpush1.msra.mxu0 0.0
    %1219 = vmatprep.subr.mxu0 0.0
    %1220 = vmatpush1.msra.mxu0 0.0
    %1221 = vmatprep.subr.mxu0 0.0
    %1222 = vmatpush1.msra.mxu0 0.0
    %1223 = vmatprep.subr.mxu0 0.0
    %1224 = vmatpush1.msra.mxu0 0.0
    %1225 = vmatprep.subr.mxu0 0.0
    %1226 = vmatpush1.msra.mxu0 0.0
    %1227 = vmatprep.subr.mxu0 0.0
    %1228 = vmatpush1.msra.mxu0 0.0
    %1229 = vmatprep.subr.mxu0 0.0
    %1230 = vmatpush1.msra.mxu0 0.0
    %1231 = vmatprep.subr.mxu0 0.0
    %1232 = vmatpush1.msra.mxu0 0.0
    %1233 = vmatprep.subr.mxu0 0.0
    %1234 = vmatpush1.msra.mxu0 0.0
    %1235 = vmatprep.subr.mxu0 0.0
    %1236 = vmatpush1.msra.mxu0 0.0
    %1237 = vmatprep.subr.mxu0 0.0
    %1238 = vmatpush1.msra.mxu0 0.0
    %1239 = vmatprep.mubr.f32.mxu0 0.0
    %v1240 = vand.u32 %v1092, 4294901760
    %1241 = vmatmul.mubr.f32.gmra.mrb[0].mxu0 %v1240
    %v1242 = vpop.f32.mrb[0].mxu0
    %v1243 = vadd.f32 %v1167, %v1242
    %v1244 = vpop.f32.mrb[0].mxu0
    %1245 = vdwg.mxu0
    %1246 = vmatprep.subr.mxu0 0.0
    %v1247 = vand.u32 %v33, 4294901760
    %v1248 = vsub.f32 %v33, %v1247
    %1249 = vmatpush1.msra.mxu0 %v1248
    %1250 = vmatprep.subr.mxu0 0.0
    %1251 = vmatpush1.msra.mxu0 0.0
    %1252 = vmatprep.subr.mxu0 0.0
    %1253 = vmatpush1.msra.mxu0 0.0
    %1254 = vmatprep.subr.mxu0 0.0
    %1255 = vmatpush1.msra.mxu0 0.0
    %1256 = vmatprep.subr.mxu0 0.0
    %1257 = vmatpush1.msra.mxu0 0.0
    %1258 = vmatprep.subr.mxu0 0.0
    %1259 = vmatpush1.msra.mxu0 0.0
    %1260 = vmatprep.subr.mxu0 0.0
    %1261 = vmatpush1.msra.mxu0 0.0
    %1262 = vmatprep.subr.mxu0 0.0
    %1263 = vmatpush1.msra.mxu0 0.0
    %1264 = vmatprep.subr.mxu0 0.0
    %1265 = vmatpush1.msra.mxu0 0.0
    %1266 = vmatprep.subr.mxu0 0.0
    %1267 = vmatpush1.msra.mxu0 0.0
    %1268 = vmatprep.subr.mxu0 0.0
    %1269 = vmatpush1.msra.mxu0 0.0
    %1270 = vmatprep.subr.mxu0 0.0
    %1271 = vmatpush1.msra.mxu0 0.0
    %1272 = vmatprep.subr.mxu0 0.0
    %1273 = vmatpush1.msra.mxu0 0.0
    %1274 = vmatprep.subr.mxu0 0.0
    %1275 = vmatpush1.msra.mxu0 0.0
    %1276 = vmatprep.subr.mxu0 0.0
    %1277 = vmatpush1.msra.mxu0 0.0
    %1278 = vmatprep.subr.mxu0 0.0
    %1279 = vmatpush1.msra.mxu0 0.0
    %1280 = vmatprep.subr.mxu0 0.0
    %1281 = vmatpush1.msra.mxu0 0.0
    %1282 = vmatprep.subr.mxu0 0.0
    %1283 = vmatpush1.msra.mxu0 0.0
    %1284 = vmatprep.subr.mxu0 0.0
    %1285 = vmatpush1.msra.mxu0 0.0
    %1286 = vmatprep.subr.mxu0 0.0
    %1287 = vmatpush1.msra.mxu0 0.0
    %1288 = vmatprep.subr.mxu0 0.0
    %1289 = vmatpush1.msra.mxu0 0.0
    %1290 = vmatprep.subr.mxu0 0.0
    %1291 = vmatpush1.msra.mxu0 0.0
    %1292 = vmatprep.subr.mxu0 0.0
    %1293 = vmatpush1.msra.mxu0 0.0
    %1294 = vmatprep.subr.mxu0 0.0
    %1295 = vmatpush1.msra.mxu0 0.0
    %1296 = vmatprep.subr.mxu0 0.0
    %1297 = vmatpush1.msra.mxu0 0.0
    %1298 = vmatprep.subr.mxu0 0.0
    %1299 = vmatpush1.msra.mxu0 0.0
    %1300 = vmatprep.subr.mxu0 0.0
    %1301 = vmatpush1.msra.mxu0 0.0
    %1302 = vmatprep.subr.mxu0 0.0
    %1303 = vmatpush1.msra.mxu0 0.0
    %1304 = vmatprep.subr.mxu0 0.0
    %1305 = vmatpush1.msra.mxu0 0.0
    %1306 = vmatprep.subr.mxu0 0.0
    %1307 = vmatpush1.msra.mxu0 0.0
    %1308 = vmatprep.subr.mxu0 0.0
    %1309 = vmatpush1.msra.mxu0 0.0
    %1310 = vmatprep.subr.mxu0 0.0
    %1311 = vmatpush1.msra.mxu0 0.0
    %1312 = vmatprep.mubr.f32.mxu0 0.0
    %v1313 = vand.u32 %v1092, 4294901760
    %v1314 = vsub.f32 %v1092, %v1313
    %1315 = vmatmul.mubr.f32.gmra.mrb[0].mxu0 %v1314
    %v1316 = vpop.f32.mrb[0].mxu0
    %v1317 = vadd.f32 %v1243, %v1316
    %v1318 = vpop.f32.mrb[0].mxu0
    %1319 = vdwg.mxu0
    %1320 = vmatprep.subr.mxu0 0.0
    %v1321 = vand.u32 %v33, 4294901760
    %1322 = vmatpush1.msra.mxu0 %v1321
    %1323 = vmatprep.subr.mxu0 0.0
    %1324 = vmatpush1.msra.mxu0 0.0
    %1325 = vmatprep.subr.mxu0 0.0
    %1326 = vmatpush1.msra.mxu0 0.0
    %1327 = vmatprep.subr.mxu0 0.0
    %1328 = vmatpush1.msra.mxu0 0.0
    %1329 = vmatprep.subr.mxu0 0.0
    %1330 = vmatpush1.msra.mxu0 0.0
    %1331 = vmatprep.subr.mxu0 0.0
    %1332 = vmatpush1.msra.mxu0 0.0
    %1333 = vmatprep.subr.mxu0 0.0
    %1334 = vmatpush1.msra.mxu0 0.0
    %1335 = vmatprep.subr.mxu0 0.0
    %1336 = vmatpush1.msra.mxu0 0.0
    %1337 = vmatprep.subr.mxu0 0.0
    %1338 = vmatpush1.msra.mxu0 0.0
    %1339 = vmatprep.subr.mxu0 0.0
    %1340 = vmatpush1.msra.mxu0 0.0
    %1341 = vmatprep.subr.mxu0 0.0
    %1342 = vmatpush1.msra.mxu0 0.0
    %1343 = vmatprep.subr.mxu0 0.0
    %1344 = vmatpush1.msra.mxu0 0.0
    %1345 = vmatprep.subr.mxu0 0.0
    %1346 = vmatpush1.msra.mxu0 0.0
    %1347 = vmatprep.subr.mxu0 0.0
    %1348 = vmatpush1.msra.mxu0 0.0
    %1349 = vmatprep.subr.mxu0 0.0
    %1350 = vmatpush1.msra.mxu0 0.0
    %1351 = vmatprep.subr.mxu0 0.0
    %1352 = vmatpush1.msra.mxu0 0.0
    %1353 = vmatprep.subr.mxu0 0.0
    %1354 = vmatpush1.msra.mxu0 0.0
    %1355 = vmatprep.subr.mxu0 0.0
    %1356 = vmatpush1.msra.mxu0 0.0
    %1357 = vmatprep.subr.mxu0 0.0
    %1358 = vmatpush1.msra.mxu0 0.0
    %1359 = vmatprep.subr.mxu0 0.0
    %1360 = vmatpush1.msra.mxu0 0.0
    %1361 = vmatprep.subr.mxu0 0.0
    %1362 = vmatpush1.msra.mxu0 0.0
    %1363 = vmatprep.subr.mxu0 0.0
    %1364 = vmatpush1.msra.mxu0 0.0
    %1365 = vmatprep.subr.mxu0 0.0
    %1366 = vmatpush1.msra.mxu0 0.0
    %1367 = vmatprep.subr.mxu0 0.0
    %1368 = vmatpush1.msra.mxu0 0.0
    %1369 = vmatprep.subr.mxu0 0.0
    %1370 = vmatpush1.msra.mxu0 0.0
    %1371 = vmatprep.subr.mxu0 0.0
    %1372 = vmatpush1.msra.mxu0 0.0
    %1373 = vmatprep.subr.mxu0 0.0
    %1374 = vmatpush1.msra.mxu0 0.0
    %1375 = vmatprep.subr.mxu0 0.0
    %1376 = vmatpush1.msra.mxu0 0.0
    %1377 = vmatprep.subr.mxu0 0.0
    %1378 = vmatpush1.msra.mxu0 0.0
    %1379 = vmatprep.subr.mxu0 0.0
    %1380 = vmatpush1.msra.mxu0 0.0
    %1381 = vmatprep.subr.mxu0 0.0
    %1382 = vmatpush1.msra.mxu0 0.0
    %1383 = vmatprep.subr.mxu0 0.0
    %1384 = vmatpush1.msra.mxu0 0.0
    %1385 = vmatprep.mubr.f32.mxu0 0.0
    %v1386 = vand.u32 %v1092, 4294901760
    %v1387 = vsub.f32 %v1092, %v1386
    %v1388 = vand.u32 %v1387, 4294901760
    %1389 = vmatmul.mubr.f32.gmra.mrb[0].mxu0 %v1388
    %v1390 = vpop.f32.mrb[0].mxu0
    %v1391 = vadd.f32 %v1317, %v1390
    %v1392 = vpop.f32.mrb[0].mxu0
    %1393 = vdwg.mxu0
    %1394 = vmatprep.subr.mxu0 0.0
    %v1395 = vand.u32 %v33, 4294901760
    %v1396 = vsub.f32 %v33, %v1395
    %v1397 = vand.u32 %v1396, 4294901760
    %1398 = vmatpush1.msra.mxu0 %v1397
    %1399 = vmatprep.subr.mxu0 0.0
    %1400 = vmatpush1.msra.mxu0 0.0
    %1401 = vmatprep.subr.mxu0 0.0
    %1402 = vmatpush1.msra.mxu0 0.0
    %1403 = vmatprep.subr.mxu0 0.0
    %1404 = vmatpush1.msra.mxu0 0.0
    %1405 = vmatprep.subr.mxu0 0.0
    %1406 = vmatpush1.msra.mxu0 0.0
    %1407 = vmatprep.subr.mxu0 0.0
    %1408 = vmatpush1.msra.mxu0 0.0
    %1409 = vmatprep.subr.mxu0 0.0
    %1410 = vmatpush1.msra.mxu0 0.0
    %1411 = vmatprep.subr.mxu0 0.0
    %1412 = vmatpush1.msra.mxu0 0.0
    %1413 = vmatprep.subr.mxu0 0.0
    %1414 = vmatpush1.msra.mxu0 0.0
    %1415 = vmatprep.subr.mxu0 0.0
    %1416 = vmatpush1.msra.mxu0 0.0
    %1417 = vmatprep.subr.mxu0 0.0
    %1418 = vmatpush1.msra.mxu0 0.0
    %1419 = vmatprep.subr.mxu0 0.0
    %1420 = vmatpush1.msra.mxu0 0.0
    %1421 = vmatprep.subr.mxu0 0.0
    %1422 = vmatpush1.msra.mxu0 0.0
    %1423 = vmatprep.subr.mxu0 0.0
    %1424 = vmatpush1.msra.mxu0 0.0
    %1425 = vmatprep.subr.mxu0 0.0
    %1426 = vmatpush1.msra.mxu0 0.0
    %1427 = vmatprep.subr.mxu0 0.0
    %1428 = vmatpush1.msra.mxu0 0.0
    %1429 = vmatprep.subr.mxu0 0.0
    %1430 = vmatpush1.msra.mxu0 0.0
    %1431 = vmatprep.subr.mxu0 0.0
    %1432 = vmatpush1.msra.mxu0 0.0
    %1433 = vmatprep.subr.mxu0 0.0
    %1434 = vmatpush1.msra.mxu0 0.0
    %1435 = vmatprep.subr.mxu0 0.0
    %1436 = vmatpush1.msra.mxu0 0.0
    %1437 = vmatprep.subr.mxu0 0.0
    %1438 = vmatpush1.msra.mxu0 0.0
    %1439 = vmatprep.subr.mxu0 0.0
    %1440 = vmatpush1.msra.mxu0 0.0
    %1441 = vmatprep.subr.mxu0 0.0
    %1442 = vmatpush1.msra.mxu0 0.0
    %1443 = vmatprep.subr.mxu0 0.0
    %1444 = vmatpush1.msra.mxu0 0.0
    %1445 = vmatprep.subr.mxu0 0.0
    %1446 = vmatpush1.msra.mxu0 0.0
    %1447 = vmatprep.subr.mxu0 0.0
    %1448 = vmatpush1.msra.mxu0 0.0
    %1449 = vmatprep.subr.mxu0 0.0
    %1450 = vmatpush1.msra.mxu0 0.0
    %1451 = vmatprep.subr.mxu0 0.0
    %1452 = vmatpush1.msra.mxu0 0.0
    %1453 = vmatprep.subr.mxu0 0.0
    %1454 = vmatpush1.msra.mxu0 0.0
    %1455 = vmatprep.subr.mxu0 0.0
    %1456 = vmatpush1.msra.mxu0 0.0
    %1457 = vmatprep.subr.mxu0 0.0
    %1458 = vmatpush1.msra.mxu0 0.0
    %1459 = vmatprep.subr.mxu0 0.0
    %1460 = vmatpush1.msra.mxu0 0.0
    %1461 = vmatprep.mubr.f32.mxu0 0.0
    %v1462 = vand.u32 %v1092, 4294901760
    %1463 = vmatmul.mubr.f32.gmra.mrb[0].mxu0 %v1462
    %v1464 = vpop.f32.mrb[0].mxu0
    %v1465 = vadd.f32 %v1391, %v1464
    %v1466 = vpop.f32.mrb[0].mxu0
    %1467 = vdwg.mxu0
    %1468 = vmatprep.subr.mxu0 0.0
    %v1469 = vand.u32 %v33, 4294901760
    %1470 = vmatpush1.msra.mxu0 %v1469
    %1471 = vmatprep.subr.mxu0 0.0
    %1472 = vmatpush1.msra.mxu0 0.0
    %1473 = vmatprep.subr.mxu0 0.0
    %1474 = vmatpush1.msra.mxu0 0.0
    %1475 = vmatprep.subr.mxu0 0.0
    %1476 = vmatpush1.msra.mxu0 0.0
    %1477 = vmatprep.subr.mxu0 0.0
    %1478 = vmatpush1.msra.mxu0 0.0
    %1479 = vmatprep.subr.mxu0 0.0
    %1480 = vmatpush1.msra.mxu0 0.0
    %1481 = vmatprep.subr.mxu0 0.0
    %1482 = vmatpush1.msra.mxu0 0.0
    %1483 = vmatprep.subr.mxu0 0.0
    %1484 = vmatpush1.msra.mxu0 0.0
    %1485 = vmatprep.subr.mxu0 0.0
    %1486 = vmatpush1.msra.mxu0 0.0
    %1487 = vmatprep.subr.mxu0 0.0
    %1488 = vmatpush1.msra.mxu0 0.0
    %1489 = vmatprep.subr.mxu0 0.0
    %1490 = vmatpush1.msra.mxu0 0.0
    %1491 = vmatprep.subr.mxu0 0.0
    %1492 = vmatpush1.msra.mxu0 0.0
    %1493 = vmatprep.subr.mxu0 0.0
    %1494 = vmatpush1.msra.mxu0 0.0
    %1495 = vmatprep.subr.mxu0 0.0
    %1496 = vmatpush1.msra.mxu0 0.0
    %1497 = vmatprep.subr.mxu0 0.0
    %1498 = vmatpush1.msra.mxu0 0.0
    %1499 = vmatprep.subr.mxu0 0.0
    %1500 = vmatpush1.msra.mxu0 0.0
    %1501 = vmatprep.subr.mxu0 0.0
    %1502 = vmatpush1.msra.mxu0 0.0
    %1503 = vmatprep.subr.mxu0 0.0
    %1504 = vmatpush1.msra.mxu0 0.0
    %1505 = vmatprep.subr.mxu0 0.0
    %1506 = vmatpush1.msra.mxu0 0.0
    %1507 = vmatprep.subr.mxu0 0.0
    %1508 = vmatpush1.msra.mxu0 0.0
    %1509 = vmatprep.subr.mxu0 0.0
    %1510 = vmatpush1.msra.mxu0 0.0
    %1511 = vmatprep.subr.mxu0 0.0
    %1512 = vmatpush1.msra.mxu0 0.0
    %1513 = vmatprep.subr.mxu0 0.0
    %1514 = vmatpush1.msra.mxu0 0.0
    %1515 = vmatprep.subr.mxu0 0.0
    %1516 = vmatpush1.msra.mxu0 0.0
    %1517 = vmatprep.subr.mxu0 0.0
    %1518 = vmatpush1.msra.mxu0 0.0
    %1519 = vmatprep.subr.mxu0 0.0
    %1520 = vmatpush1.msra.mxu0 0.0
    %1521 = vmatprep.subr.mxu0 0.0
    %1522 = vmatpush1.msra.mxu0 0.0
    %1523 = vmatprep.subr.mxu0 0.0
    %1524 = vmatpush1.msra.mxu0 0.0
    %1525 = vmatprep.subr.mxu0 0.0
    %1526 = vmatpush1.msra.mxu0 0.0
    %1527 = vmatprep.subr.mxu0 0.0
    %1528 = vmatpush1.msra.mxu0 0.0
    %1529 = vmatprep.subr.mxu0 0.0
    %1530 = vmatpush1.msra.mxu0 0.0
    %1531 = vmatprep.subr.mxu0 0.0
    %1532 = vmatpush1.msra.mxu0 0.0
    %1533 = vmatprep.mubr.f32.mxu0 0.0
    %v1534 = vand.u32 %v1092, 4294901760
    %1535 = vmatmul.mubr.f32.gmra.mrb[0].mxu0 %v1534
    %v1536 = vpop.f32.mrb[0].mxu0
    %v1537 = vadd.f32 %v1465, %v1536
    %v1538 = vpop.f32.mrb[0].mxu0
    %1539 = vdwg.mxu0
    %v1540 = vadd.f32 %v1090, %v1055
    %v1541 = vlog2.pop %v1537
    %v1542 = vmul.f32 %v1541, 0.6931472
    %v1543 = vadd.f32 %v1540, %v1542
    %v1544 = vsel %vm69, %v1543, -inf
    %1545 = vmax.xlane.f32.xlu0 %v1544
    %v1546 = vpop.xlane.xlu0 %1545
    %v1547 = vsub.f32 %v1543, %v1546
    %v1548 = vmul.f32 %v1547, 1.442695
    %v1549 = vpow.pop %v1548
    %v1550 = vsel %vm69, %v1549, 0.0
    %1551 = vadd.xlane.f32.xlu0 %v1550
    %v1552 = vpop.xlane.xlu0 %1551
    %v1553 = vlog2.pop %v1552
    %v1554 = vmul.f32 %v1553, 0.6931472
    %v1555 = vadd.f32 %v1546, %v1554
    %vm1556 = vcmask 27672
    %1557 = vst.msk [vmem:[#allocation5] sm:$0xf] %vm1556, %v1555
    %s1558 = sld [smem:[#allocation2 + $0x200]]
    %s1559 = scalar_lea.vmem %s1, %s1558
    %v1560 = vld [vmem:[%s1559] sm:$0x1]
    %s1561 = sld [smem:[#allocation2 + $0x201]]
    %s1562 = scalar_lea.vmem %s1, %s1561
    %v1563 = vld [vmem:[%s1562] sm:$0x1]
    %s1564 = sld [smem:[#allocation2 + $0x202]]
    %s1565 = scalar_lea.vmem %s1, %s1564
    %v1566 = vld [vmem:[%s1565] sm:$0x1]
    %s1567 = sld [smem:[#allocation2 + $0x203]]
    %s1568 = scalar_lea.vmem %s1, %s1567
    %v1569 = vld [vmem:[%s1568] sm:$0x1]
    %v1571 = vrot.slane %v1563, 7
    %v1574 = vrot.slane %v1566, 6
    %v1577 = vrot.slane %v1569, 5
    %v1579 = vsel %vm56, %v1560, %v1571
    %v1580 = vsel %vm58, %v1579, %v1574
    %v1581 = vsel %vm60, %v1580, %v1577
    %v1583 = vsel %vm108, %v1549, 0
    %1585 = vmatprep.subr.mxu0 0.0
    %v1586 = vand.u32 %v33, 4294901760
    %1587 = vmatpush1.msra.mxu0 %v1586
    %1588 = vmatprep.subr.mxu0 0.0
    %1589 = vmatpush1.msra.mxu0 0.0
    %1590 = vmatprep.subr.mxu0 0.0
    %1591 = vmatpush1.msra.mxu0 0.0
    %1592 = vmatprep.subr.mxu0 0.0
    %1593 = vmatpush1.msra.mxu0 0.0
    %1594 = vmatprep.subr.mxu0 0.0
    %1595 = vmatpush1.msra.mxu0 0.0
    %1596 = vmatprep.subr.mxu0 0.0
    %1597 = vmatpush1.msra.mxu0 0.0
    %1598 = vmatprep.subr.mxu0 0.0
    %1599 = vmatpush1.msra.mxu0 0.0
    %1600 = vmatprep.subr.mxu0 0.0
    %1601 = vmatpush1.msra.mxu0 0.0
    %1602 = vmatprep.subr.mxu0 0.0
    %1603 = vmatpush1.msra.mxu0 0.0
    %1604 = vmatprep.subr.mxu0 0.0
    %1605 = vmatpush1.msra.mxu0 0.0
    %1606 = vmatprep.subr.mxu0 0.0
    %1607 = vmatpush1.msra.mxu0 0.0
    %1608 = vmatprep.subr.mxu0 0.0
    %1609 = vmatpush1.msra.mxu0 0.0
    %1610 = vmatprep.subr.mxu0 0.0
    %1611 = vmatpush1.msra.mxu0 0.0
    %1612 = vmatprep.subr.mxu0 0.0
    %1613 = vmatpush1.msra.mxu0 0.0
    %1614 = vmatprep.subr.mxu0 0.0
    %1615 = vmatpush1.msra.mxu0 0.0
    %1616 = vmatprep.subr.mxu0 0.0
    %1617 = vmatpush1.msra.mxu0 0.0
    %1618 = vmatprep.subr.mxu0 0.0
    %1619 = vmatpush1.msra.mxu0 0.0
    %1620 = vmatprep.subr.mxu0 0.0
    %1621 = vmatpush1.msra.mxu0 0.0
    %1622 = vmatprep.subr.mxu0 0.0
    %1623 = vmatpush1.msra.mxu0 0.0
    %1624 = vmatprep.subr.mxu0 0.0
    %1625 = vmatpush1.msra.mxu0 0.0
    %1626 = vmatprep.subr.mxu0 0.0
    %1627 = vmatpush1.msra.mxu0 0.0
    %1628 = vmatprep.subr.mxu0 0.0
    %1629 = vmatpush1.msra.mxu0 0.0
    %1630 = vmatprep.subr.mxu0 0.0
    %1631 = vmatpush1.msra.mxu0 0.0
    %1632 = vmatprep.subr.mxu0 0.0
    %1633 = vmatpush1.msra.mxu0 0.0
    %1634 = vmatprep.subr.mxu0 0.0
    %1635 = vmatpush1.msra.mxu0 0.0
    %1636 = vmatprep.subr.mxu0 0.0
    %1637 = vmatpush1.msra.mxu0 0.0
    %1638 = vmatprep.subr.mxu0 0.0
    %1639 = vmatpush1.msra.mxu0 0.0
    %1640 = vmatprep.subr.mxu0 0.0
    %1641 = vmatpush1.msra.mxu0 0.0
    %1642 = vmatprep.subr.mxu0 0.0
    %1643 = vmatpush1.msra.mxu0 0.0
    %1644 = vmatprep.subr.mxu0 0.0
    %1645 = vmatpush1.msra.mxu0 0.0
    %1646 = vmatprep.subr.mxu0 0.0
    %1647 = vmatpush1.msra.mxu0 0.0
    %1648 = vmatprep.subr.mxu0 0.0
    %1649 = vmatpush1.msra.mxu0 0.0
    %1650 = vmatprep.mubr.f32.mxu0 0.0
    %v1651 = vand.u32 %v1583, 4294901760
    %v1652 = vsub.f32 %v1583, %v1651
    %v1653 = vand.u32 %v1652, 4294901760
    %v1654 = vsub.f32 %v1652, %v1653
    %v1655 = vand.u32 %v1654, 4294901760
    %1656 = vmatmul.mubr.f32.gmra.mrb[0].mxu0 %v1655
    %v1657 = vpop.f32.mrb[0].mxu0
    %v1658 = vadd.f32 0.0, %v1657
    %v1659 = vpop.f32.mrb[0].mxu0
    %1660 = vdwg.mxu0
    %1661 = vmatprep.subr.mxu0 0.0
    %v1662 = vand.u32 %v33, 4294901760
    %v1663 = vsub.f32 %v33, %v1662
    %v1664 = vand.u32 %v1663, 4294901760
    %v1665 = vsub.f32 %v1663, %v1664
    %v1666 = vand.u32 %v1665, 4294901760
    %1667 = vmatpush1.msra.mxu0 %v1666
    %1668 = vmatprep.subr.mxu0 0.0
    %1669 = vmatpush1.msra.mxu0 0.0
    %1670 = vmatprep.subr.mxu0 0.0
    %1671 = vmatpush1.msra.mxu0 0.0
    %1672 = vmatprep.subr.mxu0 0.0
    %1673 = vmatpush1.msra.mxu0 0.0
    %1674 = vmatprep.subr.mxu0 0.0
    %1675 = vmatpush1.msra.mxu0 0.0
    %1676 = vmatprep.subr.mxu0 0.0
    %1677 = vmatpush1.msra.mxu0 0.0
    %1678 = vmatprep.subr.mxu0 0.0
    %1679 = vmatpush1.msra.mxu0 0.0
    %1680 = vmatprep.subr.mxu0 0.0
    %1681 = vmatpush1.msra.mxu0 0.0
    %1682 = vmatprep.subr.mxu0 0.0
    %1683 = vmatpush1.msra.mxu0 0.0
    %1684 = vmatprep.subr.mxu0 0.0
    %1685 = vmatpush1.msra.mxu0 0.0
    %1686 = vmatprep.subr.mxu0 0.0
    %1687 = vmatpush1.msra.mxu0 0.0
    %1688 = vmatprep.subr.mxu0 0.0
    %1689 = vmatpush1.msra.mxu0 0.0
    %1690 = vmatprep.subr.mxu0 0.0
    %1691 = vmatpush1.msra.mxu0 0.0
    %1692 = vmatprep.subr.mxu0 0.0
    %1693 = vmatpush1.msra.mxu0 0.0
    %1694 = vmatprep.subr.mxu0 0.0
    %1695 = vmatpush1.msra.mxu0 0.0
    %1696 = vmatprep.subr.mxu0 0.0
    %1697 = vmatpush1.msra.mxu0 0.0
    %1698 = vmatprep.subr.mxu0 0.0
    %1699 = vmatpush1.msra.mxu0 0.0
    %1700 = vmatprep.subr.mxu0 0.0
    %1701 = vmatpush1.msra.mxu0 0.0
    %1702 = vmatprep.subr.mxu0 0.0
    %1703 = vmatpush1.msra.mxu0 0.0
    %1704 = vmatprep.subr.mxu0 0.0
    %1705 = vmatpush1.msra.mxu0 0.0
    %1706 = vmatprep.subr.mxu0 0.0
    %1707 = vmatpush1.msra.mxu0 0.0
    %1708 = vmatprep.subr.mxu0 0.0
    %1709 = vmatpush1.msra.mxu0 0.0
    %1710 = vmatprep.subr.mxu0 0.0
    %1711 = vmatpush1.msra.mxu0 0.0
    %1712 = vmatprep.subr.mxu0 0.0
    %1713 = vmatpush1.msra.mxu0 0.0
    %1714 = vmatprep.subr.mxu0 0.0
    %1715 = vmatpush1.msra.mxu0 0.0
    %1716 = vmatprep.subr.mxu0 0.0
    %1717 = vmatpush1.msra.mxu0 0.0
    %1718 = vmatprep.subr.mxu0 0.0
    %1719 = vmatpush1.msra.mxu0 0.0
    %1720 = vmatprep.subr.mxu0 0.0
    %1721 = vmatpush1.msra.mxu0 0.0
    %1722 = vmatprep.subr.mxu0 0.0
    %1723 = vmatpush1.msra.mxu0 0.0
    %1724 = vmatprep.subr.mxu0 0.0
    %1725 = vmatpush1.msra.mxu0 0.0
    %1726 = vmatprep.subr.mxu0 0.0
    %1727 = vmatpush1.msra.mxu0 0.0
    %1728 = vmatprep.subr.mxu0 0.0
    %1729 = vmatpush1.msra.mxu0 0.0
    %1730 = vmatprep.mubr.f32.mxu0 0.0
    %v1731 = vand.u32 %v1583, 4294901760
    %1732 = vmatmul.mubr.f32.gmra.mrb[0].mxu0 %v1731
    %v1733 = vpop.f32.mrb[0].mxu0
    %v1734 = vadd.f32 %v1658, %v1733
    %v1735 = vpop.f32.mrb[0].mxu0
    %1736 = vdwg.mxu0
    %1737 = vmatprep.subr.mxu0 0.0
    %v1738 = vand.u32 %v33, 4294901760
    %v1739 = vsub.f32 %v33, %v1738
    %1740 = vmatpush1.msra.mxu0 %v1739
    %1741 = vmatprep.subr.mxu0 0.0
    %1742 = vmatpush1.msra.mxu0 0.0
    %1743 = vmatprep.subr.mxu0 0.0
    %1744 = vmatpush1.msra.mxu0 0.0
    %1745 = vmatprep.subr.mxu0 0.0
    %1746 = vmatpush1.msra.mxu0 0.0
    %1747 = vmatprep.subr.mxu0 0.0
    %1748 = vmatpush1.msra.mxu0 0.0
    %1749 = vmatprep.subr.mxu0 0.0
    %1750 = vmatpush1.msra.mxu0 0.0
    %1751 = vmatprep.subr.mxu0 0.0
    %1752 = vmatpush1.msra.mxu0 0.0
    %1753 = vmatprep.subr.mxu0 0.0
    %1754 = vmatpush1.msra.mxu0 0.0
    %1755 = vmatprep.subr.mxu0 0.0
    %1756 = vmatpush1.msra.mxu0 0.0
    %1757 = vmatprep.subr.mxu0 0.0
    %1758 = vmatpush1.msra.mxu0 0.0
    %1759 = vmatprep.subr.mxu0 0.0
    %1760 = vmatpush1.msra.mxu0 0.0
    %1761 = vmatprep.subr.mxu0 0.0
    %1762 = vmatpush1.msra.mxu0 0.0
    %1763 = vmatprep.subr.mxu0 0.0
    %1764 = vmatpush1.msra.mxu0 0.0
    %1765 = vmatprep.subr.mxu0 0.0
    %1766 = vmatpush1.msra.mxu0 0.0
    %1767 = vmatprep.subr.mxu0 0.0
    %1768 = vmatpush1.msra.mxu0 0.0
    %1769 = vmatprep.subr.mxu0 0.0
    %1770 = vmatpush1.msra.mxu0 0.0
    %1771 = vmatprep.subr.mxu0 0.0
    %1772 = vmatpush1.msra.mxu0 0.0
    %1773 = vmatprep.subr.mxu0 0.0
    %1774 = vmatpush1.msra.mxu0 0.0
    %1775 = vmatprep.subr.mxu0 0.0
    %1776 = vmatpush1.msra.mxu0 0.0
    %1777 = vmatprep.subr.mxu0 0.0
    %1778 = vmatpush1.msra.mxu0 0.0
    %1779 = vmatprep.subr.mxu0 0.0
    %1780 = vmatpush1.msra.mxu0 0.0
    %1781 = vmatprep.subr.mxu0 0.0
    %1782 = vmatpush1.msra.mxu0 0.0
    %1783 = vmatprep.subr.mxu0 0.0
    %1784 = vmatpush1.msra.mxu0 0.0
    %1785 = vmatprep.subr.mxu0 0.0
    %1786 = vmatpush1.msra.mxu0 0.0
    %1787 = vmatprep.subr.mxu0 0.0
    %1788 = vmatpush1.msra.mxu0 0.0
    %1789 = vmatprep.subr.mxu0 0.0
    %1790 = vmatpush1.msra.mxu0 0.0
    %1791 = vmatprep.subr.mxu0 0.0
    %1792 = vmatpush1.msra.mxu0 0.0
    %1793 = vmatprep.subr.mxu0 0.0
    %1794 = vmatpush1.msra.mxu0 0.0
    %1795 = vmatprep.subr.mxu0 0.0
    %1796 = vmatpush1.msra.mxu0 0.0
    %1797 = vmatprep.subr.mxu0 0.0
    %1798 = vmatpush1.msra.mxu0 0.0
    %1799 = vmatprep.subr.mxu0 0.0
    %1800 = vmatpush1.msra.mxu0 0.0
    %1801 = vmatprep.subr.mxu0 0.0
    %1802 = vmatpush1.msra.mxu0 0.0
    %1803 = vmatprep.mubr.f32.mxu0 0.0
    %v1804 = vand.u32 %v1583, 4294901760
    %v1805 = vsub.f32 %v1583, %v1804
    %1806 = vmatmul.mubr.f32.gmra.mrb[0].mxu0 %v1805
    %v1807 = vpop.f32.mrb[0].mxu0
    %v1808 = vadd.f32 %v1734, %v1807
    %v1809 = vpop.f32.mrb[0].mxu0
    %1810 = vdwg.mxu0
    %1811 = vmatprep.subr.mxu0 0.0
    %v1812 = vand.u32 %v33, 4294901760
    %1813 = vmatpush1.msra.mxu0 %v1812
    %1814 = vmatprep.subr.mxu0 0.0
    %1815 = vmatpush1.msra.mxu0 0.0
    %1816 = vmatprep.subr.mxu0 0.0
    %1817 = vmatpush1.msra.mxu0 0.0
    %1818 = vmatprep.subr.mxu0 0.0
    %1819 = vmatpush1.msra.mxu0 0.0
    %1820 = vmatprep.subr.mxu0 0.0
    %1821 = vmatpush1.msra.mxu0 0.0
    %1822 = vmatprep.subr.mxu0 0.0
    %1823 = vmatpush1.msra.mxu0 0.0
    %1824 = vmatprep.subr.mxu0 0.0
    %1825 = vmatpush1.msra.mxu0 0.0
    %1826 = vmatprep.subr.mxu0 0.0
    %1827 = vmatpush1.msra.mxu0 0.0
    %1828 = vmatprep.subr.mxu0 0.0
    %1829 = vmatpush1.msra.mxu0 0.0
    %1830 = vmatprep.subr.mxu0 0.0
    %1831 = vmatpush1.msra.mxu0 0.0
    %1832 = vmatprep.subr.mxu0 0.0
    %1833 = vmatpush1.msra.mxu0 0.0
    %1834 = vmatprep.subr.mxu0 0.0
    %1835 = vmatpush1.msra.mxu0 0.0
    %1836 = vmatprep.subr.mxu0 0.0
    %1837 = vmatpush1.msra.mxu0 0.0
    %1838 = vmatprep.subr.mxu0 0.0
    %1839 = vmatpush1.msra.mxu0 0.0
    %1840 = vmatprep.subr.mxu0 0.0
    %1841 = vmatpush1.msra.mxu0 0.0
    %1842 = vmatprep.subr.mxu0 0.0
    %1843 = vmatpush1.msra.mxu0 0.0
    %1844 = vmatprep.subr.mxu0 0.0
    %1845 = vmatpush1.msra.mxu0 0.0
    %1846 = vmatprep.subr.mxu0 0.0
    %1847 = vmatpush1.msra.mxu0 0.0
    %1848 = vmatprep.subr.mxu0 0.0
    %1849 = vmatpush1.msra.mxu0 0.0
    %1850 = vmatprep.subr.mxu0 0.0
    %1851 = vmatpush1.msra.mxu0 0.0
    %1852 = vmatprep.subr.mxu0 0.0
    %1853 = vmatpush1.msra.mxu0 0.0
    %1854 = vmatprep.subr.mxu0 0.0
    %1855 = vmatpush1.msra.mxu0 0.0
    %1856 = vmatprep.subr.mxu0 0.0
    %1857 = vmatpush1.msra.mxu0 0.0
    %1858 = vmatprep.subr.mxu0 0.0
    %1859 = vmatpush1.msra.mxu0 0.0
    %1860 = vmatprep.subr.mxu0 0.0
    %1861 = vmatpush1.msra.mxu0 0.0
    %1862 = vmatprep.subr.mxu0 0.0
    %1863 = vmatpush1.msra.mxu0 0.0
    %1864 = vmatprep.subr.mxu0 0.0
    %1865 = vmatpush1.msra.mxu0 0.0
    %1866 = vmatprep.subr.mxu0 0.0
    %1867 = vmatpush1.msra.mxu0 0.0
    %1868 = vmatprep.subr.mxu0 0.0
    %1869 = vmatpush1.msra.mxu0 0.0
    %1870 = vmatprep.subr.mxu0 0.0
    %1871 = vmatpush1.msra.mxu0 0.0
    %1872 = vmatprep.subr.mxu0 0.0
    %1873 = vmatpush1.msra.mxu0 0.0
    %1874 = vmatprep.subr.mxu0 0.0
    %1875 = vmatpush1.msra.mxu0 0.0
    %1876 = vmatprep.mubr.f32.mxu0 0.0
    %v1877 = vand.u32 %v1583, 4294901760
    %v1878 = vsub.f32 %v1583, %v1877
    %v1879 = vand.u32 %v1878, 4294901760
    %1880 = vmatmul.mubr.f32.gmra.mrb[0].mxu0 %v1879
    %v1881 = vpop.f32.mrb[0].mxu0
    %v1882 = vadd.f32 %v1808, %v1881
    %v1883 = vpop.f32.mrb[0].mxu0
    %1884 = vdwg.mxu0
    %1885 = vmatprep.subr.mxu0 0.0
    %v1886 = vand.u32 %v33, 4294901760
    %v1887 = vsub.f32 %v33, %v1886
    %v1888 = vand.u32 %v1887, 4294901760
    %1889 = vmatpush1.msra.mxu0 %v1888
    %1890 = vmatprep.subr.mxu0 0.0
    %1891 = vmatpush1.msra.mxu0 0.0
    %1892 = vmatprep.subr.mxu0 0.0
    %1893 = vmatpush1.msra.mxu0 0.0
    %1894 = vmatprep.subr.mxu0 0.0
    %1895 = vmatpush1.msra.mxu0 0.0
    %1896 = vmatprep.subr.mxu0 0.0
    %1897 = vmatpush1.msra.mxu0 0.0
    %1898 = vmatprep.subr.mxu0 0.0
    %1899 = vmatpush1.msra.mxu0 0.0
    %1900 = vmatprep.subr.mxu0 0.0
    %1901 = vmatpush1.msra.mxu0 0.0
    %1902 = vmatprep.subr.mxu0 0.0
    %1903 = vmatpush1.msra.mxu0 0.0
    %1904 = vmatprep.subr.mxu0 0.0
    %1905 = vmatpush1.msra.mxu0 0.0
    %1906 = vmatprep.subr.mxu0 0.0
    %1907 = vmatpush1.msra.mxu0 0.0
    %1908 = vmatprep.subr.mxu0 0.0
    %1909 = vmatpush1.msra.mxu0 0.0
    %1910 = vmatprep.subr.mxu0 0.0
    %1911 = vmatpush1.msra.mxu0 0.0
    %1912 = vmatprep.subr.mxu0 0.0
    %1913 = vmatpush1.msra.mxu0 0.0
    %1914 = vmatprep.subr.mxu0 0.0
    %1915 = vmatpush1.msra.mxu0 0.0
    %1916 = vmatprep.subr.mxu0 0.0
    %1917 = vmatpush1.msra.mxu0 0.0
    %1918 = vmatprep.subr.mxu0 0.0
    %1919 = vmatpush1.msra.mxu0 0.0
    %1920 = vmatprep.subr.mxu0 0.0
    %1921 = vmatpush1.msra.mxu0 0.0
    %1922 = vmatprep.subr.mxu0 0.0
    %1923 = vmatpush1.msra.mxu0 0.0
    %1924 = vmatprep.subr.mxu0 0.0
    %1925 = vmatpush1.msra.mxu0 0.0
    %1926 = vmatprep.subr.mxu0 0.0
    %1927 = vmatpush1.msra.mxu0 0.0
    %1928 = vmatprep.subr.mxu0 0.0
    %1929 = vmatpush1.msra.mxu0 0.0
    %1930 = vmatprep.subr.mxu0 0.0
    %1931 = vmatpush1.msra.mxu0 0.0
    %1932 = vmatprep.subr.mxu0 0.0
    %1933 = vmatpush1.msra.mxu0 0.0
    %1934 = vmatprep.subr.mxu0 0.0
    %1935 = vmatpush1.msra.mxu0 0.0
    %1936 = vmatprep.subr.mxu0 0.0
    %1937 = vmatpush1.msra.mxu0 0.0
    %1938 = vmatprep.subr.mxu0 0.0
    %1939 = vmatpush1.msra.mxu0 0.0
    %1940 = vmatprep.subr.mxu0 0.0
    %1941 = vmatpush1.msra.mxu0 0.0
    %1942 = vmatprep.subr.mxu0 0.0
    %1943 = vmatpush1.msra.mxu0 0.0
    %1944 = vmatprep.subr.mxu0 0.0
    %1945 = vmatpush1.msra.mxu0 0.0
    %1946 = vmatprep.subr.mxu0 0.0
    %1947 = vmatpush1.msra.mxu0 0.0
    %1948 = vmatprep.subr.mxu0 0.0
    %1949 = vmatpush1.msra.mxu0 0.0
    %1950 = vmatprep.subr.mxu0 0.0
    %1951 = vmatpush1.msra.mxu0 0.0
    %1952 = vmatprep.mubr.f32.mxu0 0.0
    %v1953 = vand.u32 %v1583, 4294901760
    %1954 = vmatmul.mubr.f32.gmra.mrb[0].mxu0 %v1953
    %v1955 = vpop.f32.mrb[0].mxu0
    %v1956 = vadd.f32 %v1882, %v1955
    %v1957 = vpop.f32.mrb[0].mxu0
    %1958 = vdwg.mxu0
    %1959 = vmatprep.subr.mxu0 0.0
    %v1960 = vand.u32 %v33, 4294901760
    %1961 = vmatpush1.msra.mxu0 %v1960
    %1962 = vmatprep.subr.mxu0 0.0
    %1963 = vmatpush1.msra.mxu0 0.0
    %1964 = vmatprep.subr.mxu0 0.0
    %1965 = vmatpush1.msra.mxu0 0.0
    %1966 = vmatprep.subr.mxu0 0.0
    %1967 = vmatpush1.msra.mxu0 0.0
    %1968 = vmatprep.subr.mxu0 0.0
    %1969 = vmatpush1.msra.mxu0 0.0
    %1970 = vmatprep.subr.mxu0 0.0
    %1971 = vmatpush1.msra.mxu0 0.0
    %1972 = vmatprep.subr.mxu0 0.0
    %1973 = vmatpush1.msra.mxu0 0.0
    %1974 = vmatprep.subr.mxu0 0.0
    %1975 = vmatpush1.msra.mxu0 0.0
    %1976 = vmatprep.subr.mxu0 0.0
    %1977 = vmatpush1.msra.mxu0 0.0
    %1978 = vmatprep.subr.mxu0 0.0
    %1979 = vmatpush1.msra.mxu0 0.0
    %1980 = vmatprep.subr.mxu0 0.0
    %1981 = vmatpush1.msra.mxu0 0.0
    %1982 = vmatprep.subr.mxu0 0.0
    %1983 = vmatpush1.msra.mxu0 0.0
    %1984 = vmatprep.subr.mxu0 0.0
    %1985 = vmatpush1.msra.mxu0 0.0
    %1986 = vmatprep.subr.mxu0 0.0
    %1987 = vmatpush1.msra.mxu0 0.0
    %1988 = vmatprep.subr.mxu0 0.0
    %1989 = vmatpush1.msra.mxu0 0.0
    %1990 = vmatprep.subr.mxu0 0.0
    %1991 = vmatpush1.msra.mxu0 0.0
    %1992 = vmatprep.subr.mxu0 0.0
    %1993 = vmatpush1.msra.mxu0 0.0
    %1994 = vmatprep.subr.mxu0 0.0
    %1995 = vmatpush1.msra.mxu0 0.0
    %1996 = vmatprep.subr.mxu0 0.0
    %1997 = vmatpush1.msra.mxu0 0.0
    %1998 = vmatprep.subr.mxu0 0.0
    %1999 = vmatpush1.msra.mxu0 0.0
    %2000 = vmatprep.subr.mxu0 0.0
    %2001 = vmatpush1.msra.mxu0 0.0
    %2002 = vmatprep.subr.mxu0 0.0
    %2003 = vmatpush1.msra.mxu0 0.0
    %2004 = vmatprep.subr.mxu0 0.0
    %2005 = vmatpush1.msra.mxu0 0.0
    %2006 = vmatprep.subr.mxu0 0.0
    %2007 = vmatpush1.msra.mxu0 0.0
    %2008 = vmatprep.subr.mxu0 0.0
    %2009 = vmatpush1.msra.mxu0 0.0
    %2010 = vmatprep.subr.mxu0 0.0
    %2011 = vmatpush1.msra.mxu0 0.0
    %2012 = vmatprep.subr.mxu0 0.0
    %2013 = vmatpush1.msra.mxu0 0.0
    %2014 = vmatprep.subr.mxu0 0.0
    %2015 = vmatpush1.msra.mxu0 0.0
    %2016 = vmatprep.subr.mxu0 0.0
    %2017 = vmatpush1.msra.mxu0 0.0
    %2018 = vmatprep.subr.mxu0 0.0
    %2019 = vmatpush1.msra.mxu0 0.0
    %2020 = vmatprep.subr.mxu0 0.0
    %2021 = vmatpush1.msra.mxu0 0.0
    %2022 = vmatprep.subr.mxu0 0.0
    %2023 = vmatpush1.msra.mxu0 0.0
    %2024 = vmatprep.mubr.f32.mxu0 0.0
    %v2025 = vand.u32 %v1583, 4294901760
    %2026 = vmatmul.mubr.f32.gmra.mrb[0].mxu0 %v2025
    %v2027 = vpop.f32.mrb[0].mxu0
    %v2028 = vadd.f32 %v1956, %v2027
    %v2029 = vpop.f32.mrb[0].mxu0
    %2030 = vdwg.mxu0
    %v2031 = vadd.f32 %v1581, %v1546
    %v2032 = vlog2.pop %v2028
    %v2033 = vmul.f32 %v2032, 0.6931472
    %v2034 = vadd.f32 %v2031, %v2033
    %v2035 = vsel %vm69, %v2034, -inf
    %2036 = vmax.xlane.f32.xlu0 %v2035
    %v2037 = vpop.xlane.xlu0 %2036
    %v2038 = vsub.f32 %v2034, %v2037
    %v2039 = vmul.f32 %v2038, 1.442695
    %v2040 = vpow.pop %v2039
    %v2041 = vsel %vm69, %v2040, 0.0
    %2042 = vadd.xlane.f32.xlu0 %v2041
    %v2043 = vpop.xlane.xlu0 %2042
    %v2044 = vlog2.pop %v2043
    %v2045 = vmul.f32 %v2044, 0.6931472
    %v2046 = vadd.f32 %v2037, %v2045
    %vm2047 = vcmask 35872
    %2048 = vst.msk [vmem:[#allocation5] sm:$0xf] %vm2047, %v2046
    %s2049 = sld [smem:[#allocation2 + $0x280]]
    %s2050 = scalar_lea.vmem %s1, %s2049
    %v2051 = vld [vmem:[%s2050] sm:$0x1]
    %s2052 = sld [smem:[#allocation2 + $0x281]]
    %s2053 = scalar_lea.vmem %s1, %s2052
    %v2054 = vld [vmem:[%s2053] sm:$0x1]
    %s2055 = sld [smem:[#allocation2 + $0x282]]
    %s2056 = scalar_lea.vmem %s1, %s2055
    %v2057 = vld [vmem:[%s2056] sm:$0x1]
    %s2058 = sld [smem:[#allocation2 + $0x283]]
    %s2059 = scalar_lea.vmem %s1, %s2058
    %v2060 = vld [vmem:[%s2059] sm:$0x1]
    %v2062 = vrot.slane %v2054, 7
    %v2065 = vrot.slane %v2057, 6
    %v2068 = vrot.slane %v2060, 5
    %v2070 = vsel %vm56, %v2051, %v2062
    %v2071 = vsel %vm58, %v2070, %v2065
    %v2072 = vsel %vm60, %v2071, %v2068
    %v2074 = vsel %vm108, %v2040, 0
    %2076 = vmatprep.subr.mxu0 0.0
    %v2077 = vand.u32 %v33, 4294901760
    %2078 = vmatpush1.msra.mxu0 %v2077
    %2079 = vmatprep.subr.mxu0 0.0
    %2080 = vmatpush1.msra.mxu0 0.0
    %2081 = vmatprep.subr.mxu0 0.0
    %2082 = vmatpush1.msra.mxu0 0.0
    %2083 = vmatprep.subr.mxu0 0.0
    %2084 = vmatpush1.msra.mxu0 0.0
    %2085 = vmatprep.subr.mxu0 0.0
    %2086 = vmatpush1.msra.mxu0 0.0
    %2087 = vmatprep.subr.mxu0 0.0
    %2088 = vmatpush1.msra.mxu0 0.0
    %2089 = vmatprep.subr.mxu0 0.0
    %2090 = vmatpush1.msra.mxu0 0.0
    %2091 = vmatprep.subr.mxu0 0.0
    %2092 = vmatpush1.msra.mxu0 0.0
    %2093 = vmatprep.subr.mxu0 0.0
    %2094 = vmatpush1.msra.mxu0 0.0
    %2095 = vmatprep.subr.mxu0 0.0
    %2096 = vmatpush1.msra.mxu0 0.0
    %2097 = vmatprep.subr.mxu0 0.0
    %2098 = vmatpush1.msra.mxu0 0.0
    %2099 = vmatprep.subr.mxu0 0.0
    %2100 = vmatpush1.msra.mxu0 0.0
    %2101 = vmatprep.subr.mxu0 0.0
    %2102 = vmatpush1.msra.mxu0 0.0
    %2103 = vmatprep.subr.mxu0 0.0
    %2104 = vmatpush1.msra.mxu0 0.0
    %2105 = vmatprep.subr.mxu0 0.0
    %2106 = vmatpush1.msra.mxu0 0.0
    %2107 = vmatprep.subr.mxu0 0.0
    %2108 = vmatpush1.msra.mxu0 0.0
    %2109 = vmatprep.subr.mxu0 0.0
    %2110 = vmatpush1.msra.mxu0 0.0
    %2111 = vmatprep.subr.mxu0 0.0
    %2112 = vmatpush1.msra.mxu0 0.0
    %2113 = vmatprep.subr.mxu0 0.0
    %2114 = vmatpush1.msra.mxu0 0.0
    %2115 = vmatprep.subr.mxu0 0.0
    %2116 = vmatpush1.msra.mxu0 0.0
    %2117 = vmatprep.subr.mxu0 0.0
    %2118 = vmatpush1.msra.mxu0 0.0
    %2119 = vmatprep.subr.mxu0 0.0
    %2120 = vmatpush1.msra.mxu0 0.0
    %2121 = vmatprep.subr.mxu0 0.0
    %2122 = vmatpush1.msra.mxu0 0.0
    %2123 = vmatprep.subr.mxu0 0.0
    %2124 = vmatpush1.msra.mxu0 0.0
    %2125 = vmatprep.subr.mxu0 0.0
    %2126 = vmatpush1.msra.mxu0 0.0
    %2127 = vmatprep.subr.mxu0 0.0
    %2128 = vmatpush1.msra.mxu0 0.0
    %2129 = vmatprep.subr.mxu0 0.0
    %2130 = vmatpush1.msra.mxu0 0.0
    %2131 = vmatprep.subr.mxu0 0.0
    %2132 = vmatpush1.msra.mxu0 0.0
    %2133 = vmatprep.subr.mxu0 0.0
    %2134 = vmatpush1.msra.mxu0 0.0
    %2135 = vmatprep.subr.mxu0 0.0
    %2136 = vmatpush1.msra.mxu0 0.0
    %2137 = vmatprep.subr.mxu0 0.0
    %2138 = vmatpush1.msra.mxu0 0.0
    %2139 = vmatprep.subr.mxu0 0.0
    %2140 = vmatpush1.msra.mxu0 0.0
    %2141 = vmatprep.mubr.f32.mxu0 0.0
    %v2142 = vand.u32 %v2074, 4294901760
    %v2143 = vsub.f32 %v2074, %v2142
    %v2144 = vand.u32 %v2143, 4294901760
    %v2145 = vsub.f32 %v2143, %v2144
    %v2146 = vand.u32 %v2145, 4294901760
    %2147 = vmatmul.mubr.f32.gmra.mrb[0].mxu0 %v2146
    %v2148 = vpop.f32.mrb[0].mxu0
    %v2149 = vadd.f32 0.0, %v2148
    %v2150 = vpop.f32.mrb[0].mxu0
    %2151 = vdwg.mxu0
    %2152 = vmatprep.subr.mxu0 0.0
    %v2153 = vand.u32 %v33, 4294901760
    %v2154 = vsub.f32 %v33, %v2153
    %v2155 = vand.u32 %v2154, 4294901760
    %v2156 = vsub.f32 %v2154, %v2155
    %v2157 = vand.u32 %v2156, 4294901760
    %2158 = vmatpush1.msra.mxu0 %v2157
    %2159 = vmatprep.subr.mxu0 0.0
    %2160 = vmatpush1.msra.mxu0 0.0
    %2161 = vmatprep.subr.mxu0 0.0
    %2162 = vmatpush1.msra.mxu0 0.0
    %2163 = vmatprep.subr.mxu0 0.0
    %2164 = vmatpush1.msra.mxu0 0.0
    %2165 = vmatprep.subr.mxu0 0.0
    %2166 = vmatpush1.msra.mxu0 0.0
    %2167 = vmatprep.subr.mxu0 0.0
    %2168 = vmatpush1.msra.mxu0 0.0
    %2169 = vmatprep.subr.mxu0 0.0
    %2170 = vmatpush1.msra.mxu0 0.0
    %2171 = vmatprep.subr.mxu0 0.0
    %2172 = vmatpush1.msra.mxu0 0.0
    %2173 = vmatprep.subr.mxu0 0.0
    %2174 = vmatpush1.msra.mxu0 0.0
    %2175 = vmatprep.subr.mxu0 0.0
    %2176 = vmatpush1.msra.mxu0 0.0
    %2177 = vmatprep.subr.mxu0 0.0
    %2178 = vmatpush1.msra.mxu0 0.0
    %2179 = vmatprep.subr.mxu0 0.0
    %2180 = vmatpush1.msra.mxu0 0.0
    %2181 = vmatprep.subr.mxu0 0.0
    %2182 = vmatpush1.msra.mxu0 0.0
    %2183 = vmatprep.subr.mxu0 0.0
    %2184 = vmatpush1.msra.mxu0 0.0
    %2185 = vmatprep.subr.mxu0 0.0
    %2186 = vmatpush1.msra.mxu0 0.0
    %2187 = vmatprep.subr.mxu0 0.0
    %2188 = vmatpush1.msra.mxu0 0.0
    %2189 = vmatprep.subr.mxu0 0.0
    %2190 = vmatpush1.msra.mxu0 0.0
    %2191 = vmatprep.subr.mxu0 0.0
    %2192 = vmatpush1.msra.mxu0 0.0
    %2193 = vmatprep.subr.mxu0 0.0
    %2194 = vmatpush1.msra.mxu0 0.0
    %2195 = vmatprep.subr.mxu0 0.0
    %2196 = vmatpush1.msra.mxu0 0.0
    %2197 = vmatprep.subr.mxu0 0.0
    %2198 = vmatpush1.msra.mxu0 0.0
    %2199 = vmatprep.subr.mxu0 0.0
    %2200 = vmatpush1.msra.mxu0 0.0
    %2201 = vmatprep.subr.mxu0 0.0
    %2202 = vmatpush1.msra.mxu0 0.0
    %2203 = vmatprep.subr.mxu0 0.0
    %2204 = vmatpush1.msra.mxu0 0.0
    %2205 = vmatprep.subr.mxu0 0.0
    %2206 = vmatpush1.msra.mxu0 0.0
    %2207 = vmatprep.subr.mxu0 0.0
    %2208 = vmatpush1.msra.mxu0 0.0
    %2209 = vmatprep.subr.mxu0 0.0
    %2210 = vmatpush1.msra.mxu0 0.0
    %2211 = vmatprep.subr.mxu0 0.0
    %2212 = vmatpush1.msra.mxu0 0.0
    %2213 = vmatprep.subr.mxu0 0.0
    %2214 = vmatpush1.msra.mxu0 0.0
    %2215 = vmatprep.subr.mxu0 0.0
    %2216 = vmatpush1.msra.mxu0 0.0
    %2217 = vmatprep.subr.mxu0 0.0
    %2218 = vmatpush1.msra.mxu0 0.0
    %2219 = vmatprep.subr.mxu0 0.0
    %2220 = vmatpush1.msra.mxu0 0.0
    %2221 = vmatprep.mubr.f32.mxu0 0.0
    %v2222 = vand.u32 %v2074, 4294901760
    %2223 = vmatmul.mubr.f32.gmra.mrb[0].mxu0 %v2222
    %v2224 = vpop.f32.mrb[0].mxu0
    %v2225 = vadd.f32 %v2149, %v2224
    %v2226 = vpop.f32.mrb[0].mxu0
    %2227 = vdwg.mxu0
    %2228 = vmatprep.subr.mxu0 0.0
    %v2229 = vand.u32 %v33, 4294901760
    %v2230 = vsub.f32 %v33, %v2229
    %2231 = vmatpush1.msra.mxu0 %v2230
    %2232 = vmatprep.subr.mxu0 0.0
    %2233 = vmatpush1.msra.mxu0 0.0
    %2234 = vmatprep.subr.mxu0 0.0
    %2235 = vmatpush1.msra.mxu0 0.0
    %2236 = vmatprep.subr.mxu0 0.0
    %2237 = vmatpush1.msra.mxu0 0.0
    %2238 = vmatprep.subr.mxu0 0.0
    %2239 = vmatpush1.msra.mxu0 0.0
    %2240 = vmatprep.subr.mxu0 0.0
    %2241 = vmatpush1.msra.mxu0 0.0
    %2242 = vmatprep.subr.mxu0 0.0
    %2243 = vmatpush1.msra.mxu0 0.0
    %2244 = vmatprep.subr.mxu0 0.0
    %2245 = vmatpush1.msra.mxu0 0.0
    %2246 = vmatprep.subr.mxu0 0.0
    %2247 = vmatpush1.msra.mxu0 0.0
    %2248 = vmatprep.subr.mxu0 0.0
    %2249 = vmatpush1.msra.mxu0 0.0
    %2250 = vmatprep.subr.mxu0 0.0
    %2251 = vmatpush1.msra.mxu0 0.0
    %2252 = vmatprep.subr.mxu0 0.0
    %2253 = vmatpush1.msra.mxu0 0.0
    %2254 = vmatprep.subr.mxu0 0.0
    %2255 = vmatpush1.msra.mxu0 0.0
    %2256 = vmatprep.subr.mxu0 0.0
    %2257 = vmatpush1.msra.mxu0 0.0
    %2258 = vmatprep.subr.mxu0 0.0
    %2259 = vmatpush1.msra.mxu0 0.0
    %2260 = vmatprep.subr.mxu0 0.0
    %2261 = vmatpush1.msra.mxu0 0.0
    %2262 = vmatprep.subr.mxu0 0.0
    %2263 = vmatpush1.msra.mxu0 0.0
    %2264 = vmatprep.subr.mxu0 0.0
    %2265 = vmatpush1.msra.mxu0 0.0
    %2266 = vmatprep.subr.mxu0 0.0
    %2267 = vmatpush1.msra.mxu0 0.0
    %2268 = vmatprep.subr.mxu0 0.0
    %2269 = vmatpush1.msra.mxu0 0.0
    %2270 = vmatprep.subr.mxu0 0.0
    %2271 = vmatpush1.msra.mxu0 0.0
    %2272 = vmatprep.subr.mxu0 0.0
    %2273 = vmatpush1.msra.mxu0 0.0
    %2274 = vmatprep.subr.mxu0 0.0
    %2275 = vmatpush1.msra.mxu0 0.0
    %2276 = vmatprep.subr.mxu0 0.0
    %2277 = vmatpush1.msra.mxu0 0.0
    %2278 = vmatprep.subr.mxu0 0.0
    %2279 = vmatpush1.msra.mxu0 0.0
    %2280 = vmatprep.subr.mxu0 0.0
    %2281 = vmatpush1.msra.mxu0 0.0
    %2282 = vmatprep.subr.mxu0 0.0
    %2283 = vmatpush1.msra.mxu0 0.0
    %2284 = vmatprep.subr.mxu0 0.0
    %2285 = vmatpush1.msra.mxu0 0.0
    %2286 = vmatprep.subr.mxu0 0.0
    %2287 = vmatpush1.msra.mxu0 0.0
    %2288 = vmatprep.subr.mxu0 0.0
    %2289 = vmatpush1.msra.mxu0 0.0
    %2290 = vmatprep.subr.mxu0 0.0
    %2291 = vmatpush1.msra.mxu0 0.0
    %2292 = vmatprep.subr.mxu0 0.0
    %2293 = vmatpush1.msra.mxu0 0.0
    %2294 = vmatprep.mubr.f32.mxu0 0.0
    %v2295 = vand.u32 %v2074, 4294901760
    %v2296 = vsub.f32 %v2074, %v2295
    %2297 = vmatmul.mubr.f32.gmra.mrb[0].mxu0 %v2296
    %v2298 = vpop.f32.mrb[0].mxu0
    %v2299 = vadd.f32 %v2225, %v2298
    %v2300 = vpop.f32.mrb[0].mxu0
    %2301 = vdwg.mxu0
    %2302 = vmatprep.subr.mxu0 0.0
    %v2303 = vand.u32 %v33, 4294901760
    %2304 = vmatpush1.msra.mxu0 %v2303
    %2305 = vmatprep.subr.mxu0 0.0
    %2306 = vmatpush1.msra.mxu0 0.0
    %2307 = vmatprep.subr.mxu0 0.0
    %2308 = vmatpush1.msra.mxu0 0.0
    %2309 = vmatprep.subr.mxu0 0.0
    %2310 = vmatpush1.msra.mxu0 0.0
    %2311 = vmatprep.subr.mxu0 0.0
    %2312 = vmatpush1.msra.mxu0 0.0
    %2313 = vmatprep.subr.mxu0 0.0
    %2314 = vmatpush1.msra.mxu0 0.0
    %2315 = vmatprep.subr.mxu0 0.0
    %2316 = vmatpush1.msra.mxu0 0.0
    %2317 = vmatprep.subr.mxu0 0.0
    %2318 = vmatpush1.msra.mxu0 0.0
    %2319 = vmatprep.subr.mxu0 0.0
    %2320 = vmatpush1.msra.mxu0 0.0
    %2321 = vmatprep.subr.mxu0 0.0
    %2322 = vmatpush1.msra.mxu0 0.0
    %2323 = vmatprep.subr.mxu0 0.0
    %2324 = vmatpush1.msra.mxu0 0.0
    %2325 = vmatprep.subr.mxu0 0.0
    %2326 = vmatpush1.msra.mxu0 0.0
    %2327 = vmatprep.subr.mxu0 0.0
    %2328 = vmatpush1.msra.mxu0 0.0
    %2329 = vmatprep.subr.mxu0 0.0
    %2330 = vmatpush1.msra.mxu0 0.0
    %2331 = vmatprep.subr.mxu0 0.0
    %2332 = vmatpush1.msra.mxu0 0.0
    %2333 = vmatprep.subr.mxu0 0.0
    %2334 = vmatpush1.msra.mxu0 0.0
    %2335 = vmatprep.subr.mxu0 0.0
    %2336 = vmatpush1.msra.mxu0 0.0
    %2337 = vmatprep.subr.mxu0 0.0
    %2338 = vmatpush1.msra.mxu0 0.0
    %2339 = vmatprep.subr.mxu0 0.0
    %2340 = vmatpush1.msra.mxu0 0.0
    %2341 = vmatprep.subr.mxu0 0.0
    %2342 = vmatpush1.msra.mxu0 0.0
    %2343 = vmatprep.subr.mxu0 0.0
    %2344 = vmatpush1.msra.mxu0 0.0
    %2345 = vmatprep.subr.mxu0 0.0
    %2346 = vmatpush1.msra.mxu0 0.0
    %2347 = vmatprep.subr.mxu0 0.0
    %2348 = vmatpush1.msra.mxu0 0.0
    %2349 = vmatprep.subr.mxu0 0.0
    %2350 = vmatpush1.msra.mxu0 0.0
    %2351 = vmatprep.subr.mxu0 0.0
    %2352 = vmatpush1.msra.mxu0 0.0
    %2353 = vmatprep.subr.mxu0 0.0
    %2354 = vmatpush1.msra.mxu0 0.0
    %2355 = vmatprep.subr.mxu0 0.0
    %2356 = vmatpush1.msra.mxu0 0.0
    %2357 = vmatprep.subr.mxu0 0.0
    %2358 = vmatpush1.msra.mxu0 0.0
    %2359 = vmatprep.subr.mxu0 0.0
    %2360 = vmatpush1.msra.mxu0 0.0
    %2361 = vmatprep.subr.mxu0 0.0
    %2362 = vmatpush1.msra.mxu0 0.0
    %2363 = vmatprep.subr.mxu0 0.0
    %2364 = vmatpush1.msra.mxu0 0.0
    %2365 = vmatprep.subr.mxu0 0.0
    %2366 = vmatpush1.msra.mxu0 0.0
    %2367 = vmatprep.mubr.f32.mxu0 0.0
    %v2368 = vand.u32 %v2074, 4294901760
    %v2369 = vsub.f32 %v2074, %v2368
    %v2370 = vand.u32 %v2369, 4294901760
    %2371 = vmatmul.mubr.f32.gmra.mrb[0].mxu0 %v2370
    %v2372 = vpop.f32.mrb[0].mxu0
    %v2373 = vadd.f32 %v2299, %v2372
    %v2374 = vpop.f32.mrb[0].mxu0
    %2375 = vdwg.mxu0
    %2376 = vmatprep.subr.mxu0 0.0
    %v2377 = vand.u32 %v33, 4294901760
    %v2378 = vsub.f32 %v33, %v2377
    %v2379 = vand.u32 %v2378, 4294901760
    %2380 = vmatpush1.msra.mxu0 %v2379
    %2381 = vmatprep.subr.mxu0 0.0
    %2382 = vmatpush1.msra.mxu0 0.0
    %2383 = vmatprep.subr.mxu0 0.0
    %2384 = vmatpush1.msra.mxu0 0.0
    %2385 = vmatprep.subr.mxu0 0.0
    %2386 = vmatpush1.msra.mxu0 0.0
    %2387 = vmatprep.subr.mxu0 0.0
    %2388 = vmatpush1.msra.mxu0 0.0
    %2389 = vmatprep.subr.mxu0 0.0
    %2390 = vmatpush1.msra.mxu0 0.0
    %2391 = vmatprep.subr.mxu0 0.0
    %2392 = vmatpush1.msra.mxu0 0.0
    %2393 = vmatprep.subr.mxu0 0.0
    %2394 = vmatpush1.msra.mxu0 0.0
    %2395 = vmatprep.subr.mxu0 0.0
    %2396 = vmatpush1.msra.mxu0 0.0
    %2397 = vmatprep.subr.mxu0 0.0
    %2398 = vmatpush1.msra.mxu0 0.0
    %2399 = vmatprep.subr.mxu0 0.0
    %2400 = vmatpush1.msra.mxu0 0.0
    %2401 = vmatprep.subr.mxu0 0.0
    %2402 = vmatpush1.msra.mxu0 0.0
    %2403 = vmatprep.subr.mxu0 0.0
    %2404 = vmatpush1.msra.mxu0 0.0
    %2405 = vmatprep.subr.mxu0 0.0
    %2406 = vmatpush1.msra.mxu0 0.0
    %2407 = vmatprep.subr.mxu0 0.0
    %2408 = vmatpush1.msra.mxu0 0.0
    %2409 = vmatprep.subr.mxu0 0.0
    %2410 = vmatpush1.msra.mxu0 0.0
    %2411 = vmatprep.subr.mxu0 0.0
    %2412 = vmatpush1.msra.mxu0 0.0
    %2413 = vmatprep.subr.mxu0 0.0
    %2414 = vmatpush1.msra.mxu0 0.0
    %2415 = vmatprep.subr.mxu0 0.0
    %2416 = vmatpush1.msra.mxu0 0.0
    %2417 = vmatprep.subr.mxu0 0.0
    %2418 = vmatpush1.msra.mxu0 0.0
    %2419 = vmatprep.subr.mxu0 0.0
    %2420 = vmatpush1.msra.mxu0 0.0
    %2421 = vmatprep.subr.mxu0 0.0
    %2422 = vmatpush1.msra.mxu0 0.0
    %2423 = vmatprep.subr.mxu0 0.0
    %2424 = vmatpush1.msra.mxu0 0.0
    %2425 = vmatprep.subr.mxu0 0.0
    %2426 = vmatpush1.msra.mxu0 0.0
    %2427 = vmatprep.subr.mxu0 0.0
    %2428 = vmatpush1.msra.mxu0 0.0
    %2429 = vmatprep.subr.mxu0 0.0
    %2430 = vmatpush1.msra.mxu0 0.0
    %2431 = vmatprep.subr.mxu0 0.0
    %2432 = vmatpush1.msra.mxu0 0.0
    %2433 = vmatprep.subr.mxu0 0.0
    %2434 = vmatpush1.msra.mxu0 0.0
    %2435 = vmatprep.subr.mxu0 0.0
    %2436 = vmatpush1.msra.mxu0 0.0
    %2437 = vmatprep.subr.mxu0 0.0
    %2438 = vmatpush1.msra.mxu0 0.0
    %2439 = vmatprep.subr.mxu0 0.0
    %2440 = vmatpush1.msra.mxu0 0.0
    %2441 = vmatprep.subr.mxu0 0.0
    %2442 = vmatpush1.msra.mxu0 0.0
    %2443 = vmatprep.mubr.f32.mxu0 0.0
    %v2444 = vand.u32 %v2074, 4294901760
    %2445 = vmatmul.mubr.f32.gmra.mrb[0].mxu0 %v2444
    %v2446 = vpop.f32.mrb[0].mxu0
    %v2447 = vadd.f32 %v2373, %v2446
    %v2448 = vpop.f32.mrb[0].mxu0
    %2449 = vdwg.mxu0
    %2450 = vmatprep.subr.mxu0 0.0
    %v2451 = vand.u32 %v33, 4294901760
    %2452 = vmatpush1.msra.mxu0 %v2451
    %2453 = vmatprep.subr.mxu0 0.0
    %2454 = vmatpush1.msra.mxu0 0.0
    %2455 = vmatprep.subr.mxu0 0.0
    %2456 = vmatpush1.msra.mxu0 0.0
    %2457 = vmatprep.subr.mxu0 0.0
    %2458 = vmatpush1.msra.mxu0 0.0
    %2459 = vmatprep.subr.mxu0 0.0
    %2460 = vmatpush1.msra.mxu0 0.0
    %2461 = vmatprep.subr.mxu0 0.0
    %2462 = vmatpush1.msra.mxu0 0.0
    %2463 = vmatprep.subr.mxu0 0.0
    %2464 = vmatpush1.msra.mxu0 0.0
    %2465 = vmatprep.subr.mxu0 0.0
    %2466 = vmatpush1.msra.mxu0 0.0
    %2467 = vmatprep.subr.mxu0 0.0
    %2468 = vmatpush1.msra.mxu0 0.0
    %2469 = vmatprep.subr.mxu0 0.0
    %2470 = vmatpush1.msra.mxu0 0.0
    %2471 = vmatprep.subr.mxu0 0.0
    %2472 = vmatpush1.msra.mxu0 0.0
    %2473 = vmatprep.subr.mxu0 0.0
    %2474 = vmatpush1.msra.mxu0 0.0
    %2475 = vmatprep.subr.mxu0 0.0
    %2476 = vmatpush1.msra.mxu0 0.0
    %2477 = vmatprep.subr.mxu0 0.0
    %2478 = vmatpush1.msra.mxu0 0.0
    %2479 = vmatprep.subr.mxu0 0.0
    %2480 = vmatpush1.msra.mxu0 0.0
    %2481 = vmatprep.subr.mxu0 0.0
    %2482 = vmatpush1.msra.mxu0 0.0
    %2483 = vmatprep.subr.mxu0 0.0
    %2484 = vmatpush1.msra.mxu0 0.0
    %2485 = vmatprep.subr.mxu0 0.0
    %2486 = vmatpush1.msra.mxu0 0.0
    %2487 = vmatprep.subr.mxu0 0.0
    %2488 = vmatpush1.msra.mxu0 0.0
    %2489 = vmatprep.subr.mxu0 0.0
    %2490 = vmatpush1.msra.mxu0 0.0
    %2491 = vmatprep.subr.mxu0 0.0
    %2492 = vmatpush1.msra.mxu0 0.0
    %2493 = vmatprep.subr.mxu0 0.0
    %2494 = vmatpush1.msra.mxu0 0.0
    %2495 = vmatprep.subr.mxu0 0.0
    %2496 = vmatpush1.msra.mxu0 0.0
    %2497 = vmatprep.subr.mxu0 0.0
    %2498 = vmatpush1.msra.mxu0 0.0
    %2499 = vmatprep.subr.mxu0 0.0
    %2500 = vmatpush1.msra.mxu0 0.0
    %2501 = vmatprep.subr.mxu0 0.0
    %2502 = vmatpush1.msra.mxu0 0.0
    %2503 = vmatprep.subr.mxu0 0.0
    %2504 = vmatpush1.msra.mxu0 0.0
    %2505 = vmatprep.subr.mxu0 0.0
    %2506 = vmatpush1.msra.mxu0 0.0
    %2507 = vmatprep.subr.mxu0 0.0
    %2508 = vmatpush1.msra.mxu0 0.0
    %2509 = vmatprep.subr.mxu0 0.0
    %2510 = vmatpush1.msra.mxu0 0.0
    %2511 = vmatprep.subr.mxu0 0.0
    %2512 = vmatpush1.msra.mxu0 0.0
    %2513 = vmatprep.subr.mxu0 0.0
    %2514 = vmatpush1.msra.mxu0 0.0
    %2515 = vmatprep.mubr.f32.mxu0 0.0
    %v2516 = vand.u32 %v2074, 4294901760
    %2517 = vmatmul.mubr.f32.gmra.mrb[0].mxu0 %v2516
    %v2518 = vpop.f32.mrb[0].mxu0
    %v2519 = vadd.f32 %v2447, %v2518
    %v2520 = vpop.f32.mrb[0].mxu0
    %2521 = vdwg.mxu0
    %v2522 = vadd.f32 %v2072, %v2037
    %v2523 = vlog2.pop %v2519
    %v2524 = vmul.f32 %v2523, 0.6931472
    %v2525 = vadd.f32 %v2522, %v2524
    %v2526 = vsel %vm69, %v2525, -inf
    %2527 = vmax.xlane.f32.xlu0 %v2526
    %v2528 = vpop.xlane.xlu0 %2527
    %v2529 = vsub.f32 %v2525, %v2528
    %v2530 = vmul.f32 %v2529, 1.442695
    %v2531 = vpow.pop %v2530
    %v2532 = vsel %vm69, %v2531, 0.0
    %2533 = vadd.xlane.f32.xlu0 %v2532
    %v2534 = vpop.xlane.xlu0 %2533
    %v2535 = vlog2.pop %v2534
    %v2536 = vmul.f32 %v2535, 0.6931472
    %v2537 = vadd.f32 %v2528, %v2536
    %vm2538 = vcmask 44072
    %2539 = vst.msk [vmem:[#allocation5] sm:$0xf] %vm2538, %v2537
    %s2540 = sld [smem:[#allocation2 + $0x300]]
    %s2541 = scalar_lea.vmem %s1, %s2540
    %v2542 = vld [vmem:[%s2541] sm:$0x1]
    %s2543 = sld [smem:[#allocation2 + $0x301]]
    %s2544 = scalar_lea.vmem %s1, %s2543
    %v2545 = vld [vmem:[%s2544] sm:$0x1]
    %s2546 = sld [smem:[#allocation2 + $0x302]]
    %s2547 = scalar_lea.vmem %s1, %s2546
    %v2548 = vld [vmem:[%s2547] sm:$0x1]
    %s2549 = sld [smem:[#allocation2 + $0x303]]
    %s2550 = scalar_lea.vmem %s1, %s2549
    %v2551 = vld [vmem:[%s2550] sm:$0x1]
    %v2553 = vrot.slane %v2545, 7
    %v2556 = vrot.slane %v2548, 6
    %v2559 = vrot.slane %v2551, 5
    %v2561 = vsel %vm56, %v2542, %v2553
    %v2562 = vsel %vm58, %v2561, %v2556
    %v2563 = vsel %vm60, %v2562, %v2559
    %v2565 = vsel %vm108, %v2531, 0
    %2567 = vmatprep.subr.mxu0 0.0
    %v2568 = vand.u32 %v33, 4294901760
    %2569 = vmatpush1.msra.mxu0 %v2568
    %2570 = vmatprep.subr.mxu0 0.0
    %2571 = vmatpush1.msra.mxu0 0.0
    %2572 = vmatprep.subr.mxu0 0.0
    %2573 = vmatpush1.msra.mxu0 0.0
    %2574 = vmatprep.subr.mxu0 0.0
    %2575 = vmatpush1.msra.mxu0 0.0
    %2576 = vmatprep.subr.mxu0 0.0
    %2577 = vmatpush1.msra.mxu0 0.0
    %2578 = vmatprep.subr.mxu0 0.0
    %2579 = vmatpush1.msra.mxu0 0.0
    %2580 = vmatprep.subr.mxu0 0.0
    %2581 = vmatpush1.msra.mxu0 0.0
    %2582 = vmatprep.subr.mxu0 0.0
    %2583 = vmatpush1.msra.mxu0 0.0
    %2584 = vmatprep.subr.mxu0 0.0
    %2585 = vmatpush1.msra.mxu0 0.0
    %2586 = vmatprep.subr.mxu0 0.0
    %2587 = vmatpush1.msra.mxu0 0.0
    %2588 = vmatprep.subr.mxu0 0.0
    %2589 = vmatpush1.msra.mxu0 0.0
    %2590 = vmatprep.subr.mxu0 0.0
    %2591 = vmatpush1.msra.mxu0 0.0
    %2592 = vmatprep.subr.mxu0 0.0
    %2593 = vmatpush1.msra.mxu0 0.0
    %2594 = vmatprep.subr.mxu0 0.0
    %2595 = vmatpush1.msra.mxu0 0.0
    %2596 = vmatprep.subr.mxu0 0.0
    %2597 = vmatpush1.msra.mxu0 0.0
    %2598 = vmatprep.subr.mxu0 0.0
    %2599 = vmatpush1.msra.mxu0 0.0
    %2600 = vmatprep.subr.mxu0 0.0
    %2601 = vmatpush1.msra.mxu0 0.0
    %2602 = vmatprep.subr.mxu0 0.0
    %2603 = vmatpush1.msra.mxu0 0.0
    %2604 = vmatprep.subr.mxu0 0.0
    %2605 = vmatpush1.msra.mxu0 0.0
    %2606 = vmatprep.subr.mxu0 0.0
    %2607 = vmatpush1.msra.mxu0 0.0
    %2608 = vmatprep.subr.mxu0 0.0
    %2609 = vmatpush1.msra.mxu0 0.0
    %2610 = vmatprep.subr.mxu0 0.0
    %2611 = vmatpush1.msra.mxu0 0.0
    %2612 = vmatprep.subr.mxu0 0.0
    %2613 = vmatpush1.msra.mxu0 0.0
    %2614 = vmatprep.subr.mxu0 0.0
    %2615 = vmatpush1.msra.mxu0 0.0
    %2616 = vmatprep.subr.mxu0 0.0
    %2617 = vmatpush1.msra.mxu0 0.0
    %2618 = vmatprep.subr.mxu0 0.0
    %2619 = vmatpush1.msra.mxu0 0.0
    %2620 = vmatprep.subr.mxu0 0.0
    %2621 = vmatpush1.msra.mxu0 0.0
    %2622 = vmatprep.subr.mxu0 0.0
    %2623 = vmatpush1.msra.mxu0 0.0
    %2624 = vmatprep.subr.mxu0 0.0
    %2625 = vmatpush1.msra.mxu0 0.0
    %2626 = vmatprep.subr.mxu0 0.0
    %2627 = vmatpush1.msra.mxu0 0.0
    %2628 = vmatprep.subr.mxu0 0.0
    %2629 = vmatpush1.msra.mxu0 0.0
    %2630 = vmatprep.subr.mxu0 0.0
    %2631 = vmatpush1.msra.mxu0 0.0
    %2632 = vmatprep.mubr.f32.mxu0 0.0
    %v2633 = vand.u32 %v2565, 4294901760
    %v2634 = vsub.f32 %v2565, %v2633
    %v2635 = vand.u32 %v2634, 4294901760
    %v2636 = vsub.f32 %v2634, %v2635
    %v2637 = vand.u32 %v2636, 4294901760
    %2638 = vmatmul.mubr.f32.gmra.mrb[0].mxu0 %v2637
    %v2639 = vpop.f32.mrb[0].mxu0
    %v2640 = vadd.f32 0.0, %v2639
    %v2641 = vpop.f32.mrb[0].mxu0
    %2642 = vdwg.mxu0
    %2643 = vmatprep.subr.mxu0 0.0
    %v2644 = vand.u32 %v33, 4294901760
    %v2645 = vsub.f32 %v33, %v2644
    %v2646 = vand.u32 %v2645, 4294901760
    %v2647 = vsub.f32 %v2645, %v2646
    %v2648 = vand.u32 %v2647, 4294901760
    %2649 = vmatpush1.msra.mxu0 %v2648
    %2650 = vmatprep.subr.mxu0 0.0
    %2651 = vmatpush1.msra.mxu0 0.0
    %2652 = vmatprep.subr.mxu0 0.0
    %2653 = vmatpush1.msra.mxu0 0.0
    %2654 = vmatprep.subr.mxu0 0.0
    %2655 = vmatpush1.msra.mxu0 0.0
    %2656 = vmatprep.subr.mxu0 0.0
    %2657 = vmatpush1.msra.mxu0 0.0
    %2658 = vmatprep.subr.mxu0 0.0
    %2659 = vmatpush1.msra.mxu0 0.0
    %2660 = vmatprep.subr.mxu0 0.0
    %2661 = vmatpush1.msra.mxu0 0.0
    %2662 = vmatprep.subr.mxu0 0.0
    %2663 = vmatpush1.msra.mxu0 0.0
    %2664 = vmatprep.subr.mxu0 0.0
    %2665 = vmatpush1.msra.mxu0 0.0
    %2666 = vmatprep.subr.mxu0 0.0
    %2667 = vmatpush1.msra.mxu0 0.0
    %2668 = vmatprep.subr.mxu0 0.0
    %2669 = vmatpush1.msra.mxu0 0.0
    %2670 = vmatprep.subr.mxu0 0.0
    %2671 = vmatpush1.msra.mxu0 0.0
    %2672 = vmatprep.subr.mxu0 0.0
    %2673 = vmatpush1.msra.mxu0 0.0
    %2674 = vmatprep.subr.mxu0 0.0
    %2675 = vmatpush1.msra.mxu0 0.0
    %2676 = vmatprep.subr.mxu0 0.0
    %2677 = vmatpush1.msra.mxu0 0.0
    %2678 = vmatprep.subr.mxu0 0.0
    %2679 = vmatpush1.msra.mxu0 0.0
    %2680 = vmatprep.subr.mxu0 0.0
    %2681 = vmatpush1.msra.mxu0 0.0
    %2682 = vmatprep.subr.mxu0 0.0
    %2683 = vmatpush1.msra.mxu0 0.0
    %2684 = vmatprep.subr.mxu0 0.0
    %2685 = vmatpush1.msra.mxu0 0.0
    %2686 = vmatprep.subr.mxu0 0.0
    %2687 = vmatpush1.msra.mxu0 0.0
    %2688 = vmatprep.subr.mxu0 0.0
    %2689 = vmatpush1.msra.mxu0 0.0
    %2690 = vmatprep.subr.mxu0 0.0
    %2691 = vmatpush1.msra.mxu0 0.0
    %2692 = vmatprep.subr.mxu0 0.0
    %2693 = vmatpush1.msra.mxu0 0.0
    %2694 = vmatprep.subr.mxu0 0.0
    %2695 = vmatpush1.msra.mxu0 0.0
    %2696 = vmatprep.subr.mxu0 0.0
    %2697 = vmatpush1.msra.mxu0 0.0
    %2698 = vmatprep.subr.mxu0 0.0
    %2699 = vmatpush1.msra.mxu0 0.0
    %2700 = vmatprep.subr.mxu0 0.0
    %2701 = vmatpush1.msra.mxu0 0.0
    %2702 = vmatprep.subr.mxu0 0.0
    %2703 = vmatpush1.msra.mxu0 0.0
    %2704 = vmatprep.subr.mxu0 0.0
    %2705 = vmatpush1.msra.mxu0 0.0
    %2706 = vmatprep.subr.mxu0 0.0
    %2707 = vmatpush1.msra.mxu0 0.0
    %2708 = vmatprep.subr.mxu0 0.0
    %2709 = vmatpush1.msra.mxu0 0.0
    %2710 = vmatprep.subr.mxu0 0.0
    %2711 = vmatpush1.msra.mxu0 0.0
    %2712 = vmatprep.mubr.f32.mxu0 0.0
    %v2713 = vand.u32 %v2565, 4294901760
    %2714 = vmatmul.mubr.f32.gmra.mrb[0].mxu0 %v2713
    %v2715 = vpop.f32.mrb[0].mxu0
    %v2716 = vadd.f32 %v2640, %v2715
    %v2717 = vpop.f32.mrb[0].mxu0
    %2718 = vdwg.mxu0
    %2719 = vmatprep.subr.mxu0 0.0
    %v2720 = vand.u32 %v33, 4294901760
    %v2721 = vsub.f32 %v33, %v2720
    %2722 = vmatpush1.msra.mxu0 %v2721
    %2723 = vmatprep.subr.mxu0 0.0
    %2724 = vmatpush1.msra.mxu0 0.0
    %2725 = vmatprep.subr.mxu0 0.0
    %2726 = vmatpush1.msra.mxu0 0.0
    %2727 = vmatprep.subr.mxu0 0.0
    %2728 = vmatpush1.msra.mxu0 0.0
    %2729 = vmatprep.subr.mxu0 0.0
    %2730 = vmatpush1.msra.mxu0 0.0
    %2731 = vmatprep.subr.mxu0 0.0
    %2732 = vmatpush1.msra.mxu0 0.0
    %2733 = vmatprep.subr.mxu0 0.0
    %2734 = vmatpush1.msra.mxu0 0.0
    %2735 = vmatprep.subr.mxu0 0.0
    %2736 = vmatpush1.msra.mxu0 0.0
    %2737 = vmatprep.subr.mxu0 0.0
    %2738 = vmatpush1.msra.mxu0 0.0
    %2739 = vmatprep.subr.mxu0 0.0
    %2740 = vmatpush1.msra.mxu0 0.0
    %2741 = vmatprep.subr.mxu0 0.0
    %2742 = vmatpush1.msra.mxu0 0.0
    %2743 = vmatprep.subr.mxu0 0.0
    %2744 = vmatpush1.msra.mxu0 0.0
    %2745 = vmatprep.subr.mxu0 0.0
    %2746 = vmatpush1.msra.mxu0 0.0
    %2747 = vmatprep.subr.mxu0 0.0
    %2748 = vmatpush1.msra.mxu0 0.0
    %2749 = vmatprep.subr.mxu0 0.0
    %2750 = vmatpush1.msra.mxu0 0.0
    %2751 = vmatprep.subr.mxu0 0.0
    %2752 = vmatpush1.msra.mxu0 0.0
    %2753 = vmatprep.subr.mxu0 0.0
    %2754 = vmatpush1.msra.mxu0 0.0
    %2755 = vmatprep.subr.mxu0 0.0
    %2756 = vmatpush1.msra.mxu0 0.0
    %2757 = vmatprep.subr.mxu0 0.0
    %2758 = vmatpush1.msra.mxu0 0.0
    %2759 = vmatprep.subr.mxu0 0.0
    %2760 = vmatpush1.msra.mxu0 0.0
    %2761 = vmatprep.subr.mxu0 0.0
    %2762 = vmatpush1.msra.mxu0 0.0
    %2763 = vmatprep.subr.mxu0 0.0
    %2764 = vmatpush1.msra.mxu0 0.0
    %2765 = vmatprep.subr.mxu0 0.0
    %2766 = vmatpush1.msra.mxu0 0.0
    %2767 = vmatprep.subr.mxu0 0.0
    %2768 = vmatpush1.msra.mxu0 0.0
    %2769 = vmatprep.subr.mxu0 0.0
    %2770 = vmatpush1.msra.mxu0 0.0
    %2771 = vmatprep.subr.mxu0 0.0
    %2772 = vmatpush1.msra.mxu0 0.0
    %2773 = vmatprep.subr.mxu0 0.0
    %2774 = vmatpush1.msra.mxu0 0.0
    %2775 = vmatprep.subr.mxu0 0.0
    %2776 = vmatpush1.msra.mxu0 0.0
    %2777 = vmatprep.subr.mxu0 0.0
    %2778 = vmatpush1.msra.mxu0 0.0
    %2779 = vmatprep.subr.mxu0 0.0
    %2780 = vmatpush1.msra.mxu0 0.0
    %2781 = vmatprep.subr.mxu0 0.0
    %2782 = vmatpush1.msra.mxu0 0.0
    %2783 = vmatprep.subr.mxu0 0.0
    %2784 = vmatpush1.msra.mxu0 0.0
    %2785 = vmatprep.mubr.f32.mxu0 0.0
    %v2786 = vand.u32 %v2565, 4294901760
    %v2787 = vsub.f32 %v2565, %v2786
    %2788 = vmatmul.mubr.f32.gmra.mrb[0].mxu0 %v2787
    %v2789 = vpop.f32.mrb[0].mxu0
    %v2790 = vadd.f32 %v2716, %v2789
    %v2791 = vpop.f32.mrb[0].mxu0
    %2792 = vdwg.mxu0
    %2793 = vmatprep.subr.mxu0 0.0
    %v2794 = vand.u32 %v33, 4294901760
    %2795 = vmatpush1.msra.mxu0 %v2794
    %2796 = vmatprep.subr.mxu0 0.0
    %2797 = vmatpush1.msra.mxu0 0.0
    %2798 = vmatprep.subr.mxu0 0.0
    %2799 = vmatpush1.msra.mxu0 0.0
    %2800 = vmatprep.subr.mxu0 0.0
    %2801 = vmatpush1.msra.mxu0 0.0
    %2802 = vmatprep.subr.mxu0 0.0
    %2803 = vmatpush1.msra.mxu0 0.0
    %2804 = vmatprep.subr.mxu0 0.0
    %2805 = vmatpush1.msra.mxu0 0.0
    %2806 = vmatprep.subr.mxu0 0.0
    %2807 = vmatpush1.msra.mxu0 0.0
    %2808 = vmatprep.subr.mxu0 0.0
    %2809 = vmatpush1.msra.mxu0 0.0
    %2810 = vmatprep.subr.mxu0 0.0
    %2811 = vmatpush1.msra.mxu0 0.0
    %2812 = vmatprep.subr.mxu0 0.0
    %2813 = vmatpush1.msra.mxu0 0.0
    %2814 = vmatprep.subr.mxu0 0.0
    %2815 = vmatpush1.msra.mxu0 0.0
    %2816 = vmatprep.subr.mxu0 0.0
    %2817 = vmatpush1.msra.mxu0 0.0
    %2818 = vmatprep.subr.mxu0 0.0
    %2819 = vmatpush1.msra.mxu0 0.0
    %2820 = vmatprep.subr.mxu0 0.0
    %2821 = vmatpush1.msra.mxu0 0.0
    %2822 = vmatprep.subr.mxu0 0.0
    %2823 = vmatpush1.msra.mxu0 0.0
    %2824 = vmatprep.subr.mxu0 0.0
    %2825 = vmatpush1.msra.mxu0 0.0
    %2826 = vmatprep.subr.mxu0 0.0
    %2827 = vmatpush1.msra.mxu0 0.0
    %2828 = vmatprep.subr.mxu0 0.0
    %2829 = vmatpush1.msra.mxu0 0.0
    %2830 = vmatprep.subr.mxu0 0.0
    %2831 = vmatpush1.msra.mxu0 0.0
    %2832 = vmatprep.subr.mxu0 0.0
    %2833 = vmatpush1.msra.mxu0 0.0
    %2834 = vmatprep.subr.mxu0 0.0
    %2835 = vmatpush1.msra.mxu0 0.0
    %2836 = vmatprep.subr.mxu0 0.0
    %2837 = vmatpush1.msra.mxu0 0.0
    %2838 = vmatprep.subr.mxu0 0.0
    %2839 = vmatpush1.msra.mxu0 0.0
    %2840 = vmatprep.subr.mxu0 0.0
    %2841 = vmatpush1.msra.mxu0 0.0
    %2842 = vmatprep.subr.mxu0 0.0
    %2843 = vmatpush1.msra.mxu0 0.0
    %2844 = vmatprep.subr.mxu0 0.0
    %2845 = vmatpush1.msra.mxu0 0.0
    %2846 = vmatprep.subr.mxu0 0.0
    %2847 = vmatpush1.msra.mxu0 0.0
    %2848 = vmatprep.subr.mxu0 0.0
    %2849 = vmatpush1.msra.mxu0 0.0
    %2850 = vmatprep.subr.mxu0 0.0
    %2851 = vmatpush1.msra.mxu0 0.0
    %2852 = vmatprep.subr.mxu0 0.0
    %2853 = vmatpush1.msra.mxu0 0.0
    %2854 = vmatprep.subr.mxu0 0.0
    %2855 = vmatpush1.msra.mxu0 0.0
    %2856 = vmatprep.subr.mxu0 0.0
    %2857 = vmatpush1.msra.mxu0 0.0
    %2858 = vmatprep.mubr.f32.mxu0 0.0
    %v2859 = vand.u32 %v2565, 4294901760
    %v2860 = vsub.f32 %v2565, %v2859
    %v2861 = vand.u32 %v2860, 4294901760
    %2862 = vmatmul.mubr.f32.gmra.mrb[0].mxu0 %v2861
    %v2863 = vpop.f32.mrb[0].mxu0
    %v2864 = vadd.f32 %v2790, %v2863
    %v2865 = vpop.f32.mrb[0].mxu0
    %2866 = vdwg.mxu0
    %2867 = vmatprep.subr.mxu0 0.0
    %v2868 = vand.u32 %v33, 4294901760
    %v2869 = vsub.f32 %v33, %v2868
    %v2870 = vand.u32 %v2869, 4294901760
    %2871 = vmatpush1.msra.mxu0 %v2870
    %2872 = vmatprep.subr.mxu0 0.0
    %2873 = vmatpush1.msra.mxu0 0.0
    %2874 = vmatprep.subr.mxu0 0.0
    %2875 = vmatpush1.msra.mxu0 0.0
    %2876 = vmatprep.subr.mxu0 0.0
    %2877 = vmatpush1.msra.mxu0 0.0
    %2878 = vmatprep.subr.mxu0 0.0
    %2879 = vmatpush1.msra.mxu0 0.0
    %2880 = vmatprep.subr.mxu0 0.0
    %2881 = vmatpush1.msra.mxu0 0.0
    %2882 = vmatprep.subr.mxu0 0.0
    %2883 = vmatpush1.msra.mxu0 0.0
    %2884 = vmatprep.subr.mxu0 0.0
    %2885 = vmatpush1.msra.mxu0 0.0
    %2886 = vmatprep.subr.mxu0 0.0
    %2887 = vmatpush1.msra.mxu0 0.0
    %2888 = vmatprep.subr.mxu0 0.0
    %2889 = vmatpush1.msra.mxu0 0.0
    %2890 = vmatprep.subr.mxu0 0.0
    %2891 = vmatpush1.msra.mxu0 0.0
    %2892 = vmatprep.subr.mxu0 0.0
    %2893 = vmatpush1.msra.mxu0 0.0
    %2894 = vmatprep.subr.mxu0 0.0
    %2895 = vmatpush1.msra.mxu0 0.0
    %2896 = vmatprep.subr.mxu0 0.0
    %2897 = vmatpush1.msra.mxu0 0.0
    %2898 = vmatprep.subr.mxu0 0.0
    %2899 = vmatpush1.msra.mxu0 0.0
    %2900 = vmatprep.subr.mxu0 0.0
    %2901 = vmatpush1.msra.mxu0 0.0
    %2902 = vmatprep.subr.mxu0 0.0
    %2903 = vmatpush1.msra.mxu0 0.0
    %2904 = vmatprep.subr.mxu0 0.0
    %2905 = vmatpush1.msra.mxu0 0.0
    %2906 = vmatprep.subr.mxu0 0.0
    %2907 = vmatpush1.msra.mxu0 0.0
    %2908 = vmatprep.subr.mxu0 0.0
    %2909 = vmatpush1.msra.mxu0 0.0
    %2910 = vmatprep.subr.mxu0 0.0
    %2911 = vmatpush1.msra.mxu0 0.0
    %2912 = vmatprep.subr.mxu0 0.0
    %2913 = vmatpush1.msra.mxu0 0.0
    %2914 = vmatprep.subr.mxu0 0.0
    %2915 = vmatpush1.msra.mxu0 0.0
    %2916 = vmatprep.subr.mxu0 0.0
    %2917 = vmatpush1.msra.mxu0 0.0
    %2918 = vmatprep.subr.mxu0 0.0
    %2919 = vmatpush1.msra.mxu0 0.0
    %2920 = vmatprep.subr.mxu0 0.0
    %2921 = vmatpush1.msra.mxu0 0.0
    %2922 = vmatprep.subr.mxu0 0.0
    %2923 = vmatpush1.msra.mxu0 0.0
    %2924 = vmatprep.subr.mxu0 0.0
    %2925 = vmatpush1.msra.mxu0 0.0
    %2926 = vmatprep.subr.mxu0 0.0
    %2927 = vmatpush1.msra.mxu0 0.0
    %2928 = vmatprep.subr.mxu0 0.0
    %2929 = vmatpush1.msra.mxu0 0.0
    %2930 = vmatprep.subr.mxu0 0.0
    %2931 = vmatpush1.msra.mxu0 0.0
    %2932 = vmatprep.subr.mxu0 0.0
    %2933 = vmatpush1.msra.mxu0 0.0
    %2934 = vmatprep.mubr.f32.mxu0 0.0
    %v2935 = vand.u32 %v2565, 4294901760
    %2936 = vmatmul.mubr.f32.gmra.mrb[0].mxu0 %v2935
    %v2937 = vpop.f32.mrb[0].mxu0
    %v2938 = vadd.f32 %v2864, %v2937
    %v2939 = vpop.f32.mrb[0].mxu0
    %2940 = vdwg.mxu0
    %2941 = vmatprep.subr.mxu0 0.0
    %v2942 = vand.u32 %v33, 4294901760
    %2943 = vmatpush1.msra.mxu0 %v2942
    %2944 = vmatprep.subr.mxu0 0.0
    %2945 = vmatpush1.msra.mxu0 0.0
    %2946 = vmatprep.subr.mxu0 0.0
    %2947 = vmatpush1.msra.mxu0 0.0
    %2948 = vmatprep.subr.mxu0 0.0
    %2949 = vmatpush1.msra.mxu0 0.0
    %2950 = vmatprep.subr.mxu0 0.0
    %2951 = vmatpush1.msra.mxu0 0.0
    %2952 = vmatprep.subr.mxu0 0.0
    %2953 = vmatpush1.msra.mxu0 0.0
    %2954 = vmatprep.subr.mxu0 0.0
    %2955 = vmatpush1.msra.mxu0 0.0
    %2956 = vmatprep.subr.mxu0 0.0
    %2957 = vmatpush1.msra.mxu0 0.0
    %2958 = vmatprep.subr.mxu0 0.0
    %2959 = vmatpush1.msra.mxu0 0.0
    %2960 = vmatprep.subr.mxu0 0.0
    %2961 = vmatpush1.msra.mxu0 0.0
    %2962 = vmatprep.subr.mxu0 0.0
    %2963 = vmatpush1.msra.mxu0 0.0
    %2964 = vmatprep.subr.mxu0 0.0
    %2965 = vmatpush1.msra.mxu0 0.0
    %2966 = vmatprep.subr.mxu0 0.0
    %2967 = vmatpush1.msra.mxu0 0.0
    %2968 = vmatprep.subr.mxu0 0.0
    %2969 = vmatpush1.msra.mxu0 0.0
    %2970 = vmatprep.subr.mxu0 0.0
    %2971 = vmatpush1.msra.mxu0 0.0
    %2972 = vmatprep.subr.mxu0 0.0
    %2973 = vmatpush1.msra.mxu0 0.0
    %2974 = vmatprep.subr.mxu0 0.0
    %2975 = vmatpush1.msra.mxu0 0.0
    %2976 = vmatprep.subr.mxu0 0.0
    %2977 = vmatpush1.msra.mxu0 0.0
    %2978 = vmatprep.subr.mxu0 0.0
    %2979 = vmatpush1.msra.mxu0 0.0
    %2980 = vmatprep.subr.mxu0 0.0
    %2981 = vmatpush1.msra.mxu0 0.0
    %2982 = vmatprep.subr.mxu0 0.0
    %2983 = vmatpush1.msra.mxu0 0.0
    %2984 = vmatprep.subr.mxu0 0.0
    %2985 = vmatpush1.msra.mxu0 0.0
    %2986 = vmatprep.subr.mxu0 0.0
    %2987 = vmatpush1.msra.mxu0 0.0
    %2988 = vmatprep.subr.mxu0 0.0
    %2989 = vmatpush1.msra.mxu0 0.0
    %2990 = vmatprep.subr.mxu0 0.0
    %2991 = vmatpush1.msra.mxu0 0.0
    %2992 = vmatprep.subr.mxu0 0.0
    %2993 = vmatpush1.msra.mxu0 0.0
    %2994 = vmatprep.subr.mxu0 0.0
    %2995 = vmatpush1.msra.mxu0 0.0
    %2996 = vmatprep.subr.mxu0 0.0
    %2997 = vmatpush1.msra.mxu0 0.0
    %2998 = vmatprep.subr.mxu0 0.0
    %2999 = vmatpush1.msra.mxu0 0.0
    %3000 = vmatprep.subr.mxu0 0.0
    %3001 = vmatpush1.msra.mxu0 0.0
    %3002 = vmatprep.subr.mxu0 0.0
    %3003 = vmatpush1.msra.mxu0 0.0
    %3004 = vmatprep.subr.mxu0 0.0
    %3005 = vmatpush1.msra.mxu0 0.0
    %3006 = vmatprep.mubr.f32.mxu0 0.0
    %v3007 = vand.u32 %v2565, 4294901760
    %3008 = vmatmul.mubr.f32.gmra.mrb[0].mxu0 %v3007
    %v3009 = vpop.f32.mrb[0].mxu0
    %v3010 = vadd.f32 %v2938, %v3009
    %v3011 = vpop.f32.mrb[0].mxu0
    %3012 = vdwg.mxu0
    %v3013 = vadd.f32 %v2563, %v2528
    %v3014 = vlog2.pop %v3010
    %v3015 = vmul.f32 %v3014, 0.6931472
    %v3016 = vadd.f32 %v3013, %v3015
    %v3017 = vsel %vm69, %v3016, -inf
    %3018 = vmax.xlane.f32.xlu0 %v3017
    %v3019 = vpop.xlane.xlu0 %3018
    %v3020 = vsub.f32 %v3016, %v3019
    %v3021 = vmul.f32 %v3020, 1.442695
    %v3022 = vpow.pop %v3021
    %v3023 = vsel %vm69, %v3022, 0.0
    %3024 = vadd.xlane.f32.xlu0 %v3023
    %v3025 = vpop.xlane.xlu0 %3024
    %v3026 = vlog2.pop %v3025
    %v3027 = vmul.f32 %v3026, 0.6931472
    %v3028 = vadd.f32 %v3019, %v3027
    %vm3029 = vcmask 52272
    %3030 = vst.msk [vmem:[#allocation5] sm:$0xf] %vm3029, %v3028
    %s3031 = sld [smem:[#allocation2 + $0x380]]
    %s3032 = scalar_lea.vmem %s1, %s3031
    %v3033 = vld [vmem:[%s3032] sm:$0x1]
    %s3034 = sld [smem:[#allocation2 + $0x381]]
    %s3035 = scalar_lea.vmem %s1, %s3034
    %v3036 = vld [vmem:[%s3035] sm:$0x1]
    %s3037 = sld [smem:[#allocation2 + $0x382]]
    %s3038 = scalar_lea.vmem %s1, %s3037
    %v3039 = vld [vmem:[%s3038] sm:$0x1]
    %s3040 = sld [smem:[#allocation2 + $0x383]]
    %s3041 = scalar_lea.vmem %s1, %s3040
    %v3042 = vld [vmem:[%s3041] sm:$0x1]
    %v3044 = vrot.slane %v3036, 7
    %v3047 = vrot.slane %v3039, 6
    %v3050 = vrot.slane %v3042, 5
    %v3052 = vsel %vm56, %v3033, %v3044
    %v3053 = vsel %vm58, %v3052, %v3047
    %v3054 = vsel %vm60, %v3053, %v3050
    %v3056 = vsel %vm108, %v3022, 0
    %3058 = vmatprep.subr.mxu0 0.0
    %v3059 = vand.u32 %v33, 4294901760
    %3060 = vmatpush1.msra.mxu0 %v3059
    %3061 = vmatprep.subr.mxu0 0.0
    %3062 = vmatpush1.msra.mxu0 0.0
    %3063 = vmatprep.subr.mxu0 0.0
    %3064 = vmatpush1.msra.mxu0 0.0
    %3065 = vmatprep.subr.mxu0 0.0
    %3066 = vmatpush1.msra.mxu0 0.0
    %3067 = vmatprep.subr.mxu0 0.0
    %3068 = vmatpush1.msra.mxu0 0.0
    %3069 = vmatprep.subr.mxu0 0.0
    %3070 = vmatpush1.msra.mxu0 0.0
    %3071 = vmatprep.subr.mxu0 0.0
    %3072 = vmatpush1.msra.mxu0 0.0
    %3073 = vmatprep.subr.mxu0 0.0
    %3074 = vmatpush1.msra.mxu0 0.0
    %3075 = vmatprep.subr.mxu0 0.0
    %3076 = vmatpush1.msra.mxu0 0.0
    %3077 = vmatprep.subr.mxu0 0.0
    %3078 = vmatpush1.msra.mxu0 0.0
    %3079 = vmatprep.subr.mxu0 0.0
    %3080 = vmatpush1.msra.mxu0 0.0
    %3081 = vmatprep.subr.mxu0 0.0
    %3082 = vmatpush1.msra.mxu0 0.0
    %3083 = vmatprep.subr.mxu0 0.0
    %3084 = vmatpush1.msra.mxu0 0.0
    %3085 = vmatprep.subr.mxu0 0.0
    %3086 = vmatpush1.msra.mxu0 0.0
    %3087 = vmatprep.subr.mxu0 0.0
    %3088 = vmatpush1.msra.mxu0 0.0
    %3089 = vmatprep.subr.mxu0 0.0
    %3090 = vmatpush1.msra.mxu0 0.0
    %3091 = vmatprep.subr.mxu0 0.0
    %3092 = vmatpush1.msra.mxu0 0.0
    %3093 = vmatprep.subr.mxu0 0.0
    %3094 = vmatpush1.msra.mxu0 0.0
    %3095 = vmatprep.subr.mxu0 0.0
    %3096 = vmatpush1.msra.mxu0 0.0
    %3097 = vmatprep.subr.mxu0 0.0
    %3098 = vmatpush1.msra.mxu0 0.0
    %3099 = vmatprep.subr.mxu0 0.0
    %3100 = vmatpush1.msra.mxu0 0.0
    %3101 = vmatprep.subr.mxu0 0.0
    %3102 = vmatpush1.msra.mxu0 0.0
    %3103 = vmatprep.subr.mxu0 0.0
    %3104 = vmatpush1.msra.mxu0 0.0
    %3105 = vmatprep.subr.mxu0 0.0
    %3106 = vmatpush1.msra.mxu0 0.0
    %3107 = vmatprep.subr.mxu0 0.0
    %3108 = vmatpush1.msra.mxu0 0.0
    %3109 = vmatprep.subr.mxu0 0.0
    %3110 = vmatpush1.msra.mxu0 0.0
    %3111 = vmatprep.subr.mxu0 0.0
    %3112 = vmatpush1.msra.mxu0 0.0
    %3113 = vmatprep.subr.mxu0 0.0
    %3114 = vmatpush1.msra.mxu0 0.0
    %3115 = vmatprep.subr.mxu0 0.0
    %3116 = vmatpush1.msra.mxu0 0.0
    %3117 = vmatprep.subr.mxu0 0.0
    %3118 = vmatpush1.msra.mxu0 0.0
    %3119 = vmatprep.subr.mxu0 0.0
    %3120 = vmatpush1.msra.mxu0 0.0
    %3121 = vmatprep.subr.mxu0 0.0
    %3122 = vmatpush1.msra.mxu0 0.0
    %3123 = vmatprep.mubr.f32.mxu0 0.0
    %v3124 = vand.u32 %v3056, 4294901760
    %v3125 = vsub.f32 %v3056, %v3124
    %v3126 = vand.u32 %v3125, 4294901760
    %v3127 = vsub.f32 %v3125, %v3126
    %v3128 = vand.u32 %v3127, 4294901760
    %3129 = vmatmul.mubr.f32.gmra.mrb[0].mxu0 %v3128
    %v3130 = vpop.f32.mrb[0].mxu0
    %v3131 = vadd.f32 0.0, %v3130
    %v3132 = vpop.f32.mrb[0].mxu0
    %3133 = vdwg.mxu0
    %3134 = vmatprep.subr.mxu0 0.0
    %v3135 = vand.u32 %v33, 4294901760
    %v3136 = vsub.f32 %v33, %v3135
    %v3137 = vand.u32 %v3136, 4294901760
    %v3138 = vsub.f32 %v3136, %v3137
    %v3139 = vand.u32 %v3138, 4294901760
    %3140 = vmatpush1.msra.mxu0 %v3139
    %3141 = vmatprep.subr.mxu0 0.0
    %3142 = vmatpush1.msra.mxu0 0.0
    %3143 = vmatprep.subr.mxu0 0.0
    %3144 = vmatpush1.msra.mxu0 0.0
    %3145 = vmatprep.subr.mxu0 0.0
    %3146 = vmatpush1.msra.mxu0 0.0
    %3147 = vmatprep.subr.mxu0 0.0
    %3148 = vmatpush1.msra.mxu0 0.0
    %3149 = vmatprep.subr.mxu0 0.0
    %3150 = vmatpush1.msra.mxu0 0.0
    %3151 = vmatprep.subr.mxu0 0.0
    %3152 = vmatpush1.msra.mxu0 0.0
    %3153 = vmatprep.subr.mxu0 0.0
    %3154 = vmatpush1.msra.mxu0 0.0
    %3155 = vmatprep.subr.mxu0 0.0
    %3156 = vmatpush1.msra.mxu0 0.0
    %3157 = vmatprep.subr.mxu0 0.0
    %3158 = vmatpush1.msra.mxu0 0.0
    %3159 = vmatprep.subr.mxu0 0.0
    %3160 = vmatpush1.msra.mxu0 0.0
    %3161 = vmatprep.subr.mxu0 0.0
    %3162 = vmatpush1.msra.mxu0 0.0
    %3163 = vmatprep.subr.mxu0 0.0
    %3164 = vmatpush1.msra.mxu0 0.0
    %3165 = vmatprep.subr.mxu0 0.0
    %3166 = vmatpush1.msra.mxu0 0.0
    %3167 = vmatprep.subr.mxu0 0.0
    %3168 = vmatpush1.msra.mxu0 0.0
    %3169 = vmatprep.subr.mxu0 0.0
    %3170 = vmatpush1.msra.mxu0 0.0
    %3171 = vmatprep.subr.mxu0 0.0
    %3172 = vmatpush1.msra.mxu0 0.0
    %3173 = vmatprep.subr.mxu0 0.0
    %3174 = vmatpush1.msra.mxu0 0.0
    %3175 = vmatprep.subr.mxu0 0.0
    %3176 = vmatpush1.msra.mxu0 0.0
    %3177 = vmatprep.subr.mxu0 0.0
    %3178 = vmatpush1.msra.mxu0 0.0
    %3179 = vmatprep.subr.mxu0 0.0
    %3180 = vmatpush1.msra.mxu0 0.0
    %3181 = vmatprep.subr.mxu0 0.0
    %3182 = vmatpush1.msra.mxu0 0.0
    %3183 = vmatprep.subr.mxu0 0.0
    %3184 = vmatpush1.msra.mxu0 0.0
    %3185 = vmatprep.subr.mxu0 0.0
    %3186 = vmatpush1.msra.mxu0 0.0
    %3187 = vmatprep.subr.mxu0 0.0
    %3188 = vmatpush1.msra.mxu0 0.0
    %3189 = vmatprep.subr.mxu0 0.0
    %3190 = vmatpush1.msra.mxu0 0.0
    %3191 = vmatprep.subr.mxu0 0.0
    %3192 = vmatpush1.msra.mxu0 0.0
    %3193 = vmatprep.subr.mxu0 0.0
    %3194 = vmatpush1.msra.mxu0 0.0
    %3195 = vmatprep.subr.mxu0 0.0
    %3196 = vmatpush1.msra.mxu0 0.0
    %3197 = vmatprep.subr.mxu0 0.0
    %3198 = vmatpush1.msra.mxu0 0.0
    %3199 = vmatprep.subr.mxu0 0.0
    %3200 = vmatpush1.msra.mxu0 0.0
    %3201 = vmatprep.subr.mxu0 0.0
    %3202 = vmatpush1.msra.mxu0 0.0
    %3203 = vmatprep.mubr.f32.mxu0 0.0
    %v3204 = vand.u32 %v3056, 4294901760
    %3205 = vmatmul.mubr.f32.gmra.mrb[0].mxu0 %v3204
    %v3206 = vpop.f32.mrb[0].mxu0
    %v3207 = vadd.f32 %v3131, %v3206
    %v3208 = vpop.f32.mrb[0].mxu0
    %3209 = vdwg.mxu0
    %3210 = vmatprep.subr.mxu0 0.0
    %v3211 = vand.u32 %v33, 4294901760
    %v3212 = vsub.f32 %v33, %v3211
    %3213 = vmatpush1.msra.mxu0 %v3212
    %3214 = vmatprep.subr.mxu0 0.0
    %3215 = vmatpush1.msra.mxu0 0.0
    %3216 = vmatprep.subr.mxu0 0.0
    %3217 = vmatpush1.msra.mxu0 0.0
    %3218 = vmatprep.subr.mxu0 0.0
    %3219 = vmatpush1.msra.mxu0 0.0
    %3220 = vmatprep.subr.mxu0 0.0
    %3221 = vmatpush1.msra.mxu0 0.0
    %3222 = vmatprep.subr.mxu0 0.0
    %3223 = vmatpush1.msra.mxu0 0.0
    %3224 = vmatprep.subr.mxu0 0.0
    %3225 = vmatpush1.msra.mxu0 0.0
    %3226 = vmatprep.subr.mxu0 0.0
    %3227 = vmatpush1.msra.mxu0 0.0
    %3228 = vmatprep.subr.mxu0 0.0
    %3229 = vmatpush1.msra.mxu0 0.0
    %3230 = vmatprep.subr.mxu0 0.0
    %3231 = vmatpush1.msra.mxu0 0.0
    %3232 = vmatprep.subr.mxu0 0.0
    %3233 = vmatpush1.msra.mxu0 0.0
    %3234 = vmatprep.subr.mxu0 0.0
    %3235 = vmatpush1.msra.mxu0 0.0
    %3236 = vmatprep.subr.mxu0 0.0
    %3237 = vmatpush1.msra.mxu0 0.0
    %3238 = vmatprep.subr.mxu0 0.0
    %3239 = vmatpush1.msra.mxu0 0.0
    %3240 = vmatprep.subr.mxu0 0.0
    %3241 = vmatpush1.msra.mxu0 0.0
    %3242 = vmatprep.subr.mxu0 0.0
    %3243 = vmatpush1.msra.mxu0 0.0
    %3244 = vmatprep.subr.mxu0 0.0
    %3245 = vmatpush1.msra.mxu0 0.0
    %3246 = vmatprep.subr.mxu0 0.0
    %3247 = vmatpush1.msra.mxu0 0.0
    %3248 = vmatprep.subr.mxu0 0.0
    %3249 = vmatpush1.msra.mxu0 0.0
    %3250 = vmatprep.subr.mxu0 0.0
    %3251 = vmatpush1.msra.mxu0 0.0
    %3252 = vmatprep.subr.mxu0 0.0
    %3253 = vmatpush1.msra.mxu0 0.0
    %3254 = vmatprep.subr.mxu0 0.0
    %3255 = vmatpush1.msra.mxu0 0.0
    %3256 = vmatprep.subr.mxu0 0.0
    %3257 = vmatpush1.msra.mxu0 0.0
    %3258 = vmatprep.subr.mxu0 0.0
    %3259 = vmatpush1.msra.mxu0 0.0
    %3260 = vmatprep.subr.mxu0 0.0
    %3261 = vmatpush1.msra.mxu0 0.0
    %3262 = vmatprep.subr.mxu0 0.0
    %3263 = vmatpush1.msra.mxu0 0.0
    %3264 = vmatprep.subr.mxu0 0.0
    %3265 = vmatpush1.msra.mxu0 0.0
    %3266 = vmatprep.subr.mxu0 0.0
    %3267 = vmatpush1.msra.mxu0 0.0
    %3268 = vmatprep.subr.mxu0 0.0
    %3269 = vmatpush1.msra.mxu0 0.0
    %3270 = vmatprep.subr.mxu0 0.0
    %3271 = vmatpush1.msra.mxu0 0.0
    %3272 = vmatprep.subr.mxu0 0.0
    %3273 = vmatpush1.msra.mxu0 0.0
    %3274 = vmatprep.subr.mxu0 0.0
    %3275 = vmatpush1.msra.mxu0 0.0
    %3276 = vmatprep.mubr.f32.mxu0 0.0
    %v3277 = vand.u32 %v3056, 4294901760
    %v3278 = vsub.f32 %v3056, %v3277
    %3279 = vmatmul.mubr.f32.gmra.mrb[0].mxu0 %v3278
    %v3280 = vpop.f32.mrb[0].mxu0
    %v3281 = vadd.f32 %v3207, %v3280
    %v3282 = vpop.f32.mrb[0].mxu0
    %3283 = vdwg.mxu0
    %3284 = vmatprep.subr.mxu0 0.0
    %v3285 = vand.u32 %v33, 4294901760
    %3286 = vmatpush1.msra.mxu0 %v3285
    %3287 = vmatprep.subr.mxu0 0.0
    %3288 = vmatpush1.msra.mxu0 0.0
    %3289 = vmatprep.subr.mxu0 0.0
    %3290 = vmatpush1.msra.mxu0 0.0
    %3291 = vmatprep.subr.mxu0 0.0
    %3292 = vmatpush1.msra.mxu0 0.0
    %3293 = vmatprep.subr.mxu0 0.0
    %3294 = vmatpush1.msra.mxu0 0.0
    %3295 = vmatprep.subr.mxu0 0.0
    %3296 = vmatpush1.msra.mxu0 0.0
    %3297 = vmatprep.subr.mxu0 0.0
    %3298 = vmatpush1.msra.mxu0 0.0
    %3299 = vmatprep.subr.mxu0 0.0
    %3300 = vmatpush1.msra.mxu0 0.0
    %3301 = vmatprep.subr.mxu0 0.0
    %3302 = vmatpush1.msra.mxu0 0.0
    %3303 = vmatprep.subr.mxu0 0.0
    %3304 = vmatpush1.msra.mxu0 0.0
    %3305 = vmatprep.subr.mxu0 0.0
    %3306 = vmatpush1.msra.mxu0 0.0
    %3307 = vmatprep.subr.mxu0 0.0
    %3308 = vmatpush1.msra.mxu0 0.0
    %3309 = vmatprep.subr.mxu0 0.0
    %3310 = vmatpush1.msra.mxu0 0.0
    %3311 = vmatprep.subr.mxu0 0.0
    %3312 = vmatpush1.msra.mxu0 0.0
    %3313 = vmatprep.subr.mxu0 0.0
    %3314 = vmatpush1.msra.mxu0 0.0
    %3315 = vmatprep.subr.mxu0 0.0
    %3316 = vmatpush1.msra.mxu0 0.0
    %3317 = vmatprep.subr.mxu0 0.0
    %3318 = vmatpush1.msra.mxu0 0.0
    %3319 = vmatprep.subr.mxu0 0.0
    %3320 = vmatpush1.msra.mxu0 0.0
    %3321 = vmatprep.subr.mxu0 0.0
    %3322 = vmatpush1.msra.mxu0 0.0
    %3323 = vmatprep.subr.mxu0 0.0
    %3324 = vmatpush1.msra.mxu0 0.0
    %3325 = vmatprep.subr.mxu0 0.0
    %3326 = vmatpush1.msra.mxu0 0.0
    %3327 = vmatprep.subr.mxu0 0.0
    %3328 = vmatpush1.msra.mxu0 0.0
    %3329 = vmatprep.subr.mxu0 0.0
    %3330 = vmatpush1.msra.mxu0 0.0
    %3331 = vmatprep.subr.mxu0 0.0
    %3332 = vmatpush1.msra.mxu0 0.0
    %3333 = vmatprep.subr.mxu0 0.0
    %3334 = vmatpush1.msra.mxu0 0.0
    %3335 = vmatprep.subr.mxu0 0.0
    %3336 = vmatpush1.msra.mxu0 0.0
    %3337 = vmatprep.subr.mxu0 0.0
    %3338 = vmatpush1.msra.mxu0 0.0
    %3339 = vmatprep.subr.mxu0 0.0
    %3340 = vmatpush1.msra.mxu0 0.0
    %3341 = vmatprep.subr.mxu0 0.0
    %3342 = vmatpush1.msra.mxu0 0.0
    %3343 = vmatprep.subr.mxu0 0.0
    %3344 = vmatpush1.msra.mxu0 0.0
    %3345 = vmatprep.subr.mxu0 0.0
    %3346 = vmatpush1.msra.mxu0 0.0
    %3347 = vmatprep.subr.mxu0 0.0
    %3348 = vmatpush1.msra.mxu0 0.0
    %3349 = vmatprep.mubr.f32.mxu0 0.0
    %v3350 = vand.u32 %v3056, 4294901760
    %v3351 = vsub.f32 %v3056, %v3350
    %v3352 = vand.u32 %v3351, 4294901760
    %3353 = vmatmul.mubr.f32.gmra.mrb[0].mxu0 %v3352
    %v3354 = vpop.f32.mrb[0].mxu0
    %v3355 = vadd.f32 %v3281, %v3354
    %v3356 = vpop.f32.mrb[0].mxu0
    %3357 = vdwg.mxu0
    %3358 = vmatprep.subr.mxu0 0.0
    %v3359 = vand.u32 %v33, 4294901760
    %v3360 = vsub.f32 %v33, %v3359
    %v3361 = vand.u32 %v3360, 4294901760
    %3362 = vmatpush1.msra.mxu0 %v3361
    %3363 = vmatprep.subr.mxu0 0.0
    %3364 = vmatpush1.msra.mxu0 0.0
    %3365 = vmatprep.subr.mxu0 0.0
    %3366 = vmatpush1.msra.mxu0 0.0
    %3367 = vmatprep.subr.mxu0 0.0
    %3368 = vmatpush1.msra.mxu0 0.0
    %3369 = vmatprep.subr.mxu0 0.0
    %3370 = vmatpush1.msra.mxu0 0.0
    %3371 = vmatprep.subr.mxu0 0.0
    %3372 = vmatpush1.msra.mxu0 0.0
    %3373 = vmatprep.subr.mxu0 0.0
    %3374 = vmatpush1.msra.mxu0 0.0
    %3375 = vmatprep.subr.mxu0 0.0
    %3376 = vmatpush1.msra.mxu0 0.0
    %3377 = vmatprep.subr.mxu0 0.0
    %3378 = vmatpush1.msra.mxu0 0.0
    %3379 = vmatprep.subr.mxu0 0.0
    %3380 = vmatpush1.msra.mxu0 0.0
    %3381 = vmatprep.subr.mxu0 0.0
    %3382 = vmatpush1.msra.mxu0 0.0
    %3383 = vmatprep.subr.mxu0 0.0
    %3384 = vmatpush1.msra.mxu0 0.0
    %3385 = vmatprep.subr.mxu0 0.0
    %3386 = vmatpush1.msra.mxu0 0.0
    %3387 = vmatprep.subr.mxu0 0.0
    %3388 = vmatpush1.msra.mxu0 0.0
    %3389 = vmatprep.subr.mxu0 0.0
    %3390 = vmatpush1.msra.mxu0 0.0
    %3391 = vmatprep.subr.mxu0 0.0
    %3392 = vmatpush1.msra.mxu0 0.0
    %3393 = vmatprep.subr.mxu0 0.0
    %3394 = vmatpush1.msra.mxu0 0.0
    %3395 = vmatprep.subr.mxu0 0.0
    %3396 = vmatpush1.msra.mxu0 0.0
    %3397 = vmatprep.subr.mxu0 0.0
    %3398 = vmatpush1.msra.mxu0 0.0
    %3399 = vmatprep.subr.mxu0 0.0
    %3400 = vmatpush1.msra.mxu0 0.0
    %3401 = vmatprep.subr.mxu0 0.0
    %3402 = vmatpush1.msra.mxu0 0.0
    %3403 = vmatprep.subr.mxu0 0.0
    %3404 = vmatpush1.msra.mxu0 0.0
    %3405 = vmatprep.subr.mxu0 0.0
    %3406 = vmatpush1.msra.mxu0 0.0
    %3407 = vmatprep.subr.mxu0 0.0
    %3408 = vmatpush1.msra.mxu0 0.0
    %3409 = vmatprep.subr.mxu0 0.0
    %3410 = vmatpush1.msra.mxu0 0.0
    %3411 = vmatprep.subr.mxu0 0.0
    %3412 = vmatpush1.msra.mxu0 0.0
    %3413 = vmatprep.subr.mxu0 0.0
    %3414 = vmatpush1.msra.mxu0 0.0
    %3415 = vmatprep.subr.mxu0 0.0
    %3416 = vmatpush1.msra.mxu0 0.0
    %3417 = vmatprep.subr.mxu0 0.0
    %3418 = vmatpush1.msra.mxu0 0.0
    %3419 = vmatprep.subr.mxu0 0.0
    %3420 = vmatpush1.msra.mxu0 0.0
    %3421 = vmatprep.subr.mxu0 0.0
    %3422 = vmatpush1.msra.mxu0 0.0
    %3423 = vmatprep.subr.mxu0 0.0
    %3424 = vmatpush1.msra.mxu0 0.0
    %3425 = vmatprep.mubr.f32.mxu0 0.0
    %v3426 = vand.u32 %v3056, 4294901760
    %3427 = vmatmul.mubr.f32.gmra.mrb[0].mxu0 %v3426
    %v3428 = vpop.f32.mrb[0].mxu0
    %v3429 = vadd.f32 %v3355, %v3428
    %v3430 = vpop.f32.mrb[0].mxu0
    %3431 = vdwg.mxu0
    %3432 = vmatprep.subr.mxu0 0.0
    %v3433 = vand.u32 %v33, 4294901760
    %3434 = vmatpush1.msra.mxu0 %v3433
    %3435 = vmatprep.subr.mxu0 0.0
    %3436 = vmatpush1.msra.mxu0 0.0
    %3437 = vmatprep.subr.mxu0 0.0
    %3438 = vmatpush1.msra.mxu0 0.0
    %3439 = vmatprep.subr.mxu0 0.0
    %3440 = vmatpush1.msra.mxu0 0.0
    %3441 = vmatprep.subr.mxu0 0.0
    %3442 = vmatpush1.msra.mxu0 0.0
    %3443 = vmatprep.subr.mxu0 0.0
    %3444 = vmatpush1.msra.mxu0 0.0
    %3445 = vmatprep.subr.mxu0 0.0
    %3446 = vmatpush1.msra.mxu0 0.0
    %3447 = vmatprep.subr.mxu0 0.0
    %3448 = vmatpush1.msra.mxu0 0.0
    %3449 = vmatprep.subr.mxu0 0.0
    %3450 = vmatpush1.msra.mxu0 0.0
    %3451 = vmatprep.subr.mxu0 0.0
    %3452 = vmatpush1.msra.mxu0 0.0
    %3453 = vmatprep.subr.mxu0 0.0
    %3454 = vmatpush1.msra.mxu0 0.0
    %3455 = vmatprep.subr.mxu0 0.0
    %3456 = vmatpush1.msra.mxu0 0.0
    %3457 = vmatprep.subr.mxu0 0.0
    %3458 = vmatpush1.msra.mxu0 0.0
    %3459 = vmatprep.subr.mxu0 0.0
    %3460 = vmatpush1.msra.mxu0 0.0
    %3461 = vmatprep.subr.mxu0 0.0
    %3462 = vmatpush1.msra.mxu0 0.0
    %3463 = vmatprep.subr.mxu0 0.0
    %3464 = vmatpush1.msra.mxu0 0.0
    %3465 = vmatprep.subr.mxu0 0.0
    %3466 = vmatpush1.msra.mxu0 0.0
    %3467 = vmatprep.subr.mxu0 0.0
    %3468 = vmatpush1.msra.mxu0 0.0
    %3469 = vmatprep.subr.mxu0 0.0
    %3470 = vmatpush1.msra.mxu0 0.0
    %3471 = vmatprep.subr.mxu0 0.0
    %3472 = vmatpush1.msra.mxu0 0.0
    %3473 = vmatprep.subr.mxu0 0.0
    %3474 = vmatpush1.msra.mxu0 0.0
    %3475 = vmatprep.subr.mxu0 0.0
    %3476 = vmatpush1.msra.mxu0 0.0
    %3477 = vmatprep.subr.mxu0 0.0
    %3478 = vmatpush1.msra.mxu0 0.0
    %3479 = vmatprep.subr.mxu0 0.0
    %3480 = vmatpush1.msra.mxu0 0.0
    %3481 = vmatprep.subr.mxu0 0.0
    %3482 = vmatpush1.msra.mxu0 0.0
    %3483 = vmatprep.subr.mxu0 0.0
    %3484 = vmatpush1.msra.mxu0 0.0
    %3485 = vmatprep.subr.mxu0 0.0
    %3486 = vmatpush1.msra.mxu0 0.0
    %3487 = vmatprep.subr.mxu0 0.0
    %3488 = vmatpush1.msra.mxu0 0.0
    %3489 = vmatprep.subr.mxu0 0.0
    %3490 = vmatpush1.msra.mxu0 0.0
    %3491 = vmatprep.subr.mxu0 0.0
    %3492 = vmatpush1.msra.mxu0 0.0
    %3493 = vmatprep.subr.mxu0 0.0
    %3494 = vmatpush1.msra.mxu0 0.0
    %3495 = vmatprep.subr.mxu0 0.0
    %3496 = vmatpush1.msra.mxu0 0.0
    %3497 = vmatprep.mubr.f32.mxu0 0.0
    %v3498 = vand.u32 %v3056, 4294901760
    %3499 = vmatmul.mubr.f32.gmra.mrb[0].mxu0 %v3498
    %v3500 = vpop.f32.mrb[0].mxu0
    %v3501 = vadd.f32 %v3429, %v3500
    %v3502 = vpop.f32.mrb[0].mxu0
    %3503 = vdwg.mxu0
    %v3504 = vadd.f32 %v3054, %v3019
    %v3505 = vlog2.pop %v3501
    %v3506 = vmul.f32 %v3505, 0.6931472
    %v3507 = vadd.f32 %v3504, %v3506
    %v3508 = vsel %vm69, %v3507, -inf
    %3509 = vmax.xlane.f32.xlu0 %v3508
    %v3510 = vpop.xlane.xlu0 %3509
    %v3511 = vsub.f32 %v3507, %v3510
    %v3512 = vmul.f32 %v3511, 1.442695
    %v3513 = vpow.pop %v3512
    %v3514 = vsel %vm69, %v3513, 0.0
    %3515 = vadd.xlane.f32.xlu0 %v3514
    %v3516 = vpop.xlane.xlu0 %3515
    %v3517 = vlog2.pop %v3516
    %v3518 = vmul.f32 %v3517, 0.6931472
    %v3519 = vadd.f32 %v3510, %v3518
    %vm3520 = vcmask 60472
    %3521 = vst.msk [vmem:[#allocation5] sm:$0xf] %vm3520, %v3519
    %s3522 = sld [smem:[#allocation2 + $0x400]]
    %s3523 = scalar_lea.vmem %s1, %s3522
    %v3524 = vld [vmem:[%s3523] sm:$0x1]
    %s3525 = sld [smem:[#allocation2 + $0x401]]
    %s3526 = scalar_lea.vmem %s1, %s3525
    %v3527 = vld [vmem:[%s3526] sm:$0x1]
    %s3528 = sld [smem:[#allocation2 + $0x402]]
    %s3529 = scalar_lea.vmem %s1, %s3528
    %v3530 = vld [vmem:[%s3529] sm:$0x1]
    %s3531 = sld [smem:[#allocation2 + $0x403]]
    %s3532 = scalar_lea.vmem %s1, %s3531
    %v3533 = vld [vmem:[%s3532] sm:$0x1]
    %v3535 = vrot.slane %v3527, 7
    %v3538 = vrot.slane %v3530, 6
    %v3541 = vrot.slane %v3533, 5
    %v3543 = vsel %vm56, %v3524, %v3535
    %v3544 = vsel %vm58, %v3543, %v3538
    %v3545 = vsel %vm60, %v3544, %v3541
    %v3547 = vsel %vm108, %v3513, 0
    %3549 = vmatprep.subr.mxu0 0.0
    %v3550 = vand.u32 %v33, 4294901760
    %3551 = vmatpush1.msra.mxu0 %v3550
    %3552 = vmatprep.subr.mxu0 0.0
    %3553 = vmatpush1.msra.mxu0 0.0
    %3554 = vmatprep.subr.mxu0 0.0
    %3555 = vmatpush1.msra.mxu0 0.0
    %3556 = vmatprep.subr.mxu0 0.0
    %3557 = vmatpush1.msra.mxu0 0.0
    %3558 = vmatprep.subr.mxu0 0.0
    %3559 = vmatpush1.msra.mxu0 0.0
    %3560 = vmatprep.subr.mxu0 0.0
    %3561 = vmatpush1.msra.mxu0 0.0
    %3562 = vmatprep.subr.mxu0 0.0
    %3563 = vmatpush1.msra.mxu0 0.0
    %3564 = vmatprep.subr.mxu0 0.0
    %3565 = vmatpush1.msra.mxu0 0.0
    %3566 = vmatprep.subr.mxu0 0.0
    %3567 = vmatpush1.msra.mxu0 0.0
    %3568 = vmatprep.subr.mxu0 0.0
    %3569 = vmatpush1.msra.mxu0 0.0
    %3570 = vmatprep.subr.mxu0 0.0
    %3571 = vmatpush1.msra.mxu0 0.0
    %3572 = vmatprep.subr.mxu0 0.0
    %3573 = vmatpush1.msra.mxu0 0.0
    %3574 = vmatprep.subr.mxu0 0.0
    %3575 = vmatpush1.msra.mxu0 0.0
    %3576 = vmatprep.subr.mxu0 0.0
    %3577 = vmatpush1.msra.mxu0 0.0
    %3578 = vmatprep.subr.mxu0 0.0
    %3579 = vmatpush1.msra.mxu0 0.0
    %3580 = vmatprep.subr.mxu0 0.0
    %3581 = vmatpush1.msra.mxu0 0.0
    %3582 = vmatprep.subr.mxu0 0.0
    %3583 = vmatpush1.msra.mxu0 0.0
    %3584 = vmatprep.subr.mxu0 0.0
    %3585 = vmatpush1.msra.mxu0 0.0
    %3586 = vmatprep.subr.mxu0 0.0
    %3587 = vmatpush1.msra.mxu0 0.0
    %3588 = vmatprep.subr.mxu0 0.0
    %3589 = vmatpush1.msra.mxu0 0.0
    %3590 = vmatprep.subr.mxu0 0.0
    %3591 = vmatpush1.msra.mxu0 0.0
    %3592 = vmatprep.subr.mxu0 0.0
    %3593 = vmatpush1.msra.mxu0 0.0
    %3594 = vmatprep.subr.mxu0 0.0
    %3595 = vmatpush1.msra.mxu0 0.0
    %3596 = vmatprep.subr.mxu0 0.0
    %3597 = vmatpush1.msra.mxu0 0.0
    %3598 = vmatprep.subr.mxu0 0.0
    %3599 = vmatpush1.msra.mxu0 0.0
    %3600 = vmatprep.subr.mxu0 0.0
    %3601 = vmatpush1.msra.mxu0 0.0
    %3602 = vmatprep.subr.mxu0 0.0
    %3603 = vmatpush1.msra.mxu0 0.0
    %3604 = vmatprep.subr.mxu0 0.0
    %3605 = vmatpush1.msra.mxu0 0.0
    %3606 = vmatprep.subr.mxu0 0.0
    %3607 = vmatpush1.msra.mxu0 0.0
    %3608 = vmatprep.subr.mxu0 0.0
    %3609 = vmatpush1.msra.mxu0 0.0
    %3610 = vmatprep.subr.mxu0 0.0
    %3611 = vmatpush1.msra.mxu0 0.0
    %3612 = vmatprep.subr.mxu0 0.0
    %3613 = vmatpush1.msra.mxu0 0.0
    %3614 = vmatprep.mubr.f32.mxu0 0.0
    %v3615 = vand.u32 %v3547, 4294901760
    %v3616 = vsub.f32 %v3547, %v3615
    %v3617 = vand.u32 %v3616, 4294901760
    %v3618 = vsub.f32 %v3616, %v3617
    %v3619 = vand.u32 %v3618, 4294901760
    %3620 = vmatmul.mubr.f32.gmra.mrb[0].mxu0 %v3619
    %v3621 = vpop.f32.mrb[0].mxu0
    %v3622 = vadd.f32 0.0, %v3621
    %v3623 = vpop.f32.mrb[0].mxu0
    %3624 = vdwg.mxu0
    %3625 = vmatprep.subr.mxu0 0.0
    %v3626 = vand.u32 %v33, 4294901760
    %v3627 = vsub.f32 %v33, %v3626
    %v3628 = vand.u32 %v3627, 4294901760
    %v3629 = vsub.f32 %v3627, %v3628
    %v3630 = vand.u32 %v3629, 4294901760
    %3631 = vmatpush1.msra.mxu0 %v3630
    %3632 = vmatprep.subr.mxu0 0.0
    %3633 = vmatpush1.msra.mxu0 0.0
    %3634 = vmatprep.subr.mxu0 0.0
    %3635 = vmatpush1.msra.mxu0 0.0
    %3636 = vmatprep.subr.mxu0 0.0
    %3637 = vmatpush1.msra.mxu0 0.0
    %3638 = vmatprep.subr.mxu0 0.0
    %3639 = vmatpush1.msra.mxu0 0.0
    %3640 = vmatprep.subr.mxu0 0.0
    %3641 = vmatpush1.msra.mxu0 0.0
    %3642 = vmatprep.subr.mxu0 0.0
    %3643 = vmatpush1.msra.mxu0 0.0
    %3644 = vmatprep.subr.mxu0 0.0
    %3645 = vmatpush1.msra.mxu0 0.0
    %3646 = vmatprep.subr.mxu0 0.0
    %3647 = vmatpush1.msra.mxu0 0.0
    %3648 = vmatprep.subr.mxu0 0.0
    %3649 = vmatpush1.msra.mxu0 0.0
    %3650 = vmatprep.subr.mxu0 0.0
    %3651 = vmatpush1.msra.mxu0 0.0
    %3652 = vmatprep.subr.mxu0 0.0
    %3653 = vmatpush1.msra.mxu0 0.0
    %3654 = vmatprep.subr.mxu0 0.0
    %3655 = vmatpush1.msra.mxu0 0.0
    %3656 = vmatprep.subr.mxu0 0.0
    %3657 = vmatpush1.msra.mxu0 0.0
    %3658 = vmatprep.subr.mxu0 0.0
    %3659 = vmatpush1.msra.mxu0 0.0
    %3660 = vmatprep.subr.mxu0 0.0
    %3661 = vmatpush1.msra.mxu0 0.0
    %3662 = vmatprep.subr.mxu0 0.0
    %3663 = vmatpush1.msra.mxu0 0.0
    %3664 = vmatprep.subr.mxu0 0.0
    %3665 = vmatpush1.msra.mxu0 0.0
    %3666 = vmatprep.subr.mxu0 0.0
    %3667 = vmatpush1.msra.mxu0 0.0
    %3668 = vmatprep.subr.mxu0 0.0
    %3669 = vmatpush1.msra.mxu0 0.0
    %3670 = vmatprep.subr.mxu0 0.0
    %3671 = vmatpush1.msra.mxu0 0.0
    %3672 = vmatprep.subr.mxu0 0.0
    %3673 = vmatpush1.msra.mxu0 0.0
    %3674 = vmatprep.subr.mxu0 0.0
    %3675 = vmatpush1.msra.mxu0 0.0
    %3676 = vmatprep.subr.mxu0 0.0
    %3677 = vmatpush1.msra.mxu0 0.0
    %3678 = vmatprep.subr.mxu0 0.0
    %3679 = vmatpush1.msra.mxu0 0.0
    %3680 = vmatprep.subr.mxu0 0.0
    %3681 = vmatpush1.msra.mxu0 0.0
    %3682 = vmatprep.subr.mxu0 0.0
    %3683 = vmatpush1.msra.mxu0 0.0
    %3684 = vmatprep.subr.mxu0 0.0
    %3685 = vmatpush1.msra.mxu0 0.0
    %3686 = vmatprep.subr.mxu0 0.0
    %3687 = vmatpush1.msra.mxu0 0.0
    %3688 = vmatprep.subr.mxu0 0.0
    %3689 = vmatpush1.msra.mxu0 0.0
    %3690 = vmatprep.subr.mxu0 0.0
    %3691 = vmatpush1.msra.mxu0 0.0
    %3692 = vmatprep.subr.mxu0 0.0
    %3693 = vmatpush1.msra.mxu0 0.0
    %3694 = vmatprep.mubr.f32.mxu0 0.0
    %v3695 = vand.u32 %v3547, 4294901760
    %3696 = vmatmul.mubr.f32.gmra.mrb[0].mxu0 %v3695
    %v3697 = vpop.f32.mrb[0].mxu0
    %v3698 = vadd.f32 %v3622, %v3697
    %v3699 = vpop.f32.mrb[0].mxu0
    %3700 = vdwg.mxu0
    %3701 = vmatprep.subr.mxu0 0.0
    %v3702 = vand.u32 %v33, 4294901760
    %v3703 = vsub.f32 %v33, %v3702
    %3704 = vmatpush1.msra.mxu0 %v3703
    %3705 = vmatprep.subr.mxu0 0.0
    %3706 = vmatpush1.msra.mxu0 0.0
    %3707 = vmatprep.subr.mxu0 0.0
    %3708 = vmatpush1.msra.mxu0 0.0
    %3709 = vmatprep.subr.mxu0 0.0
    %3710 = vmatpush1.msra.mxu0 0.0
    %3711 = vmatprep.subr.mxu0 0.0
    %3712 = vmatpush1.msra.mxu0 0.0
    %3713 = vmatprep.subr.mxu0 0.0
    %3714 = vmatpush1.msra.mxu0 0.0
    %3715 = vmatprep.subr.mxu0 0.0
    %3716 = vmatpush1.msra.mxu0 0.0
    %3717 = vmatprep.subr.mxu0 0.0
    %3718 = vmatpush1.msra.mxu0 0.0
    %3719 = vmatprep.subr.mxu0 0.0
    %3720 = vmatpush1.msra.mxu0 0.0
    %3721 = vmatprep.subr.mxu0 0.0
    %3722 = vmatpush1.msra.mxu0 0.0
    %3723 = vmatprep.subr.mxu0 0.0
    %3724 = vmatpush1.msra.mxu0 0.0
    %3725 = vmatprep.subr.mxu0 0.0
    %3726 = vmatpush1.msra.mxu0 0.0
    %3727 = vmatprep.subr.mxu0 0.0
    %3728 = vmatpush1.msra.mxu0 0.0
    %3729 = vmatprep.subr.mxu0 0.0
    %3730 = vmatpush1.msra.mxu0 0.0
    %3731 = vmatprep.subr.mxu0 0.0
    %3732 = vmatpush1.msra.mxu0 0.0
    %3733 = vmatprep.subr.mxu0 0.0
    %3734 = vmatpush1.msra.mxu0 0.0
    %3735 = vmatprep.subr.mxu0 0.0
    %3736 = vmatpush1.msra.mxu0 0.0
    %3737 = vmatprep.subr.mxu0 0.0
    %3738 = vmatpush1.msra.mxu0 0.0
    %3739 = vmatprep.subr.mxu0 0.0
    %3740 = vmatpush1.msra.mxu0 0.0
    %3741 = vmatprep.subr.mxu0 0.0
    %3742 = vmatpush1.msra.mxu0 0.0
    %3743 = vmatprep.subr.mxu0 0.0
    %3744 = vmatpush1.msra.mxu0 0.0
    %3745 = vmatprep.subr.mxu0 0.0
    %3746 = vmatpush1.msra.mxu0 0.0
    %3747 = vmatprep.subr.mxu0 0.0
    %3748 = vmatpush1.msra.mxu0 0.0
    %3749 = vmatprep.subr.mxu0 0.0
    %3750 = vmatpush1.msra.mxu0 0.0
    %3751 = vmatprep.subr.mxu0 0.0
    %3752 = vmatpush1.msra.mxu0 0.0
    %3753 = vmatprep.subr.mxu0 0.0
    %3754 = vmatpush1.msra.mxu0 0.0
    %3755 = vmatprep.subr.mxu0 0.0
    %3756 = vmatpush1.msra.mxu0 0.0
    %3757 = vmatprep.subr.mxu0 0.0
    %3758 = vmatpush1.msra.mxu0 0.0
    %3759 = vmatprep.subr.mxu0 0.0
    %3760 = vmatpush1.msra.mxu0 0.0
    %3761 = vmatprep.subr.mxu0 0.0
    %3762 = vmatpush1.msra.mxu0 0.0
    %3763 = vmatprep.subr.mxu0 0.0
    %3764 = vmatpush1.msra.mxu0 0.0
    %3765 = vmatprep.subr.mxu0 0.0
    %3766 = vmatpush1.msra.mxu0 0.0
    %3767 = vmatprep.mubr.f32.mxu0 0.0
    %v3768 = vand.u32 %v3547, 4294901760
    %v3769 = vsub.f32 %v3547, %v3768
    %3770 = vmatmul.mubr.f32.gmra.mrb[0].mxu0 %v3769
    %v3771 = vpop.f32.mrb[0].mxu0
    %v3772 = vadd.f32 %v3698, %v3771
    %v3773 = vpop.f32.mrb[0].mxu0
    %3774 = vdwg.mxu0
    %3775 = vmatprep.subr.mxu0 0.0
    %v3776 = vand.u32 %v33, 4294901760
    %3777 = vmatpush1.msra.mxu0 %v3776
    %3778 = vmatprep.subr.mxu0 0.0
    %3779 = vmatpush1.msra.mxu0 0.0
    %3780 = vmatprep.subr.mxu0 0.0
    %3781 = vmatpush1.msra.mxu0 0.0
    %3782 = vmatprep.subr.mxu0 0.0
    %3783 = vmatpush1.msra.mxu0 0.0
    %3784 = vmatprep.subr.mxu0 0.0
    %3785 = vmatpush1.msra.mxu0 0.0
    %3786 = vmatprep.subr.mxu0 0.0
    %3787 = vmatpush1.msra.mxu0 0.0
    %3788 = vmatprep.subr.mxu0 0.0
    %3789 = vmatpush1.msra.mxu0 0.0
    %3790 = vmatprep.subr.mxu0 0.0
    %3791 = vmatpush1.msra.mxu0 0.0
    %3792 = vmatprep.subr.mxu0 0.0
    %3793 = vmatpush1.msra.mxu0 0.0
    %3794 = vmatprep.subr.mxu0 0.0
    %3795 = vmatpush1.msra.mxu0 0.0
    %3796 = vmatprep.subr.mxu0 0.0
    %3797 = vmatpush1.msra.mxu0 0.0
    %3798 = vmatprep.subr.mxu0 0.0
    %3799 = vmatpush1.msra.mxu0 0.0
    %3800 = vmatprep.subr.mxu0 0.0
    %3801 = vmatpush1.msra.mxu0 0.0
    %3802 = vmatprep.subr.mxu0 0.0
    %3803 = vmatpush1.msra.mxu0 0.0
    %3804 = vmatprep.subr.mxu0 0.0
    %3805 = vmatpush1.msra.mxu0 0.0
    %3806 = vmatprep.subr.mxu0 0.0
    %3807 = vmatpush1.msra.mxu0 0.0
    %3808 = vmatprep.subr.mxu0 0.0
    %3809 = vmatpush1.msra.mxu0 0.0
    %3810 = vmatprep.subr.mxu0 0.0
    %3811 = vmatpush1.msra.mxu0 0.0
    %3812 = vmatprep.subr.mxu0 0.0
    %3813 = vmatpush1.msra.mxu0 0.0
    %3814 = vmatprep.subr.mxu0 0.0
    %3815 = vmatpush1.msra.mxu0 0.0
    %3816 = vmatprep.subr.mxu0 0.0
    %3817 = vmatpush1.msra.mxu0 0.0
    %3818 = vmatprep.subr.mxu0 0.0
    %3819 = vmatpush1.msra.mxu0 0.0
    %3820 = vmatprep.subr.mxu0 0.0
    %3821 = vmatpush1.msra.mxu0 0.0
    %3822 = vmatprep.subr.mxu0 0.0
    %3823 = vmatpush1.msra.mxu0 0.0
    %3824 = vmatprep.subr.mxu0 0.0
    %3825 = vmatpush1.msra.mxu0 0.0
    %3826 = vmatprep.subr.mxu0 0.0
    %3827 = vmatpush1.msra.mxu0 0.0
    %3828 = vmatprep.subr.mxu0 0.0
    %3829 = vmatpush1.msra.mxu0 0.0
    %3830 = vmatprep.subr.mxu0 0.0
    %3831 = vmatpush1.msra.mxu0 0.0
    %3832 = vmatprep.subr.mxu0 0.0
    %3833 = vmatpush1.msra.mxu0 0.0
    %3834 = vmatprep.subr.mxu0 0.0
    %3835 = vmatpush1.msra.mxu0 0.0
    %3836 = vmatprep.subr.mxu0 0.0
    %3837 = vmatpush1.msra.mxu0 0.0
    %3838 = vmatprep.subr.mxu0 0.0
    %3839 = vmatpush1.msra.mxu0 0.0
    %3840 = vmatprep.mubr.f32.mxu0 0.0
    %v3841 = vand.u32 %v3547, 4294901760
    %v3842 = vsub.f32 %v3547, %v3841
    %v3843 = vand.u32 %v3842, 4294901760
    %3844 = vmatmul.mubr.f32.gmra.mrb[0].mxu0 %v3843
    %v3845 = vpop.f32.mrb[0].mxu0
    %v3846 = vadd.f32 %v3772, %v3845
    %v3847 = vpop.f32.mrb[0].mxu0
    %3848 = vdwg.mxu0
    %3849 = vmatprep.subr.mxu0 0.0
    %v3850 = vand.u32 %v33, 4294901760
    %v3851 = vsub.f32 %v33, %v3850
    %v3852 = vand.u32 %v3851, 4294901760
    %3853 = vmatpush1.msra.mxu0 %v3852
    %3854 = vmatprep.subr.mxu0 0.0
    %3855 = vmatpush1.msra.mxu0 0.0
    %3856 = vmatprep.subr.mxu0 0.0
    %3857 = vmatpush1.msra.mxu0 0.0
    %3858 = vmatprep.subr.mxu0 0.0
    %3859 = vmatpush1.msra.mxu0 0.0
    %3860 = vmatprep.subr.mxu0 0.0
    %3861 = vmatpush1.msra.mxu0 0.0
    %3862 = vmatprep.subr.mxu0 0.0
    %3863 = vmatpush1.msra.mxu0 0.0
    %3864 = vmatprep.subr.mxu0 0.0
    %3865 = vmatpush1.msra.mxu0 0.0
    %3866 = vmatprep.subr.mxu0 0.0
    %3867 = vmatpush1.msra.mxu0 0.0
    %3868 = vmatprep.subr.mxu0 0.0
    %3869 = vmatpush1.msra.mxu0 0.0
    %3870 = vmatprep.subr.mxu0 0.0
    %3871 = vmatpush1.msra.mxu0 0.0
    %3872 = vmatprep.subr.mxu0 0.0
    %3873 = vmatpush1.msra.mxu0 0.0
    %3874 = vmatprep.subr.mxu0 0.0
    %3875 = vmatpush1.msra.mxu0 0.0
    %3876 = vmatprep.subr.mxu0 0.0
    %3877 = vmatpush1.msra.mxu0 0.0
    %3878 = vmatprep.subr.mxu0 0.0
    %3879 = vmatpush1.msra.mxu0 0.0
    %3880 = vmatprep.subr.mxu0 0.0
    %3881 = vmatpush1.msra.mxu0 0.0
    %3882 = vmatprep.subr.mxu0 0.0
    %3883 = vmatpush1.msra.mxu0 0.0
    %3884 = vmatprep.subr.mxu0 0.0
    %3885 = vmatpush1.msra.mxu0 0.0
    %3886 = vmatprep.subr.mxu0 0.0
    %3887 = vmatpush1.msra.mxu0 0.0
    %3888 = vmatprep.subr.mxu0 0.0
    %3889 = vmatpush1.msra.mxu0 0.0
    %3890 = vmatprep.subr.mxu0 0.0
    %3891 = vmatpush1.msra.mxu0 0.0
    %3892 = vmatprep.subr.mxu0 0.0
    %3893 = vmatpush1.msra.mxu0 0.0
    %3894 = vmatprep.subr.mxu0 0.0
    %3895 = vmatpush1.msra.mxu0 0.0
    %3896 = vmatprep.subr.mxu0 0.0
    %3897 = vmatpush1.msra.mxu0 0.0
    %3898 = vmatprep.subr.mxu0 0.0
    %3899 = vmatpush1.msra.mxu0 0.0
    %3900 = vmatprep.subr.mxu0 0.0
    %3901 = vmatpush1.msra.mxu0 0.0
    %3902 = vmatprep.subr.mxu0 0.0
    %3903 = vmatpush1.msra.mxu0 0.0
    %3904 = vmatprep.subr.mxu0 0.0
    %3905 = vmatpush1.msra.mxu0 0.0
    %3906 = vmatprep.subr.mxu0 0.0
    %3907 = vmatpush1.msra.mxu0 0.0
    %3908 = vmatprep.subr.mxu0 0.0
    %3909 = vmatpush1.msra.mxu0 0.0
    %3910 = vmatprep.subr.mxu0 0.0
    %3911 = vmatpush1.msra.mxu0 0.0
    %3912 = vmatprep.subr.mxu0 0.0
    %3913 = vmatpush1.msra.mxu0 0.0
    %3914 = vmatprep.subr.mxu0 0.0
    %3915 = vmatpush1.msra.mxu0 0.0
    %3916 = vmatprep.mubr.f32.mxu0 0.0
    %v3917 = vand.u32 %v3547, 4294901760
    %3918 = vmatmul.mubr.f32.gmra.mrb[0].mxu0 %v3917
    %v3919 = vpop.f32.mrb[0].mxu0
    %v3920 = vadd.f32 %v3846, %v3919
    %v3921 = vpop.f32.mrb[0].mxu0
    %3922 = vdwg.mxu0
    %3923 = vmatprep.subr.mxu0 0.0
    %v3924 = vand.u32 %v33, 4294901760
    %3925 = vmatpush1.msra.mxu0 %v3924
    %3926 = vmatprep.subr.mxu0 0.0
    %3927 = vmatpush1.msra.mxu0 0.0
    %3928 = vmatprep.subr.mxu0 0.0
    %3929 = vmatpush1.msra.mxu0 0.0
    %3930 = vmatprep.subr.mxu0 0.0
    %3931 = vmatpush1.msra.mxu0 0.0
    %3932 = vmatprep.subr.mxu0 0.0
    %3933 = vmatpush1.msra.mxu0 0.0
    %3934 = vmatprep.subr.mxu0 0.0
    %3935 = vmatpush1.msra.mxu0 0.0
    %3936 = vmatprep.subr.mxu0 0.0
    %3937 = vmatpush1.msra.mxu0 0.0
    %3938 = vmatprep.subr.mxu0 0.0
    %3939 = vmatpush1.msra.mxu0 0.0
    %3940 = vmatprep.subr.mxu0 0.0
    %3941 = vmatpush1.msra.mxu0 0.0
    %3942 = vmatprep.subr.mxu0 0.0
    %3943 = vmatpush1.msra.mxu0 0.0
    %3944 = vmatprep.subr.mxu0 0.0
    %3945 = vmatpush1.msra.mxu0 0.0
    %3946 = vmatprep.subr.mxu0 0.0
    %3947 = vmatpush1.msra.mxu0 0.0
    %3948 = vmatprep.subr.mxu0 0.0
    %3949 = vmatpush1.msra.mxu0 0.0
    %3950 = vmatprep.subr.mxu0 0.0
    %3951 = vmatpush1.msra.mxu0 0.0
    %3952 = vmatprep.subr.mxu0 0.0
    %3953 = vmatpush1.msra.mxu0 0.0
    %3954 = vmatprep.subr.mxu0 0.0
    %3955 = vmatpush1.msra.mxu0 0.0
    %3956 = vmatprep.subr.mxu0 0.0
    %3957 = vmatpush1.msra.mxu0 0.0
    %3958 = vmatprep.subr.mxu0 0.0
    %3959 = vmatpush1.msra.mxu0 0.0
    %3960 = vmatprep.subr.mxu0 0.0
    %3961 = vmatpush1.msra.mxu0 0.0
    %3962 = vmatprep.subr.mxu0 0.0
    %3963 = vmatpush1.msra.mxu0 0.0
    %3964 = vmatprep.subr.mxu0 0.0
    %3965 = vmatpush1.msra.mxu0 0.0
    %3966 = vmatprep.subr.mxu0 0.0
    %3967 = vmatpush1.msra.mxu0 0.0
    %3968 = vmatprep.subr.mxu0 0.0
    %3969 = vmatpush1.msra.mxu0 0.0
    %3970 = vmatprep.subr.mxu0 0.0
    %3971 = vmatpush1.msra.mxu0 0.0
    %3972 = vmatprep.subr.mxu0 0.0
    %3973 = vmatpush1.msra.mxu0 0.0
    %3974 = vmatprep.subr.mxu0 0.0
    %3975 = vmatpush1.msra.mxu0 0.0
    %3976 = vmatprep.subr.mxu0 0.0
    %3977 = vmatpush1.msra.mxu0 0.0
    %3978 = vmatprep.subr.mxu0 0.0
    %3979 = vmatpush1.msra.mxu0 0.0
    %3980 = vmatprep.subr.mxu0 0.0
    %3981 = vmatpush1.msra.mxu0 0.0
    %3982 = vmatprep.subr.mxu0 0.0
    %3983 = vmatpush1.msra.mxu0 0.0
    %3984 = vmatprep.subr.mxu0 0.0
    %3985 = vmatpush1.msra.mxu0 0.0
    %3986 = vmatprep.subr.mxu0 0.0
    %3987 = vmatpush1.msra.mxu0 0.0
    %3988 = vmatprep.mubr.f32.mxu0 0.0
    %v3989 = vand.u32 %v3547, 4294901760
    %3990 = vmatmul.mubr.f32.gmra.mrb[0].mxu0 %v3989
    %v3991 = vpop.f32.mrb[0].mxu0
    %v3992 = vadd.f32 %v3920, %v3991
    %v3993 = vpop.f32.mrb[0].mxu0
    %3994 = vdwg.mxu0
    %v3995 = vadd.f32 %v3545, %v3510
    %v3996 = vlog2.pop %v3992
    %v3997 = vmul.f32 %v3996, 0.6931472
    %v3998 = vadd.f32 %v3995, %v3997
    %v3999 = vsel %vm69, %v3998, -inf
    %4000 = vmax.xlane.f32.xlu0 %v3999
    %v4001 = vpop.xlane.xlu0 %4000
    %v4002 = vsub.f32 %v3998, %v4001
    %v4003 = vmul.f32 %v4002, 1.442695
    %v4004 = vpow.pop %v4003
    %v4005 = vsel %vm69, %v4004, 0.0
    %4006 = vadd.xlane.f32.xlu0 %v4005
    %v4007 = vpop.xlane.xlu0 %4006
    %v4008 = vlog2.pop %v4007
    %v4009 = vmul.f32 %v4008, 0.6931472
    %v4010 = vadd.f32 %v4001, %v4009
    %vm4011 = vcmask 68672
    %4012 = vst.msk [vmem:[#allocation5] sm:$0xf] %vm4011, %v4010
    %s4013 = sld [smem:[#allocation2 + $0x480]]
    %s4014 = scalar_lea.vmem %s1, %s4013
    %v4015 = vld [vmem:[%s4014] sm:$0x1]
    %s4016 = sld [smem:[#allocation2 + $0x481]]
    %s4017 = scalar_lea.vmem %s1, %s4016
    %v4018 = vld [vmem:[%s4017] sm:$0x1]
    %s4019 = sld [smem:[#allocation2 + $0x482]]
    %s4020 = scalar_lea.vmem %s1, %s4019
    %v4021 = vld [vmem:[%s4020] sm:$0x1]
    %s4022 = sld [smem:[#allocation2 + $0x483]]
    %s4023 = scalar_lea.vmem %s1, %s4022
    %v4024 = vld [vmem:[%s4023] sm:$0x1]
    %v4026 = vrot.slane %v4018, 7
    %v4029 = vrot.slane %v4021, 6
    %v4032 = vrot.slane %v4024, 5
    %v4034 = vsel %vm56, %v4015, %v4026
    %v4035 = vsel %vm58, %v4034, %v4029
    %v4036 = vsel %vm60, %v4035, %v4032
    %v4038 = vsel %vm108, %v4004, 0
    %4040 = vmatprep.subr.mxu0 0.0
    %v4041 = vand.u32 %v33, 4294901760
    %4042 = vmatpush1.msra.mxu0 %v4041
    %4043 = vmatprep.subr.mxu0 0.0
    %4044 = vmatpush1.msra.mxu0 0.0
    %4045 = vmatprep.subr.mxu0 0.0
    %4046 = vmatpush1.msra.mxu0 0.0
    %4047 = vmatprep.subr.mxu0 0.0
    %4048 = vmatpush1.msra.mxu0 0.0
    %4049 = vmatprep.subr.mxu0 0.0
    %4050 = vmatpush1.msra.mxu0 0.0
    %4051 = vmatprep.subr.mxu0 0.0
    %4052 = vmatpush1.msra.mxu0 0.0
    %4053 = vmatprep.subr.mxu0 0.0
    %4054 = vmatpush1.msra.mxu0 0.0
    %4055 = vmatprep.subr.mxu0 0.0
    %4056 = vmatpush1.msra.mxu0 0.0
    %4057 = vmatprep.subr.mxu0 0.0
    %4058 = vmatpush1.msra.mxu0 0.0
    %4059 = vmatprep.subr.mxu0 0.0
    %4060 = vmatpush1.msra.mxu0 0.0
    %4061 = vmatprep.subr.mxu0 0.0
    %4062 = vmatpush1.msra.mxu0 0.0
    %4063 = vmatprep.subr.mxu0 0.0
    %4064 = vmatpush1.msra.mxu0 0.0
    %4065 = vmatprep.subr.mxu0 0.0
    %4066 = vmatpush1.msra.mxu0 0.0
    %4067 = vmatprep.subr.mxu0 0.0
    %4068 = vmatpush1.msra.mxu0 0.0
    %4069 = vmatprep.subr.mxu0 0.0
    %4070 = vmatpush1.msra.mxu0 0.0
    %4071 = vmatprep.subr.mxu0 0.0
    %4072 = vmatpush1.msra.mxu0 0.0
    %4073 = vmatprep.subr.mxu0 0.0
    %4074 = vmatpush1.msra.mxu0 0.0
    %4075 = vmatprep.subr.mxu0 0.0
    %4076 = vmatpush1.msra.mxu0 0.0
    %4077 = vmatprep.subr.mxu0 0.0
    %4078 = vmatpush1.msra.mxu0 0.0
    %4079 = vmatprep.subr.mxu0 0.0
    %4080 = vmatpush1.msra.mxu0 0.0
    %4081 = vmatprep.subr.mxu0 0.0
    %4082 = vmatpush1.msra.mxu0 0.0
    %4083 = vmatprep.subr.mxu0 0.0
    %4084 = vmatpush1.msra.mxu0 0.0
    %4085 = vmatprep.subr.mxu0 0.0
    %4086 = vmatpush1.msra.mxu0 0.0
    %4087 = vmatprep.subr.mxu0 0.0
    %4088 = vmatpush1.msra.mxu0 0.0
    %4089 = vmatprep.subr.mxu0 0.0
    %4090 = vmatpush1.msra.mxu0 0.0
    %4091 = vmatprep.subr.mxu0 0.0
    %4092 = vmatpush1.msra.mxu0 0.0
    %4093 = vmatprep.subr.mxu0 0.0
    %4094 = vmatpush1.msra.mxu0 0.0
    %4095 = vmatprep.subr.mxu0 0.0
    %4096 = vmatpush1.msra.mxu0 0.0
    %4097 = vmatprep.subr.mxu0 0.0
    %4098 = vmatpush1.msra.mxu0 0.0
    %4099 = vmatprep.subr.mxu0 0.0
    %4100 = vmatpush1.msra.mxu0 0.0
    %4101 = vmatprep.subr.mxu0 0.0
    %4102 = vmatpush1.msra.mxu0 0.0
    %4103 = vmatprep.subr.mxu0 0.0
    %4104 = vmatpush1.msra.mxu0 0.0
    %4105 = vmatprep.mubr.f32.mxu0 0.0
    %v4106 = vand.u32 %v4038, 4294901760
    %v4107 = vsub.f32 %v4038, %v4106
    %v4108 = vand.u32 %v4107, 4294901760
    %v4109 = vsub.f32 %v4107, %v4108
    %v4110 = vand.u32 %v4109, 4294901760
    %4111 = vmatmul.mubr.f32.gmra.mrb[0].mxu0 %v4110
    %v4112 = vpop.f32.mrb[0].mxu0
    %v4113 = vadd.f32 0.0, %v4112
    %v4114 = vpop.f32.mrb[0].mxu0
    %4115 = vdwg.mxu0
    %4116 = vmatprep.subr.mxu0 0.0
    %v4117 = vand.u32 %v33, 4294901760
    %v4118 = vsub.f32 %v33, %v4117
    %v4119 = vand.u32 %v4118, 4294901760
    %v4120 = vsub.f32 %v4118, %v4119
    %v4121 = vand.u32 %v4120, 4294901760
    %4122 = vmatpush1.msra.mxu0 %v4121
    %4123 = vmatprep.subr.mxu0 0.0
    %4124 = vmatpush1.msra.mxu0 0.0
    %4125 = vmatprep.subr.mxu0 0.0
    %4126 = vmatpush1.msra.mxu0 0.0
    %4127 = vmatprep.subr.mxu0 0.0
    %4128 = vmatpush1.msra.mxu0 0.0
    %4129 = vmatprep.subr.mxu0 0.0
    %4130 = vmatpush1.msra.mxu0 0.0
    %4131 = vmatprep.subr.mxu0 0.0
    %4132 = vmatpush1.msra.mxu0 0.0
    %4133 = vmatprep.subr.mxu0 0.0
    %4134 = vmatpush1.msra.mxu0 0.0
    %4135 = vmatprep.subr.mxu0 0.0
    %4136 = vmatpush1.msra.mxu0 0.0
    %4137 = vmatprep.subr.mxu0 0.0
    %4138 = vmatpush1.msra.mxu0 0.0
    %4139 = vmatprep.subr.mxu0 0.0
    %4140 = vmatpush1.msra.mxu0 0.0
    %4141 = vmatprep.subr.mxu0 0.0
    %4142 = vmatpush1.msra.mxu0 0.0
    %4143 = vmatprep.subr.mxu0 0.0
    %4144 = vmatpush1.msra.mxu0 0.0
    %4145 = vmatprep.subr.mxu0 0.0
    %4146 = vmatpush1.msra.mxu0 0.0
    %4147 = vmatprep.subr.mxu0 0.0
    %4148 = vmatpush1.msra.mxu0 0.0
    %4149 = vmatprep.subr.mxu0 0.0
    %4150 = vmatpush1.msra.mxu0 0.0
    %4151 = vmatprep.subr.mxu0 0.0
    %4152 = vmatpush1.msra.mxu0 0.0
    %4153 = vmatprep.subr.mxu0 0.0
    %4154 = vmatpush1.msra.mxu0 0.0
    %4155 = vmatprep.subr.mxu0 0.0
    %4156 = vmatpush1.msra.mxu0 0.0
    %4157 = vmatprep.subr.mxu0 0.0
    %4158 = vmatpush1.msra.mxu0 0.0
    %4159 = vmatprep.subr.mxu0 0.0
    %4160 = vmatpush1.msra.mxu0 0.0
    %4161 = vmatprep.subr.mxu0 0.0
    %4162 = vmatpush1.msra.mxu0 0.0
    %4163 = vmatprep.subr.mxu0 0.0
    %4164 = vmatpush1.msra.mxu0 0.0
    %4165 = vmatprep.subr.mxu0 0.0
    %4166 = vmatpush1.msra.mxu0 0.0
    %4167 = vmatprep.subr.mxu0 0.0
    %4168 = vmatpush1.msra.mxu0 0.0
    %4169 = vmatprep.subr.mxu0 0.0
    %4170 = vmatpush1.msra.mxu0 0.0
    %4171 = vmatprep.subr.mxu0 0.0
    %4172 = vmatpush1.msra.mxu0 0.0
    %4173 = vmatprep.subr.mxu0 0.0
    %4174 = vmatpush1.msra.mxu0 0.0
    %4175 = vmatprep.subr.mxu0 0.0
    %4176 = vmatpush1.msra.mxu0 0.0
    %4177 = vmatprep.subr.mxu0 0.0
    %4178 = vmatpush1.msra.mxu0 0.0
    %4179 = vmatprep.subr.mxu0 0.0
    %4180 = vmatpush1.msra.mxu0 0.0
    %4181 = vmatprep.subr.mxu0 0.0
    %4182 = vmatpush1.msra.mxu0 0.0
    %4183 = vmatprep.subr.mxu0 0.0
    %4184 = vmatpush1.msra.mxu0 0.0
    %4185 = vmatprep.mubr.f32.mxu0 0.0
    %v4186 = vand.u32 %v4038, 4294901760
    %4187 = vmatmul.mubr.f32.gmra.mrb[0].mxu0 %v4186
    %v4188 = vpop.f32.mrb[0].mxu0
    %v4189 = vadd.f32 %v4113, %v4188
    %v4190 = vpop.f32.mrb[0].mxu0
    %4191 = vdwg.mxu0
    %4192 = vmatprep.subr.mxu0 0.0
    %v4193 = vand.u32 %v33, 4294901760
    %v4194 = vsub.f32 %v33, %v4193
    %4195 = vmatpush1.msra.mxu0 %v4194
    %4196 = vmatprep.subr.mxu0 0.0
    %4197 = vmatpush1.msra.mxu0 0.0
    %4198 = vmatprep.subr.mxu0 0.0
    %4199 = vmatpush1.msra.mxu0 0.0
    %4200 = vmatprep.subr.mxu0 0.0
    %4201 = vmatpush1.msra.mxu0 0.0
    %4202 = vmatprep.subr.mxu0 0.0
    %4203 = vmatpush1.msra.mxu0 0.0
    %4204 = vmatprep.subr.mxu0 0.0
    %4205 = vmatpush1.msra.mxu0 0.0
    %4206 = vmatprep.subr.mxu0 0.0
    %4207 = vmatpush1.msra.mxu0 0.0
    %4208 = vmatprep.subr.mxu0 0.0
    %4209 = vmatpush1.msra.mxu0 0.0
    %4210 = vmatprep.subr.mxu0 0.0
    %4211 = vmatpush1.msra.mxu0 0.0
    %4212 = vmatprep.subr.mxu0 0.0
    %4213 = vmatpush1.msra.mxu0 0.0
    %4214 = vmatprep.subr.mxu0 0.0
    %4215 = vmatpush1.msra.mxu0 0.0
    %4216 = vmatprep.subr.mxu0 0.0
    %4217 = vmatpush1.msra.mxu0 0.0
    %4218 = vmatprep.subr.mxu0 0.0
    %4219 = vmatpush1.msra.mxu0 0.0
    %4220 = vmatprep.subr.mxu0 0.0
    %4221 = vmatpush1.msra.mxu0 0.0
    %4222 = vmatprep.subr.mxu0 0.0
    %4223 = vmatpush1.msra.mxu0 0.0
    %4224 = vmatprep.subr.mxu0 0.0
    %4225 = vmatpush1.msra.mxu0 0.0
    %4226 = vmatprep.subr.mxu0 0.0
    %4227 = vmatpush1.msra.mxu0 0.0
    %4228 = vmatprep.subr.mxu0 0.0
    %4229 = vmatpush1.msra.mxu0 0.0
    %4230 = vmatprep.subr.mxu0 0.0
    %4231 = vmatpush1.msra.mxu0 0.0
    %4232 = vmatprep.subr.mxu0 0.0
    %4233 = vmatpush1.msra.mxu0 0.0
    %4234 = vmatprep.subr.mxu0 0.0
    %4235 = vmatpush1.msra.mxu0 0.0
    %4236 = vmatprep.subr.mxu0 0.0
    %4237 = vmatpush1.msra.mxu0 0.0
    %4238 = vmatprep.subr.mxu0 0.0
    %4239 = vmatpush1.msra.mxu0 0.0
    %4240 = vmatprep.subr.mxu0 0.0
    %4241 = vmatpush1.msra.mxu0 0.0
    %4242 = vmatprep.subr.mxu0 0.0
    %4243 = vmatpush1.msra.mxu0 0.0
    %4244 = vmatprep.subr.mxu0 0.0
    %4245 = vmatpush1.msra.mxu0 0.0
    %4246 = vmatprep.subr.mxu0 0.0
    %4247 = vmatpush1.msra.mxu0 0.0
    %4248 = vmatprep.subr.mxu0 0.0
    %4249 = vmatpush1.msra.mxu0 0.0
    %4250 = vmatprep.subr.mxu0 0.0
    %4251 = vmatpush1.msra.mxu0 0.0
    %4252 = vmatprep.subr.mxu0 0.0
    %4253 = vmatpush1.msra.mxu0 0.0
    %4254 = vmatprep.subr.mxu0 0.0
    %4255 = vmatpush1.msra.mxu0 0.0
    %4256 = vmatprep.subr.mxu0 0.0
    %4257 = vmatpush1.msra.mxu0 0.0
    %4258 = vmatprep.mubr.f32.mxu0 0.0
    %v4259 = vand.u32 %v4038, 4294901760
    %v4260 = vsub.f32 %v4038, %v4259
    %4261 = vmatmul.mubr.f32.gmra.mrb[0].mxu0 %v4260
    %v4262 = vpop.f32.mrb[0].mxu0
    %v4263 = vadd.f32 %v4189, %v4262
    %v4264 = vpop.f32.mrb[0].mxu0
    %4265 = vdwg.mxu0
    %4266 = vmatprep.subr.mxu0 0.0
    %v4267 = vand.u32 %v33, 4294901760
    %4268 = vmatpush1.msra.mxu0 %v4267
    %4269 = vmatprep.subr.mxu0 0.0
    %4270 = vmatpush1.msra.mxu0 0.0
    %4271 = vmatprep.subr.mxu0 0.0
    %4272 = vmatpush1.msra.mxu0 0.0
    %4273 = vmatprep.subr.mxu0 0.0
    %4274 = vmatpush1.msra.mxu0 0.0
    %4275 = vmatprep.subr.mxu0 0.0
    %4276 = vmatpush1.msra.mxu0 0.0
    %4277 = vmatprep.subr.mxu0 0.0
    %4278 = vmatpush1.msra.mxu0 0.0
    %4279 = vmatprep.subr.mxu0 0.0
    %4280 = vmatpush1.msra.mxu0 0.0
    %4281 = vmatprep.subr.mxu0 0.0
    %4282 = vmatpush1.msra.mxu0 0.0
    %4283 = vmatprep.subr.mxu0 0.0
    %4284 = vmatpush1.msra.mxu0 0.0
    %4285 = vmatprep.subr.mxu0 0.0
    %4286 = vmatpush1.msra.mxu0 0.0
    %4287 = vmatprep.subr.mxu0 0.0
    %4288 = vmatpush1.msra.mxu0 0.0
    %4289 = vmatprep.subr.mxu0 0.0
    %4290 = vmatpush1.msra.mxu0 0.0
    %4291 = vmatprep.subr.mxu0 0.0
    %4292 = vmatpush1.msra.mxu0 0.0
    %4293 = vmatprep.subr.mxu0 0.0
    %4294 = vmatpush1.msra.mxu0 0.0
    %4295 = vmatprep.subr.mxu0 0.0
    %4296 = vmatpush1.msra.mxu0 0.0
    %4297 = vmatprep.subr.mxu0 0.0
    %4298 = vmatpush1.msra.mxu0 0.0
    %4299 = vmatprep.subr.mxu0 0.0
    %4300 = vmatpush1.msra.mxu0 0.0
    %4301 = vmatprep.subr.mxu0 0.0
    %4302 = vmatpush1.msra.mxu0 0.0
    %4303 = vmatprep.subr.mxu0 0.0
    %4304 = vmatpush1.msra.mxu0 0.0
    %4305 = vmatprep.subr.mxu0 0.0
    %4306 = vmatpush1.msra.mxu0 0.0
    %4307 = vmatprep.subr.mxu0 0.0
    %4308 = vmatpush1.msra.mxu0 0.0
    %4309 = vmatprep.subr.mxu0 0.0
    %4310 = vmatpush1.msra.mxu0 0.0
    %4311 = vmatprep.subr.mxu0 0.0
    %4312 = vmatpush1.msra.mxu0 0.0
    %4313 = vmatprep.subr.mxu0 0.0
    %4314 = vmatpush1.msra.mxu0 0.0
    %4315 = vmatprep.subr.mxu0 0.0
    %4316 = vmatpush1.msra.mxu0 0.0
    %4317 = vmatprep.subr.mxu0 0.0
    %4318 = vmatpush1.msra.mxu0 0.0
    %4319 = vmatprep.subr.mxu0 0.0
    %4320 = vmatpush1.msra.mxu0 0.0
    %4321 = vmatprep.subr.mxu0 0.0
    %4322 = vmatpush1.msra.mxu0 0.0
    %4323 = vmatprep.subr.mxu0 0.0
    %4324 = vmatpush1.msra.mxu0 0.0
    %4325 = vmatprep.subr.mxu0 0.0
    %4326 = vmatpush1.msra.mxu0 0.0
    %4327 = vmatprep.subr.mxu0 0.0
    %4328 = vmatpush1.msra.mxu0 0.0
    %4329 = vmatprep.subr.mxu0 0.0
    %4330 = vmatpush1.msra.mxu0 0.0
    %4331 = vmatprep.mubr.f32.mxu0 0.0
    %v4332 = vand.u32 %v4038, 4294901760
    %v4333 = vsub.f32 %v4038, %v4332
    %v4334 = vand.u32 %v4333, 4294901760
    %4335 = vmatmul.mubr.f32.gmra.mrb[0].mxu0 %v4334
    %v4336 = vpop.f32.mrb[0].mxu0
    %v4337 = vadd.f32 %v4263, %v4336
    %v4338 = vpop.f32.mrb[0].mxu0
    %4339 = vdwg.mxu0
    %4340 = vmatprep.subr.mxu0 0.0
    %v4341 = vand.u32 %v33, 4294901760
    %v4342 = vsub.f32 %v33, %v4341
    %v4343 = vand.u32 %v4342, 4294901760
    %4344 = vmatpush1.msra.mxu0 %v4343
    %4345 = vmatprep.subr.mxu0 0.0
    %4346 = vmatpush1.msra.mxu0 0.0
    %4347 = vmatprep.subr.mxu0 0.0
    %4348 = vmatpush1.msra.mxu0 0.0
    %4349 = vmatprep.subr.mxu0 0.0
    %4350 = vmatpush1.msra.mxu0 0.0
    %4351 = vmatprep.subr.mxu0 0.0
    %4352 = vmatpush1.msra.mxu0 0.0
    %4353 = vmatprep.subr.mxu0 0.0
    %4354 = vmatpush1.msra.mxu0 0.0
    %4355 = vmatprep.subr.mxu0 0.0
    %4356 = vmatpush1.msra.mxu0 0.0
    %4357 = vmatprep.subr.mxu0 0.0
    %4358 = vmatpush1.msra.mxu0 0.0
    %4359 = vmatprep.subr.mxu0 0.0
    %4360 = vmatpush1.msra.mxu0 0.0
    %4361 = vmatprep.subr.mxu0 0.0
    %4362 = vmatpush1.msra.mxu0 0.0
    %4363 = vmatprep.subr.mxu0 0.0
    %4364 = vmatpush1.msra.mxu0 0.0
    %4365 = vmatprep.subr.mxu0 0.0
    %4366 = vmatpush1.msra.mxu0 0.0
    %4367 = vmatprep.subr.mxu0 0.0
    %4368 = vmatpush1.msra.mxu0 0.0
    %4369 = vmatprep.subr.mxu0 0.0
    %4370 = vmatpush1.msra.mxu0 0.0
    %4371 = vmatprep.subr.mxu0 0.0
    %4372 = vmatpush1.msra.mxu0 0.0
    %4373 = vmatprep.subr.mxu0 0.0
    %4374 = vmatpush1.msra.mxu0 0.0
    %4375 = vmatprep.subr.mxu0 0.0
    %4376 = vmatpush1.msra.mxu0 0.0
    %4377 = vmatprep.subr.mxu0 0.0
    %4378 = vmatpush1.msra.mxu0 0.0
    %4379 = vmatprep.subr.mxu0 0.0
    %4380 = vmatpush1.msra.mxu0 0.0
    %4381 = vmatprep.subr.mxu0 0.0
    %4382 = vmatpush1.msra.mxu0 0.0
    %4383 = vmatprep.subr.mxu0 0.0
    %4384 = vmatpush1.msra.mxu0 0.0
    %4385 = vmatprep.subr.mxu0 0.0
    %4386 = vmatpush1.msra.mxu0 0.0
    %4387 = vmatprep.subr.mxu0 0.0
    %4388 = vmatpush1.msra.mxu0 0.0
    %4389 = vmatprep.subr.mxu0 0.0
    %4390 = vmatpush1.msra.mxu0 0.0
    %4391 = vmatprep.subr.mxu0 0.0
    %4392 = vmatpush1.msra.mxu0 0.0
    %4393 = vmatprep.subr.mxu0 0.0
    %4394 = vmatpush1.msra.mxu0 0.0
    %4395 = vmatprep.subr.mxu0 0.0
    %4396 = vmatpush1.msra.mxu0 0.0
    %4397 = vmatprep.subr.mxu0 0.0
    %4398 = vmatpush1.msra.mxu0 0.0
    %4399 = vmatprep.subr.mxu0 0.0
    %4400 = vmatpush1.msra.mxu0 0.0
    %4401 = vmatprep.subr.mxu0 0.0
    %4402 = vmatpush1.msra.mxu0 0.0
    %4403 = vmatprep.subr.mxu0 0.0
    %4404 = vmatpush1.msra.mxu0 0.0
    %4405 = vmatprep.subr.mxu0 0.0
    %4406 = vmatpush1.msra.mxu0 0.0
    %4407 = vmatprep.mubr.f32.mxu0 0.0
    %v4408 = vand.u32 %v4038, 4294901760
    %4409 = vmatmul.mubr.f32.gmra.mrb[0].mxu0 %v4408
    %v4410 = vpop.f32.mrb[0].mxu0
    %v4411 = vadd.f32 %v4337, %v4410
    %v4412 = vpop.f32.mrb[0].mxu0
    %4413 = vdwg.mxu0
    %4414 = vmatprep.subr.mxu0 0.0
    %v4415 = vand.u32 %v33, 4294901760
    %4416 = vmatpush1.msra.mxu0 %v4415
    %4417 = vmatprep.subr.mxu0 0.0
    %4418 = vmatpush1.msra.mxu0 0.0
    %4419 = vmatprep.subr.mxu0 0.0
    %4420 = vmatpush1.msra.mxu0 0.0
    %4421 = vmatprep.subr.mxu0 0.0
    %4422 = vmatpush1.msra.mxu0 0.0
    %4423 = vmatprep.subr.mxu0 0.0
    %4424 = vmatpush1.msra.mxu0 0.0
    %4425 = vmatprep.subr.mxu0 0.0
    %4426 = vmatpush1.msra.mxu0 0.0
    %4427 = vmatprep.subr.mxu0 0.0
    %4428 = vmatpush1.msra.mxu0 0.0
    %4429 = vmatprep.subr.mxu0 0.0
    %4430 = vmatpush1.msra.mxu0 0.0
    %4431 = vmatprep.subr.mxu0 0.0
    %4432 = vmatpush1.msra.mxu0 0.0
    %4433 = vmatprep.subr.mxu0 0.0
    %4434 = vmatpush1.msra.mxu0 0.0
    %4435 = vmatprep.subr.mxu0 0.0
    %4436 = vmatpush1.msra.mxu0 0.0
    %4437 = vmatprep.subr.mxu0 0.0
    %4438 = vmatpush1.msra.mxu0 0.0
    %4439 = vmatprep.subr.mxu0 0.0
    %4440 = vmatpush1.msra.mxu0 0.0
    %4441 = vmatprep.subr.mxu0 0.0
    %4442 = vmatpush1.msra.mxu0 0.0
    %4443 = vmatprep.subr.mxu0 0.0
    %4444 = vmatpush1.msra.mxu0 0.0
    %4445 = vmatprep.subr.mxu0 0.0
    %4446 = vmatpush1.msra.mxu0 0.0
    %4447 = vmatprep.subr.mxu0 0.0
    %4448 = vmatpush1.msra.mxu0 0.0
    %4449 = vmatprep.subr.mxu0 0.0
    %4450 = vmatpush1.msra.mxu0 0.0
    %4451 = vmatprep.subr.mxu0 0.0
    %4452 = vmatpush1.msra.mxu0 0.0
    %4453 = vmatprep.subr.mxu0 0.0
    %4454 = vmatpush1.msra.mxu0 0.0
    %4455 = vmatprep.subr.mxu0 0.0
    %4456 = vmatpush1.msra.mxu0 0.0
    %4457 = vmatprep.subr.mxu0 0.0
    %4458 = vmatpush1.msra.mxu0 0.0
    %4459 = vmatprep.subr.mxu0 0.0
    %4460 = vmatpush1.msra.mxu0 0.0
    %4461 = vmatprep.subr.mxu0 0.0
    %4462 = vmatpush1.msra.mxu0 0.0
    %4463 = vmatprep.subr.mxu0 0.0
    %4464 = vmatpush1.msra.mxu0 0.0
    %4465 = vmatprep.subr.mxu0 0.0
    %4466 = vmatpush1.msra.mxu0 0.0
    %4467 = vmatprep.subr.mxu0 0.0
    %4468 = vmatpush1.msra.mxu0 0.0
    %4469 = vmatprep.subr.mxu0 0.0
    %4470 = vmatpush1.msra.mxu0 0.0
    %4471 = vmatprep.subr.mxu0 0.0
    %4472 = vmatpush1.msra.mxu0 0.0
    %4473 = vmatprep.subr.mxu0 0.0
    %4474 = vmatpush1.msra.mxu0 0.0
    %4475 = vmatprep.subr.mxu0 0.0
    %4476 = vmatpush1.msra.mxu0 0.0
    %4477 = vmatprep.subr.mxu0 0.0
    %4478 = vmatpush1.msra.mxu0 0.0
    %4479 = vmatprep.mubr.f32.mxu0 0.0
    %v4480 = vand.u32 %v4038, 4294901760
    %4481 = vmatmul.mubr.f32.gmra.mrb[0].mxu0 %v4480
    %v4482 = vpop.f32.mrb[0].mxu0
    %v4483 = vadd.f32 %v4411, %v4482
    %v4484 = vpop.f32.mrb[0].mxu0
    %4485 = vdwg.mxu0
    %v4486 = vadd.f32 %v4036, %v4001
    %v4487 = vlog2.pop %v4483
    %v4488 = vmul.f32 %v4487, 0.6931472
    %v4489 = vadd.f32 %v4486, %v4488
    %v4490 = vsel %vm69, %v4489, -inf
    %4491 = vmax.xlane.f32.xlu0 %v4490
    %v4492 = vpop.xlane.xlu0 %4491
    %v4493 = vsub.f32 %v4489, %v4492
    %v4494 = vmul.f32 %v4493, 1.442695
    %v4495 = vpow.pop %v4494
    %v4496 = vsel %vm69, %v4495, 0.0
    %4497 = vadd.xlane.f32.xlu0 %v4496
    %v4498 = vpop.xlane.xlu0 %4497
    %v4499 = vlog2.pop %v4498
    %v4500 = vmul.f32 %v4499, 0.6931472
    %v4501 = vadd.f32 %v4492, %v4500
    %vm4502 = vcmask 76872
    %4503 = vst.msk [vmem:[#allocation5] sm:$0xf] %vm4502, %v4501
    %s4504 = sld [smem:[#allocation2 + $0x500]]
    %s4505 = scalar_lea.vmem %s1, %s4504
    %v4506 = vld [vmem:[%s4505] sm:$0x1]
    %s4507 = sld [smem:[#allocation2 + $0x501]]
    %s4508 = scalar_lea.vmem %s1, %s4507
    %v4509 = vld [vmem:[%s4508] sm:$0x1]
    %s4510 = sld [smem:[#allocation2 + $0x502]]
    %s4511 = scalar_lea.vmem %s1, %s4510
    %v4512 = vld [vmem:[%s4511] sm:$0x1]
    %s4513 = sld [smem:[#allocation2 + $0x503]]
    %s4514 = scalar_lea.vmem %s1, %s4513
    %v4515 = vld [vmem:[%s4514] sm:$0x1]
    %v4517 = vrot.slane %v4509, 7
    %v4520 = vrot.slane %v4512, 6
    %v4523 = vrot.slane %v4515, 5
    %v4525 = vsel %vm56, %v4506, %v4517
    %v4526 = vsel %vm58, %v4525, %v4520
    %v4527 = vsel %vm60, %v4526, %v4523
    %v4529 = vsel %vm108, %v4495, 0
    %4531 = vmatprep.subr.mxu0 0.0
    %v4532 = vand.u32 %v33, 4294901760
    %4533 = vmatpush1.msra.mxu0 %v4532
    %4534 = vmatprep.subr.mxu0 0.0
    %4535 = vmatpush1.msra.mxu0 0.0
    %4536 = vmatprep.subr.mxu0 0.0
    %4537 = vmatpush1.msra.mxu0 0.0
    %4538 = vmatprep.subr.mxu0 0.0
    %4539 = vmatpush1.msra.mxu0 0.0
    %4540 = vmatprep.subr.mxu0 0.0
    %4541 = vmatpush1.msra.mxu0 0.0
    %4542 = vmatprep.subr.mxu0 0.0
    %4543 = vmatpush1.msra.mxu0 0.0
    %4544 = vmatprep.subr.mxu0 0.0
    %4545 = vmatpush1.msra.mxu0 0.0
    %4546 = vmatprep.subr.mxu0 0.0
    %4547 = vmatpush1.msra.mxu0 0.0
    %4548 = vmatprep.subr.mxu0 0.0
    %4549 = vmatpush1.msra.mxu0 0.0
    %4550 = vmatprep.subr.mxu0 0.0
    %4551 = vmatpush1.msra.mxu0 0.0
    %4552 = vmatprep.subr.mxu0 0.0
    %4553 = vmatpush1.msra.mxu0 0.0
    %4554 = vmatprep.subr.mxu0 0.0
    %4555 = vmatpush1.msra.mxu0 0.0
    %4556 = vmatprep.subr.mxu0 0.0
    %4557 = vmatpush1.msra.mxu0 0.0
    %4558 = vmatprep.subr.mxu0 0.0
    %4559 = vmatpush1.msra.mxu0 0.0
    %4560 = vmatprep.subr.mxu0 0.0
    %4561 = vmatpush1.msra.mxu0 0.0
    %4562 = vmatprep.subr.mxu0 0.0
    %4563 = vmatpush1.msra.mxu0 0.0
    %4564 = vmatprep.subr.mxu0 0.0
    %4565 = vmatpush1.msra.mxu0 0.0
    %4566 = vmatprep.subr.mxu0 0.0
    %4567 = vmatpush1.msra.mxu0 0.0
    %4568 = vmatprep.subr.mxu0 0.0
    %4569 = vmatpush1.msra.mxu0 0.0
    %4570 = vmatprep.subr.mxu0 0.0
    %4571 = vmatpush1.msra.mxu0 0.0
    %4572 = vmatprep.subr.mxu0 0.0
    %4573 = vmatpush1.msra.mxu0 0.0
    %4574 = vmatprep.subr.mxu0 0.0
    %4575 = vmatpush1.msra.mxu0 0.0
    %4576 = vmatprep.subr.mxu0 0.0
    %4577 = vmatpush1.msra.mxu0 0.0
    %4578 = vmatprep.subr.mxu0 0.0
    %4579 = vmatpush1.msra.mxu0 0.0
    %4580 = vmatprep.subr.mxu0 0.0
    %4581 = vmatpush1.msra.mxu0 0.0
    %4582 = vmatprep.subr.mxu0 0.0
    %4583 = vmatpush1.msra.mxu0 0.0
    %4584 = vmatprep.subr.mxu0 0.0
    %4585 = vmatpush1.msra.mxu0 0.0
    %4586 = vmatprep.subr.mxu0 0.0
    %4587 = vmatpush1.msra.mxu0 0.0
    %4588 = vmatprep.subr.mxu0 0.0
    %4589 = vmatpush1.msra.mxu0 0.0
    %4590 = vmatprep.subr.mxu0 0.0
    %4591 = vmatpush1.msra.mxu0 0.0
    %4592 = vmatprep.subr.mxu0 0.0
    %4593 = vmatpush1.msra.mxu0 0.0
    %4594 = vmatprep.subr.mxu0 0.0
    %4595 = vmatpush1.msra.mxu0 0.0
    %4596 = vmatprep.mubr.f32.mxu0 0.0
    %v4597 = vand.u32 %v4529, 4294901760
    %v4598 = vsub.f32 %v4529, %v4597
    %v4599 = vand.u32 %v4598, 4294901760
    %v4600 = vsub.f32 %v4598, %v4599
    %v4601 = vand.u32 %v4600, 4294901760
    %4602 = vmatmul.mubr.f32.gmra.mrb[0].mxu0 %v4601
    %v4603 = vpop.f32.mrb[0].mxu0
    %v4604 = vadd.f32 0.0, %v4603
    %v4605 = vpop.f32.mrb[0].mxu0
    %4606 = vdwg.mxu0
    %4607 = vmatprep.subr.mxu0 0.0
    %v4608 = vand.u32 %v33, 4294901760
    %v4609 = vsub.f32 %v33, %v4608
    %v4610 = vand.u32 %v4609, 4294901760
    %v4611 = vsub.f32 %v4609, %v4610
    %v4612 = vand.u32 %v4611, 4294901760
    %4613 = vmatpush1.msra.mxu0 %v4612
    %4614 = vmatprep.subr.mxu0 0.0
    %4615 = vmatpush1.msra.mxu0 0.0
    %4616 = vmatprep.subr.mxu0 0.0
    %4617 = vmatpush1.msra.mxu0 0.0
    %4618 = vmatprep.subr.mxu0 0.0
    %4619 = vmatpush1.msra.mxu0 0.0
    %4620 = vmatprep.subr.mxu0 0.0
    %4621 = vmatpush1.msra.mxu0 0.0
    %4622 = vmatprep.subr.mxu0 0.0
    %4623 = vmatpush1.msra.mxu0 0.0
    %4624 = vmatprep.subr.mxu0 0.0
    %4625 = vmatpush1.msra.mxu0 0.0
    %4626 = vmatprep.subr.mxu0 0.0
    %4627 = vmatpush1.msra.mxu0 0.0
    %4628 = vmatprep.subr.mxu0 0.0
    %4629 = vmatpush1.msra.mxu0 0.0
    %4630 = vmatprep.subr.mxu0 0.0
    %4631 = vmatpush1.msra.mxu0 0.0
    %4632 = vmatprep.subr.mxu0 0.0
    %4633 = vmatpush1.msra.mxu0 0.0
    %4634 = vmatprep.subr.mxu0 0.0
    %4635 = vmatpush1.msra.mxu0 0.0
    %4636 = vmatprep.subr.mxu0 0.0
    %4637 = vmatpush1.msra.mxu0 0.0
    %4638 = vmatprep.subr.mxu0 0.0
    %4639 = vmatpush1.msra.mxu0 0.0
    %4640 = vmatprep.subr.mxu0 0.0
    %4641 = vmatpush1.msra.mxu0 0.0
    %4642 = vmatprep.subr.mxu0 0.0
    %4643 = vmatpush1.msra.mxu0 0.0
    %4644 = vmatprep.subr.mxu0 0.0
    %4645 = vmatpush1.msra.mxu0 0.0
    %4646 = vmatprep.subr.mxu0 0.0
    %4647 = vmatpush1.msra.mxu0 0.0
    %4648 = vmatprep.subr.mxu0 0.0
    %4649 = vmatpush1.msra.mxu0 0.0
    %4650 = vmatprep.subr.mxu0 0.0
    %4651 = vmatpush1.msra.mxu0 0.0
    %4652 = vmatprep.subr.mxu0 0.0
    %4653 = vmatpush1.msra.mxu0 0.0
    %4654 = vmatprep.subr.mxu0 0.0
    %4655 = vmatpush1.msra.mxu0 0.0
    %4656 = vmatprep.subr.mxu0 0.0
    %4657 = vmatpush1.msra.mxu0 0.0
    %4658 = vmatprep.subr.mxu0 0.0
    %4659 = vmatpush1.msra.mxu0 0.0
    %4660 = vmatprep.subr.mxu0 0.0
    %4661 = vmatpush1.msra.mxu0 0.0
    %4662 = vmatprep.subr.mxu0 0.0
    %4663 = vmatpush1.msra.mxu0 0.0
    %4664 = vmatprep.subr.mxu0 0.0
    %4665 = vmatpush1.msra.mxu0 0.0
    %4666 = vmatprep.subr.mxu0 0.0
    %4667 = vmatpush1.msra.mxu0 0.0
    %4668 = vmatprep.subr.mxu0 0.0
    %4669 = vmatpush1.msra.mxu0 0.0
    %4670 = vmatprep.subr.mxu0 0.0
    %4671 = vmatpush1.msra.mxu0 0.0
    %4672 = vmatprep.subr.mxu0 0.0
    %4673 = vmatpush1.msra.mxu0 0.0
    %4674 = vmatprep.subr.mxu0 0.0
    %4675 = vmatpush1.msra.mxu0 0.0
    %4676 = vmatprep.mubr.f32.mxu0 0.0
    %v4677 = vand.u32 %v4529, 4294901760
    %4678 = vmatmul.mubr.f32.gmra.mrb[0].mxu0 %v4677
    %v4679 = vpop.f32.mrb[0].mxu0
    %v4680 = vadd.f32 %v4604, %v4679
    %v4681 = vpop.f32.mrb[0].mxu0
    %4682 = vdwg.mxu0
    %4683 = vmatprep.subr.mxu0 0.0
    %v4684 = vand.u32 %v33, 4294901760
    %v4685 = vsub.f32 %v33, %v4684
    %4686 = vmatpush1.msra.mxu0 %v4685
    %4687 = vmatprep.subr.mxu0 0.0
    %4688 = vmatpush1.msra.mxu0 0.0
    %4689 = vmatprep.subr.mxu0 0.0
    %4690 = vmatpush1.msra.mxu0 0.0
    %4691 = vmatprep.subr.mxu0 0.0
    %4692 = vmatpush1.msra.mxu0 0.0
    %4693 = vmatprep.subr.mxu0 0.0
    %4694 = vmatpush1.msra.mxu0 0.0
    %4695 = vmatprep.subr.mxu0 0.0
    %4696 = vmatpush1.msra.mxu0 0.0
    %4697 = vmatprep.subr.mxu0 0.0
    %4698 = vmatpush1.msra.mxu0 0.0
    %4699 = vmatprep.subr.mxu0 0.0
    %4700 = vmatpush1.msra.mxu0 0.0
    %4701 = vmatprep.subr.mxu0 0.0
    %4702 = vmatpush1.msra.mxu0 0.0
    %4703 = vmatprep.subr.mxu0 0.0
    %4704 = vmatpush1.msra.mxu0 0.0
    %4705 = vmatprep.subr.mxu0 0.0
    %4706 = vmatpush1.msra.mxu0 0.0
    %4707 = vmatprep.subr.mxu0 0.0
    %4708 = vmatpush1.msra.mxu0 0.0
    %4709 = vmatprep.subr.mxu0 0.0
    %4710 = vmatpush1.msra.mxu0 0.0
    %4711 = vmatprep.subr.mxu0 0.0
    %4712 = vmatpush1.msra.mxu0 0.0
    %4713 = vmatprep.subr.mxu0 0.0
    %4714 = vmatpush1.msra.mxu0 0.0
    %4715 = vmatprep.subr.mxu0 0.0
    %4716 = vmatpush1.msra.mxu0 0.0
    %4717 = vmatprep.subr.mxu0 0.0
    %4718 = vmatpush1.msra.mxu0 0.0
    %4719 = vmatprep.subr.mxu0 0.0
    %4720 = vmatpush1.msra.mxu0 0.0
    %4721 = vmatprep.subr.mxu0 0.0
    %4722 = vmatpush1.msra.mxu0 0.0
    %4723 = vmatprep.subr.mxu0 0.0
    %4724 = vmatpush1.msra.mxu0 0.0
    %4725 = vmatprep.subr.mxu0 0.0
    %4726 = vmatpush1.msra.mxu0 0.0
    %4727 = vmatprep.subr.mxu0 0.0
    %4728 = vmatpush1.msra.mxu0 0.0
    %4729 = vmatprep.subr.mxu0 0.0
    %4730 = vmatpush1.msra.mxu0 0.0
    %4731 = vmatprep.subr.mxu0 0.0
    %4732 = vmatpush1.msra.mxu0 0.0
    %4733 = vmatprep.subr.mxu0 0.0
    %4734 = vmatpush1.msra.mxu0 0.0
    %4735 = vmatprep.subr.mxu0 0.0
    %4736 = vmatpush1.msra.mxu0 0.0
    %4737 = vmatprep.subr.mxu0 0.0
    %4738 = vmatpush1.msra.mxu0 0.0
    %4739 = vmatprep.subr.mxu0 0.0
    %4740 = vmatpush1.msra.mxu0 0.0
    %4741 = vmatprep.subr.mxu0 0.0
    %4742 = vmatpush1.msra.mxu0 0.0
    %4743 = vmatprep.subr.mxu0 0.0
    %4744 = vmatpush1.msra.mxu0 0.0
    %4745 = vmatprep.subr.mxu0 0.0
    %4746 = vmatpush1.msra.mxu0 0.0
    %4747 = vmatprep.subr.mxu0 0.0
    %4748 = vmatpush1.msra.mxu0 0.0
    %4749 = vmatprep.mubr.f32.mxu0 0.0
    %v4750 = vand.u32 %v4529, 4294901760
    %v4751 = vsub.f32 %v4529, %v4750
    %4752 = vmatmul.mubr.f32.gmra.mrb[0].mxu0 %v4751
    %v4753 = vpop.f32.mrb[0].mxu0
    %v4754 = vadd.f32 %v4680, %v4753
    %v4755 = vpop.f32.mrb[0].mxu0
    %4756 = vdwg.mxu0
    %4757 = vmatprep.subr.mxu0 0.0
    %v4758 = vand.u32 %v33, 4294901760
    %4759 = vmatpush1.msra.mxu0 %v4758
    %4760 = vmatprep.subr.mxu0 0.0
    %4761 = vmatpush1.msra.mxu0 0.0
    %4762 = vmatprep.subr.mxu0 0.0
    %4763 = vmatpush1.msra.mxu0 0.0
    %4764 = vmatprep.subr.mxu0 0.0
    %4765 = vmatpush1.msra.mxu0 0.0
    %4766 = vmatprep.subr.mxu0 0.0
    %4767 = vmatpush1.msra.mxu0 0.0
    %4768 = vmatprep.subr.mxu0 0.0
    %4769 = vmatpush1.msra.mxu0 0.0
    %4770 = vmatprep.subr.mxu0 0.0
    %4771 = vmatpush1.msra.mxu0 0.0
    %4772 = vmatprep.subr.mxu0 0.0
    %4773 = vmatpush1.msra.mxu0 0.0
    %4774 = vmatprep.subr.mxu0 0.0
    %4775 = vmatpush1.msra.mxu0 0.0
    %4776 = vmatprep.subr.mxu0 0.0
    %4777 = vmatpush1.msra.mxu0 0.0
    %4778 = vmatprep.subr.mxu0 0.0
    %4779 = vmatpush1.msra.mxu0 0.0
    %4780 = vmatprep.subr.mxu0 0.0
    %4781 = vmatpush1.msra.mxu0 0.0
    %4782 = vmatprep.subr.mxu0 0.0
    %4783 = vmatpush1.msra.mxu0 0.0
    %4784 = vmatprep.subr.mxu0 0.0
    %4785 = vmatpush1.msra.mxu0 0.0
    %4786 = vmatprep.subr.mxu0 0.0
    %4787 = vmatpush1.msra.mxu0 0.0
    %4788 = vmatprep.subr.mxu0 0.0
    %4789 = vmatpush1.msra.mxu0 0.0
    %4790 = vmatprep.subr.mxu0 0.0
    %4791 = vmatpush1.msra.mxu0 0.0
    %4792 = vmatprep.subr.mxu0 0.0
    %4793 = vmatpush1.msra.mxu0 0.0
    %4794 = vmatprep.subr.mxu0 0.0
    %4795 = vmatpush1.msra.mxu0 0.0
    %4796 = vmatprep.subr.mxu0 0.0
    %4797 = vmatpush1.msra.mxu0 0.0
    %4798 = vmatprep.subr.mxu0 0.0
    %4799 = vmatpush1.msra.mxu0 0.0
    %4800 = vmatprep.subr.mxu0 0.0
    %4801 = vmatpush1.msra.mxu0 0.0
    %4802 = vmatprep.subr.mxu0 0.0
    %4803 = vmatpush1.msra.mxu0 0.0
    %4804 = vmatprep.subr.mxu0 0.0
    %4805 = vmatpush1.msra.mxu0 0.0
    %4806 = vmatprep.subr.mxu0 0.0
    %4807 = vmatpush1.msra.mxu0 0.0
    %4808 = vmatprep.subr.mxu0 0.0
    %4809 = vmatpush1.msra.mxu0 0.0
    %4810 = vmatprep.subr.mxu0 0.0
    %4811 = vmatpush1.msra.mxu0 0.0
    %4812 = vmatprep.subr.mxu0 0.0
    %4813 = vmatpush1.msra.mxu0 0.0
    %4814 = vmatprep.subr.mxu0 0.0
    %4815 = vmatpush1.msra.mxu0 0.0
    %4816 = vmatprep.subr.mxu0 0.0
    %4817 = vmatpush1.msra.mxu0 0.0
    %4818 = vmatprep.subr.mxu0 0.0
    %4819 = vmatpush1.msra.mxu0 0.0
    %4820 = vmatprep.subr.mxu0 0.0
    %4821 = vmatpush1.msra.mxu0 0.0
    %4822 = vmatprep.mubr.f32.mxu0 0.0
    %v4823 = vand.u32 %v4529, 4294901760
    %v4824 = vsub.f32 %v4529, %v4823
    %v4825 = vand.u32 %v4824, 4294901760
    %4826 = vmatmul.mubr.f32.gmra.mrb[0].mxu0 %v4825
    %v4827 = vpop.f32.mrb[0].mxu0
    %v4828 = vadd.f32 %v4754, %v4827
    %v4829 = vpop.f32.mrb[0].mxu0
    %4830 = vdwg.mxu0
    %4831 = vmatprep.subr.mxu0 0.0
    %v4832 = vand.u32 %v33, 4294901760
    %v4833 = vsub.f32 %v33, %v4832
    %v4834 = vand.u32 %v4833, 4294901760
    %4835 = vmatpush1.msra.mxu0 %v4834
    %4836 = vmatprep.subr.mxu0 0.0
    %4837 = vmatpush1.msra.mxu0 0.0
    %4838 = vmatprep.subr.mxu0 0.0
    %4839 = vmatpush1.msra.mxu0 0.0
    %4840 = vmatprep.subr.mxu0 0.0
    %4841 = vmatpush1.msra.mxu0 0.0
    %4842 = vmatprep.subr.mxu0 0.0
    %4843 = vmatpush1.msra.mxu0 0.0
    %4844 = vmatprep.subr.mxu0 0.0
    %4845 = vmatpush1.msra.mxu0 0.0
    %4846 = vmatprep.subr.mxu0 0.0
    %4847 = vmatpush1.msra.mxu0 0.0
    %4848 = vmatprep.subr.mxu0 0.0
    %4849 = vmatpush1.msra.mxu0 0.0
    %4850 = vmatprep.subr.mxu0 0.0
    %4851 = vmatpush1.msra.mxu0 0.0
    %4852 = vmatprep.subr.mxu0 0.0
    %4853 = vmatpush1.msra.mxu0 0.0
    %4854 = vmatprep.subr.mxu0 0.0
    %4855 = vmatpush1.msra.mxu0 0.0
    %4856 = vmatprep.subr.mxu0 0.0
    %4857 = vmatpush1.msra.mxu0 0.0
    %4858 = vmatprep.subr.mxu0 0.0
    %4859 = vmatpush1.msra.mxu0 0.0
    %4860 = vmatprep.subr.mxu0 0.0
    %4861 = vmatpush1.msra.mxu0 0.0
    %4862 = vmatprep.subr.mxu0 0.0
    %4863 = vmatpush1.msra.mxu0 0.0
    %4864 = vmatprep.subr.mxu0 0.0
    %4865 = vmatpush1.msra.mxu0 0.0
    %4866 = vmatprep.subr.mxu0 0.0
    %4867 = vmatpush1.msra.mxu0 0.0
    %4868 = vmatprep.subr.mxu0 0.0
    %4869 = vmatpush1.msra.mxu0 0.0
    %4870 = vmatprep.subr.mxu0 0.0
    %4871 = vmatpush1.msra.mxu0 0.0
    %4872 = vmatprep.subr.mxu0 0.0
    %4873 = vmatpush1.msra.mxu0 0.0
    %4874 = vmatprep.subr.mxu0 0.0
    %4875 = vmatpush1.msra.mxu0 0.0
    %4876 = vmatprep.subr.mxu0 0.0
    %4877 = vmatpush1.msra.mxu0 0.0
    %4878 = vmatprep.subr.mxu0 0.0
    %4879 = vmatpush1.msra.mxu0 0.0
    %4880 = vmatprep.subr.mxu0 0.0
    %4881 = vmatpush1.msra.mxu0 0.0
    %4882 = vmatprep.subr.mxu0 0.0
    %4883 = vmatpush1.msra.mxu0 0.0
    %4884 = vmatprep.subr.mxu0 0.0
    %4885 = vmatpush1.msra.mxu0 0.0
    %4886 = vmatprep.subr.mxu0 0.0
    %4887 = vmatpush1.msra.mxu0 0.0
    %4888 = vmatprep.subr.mxu0 0.0
    %4889 = vmatpush1.msra.mxu0 0.0
    %4890 = vmatprep.subr.mxu0 0.0
    %4891 = vmatpush1.msra.mxu0 0.0
    %4892 = vmatprep.subr.mxu0 0.0
    %4893 = vmatpush1.msra.mxu0 0.0
    %4894 = vmatprep.subr.mxu0 0.0
    %4895 = vmatpush1.msra.mxu0 0.0
    %4896 = vmatprep.subr.mxu0 0.0
    %4897 = vmatpush1.msra.mxu0 0.0
    %4898 = vmatprep.mubr.f32.mxu0 0.0
    %v4899 = vand.u32 %v4529, 4294901760
    %4900 = vmatmul.mubr.f32.gmra.mrb[0].mxu0 %v4899
    %v4901 = vpop.f32.mrb[0].mxu0
    %v4902 = vadd.f32 %v4828, %v4901
    %v4903 = vpop.f32.mrb[0].mxu0
    %4904 = vdwg.mxu0
    %4905 = vmatprep.subr.mxu0 0.0
    %v4906 = vand.u32 %v33, 4294901760
    %4907 = vmatpush1.msra.mxu0 %v4906
    %4908 = vmatprep.subr.mxu0 0.0
    %4909 = vmatpush1.msra.mxu0 0.0
    %4910 = vmatprep.subr.mxu0 0.0
    %4911 = vmatpush1.msra.mxu0 0.0
    %4912 = vmatprep.subr.mxu0 0.0
    %4913 = vmatpush1.msra.mxu0 0.0
    %4914 = vmatprep.subr.mxu0 0.0
    %4915 = vmatpush1.msra.mxu0 0.0
    %4916 = vmatprep.subr.mxu0 0.0
    %4917 = vmatpush1.msra.mxu0 0.0
    %4918 = vmatprep.subr.mxu0 0.0
    %4919 = vmatpush1.msra.mxu0 0.0
    %4920 = vmatprep.subr.mxu0 0.0
    %4921 = vmatpush1.msra.mxu0 0.0
    %4922 = vmatprep.subr.mxu0 0.0
    %4923 = vmatpush1.msra.mxu0 0.0
    %4924 = vmatprep.subr.mxu0 0.0
    %4925 = vmatpush1.msra.mxu0 0.0
    %4926 = vmatprep.subr.mxu0 0.0
    %4927 = vmatpush1.msra.mxu0 0.0
    %4928 = vmatprep.subr.mxu0 0.0
    %4929 = vmatpush1.msra.mxu0 0.0
    %4930 = vmatprep.subr.mxu0 0.0
    %4931 = vmatpush1.msra.mxu0 0.0
    %4932 = vmatprep.subr.mxu0 0.0
    %4933 = vmatpush1.msra.mxu0 0.0
    %4934 = vmatprep.subr.mxu0 0.0
    %4935 = vmatpush1.msra.mxu0 0.0
    %4936 = vmatprep.subr.mxu0 0.0
    %4937 = vmatpush1.msra.mxu0 0.0
    %4938 = vmatprep.subr.mxu0 0.0
    %4939 = vmatpush1.msra.mxu0 0.0
    %4940 = vmatprep.subr.mxu0 0.0
    %4941 = vmatpush1.msra.mxu0 0.0
    %4942 = vmatprep.subr.mxu0 0.0
    %4943 = vmatpush1.msra.mxu0 0.0
    %4944 = vmatprep.subr.mxu0 0.0
    %4945 = vmatpush1.msra.mxu0 0.0
    %4946 = vmatprep.subr.mxu0 0.0
    %4947 = vmatpush1.msra.mxu0 0.0
    %4948 = vmatprep.subr.mxu0 0.0
    %4949 = vmatpush1.msra.mxu0 0.0
    %4950 = vmatprep.subr.mxu0 0.0
    %4951 = vmatpush1.msra.mxu0 0.0
    %4952 = vmatprep.subr.mxu0 0.0
    %4953 = vmatpush1.msra.mxu0 0.0
    %4954 = vmatprep.subr.mxu0 0.0
    %4955 = vmatpush1.msra.mxu0 0.0
    %4956 = vmatprep.subr.mxu0 0.0
    %4957 = vmatpush1.msra.mxu0 0.0
    %4958 = vmatprep.subr.mxu0 0.0
    %4959 = vmatpush1.msra.mxu0 0.0
    %4960 = vmatprep.subr.mxu0 0.0
    %4961 = vmatpush1.msra.mxu0 0.0
    %4962 = vmatprep.subr.mxu0 0.0
    %4963 = vmatpush1.msra.mxu0 0.0
    %4964 = vmatprep.subr.mxu0 0.0
    %4965 = vmatpush1.msra.mxu0 0.0
    %4966 = vmatprep.subr.mxu0 0.0
    %4967 = vmatpush1.msra.mxu0 0.0
    %4968 = vmatprep.subr.mxu0 0.0
    %4969 = vmatpush1.msra.mxu0 0.0
    %4970 = vmatprep.mubr.f32.mxu0 0.0
    %v4971 = vand.u32 %v4529, 4294901760
    %4972 = vmatmul.mubr.f32.gmra.mrb[0].mxu0 %v4971
    %v4973 = vpop.f32.mrb[0].mxu0
    %v4974 = vadd.f32 %v4902, %v4973
    %v4975 = vpop.f32.mrb[0].mxu0
    %4976 = vdwg.mxu0
    %v4977 = vadd.f32 %v4527, %v4492
    %v4978 = vlog2.pop %v4974
    %v4979 = vmul.f32 %v4978, 0.6931472
    %v4980 = vadd.f32 %v4977, %v4979
    %v4981 = vsel %vm69, %v4980, -inf
    %4982 = vmax.xlane.f32.xlu0 %v4981
    %v4983 = vpop.xlane.xlu0 %4982
    %v4984 = vsub.f32 %v4980, %v4983
    %v4985 = vmul.f32 %v4984, 1.442695
    %v4986 = vpow.pop %v4985
    %v4987 = vsel %vm69, %v4986, 0.0
    %4988 = vadd.xlane.f32.xlu0 %v4987
    %v4989 = vpop.xlane.xlu0 %4988
    %v4990 = vlog2.pop %v4989
    %v4991 = vmul.f32 %v4990, 0.6931472
    %v4992 = vadd.f32 %v4983, %v4991
    %vm4993 = vcmask 85072
    %4994 = vst.msk [vmem:[#allocation5] sm:$0xf] %vm4993, %v4992
    %s4995 = sld [smem:[#allocation2 + $0x580]]
    %s4996 = scalar_lea.vmem %s1, %s4995
    %v4997 = vld [vmem:[%s4996] sm:$0x1]
    %s4998 = sld [smem:[#allocation2 + $0x581]]
    %s4999 = scalar_lea.vmem %s1, %s4998
    %v5000 = vld [vmem:[%s4999] sm:$0x1]
    %s5001 = sld [smem:[#allocation2 + $0x582]]
    %s5002 = scalar_lea.vmem %s1, %s5001
    %v5003 = vld [vmem:[%s5002] sm:$0x1]
    %s5004 = sld [smem:[#allocation2 + $0x583]]
    %s5005 = scalar_lea.vmem %s1, %s5004
    %v5006 = vld [vmem:[%s5005] sm:$0x1]
    %v5008 = vrot.slane %v5000, 7
    %v5011 = vrot.slane %v5003, 6
    %v5014 = vrot.slane %v5006, 5
    %v5016 = vsel %vm56, %v4997, %v5008
    %v5017 = vsel %vm58, %v5016, %v5011
    %v5018 = vsel %vm60, %v5017, %v5014
    %v5020 = vsel %vm108, %v4986, 0
    %5022 = vmatprep.subr.mxu0 0.0
    %v5023 = vand.u32 %v33, 4294901760
    %5024 = vmatpush1.msra.mxu0 %v5023
    %5025 = vmatprep.subr.mxu0 0.0
    %5026 = vmatpush1.msra.mxu0 0.0
    %5027 = vmatprep.subr.mxu0 0.0
    %5028 = vmatpush1.msra.mxu0 0.0
    %5029 = vmatprep.subr.mxu0 0.0
    %5030 = vmatpush1.msra.mxu0 0.0
    %5031 = vmatprep.subr.mxu0 0.0
    %5032 = vmatpush1.msra.mxu0 0.0
    %5033 = vmatprep.subr.mxu0 0.0
    %5034 = vmatpush1.msra.mxu0 0.0
    %5035 = vmatprep.subr.mxu0 0.0
    %5036 = vmatpush1.msra.mxu0 0.0
    %5037 = vmatprep.subr.mxu0 0.0
    %5038 = vmatpush1.msra.mxu0 0.0
    %5039 = vmatprep.subr.mxu0 0.0
    %5040 = vmatpush1.msra.mxu0 0.0
    %5041 = vmatprep.subr.mxu0 0.0
    %5042 = vmatpush1.msra.mxu0 0.0
    %5043 = vmatprep.subr.mxu0 0.0
    %5044 = vmatpush1.msra.mxu0 0.0
    %5045 = vmatprep.subr.mxu0 0.0
    %5046 = vmatpush1.msra.mxu0 0.0
    %5047 = vmatprep.subr.mxu0 0.0
    %5048 = vmatpush1.msra.mxu0 0.0
    %5049 = vmatprep.subr.mxu0 0.0
    %5050 = vmatpush1.msra.mxu0 0.0
    %5051 = vmatprep.subr.mxu0 0.0
    %5052 = vmatpush1.msra.mxu0 0.0
    %5053 = vmatprep.subr.mxu0 0.0
    %5054 = vmatpush1.msra.mxu0 0.0
    %5055 = vmatprep.subr.mxu0 0.0
    %5056 = vmatpush1.msra.mxu0 0.0
    %5057 = vmatprep.subr.mxu0 0.0
    %5058 = vmatpush1.msra.mxu0 0.0
    %5059 = vmatprep.subr.mxu0 0.0
    %5060 = vmatpush1.msra.mxu0 0.0
    %5061 = vmatprep.subr.mxu0 0.0
    %5062 = vmatpush1.msra.mxu0 0.0
    %5063 = vmatprep.subr.mxu0 0.0
    %5064 = vmatpush1.msra.mxu0 0.0
    %5065 = vmatprep.subr.mxu0 0.0
    %5066 = vmatpush1.msra.mxu0 0.0
    %5067 = vmatprep.subr.mxu0 0.0
    %5068 = vmatpush1.msra.mxu0 0.0
    %5069 = vmatprep.subr.mxu0 0.0
    %5070 = vmatpush1.msra.mxu0 0.0
    %5071 = vmatprep.subr.mxu0 0.0
    %5072 = vmatpush1.msra.mxu0 0.0
    %5073 = vmatprep.subr.mxu0 0.0
    %5074 = vmatpush1.msra.mxu0 0.0
    %5075 = vmatprep.subr.mxu0 0.0
    %5076 = vmatpush1.msra.mxu0 0.0
    %5077 = vmatprep.subr.mxu0 0.0
    %5078 = vmatpush1.msra.mxu0 0.0
    %5079 = vmatprep.subr.mxu0 0.0
    %5080 = vmatpush1.msra.mxu0 0.0
    %5081 = vmatprep.subr.mxu0 0.0
    %5082 = vmatpush1.msra.mxu0 0.0
    %5083 = vmatprep.subr.mxu0 0.0
    %5084 = vmatpush1.msra.mxu0 0.0
    %5085 = vmatprep.subr.mxu0 0.0
    %5086 = vmatpush1.msra.mxu0 0.0
    %5087 = vmatprep.mubr.f32.mxu0 0.0
    %v5088 = vand.u32 %v5020, 4294901760
    %v5089 = vsub.f32 %v5020, %v5088
    %v5090 = vand.u32 %v5089, 4294901760
    %v5091 = vsub.f32 %v5089, %v5090
    %v5092 = vand.u32 %v5091, 4294901760
    %5093 = vmatmul.mubr.f32.gmra.mrb[0].mxu0 %v5092
    %v5094 = vpop.f32.mrb[0].mxu0
    %v5095 = vadd.f32 0.0, %v5094
    %v5096 = vpop.f32.mrb[0].mxu0
    %5097 = vdwg.mxu0
    %5098 = vmatprep.subr.mxu0 0.0
    %v5099 = vand.u32 %v33, 4294901760
    %v5100 = vsub.f32 %v33, %v5099
    %v5101 = vand.u32 %v5100, 4294901760
    %v5102 = vsub.f32 %v5100, %v5101
    %v5103 = vand.u32 %v5102, 4294901760
    %5104 = vmatpush1.msra.mxu0 %v5103
    %5105 = vmatprep.subr.mxu0 0.0
    %5106 = vmatpush1.msra.mxu0 0.0
    %5107 = vmatprep.subr.mxu0 0.0
    %5108 = vmatpush1.msra.mxu0 0.0
    %5109 = vmatprep.subr.mxu0 0.0
    %5110 = vmatpush1.msra.mxu0 0.0
    %5111 = vmatprep.subr.mxu0 0.0
    %5112 = vmatpush1.msra.mxu0 0.0
    %5113 = vmatprep.subr.mxu0 0.0
    %5114 = vmatpush1.msra.mxu0 0.0
    %5115 = vmatprep.subr.mxu0 0.0
    %5116 = vmatpush1.msra.mxu0 0.0
    %5117 = vmatprep.subr.mxu0 0.0
    %5118 = vmatpush1.msra.mxu0 0.0
    %5119 = vmatprep.subr.mxu0 0.0
    %5120 = vmatpush1.msra.mxu0 0.0
    %5121 = vmatprep.subr.mxu0 0.0
    %5122 = vmatpush1.msra.mxu0 0.0
    %5123 = vmatprep.subr.mxu0 0.0
    %5124 = vmatpush1.msra.mxu0 0.0
    %5125 = vmatprep.subr.mxu0 0.0
    %5126 = vmatpush1.msra.mxu0 0.0
    %5127 = vmatprep.subr.mxu0 0.0
    %5128 = vmatpush1.msra.mxu0 0.0
    %5129 = vmatprep.subr.mxu0 0.0
    %5130 = vmatpush1.msra.mxu0 0.0
    %5131 = vmatprep.subr.mxu0 0.0
    %5132 = vmatpush1.msra.mxu0 0.0
    %5133 = vmatprep.subr.mxu0 0.0
    %5134 = vmatpush1.msra.mxu0 0.0
    %5135 = vmatprep.subr.mxu0 0.0
    %5136 = vmatpush1.msra.mxu0 0.0
    %5137 = vmatprep.subr.mxu0 0.0
    %5138 = vmatpush1.msra.mxu0 0.0
    %5139 = vmatprep.subr.mxu0 0.0
    %5140 = vmatpush1.msra.mxu0 0.0
    %5141 = vmatprep.subr.mxu0 0.0
    %5142 = vmatpush1.msra.mxu0 0.0
    %5143 = vmatprep.subr.mxu0 0.0
    %5144 = vmatpush1.msra.mxu0 0.0
    %5145 = vmatprep.subr.mxu0 0.0
    %5146 = vmatpush1.msra.mxu0 0.0
    %5147 = vmatprep.subr.mxu0 0.0
    %5148 = vmatpush1.msra.mxu0 0.0
    %5149 = vmatprep.subr.mxu0 0.0
    %5150 = vmatpush1.msra.mxu0 0.0
    %5151 = vmatprep.subr.mxu0 0.0
    %5152 = vmatpush1.msra.mxu0 0.0
    %5153 = vmatprep.subr.mxu0 0.0
    %5154 = vmatpush1.msra.mxu0 0.0
    %5155 = vmatprep.subr.mxu0 0.0
    %5156 = vmatpush1.msra.mxu0 0.0
    %5157 = vmatprep.subr.mxu0 0.0
    %5158 = vmatpush1.msra.mxu0 0.0
    %5159 = vmatprep.subr.mxu0 0.0
    %5160 = vmatpush1.msra.mxu0 0.0
    %5161 = vmatprep.subr.mxu0 0.0
    %5162 = vmatpush1.msra.mxu0 0.0
    %5163 = vmatprep.subr.mxu0 0.0
    %5164 = vmatpush1.msra.mxu0 0.0
    %5165 = vmatprep.subr.mxu0 0.0
    %5166 = vmatpush1.msra.mxu0 0.0
    %5167 = vmatprep.mubr.f32.mxu0 0.0
    %v5168 = vand.u32 %v5020, 4294901760
    %5169 = vmatmul.mubr.f32.gmra.mrb[0].mxu0 %v5168
    %v5170 = vpop.f32.mrb[0].mxu0
    %v5171 = vadd.f32 %v5095, %v5170
    %v5172 = vpop.f32.mrb[0].mxu0
    %5173 = vdwg.mxu0
    %5174 = vmatprep.subr.mxu0 0.0
    %v5175 = vand.u32 %v33, 4294901760
    %v5176 = vsub.f32 %v33, %v5175
    %5177 = vmatpush1.msra.mxu0 %v5176
    %5178 = vmatprep.subr.mxu0 0.0
    %5179 = vmatpush1.msra.mxu0 0.0
    %5180 = vmatprep.subr.mxu0 0.0
    %5181 = vmatpush1.msra.mxu0 0.0
    %5182 = vmatprep.subr.mxu0 0.0
    %5183 = vmatpush1.msra.mxu0 0.0
    %5184 = vmatprep.subr.mxu0 0.0
    %5185 = vmatpush1.msra.mxu0 0.0
    %5186 = vmatprep.subr.mxu0 0.0
    %5187 = vmatpush1.msra.mxu0 0.0
    %5188 = vmatprep.subr.mxu0 0.0
    %5189 = vmatpush1.msra.mxu0 0.0
    %5190 = vmatprep.subr.mxu0 0.0
    %5191 = vmatpush1.msra.mxu0 0.0
    %5192 = vmatprep.subr.mxu0 0.0
    %5193 = vmatpush1.msra.mxu0 0.0
    %5194 = vmatprep.subr.mxu0 0.0
    %5195 = vmatpush1.msra.mxu0 0.0
    %5196 = vmatprep.subr.mxu0 0.0
    %5197 = vmatpush1.msra.mxu0 0.0
    %5198 = vmatprep.subr.mxu0 0.0
    %5199 = vmatpush1.msra.mxu0 0.0
    %5200 = vmatprep.subr.mxu0 0.0
    %5201 = vmatpush1.msra.mxu0 0.0
    %5202 = vmatprep.subr.mxu0 0.0
    %5203 = vmatpush1.msra.mxu0 0.0
    %5204 = vmatprep.subr.mxu0 0.0
    %5205 = vmatpush1.msra.mxu0 0.0
    %5206 = vmatprep.subr.mxu0 0.0
    %5207 = vmatpush1.msra.mxu0 0.0
    %5208 = vmatprep.subr.mxu0 0.0
    %5209 = vmatpush1.msra.mxu0 0.0
    %5210 = vmatprep.subr.mxu0 0.0
    %5211 = vmatpush1.msra.mxu0 0.0
    %5212 = vmatprep.subr.mxu0 0.0
    %5213 = vmatpush1.msra.mxu0 0.0
    %5214 = vmatprep.subr.mxu0 0.0
    %5215 = vmatpush1.msra.mxu0 0.0
    %5216 = vmatprep.subr.mxu0 0.0
    %5217 = vmatpush1.msra.mxu0 0.0
    %5218 = vmatprep.subr.mxu0 0.0
    %5219 = vmatpush1.msra.mxu0 0.0
    %5220 = vmatprep.subr.mxu0 0.0
    %5221 = vmatpush1.msra.mxu0 0.0
    %5222 = vmatprep.subr.mxu0 0.0
    %5223 = vmatpush1.msra.mxu0 0.0
    %5224 = vmatprep.subr.mxu0 0.0
    %5225 = vmatpush1.msra.mxu0 0.0
    %5226 = vmatprep.subr.mxu0 0.0
    %5227 = vmatpush1.msra.mxu0 0.0
    %5228 = vmatprep.subr.mxu0 0.0
    %5229 = vmatpush1.msra.mxu0 0.0
    %5230 = vmatprep.subr.mxu0 0.0
    %5231 = vmatpush1.msra.mxu0 0.0
    %5232 = vmatprep.subr.mxu0 0.0
    %5233 = vmatpush1.msra.mxu0 0.0
    %5234 = vmatprep.subr.mxu0 0.0
    %5235 = vmatpush1.msra.mxu0 0.0
    %5236 = vmatprep.subr.mxu0 0.0
    %5237 = vmatpush1.msra.mxu0 0.0
    %5238 = vmatprep.subr.mxu0 0.0
    %5239 = vmatpush1.msra.mxu0 0.0
    %5240 = vmatprep.mubr.f32.mxu0 0.0
    %v5241 = vand.u32 %v5020, 4294901760
    %v5242 = vsub.f32 %v5020, %v5241
    %5243 = vmatmul.mubr.f32.gmra.mrb[0].mxu0 %v5242
    %v5244 = vpop.f32.mrb[0].mxu0
    %v5245 = vadd.f32 %v5171, %v5244
    %v5246 = vpop.f32.mrb[0].mxu0
    %5247 = vdwg.mxu0
    %5248 = vmatprep.subr.mxu0 0.0
    %v5249 = vand.u32 %v33, 4294901760
    %5250 = vmatpush1.msra.mxu0 %v5249
    %5251 = vmatprep.subr.mxu0 0.0
    %5252 = vmatpush1.msra.mxu0 0.0
    %5253 = vmatprep.subr.mxu0 0.0
    %5254 = vmatpush1.msra.mxu0 0.0
    %5255 = vmatprep.subr.mxu0 0.0
    %5256 = vmatpush1.msra.mxu0 0.0
    %5257 = vmatprep.subr.mxu0 0.0
    %5258 = vmatpush1.msra.mxu0 0.0
    %5259 = vmatprep.subr.mxu0 0.0
    %5260 = vmatpush1.msra.mxu0 0.0
    %5261 = vmatprep.subr.mxu0 0.0
    %5262 = vmatpush1.msra.mxu0 0.0
    %5263 = vmatprep.subr.mxu0 0.0
    %5264 = vmatpush1.msra.mxu0 0.0
    %5265 = vmatprep.subr.mxu0 0.0
    %5266 = vmatpush1.msra.mxu0 0.0
    %5267 = vmatprep.subr.mxu0 0.0
    %5268 = vmatpush1.msra.mxu0 0.0
    %5269 = vmatprep.subr.mxu0 0.0
    %5270 = vmatpush1.msra.mxu0 0.0
    %5271 = vmatprep.subr.mxu0 0.0
    %5272 = vmatpush1.msra.mxu0 0.0
    %5273 = vmatprep.subr.mxu0 0.0
    %5274 = vmatpush1.msra.mxu0 0.0
    %5275 = vmatprep.subr.mxu0 0.0
    %5276 = vmatpush1.msra.mxu0 0.0
    %5277 = vmatprep.subr.mxu0 0.0
    %5278 = vmatpush1.msra.mxu0 0.0
    %5279 = vmatprep.subr.mxu0 0.0
    %5280 = vmatpush1.msra.mxu0 0.0
    %5281 = vmatprep.subr.mxu0 0.0
    %5282 = vmatpush1.msra.mxu0 0.0
    %5283 = vmatprep.subr.mxu0 0.0
    %5284 = vmatpush1.msra.mxu0 0.0
    %5285 = vmatprep.subr.mxu0 0.0
    %5286 = vmatpush1.msra.mxu0 0.0
    %5287 = vmatprep.subr.mxu0 0.0
    %5288 = vmatpush1.msra.mxu0 0.0
    %5289 = vmatprep.subr.mxu0 0.0
    %5290 = vmatpush1.msra.mxu0 0.0
    %5291 = vmatprep.subr.mxu0 0.0
    %5292 = vmatpush1.msra.mxu0 0.0
    %5293 = vmatprep.subr.mxu0 0.0
    %5294 = vmatpush1.msra.mxu0 0.0
    %5295 = vmatprep.subr.mxu0 0.0
    %5296 = vmatpush1.msra.mxu0 0.0
    %5297 = vmatprep.subr.mxu0 0.0
    %5298 = vmatpush1.msra.mxu0 0.0
    %5299 = vmatprep.subr.mxu0 0.0
    %5300 = vmatpush1.msra.mxu0 0.0
    %5301 = vmatprep.subr.mxu0 0.0
    %5302 = vmatpush1.msra.mxu0 0.0
    %5303 = vmatprep.subr.mxu0 0.0
    %5304 = vmatpush1.msra.mxu0 0.0
    %5305 = vmatprep.subr.mxu0 0.0
    %5306 = vmatpush1.msra.mxu0 0.0
    %5307 = vmatprep.subr.mxu0 0.0
    %5308 = vmatpush1.msra.mxu0 0.0
    %5309 = vmatprep.subr.mxu0 0.0
    %5310 = vmatpush1.msra.mxu0 0.0
    %5311 = vmatprep.subr.mxu0 0.0
    %5312 = vmatpush1.msra.mxu0 0.0
    %5313 = vmatprep.mubr.f32.mxu0 0.0
    %v5314 = vand.u32 %v5020, 4294901760
    %v5315 = vsub.f32 %v5020, %v5314
    %v5316 = vand.u32 %v5315, 4294901760
    %5317 = vmatmul.mubr.f32.gmra.mrb[0].mxu0 %v5316
    %v5318 = vpop.f32.mrb[0].mxu0
    %v5319 = vadd.f32 %v5245, %v5318
    %v5320 = vpop.f32.mrb[0].mxu0
    %5321 = vdwg.mxu0
    %5322 = vmatprep.subr.mxu0 0.0
    %v5323 = vand.u32 %v33, 4294901760
    %v5324 = vsub.f32 %v33, %v5323
    %v5325 = vand.u32 %v5324, 4294901760
    %5326 = vmatpush1.msra.mxu0 %v5325
    %5327 = vmatprep.subr.mxu0 0.0
    %5328 = vmatpush1.msra.mxu0 0.0
    %5329 = vmatprep.subr.mxu0 0.0
    %5330 = vmatpush1.msra.mxu0 0.0
    %5331 = vmatprep.subr.mxu0 0.0
    %5332 = vmatpush1.msra.mxu0 0.0
    %5333 = vmatprep.subr.mxu0 0.0
    %5334 = vmatpush1.msra.mxu0 0.0
    %5335 = vmatprep.subr.mxu0 0.0
    %5336 = vmatpush1.msra.mxu0 0.0
    %5337 = vmatprep.subr.mxu0 0.0
    %5338 = vmatpush1.msra.mxu0 0.0
    %5339 = vmatprep.subr.mxu0 0.0
    %5340 = vmatpush1.msra.mxu0 0.0
    %5341 = vmatprep.subr.mxu0 0.0
    %5342 = vmatpush1.msra.mxu0 0.0
    %5343 = vmatprep.subr.mxu0 0.0
    %5344 = vmatpush1.msra.mxu0 0.0
    %5345 = vmatprep.subr.mxu0 0.0
    %5346 = vmatpush1.msra.mxu0 0.0
    %5347 = vmatprep.subr.mxu0 0.0
    %5348 = vmatpush1.msra.mxu0 0.0
    %5349 = vmatprep.subr.mxu0 0.0
    %5350 = vmatpush1.msra.mxu0 0.0
    %5351 = vmatprep.subr.mxu0 0.0
    %5352 = vmatpush1.msra.mxu0 0.0
    %5353 = vmatprep.subr.mxu0 0.0
    %5354 = vmatpush1.msra.mxu0 0.0
    %5355 = vmatprep.subr.mxu0 0.0
    %5356 = vmatpush1.msra.mxu0 0.0
    %5357 = vmatprep.subr.mxu0 0.0
    %5358 = vmatpush1.msra.mxu0 0.0
    %5359 = vmatprep.subr.mxu0 0.0
    %5360 = vmatpush1.msra.mxu0 0.0
    %5361 = vmatprep.subr.mxu0 0.0
    %5362 = vmatpush1.msra.mxu0 0.0
    %5363 = vmatprep.subr.mxu0 0.0
    %5364 = vmatpush1.msra.mxu0 0.0
    %5365 = vmatprep.subr.mxu0 0.0
    %5366 = vmatpush1.msra.mxu0 0.0
    %5367 = vmatprep.subr.mxu0 0.0
    %5368 = vmatpush1.msra.mxu0 0.0
    %5369 = vmatprep.subr.mxu0 0.0
    %5370 = vmatpush1.msra.mxu0 0.0
    %5371 = vmatprep.subr.mxu0 0.0
    %5372 = vmatpush1.msra.mxu0 0.0
    %5373 = vmatprep.subr.mxu0 0.0
    %5374 = vmatpush1.msra.mxu0 0.0
    %5375 = vmatprep.subr.mxu0 0.0
    %5376 = vmatpush1.msra.mxu0 0.0
    %5377 = vmatprep.subr.mxu0 0.0
    %5378 = vmatpush1.msra.mxu0 0.0
    %5379 = vmatprep.subr.mxu0 0.0
    %5380 = vmatpush1.msra.mxu0 0.0
    %5381 = vmatprep.subr.mxu0 0.0
    %5382 = vmatpush1.msra.mxu0 0.0
    %5383 = vmatprep.subr.mxu0 0.0
    %5384 = vmatpush1.msra.mxu0 0.0
    %5385 = vmatprep.subr.mxu0 0.0
    %5386 = vmatpush1.msra.mxu0 0.0
    %5387 = vmatprep.subr.mxu0 0.0
    %5388 = vmatpush1.msra.mxu0 0.0
    %5389 = vmatprep.mubr.f32.mxu0 0.0
    %v5390 = vand.u32 %v5020, 4294901760
    %5391 = vmatmul.mubr.f32.gmra.mrb[0].mxu0 %v5390
    %v5392 = vpop.f32.mrb[0].mxu0
    %v5393 = vadd.f32 %v5319, %v5392
    %v5394 = vpop.f32.mrb[0].mxu0
    %5395 = vdwg.mxu0
    %5396 = vmatprep.subr.mxu0 0.0
    %v5397 = vand.u32 %v33, 4294901760
    %5398 = vmatpush1.msra.mxu0 %v5397
    %5399 = vmatprep.subr.mxu0 0.0
    %5400 = vmatpush1.msra.mxu0 0.0
    %5401 = vmatprep.subr.mxu0 0.0
    %5402 = vmatpush1.msra.mxu0 0.0
    %5403 = vmatprep.subr.mxu0 0.0
    %5404 = vmatpush1.msra.mxu0 0.0
    %5405 = vmatprep.subr.mxu0 0.0
    %5406 = vmatpush1.msra.mxu0 0.0
    %5407 = vmatprep.subr.mxu0 0.0
    %5408 = vmatpush1.msra.mxu0 0.0
    %5409 = vmatprep.subr.mxu0 0.0
    %5410 = vmatpush1.msra.mxu0 0.0
    %5411 = vmatprep.subr.mxu0 0.0
    %5412 = vmatpush1.msra.mxu0 0.0
    %5413 = vmatprep.subr.mxu0 0.0
    %5414 = vmatpush1.msra.mxu0 0.0
    %5415 = vmatprep.subr.mxu0 0.0
    %5416 = vmatpush1.msra.mxu0 0.0
    %5417 = vmatprep.subr.mxu0 0.0
    %5418 = vmatpush1.msra.mxu0 0.0
    %5419 = vmatprep.subr.mxu0 0.0
    %5420 = vmatpush1.msra.mxu0 0.0
    %5421 = vmatprep.subr.mxu0 0.0
    %5422 = vmatpush1.msra.mxu0 0.0
    %5423 = vmatprep.subr.mxu0 0.0
    %5424 = vmatpush1.msra.mxu0 0.0
    %5425 = vmatprep.subr.mxu0 0.0
    %5426 = vmatpush1.msra.mxu0 0.0
    %5427 = vmatprep.subr.mxu0 0.0
    %5428 = vmatpush1.msra.mxu0 0.0
    %5429 = vmatprep.subr.mxu0 0.0
    %5430 = vmatpush1.msra.mxu0 0.0
    %5431 = vmatprep.subr.mxu0 0.0
    %5432 = vmatpush1.msra.mxu0 0.0
    %5433 = vmatprep.subr.mxu0 0.0
    %5434 = vmatpush1.msra.mxu0 0.0
    %5435 = vmatprep.subr.mxu0 0.0
    %5436 = vmatpush1.msra.mxu0 0.0
    %5437 = vmatprep.subr.mxu0 0.0
    %5438 = vmatpush1.msra.mxu0 0.0
    %5439 = vmatprep.subr.mxu0 0.0
    %5440 = vmatpush1.msra.mxu0 0.0
    %5441 = vmatprep.subr.mxu0 0.0
    %5442 = vmatpush1.msra.mxu0 0.0
    %5443 = vmatprep.subr.mxu0 0.0
    %5444 = vmatpush1.msra.mxu0 0.0
    %5445 = vmatprep.subr.mxu0 0.0
    %5446 = vmatpush1.msra.mxu0 0.0
    %5447 = vmatprep.subr.mxu0 0.0
    %5448 = vmatpush1.msra.mxu0 0.0
    %5449 = vmatprep.subr.mxu0 0.0
    %5450 = vmatpush1.msra.mxu0 0.0
    %5451 = vmatprep.subr.mxu0 0.0
    %5452 = vmatpush1.msra.mxu0 0.0
    %5453 = vmatprep.subr.mxu0 0.0
    %5454 = vmatpush1.msra.mxu0 0.0
    %5455 = vmatprep.subr.mxu0 0.0
    %5456 = vmatpush1.msra.mxu0 0.0
    %5457 = vmatprep.subr.mxu0 0.0
    %5458 = vmatpush1.msra.mxu0 0.0
    %5459 = vmatprep.subr.mxu0 0.0
    %5460 = vmatpush1.msra.mxu0 0.0
    %5461 = vmatprep.mubr.f32.mxu0 0.0
    %v5462 = vand.u32 %v5020, 4294901760
    %5463 = vmatmul.mubr.f32.gmra.mrb[0].mxu0 %v5462
    %v5464 = vpop.f32.mrb[0].mxu0
    %v5465 = vadd.f32 %v5393, %v5464
    %v5466 = vpop.f32.mrb[0].mxu0
    %5467 = vdwg.mxu0
    %v5468 = vadd.f32 %v5018, %v4983
    %v5469 = vlog2.pop %v5465
    %v5470 = vmul.f32 %v5469, 0.6931472
    %v5471 = vadd.f32 %v5468, %v5470
    %v5472 = vsel %vm69, %v5471, -inf
    %5473 = vmax.xlane.f32.xlu0 %v5472
    %v5474 = vpop.xlane.xlu0 %5473
    %v5475 = vsub.f32 %v5471, %v5474
    %v5476 = vmul.f32 %v5475, 1.442695
    %v5477 = vpow.pop %v5476
    %v5478 = vsel %vm69, %v5477, 0.0
    %5479 = vadd.xlane.f32.xlu0 %v5478
    %v5480 = vpop.xlane.xlu0 %5479
    %v5481 = vlog2.pop %v5480
    %v5482 = vmul.f32 %v5481, 0.6931472
    %v5483 = vadd.f32 %v5474, %v5482
    %vm5484 = vcmask 93272
    %5485 = vst.msk [vmem:[#allocation5] sm:$0xf] %vm5484, %v5483
    %s5486 = sld [smem:[#allocation2 + $0x600]]
    %s5487 = scalar_lea.vmem %s1, %s5486
    %v5488 = vld [vmem:[%s5487] sm:$0x1]
    %s5489 = sld [smem:[#allocation2 + $0x601]]
    %s5490 = scalar_lea.vmem %s1, %s5489
    %v5491 = vld [vmem:[%s5490] sm:$0x1]
    %s5492 = sld [smem:[#allocation2 + $0x602]]
    %s5493 = scalar_lea.vmem %s1, %s5492
    %v5494 = vld [vmem:[%s5493] sm:$0x1]
    %s5495 = sld [smem:[#allocation2 + $0x603]]
    %s5496 = scalar_lea.vmem %s1, %s5495
    %v5497 = vld [vmem:[%s5496] sm:$0x1]
    %v5499 = vrot.slane %v5491, 7
    %v5502 = vrot.slane %v5494, 6
    %v5505 = vrot.slane %v5497, 5
    %v5507 = vsel %vm56, %v5488, %v5499
    %v5508 = vsel %vm58, %v5507, %v5502
    %v5509 = vsel %vm60, %v5508, %v5505
    %v5511 = vsel %vm108, %v5477, 0
    %5513 = vmatprep.subr.mxu0 0.0
    %v5514 = vand.u32 %v33, 4294901760
    %5515 = vmatpush1.msra.mxu0 %v5514
    %5516 = vmatprep.subr.mxu0 0.0
    %5517 = vmatpush1.msra.mxu0 0.0
    %5518 = vmatprep.subr.mxu0 0.0
    %5519 = vmatpush1.msra.mxu0 0.0
    %5520 = vmatprep.subr.mxu0 0.0
    %5521 = vmatpush1.msra.mxu0 0.0
    %5522 = vmatprep.subr.mxu0 0.0
    %5523 = vmatpush1.msra.mxu0 0.0
    %5524 = vmatprep.subr.mxu0 0.0
    %5525 = vmatpush1.msra.mxu0 0.0
    %5526 = vmatprep.subr.mxu0 0.0
    %5527 = vmatpush1.msra.mxu0 0.0
    %5528 = vmatprep.subr.mxu0 0.0
    %5529 = vmatpush1.msra.mxu0 0.0
    %5530 = vmatprep.subr.mxu0 0.0
    %5531 = vmatpush1.msra.mxu0 0.0
    %5532 = vmatprep.subr.mxu0 0.0
    %5533 = vmatpush1.msra.mxu0 0.0
    %5534 = vmatprep.subr.mxu0 0.0
    %5535 = vmatpush1.msra.mxu0 0.0
    %5536 = vmatprep.subr.mxu0 0.0
    %5537 = vmatpush1.msra.mxu0 0.0
    %5538 = vmatprep.subr.mxu0 0.0
    %5539 = vmatpush1.msra.mxu0 0.0
    %5540 = vmatprep.subr.mxu0 0.0
    %5541 = vmatpush1.msra.mxu0 0.0
    %5542 = vmatprep.subr.mxu0 0.0
    %5543 = vmatpush1.msra.mxu0 0.0
    %5544 = vmatprep.subr.mxu0 0.0
    %5545 = vmatpush1.msra.mxu0 0.0
    %5546 = vmatprep.subr.mxu0 0.0
    %5547 = vmatpush1.msra.mxu0 0.0
    %5548 = vmatprep.subr.mxu0 0.0
    %5549 = vmatpush1.msra.mxu0 0.0
    %5550 = vmatprep.subr.mxu0 0.0
    %5551 = vmatpush1.msra.mxu0 0.0
    %5552 = vmatprep.subr.mxu0 0.0
    %5553 = vmatpush1.msra.mxu0 0.0
    %5554 = vmatprep.subr.mxu0 0.0
    %5555 = vmatpush1.msra.mxu0 0.0
    %5556 = vmatprep.subr.mxu0 0.0
    %5557 = vmatpush1.msra.mxu0 0.0
    %5558 = vmatprep.subr.mxu0 0.0
    %5559 = vmatpush1.msra.mxu0 0.0
    %5560 = vmatprep.subr.mxu0 0.0
    %5561 = vmatpush1.msra.mxu0 0.0
    %5562 = vmatprep.subr.mxu0 0.0
    %5563 = vmatpush1.msra.mxu0 0.0
    %5564 = vmatprep.subr.mxu0 0.0
    %5565 = vmatpush1.msra.mxu0 0.0
    %5566 = vmatprep.subr.mxu0 0.0
    %5567 = vmatpush1.msra.mxu0 0.0
    %5568 = vmatprep.subr.mxu0 0.0
    %5569 = vmatpush1.msra.mxu0 0.0
    %5570 = vmatprep.subr.mxu0 0.0
    %5571 = vmatpush1.msra.mxu0 0.0
    %5572 = vmatprep.subr.mxu0 0.0
    %5573 = vmatpush1.msra.mxu0 0.0
    %5574 = vmatprep.subr.mxu0 0.0
    %5575 = vmatpush1.msra.mxu0 0.0
    %5576 = vmatprep.subr.mxu0 0.0
    %5577 = vmatpush1.msra.mxu0 0.0
    %5578 = vmatprep.mubr.f32.mxu0 0.0
    %v5579 = vand.u32 %v5511, 4294901760
    %v5580 = vsub.f32 %v5511, %v5579
    %v5581 = vand.u32 %v5580, 4294901760
    %v5582 = vsub.f32 %v5580, %v5581
    %v5583 = vand.u32 %v5582, 4294901760
    %5584 = vmatmul.mubr.f32.gmra.mrb[0].mxu0 %v5583
    %v5585 = vpop.f32.mrb[0].mxu0
    %v5586 = vadd.f32 0.0, %v5585
    %v5587 = vpop.f32.mrb[0].mxu0
    %5588 = vdwg.mxu0
    %5589 = vmatprep.subr.mxu0 0.0
    %v5590 = vand.u32 %v33, 4294901760
    %v5591 = vsub.f32 %v33, %v5590
    %v5592 = vand.u32 %v5591, 4294901760
    %v5593 = vsub.f32 %v5591, %v5592
    %v5594 = vand.u32 %v5593, 4294901760
    %5595 = vmatpush1.msra.mxu0 %v5594
    %5596 = vmatprep.subr.mxu0 0.0
    %5597 = vmatpush1.msra.mxu0 0.0
    %5598 = vmatprep.subr.mxu0 0.0
    %5599 = vmatpush1.msra.mxu0 0.0
    %5600 = vmatprep.subr.mxu0 0.0
    %5601 = vmatpush1.msra.mxu0 0.0
    %5602 = vmatprep.subr.mxu0 0.0
    %5603 = vmatpush1.msra.mxu0 0.0
    %5604 = vmatprep.subr.mxu0 0.0
    %5605 = vmatpush1.msra.mxu0 0.0
    %5606 = vmatprep.subr.mxu0 0.0
    %5607 = vmatpush1.msra.mxu0 0.0
    %5608 = vmatprep.subr.mxu0 0.0
    %5609 = vmatpush1.msra.mxu0 0.0
    %5610 = vmatprep.subr.mxu0 0.0
    %5611 = vmatpush1.msra.mxu0 0.0
    %5612 = vmatprep.subr.mxu0 0.0
    %5613 = vmatpush1.msra.mxu0 0.0
    %5614 = vmatprep.subr.mxu0 0.0
    %5615 = vmatpush1.msra.mxu0 0.0
    %5616 = vmatprep.subr.mxu0 0.0
    %5617 = vmatpush1.msra.mxu0 0.0
    %5618 = vmatprep.subr.mxu0 0.0
    %5619 = vmatpush1.msra.mxu0 0.0
    %5620 = vmatprep.subr.mxu0 0.0
    %5621 = vmatpush1.msra.mxu0 0.0
    %5622 = vmatprep.subr.mxu0 0.0
    %5623 = vmatpush1.msra.mxu0 0.0
    %5624 = vmatprep.subr.mxu0 0.0
    %5625 = vmatpush1.msra.mxu0 0.0
    %5626 = vmatprep.subr.mxu0 0.0
    %5627 = vmatpush1.msra.mxu0 0.0
    %5628 = vmatprep.subr.mxu0 0.0
    %5629 = vmatpush1.msra.mxu0 0.0
    %5630 = vmatprep.subr.mxu0 0.0
    %5631 = vmatpush1.msra.mxu0 0.0
    %5632 = vmatprep.subr.mxu0 0.0
    %5633 = vmatpush1.msra.mxu0 0.0
    %5634 = vmatprep.subr.mxu0 0.0
    %5635 = vmatpush1.msra.mxu0 0.0
    %5636 = vmatprep.subr.mxu0 0.0
    %5637 = vmatpush1.msra.mxu0 0.0
    %5638 = vmatprep.subr.mxu0 0.0
    %5639 = vmatpush1.msra.mxu0 0.0
    %5640 = vmatprep.subr.mxu0 0.0
    %5641 = vmatpush1.msra.mxu0 0.0
    %5642 = vmatprep.subr.mxu0 0.0
    %5643 = vmatpush1.msra.mxu0 0.0
    %5644 = vmatprep.subr.mxu0 0.0
    %5645 = vmatpush1.msra.mxu0 0.0
    %5646 = vmatprep.subr.mxu0 0.0
    %5647 = vmatpush1.msra.mxu0 0.0
    %5648 = vmatprep.subr.mxu0 0.0
    %5649 = vmatpush1.msra.mxu0 0.0
    %5650 = vmatprep.subr.mxu0 0.0
    %5651 = vmatpush1.msra.mxu0 0.0
    %5652 = vmatprep.subr.mxu0 0.0
    %5653 = vmatpush1.msra.mxu0 0.0
    %5654 = vmatprep.subr.mxu0 0.0
    %5655 = vmatpush1.msra.mxu0 0.0
    %5656 = vmatprep.subr.mxu0 0.0
    %5657 = vmatpush1.msra.mxu0 0.0
    %5658 = vmatprep.mubr.f32.mxu0 0.0
    %v5659 = vand.u32 %v5511, 4294901760
    %5660 = vmatmul.mubr.f32.gmra.mrb[0].mxu0 %v5659
    %v5661 = vpop.f32.mrb[0].mxu0
    %v5662 = vadd.f32 %v5586, %v5661
    %v5663 = vpop.f32.mrb[0].mxu0
    %5664 = vdwg.mxu0
    %5665 = vmatprep.subr.mxu0 0.0
    %v5666 = vand.u32 %v33, 4294901760
    %v5667 = vsub.f32 %v33, %v5666
    %5668 = vmatpush1.msra.mxu0 %v5667
    %5669 = vmatprep.subr.mxu0 0.0
    %5670 = vmatpush1.msra.mxu0 0.0
    %5671 = vmatprep.subr.mxu0 0.0
    %5672 = vmatpush1.msra.mxu0 0.0
    %5673 = vmatprep.subr.mxu0 0.0
    %5674 = vmatpush1.msra.mxu0 0.0
    %5675 = vmatprep.subr.mxu0 0.0
    %5676 = vmatpush1.msra.mxu0 0.0
    %5677 = vmatprep.subr.mxu0 0.0
    %5678 = vmatpush1.msra.mxu0 0.0
    %5679 = vmatprep.subr.mxu0 0.0
    %5680 = vmatpush1.msra.mxu0 0.0
    %5681 = vmatprep.subr.mxu0 0.0
    %5682 = vmatpush1.msra.mxu0 0.0
    %5683 = vmatprep.subr.mxu0 0.0
    %5684 = vmatpush1.msra.mxu0 0.0
    %5685 = vmatprep.subr.mxu0 0.0
    %5686 = vmatpush1.msra.mxu0 0.0
    %5687 = vmatprep.subr.mxu0 0.0
    %5688 = vmatpush1.msra.mxu0 0.0
    %5689 = vmatprep.subr.mxu0 0.0
    %5690 = vmatpush1.msra.mxu0 0.0
    %5691 = vmatprep.subr.mxu0 0.0
    %5692 = vmatpush1.msra.mxu0 0.0
    %5693 = vmatprep.subr.mxu0 0.0
    %5694 = vmatpush1.msra.mxu0 0.0
    %5695 = vmatprep.subr.mxu0 0.0
    %5696 = vmatpush1.msra.mxu0 0.0
    %5697 = vmatprep.subr.mxu0 0.0
    %5698 = vmatpush1.msra.mxu0 0.0
    %5699 = vmatprep.subr.mxu0 0.0
    %5700 = vmatpush1.msra.mxu0 0.0
    %5701 = vmatprep.subr.mxu0 0.0
    %5702 = vmatpush1.msra.mxu0 0.0
    %5703 = vmatprep.subr.mxu0 0.0
    %5704 = vmatpush1.msra.mxu0 0.0
    %5705 = vmatprep.subr.mxu0 0.0
    %5706 = vmatpush1.msra.mxu0 0.0
    %5707 = vmatprep.subr.mxu0 0.0
    %5708 = vmatpush1.msra.mxu0 0.0
    %5709 = vmatprep.subr.mxu0 0.0
    %5710 = vmatpush1.msra.mxu0 0.0
    %5711 = vmatprep.subr.mxu0 0.0
    %5712 = vmatpush1.msra.mxu0 0.0
    %5713 = vmatprep.subr.mxu0 0.0
    %5714 = vmatpush1.msra.mxu0 0.0
    %5715 = vmatprep.subr.mxu0 0.0
    %5716 = vmatpush1.msra.mxu0 0.0
    %5717 = vmatprep.subr.mxu0 0.0
    %5718 = vmatpush1.msra.mxu0 0.0
    %5719 = vmatprep.subr.mxu0 0.0
    %5720 = vmatpush1.msra.mxu0 0.0
    %5721 = vmatprep.subr.mxu0 0.0
    %5722 = vmatpush1.msra.mxu0 0.0
    %5723 = vmatprep.subr.mxu0 0.0
    %5724 = vmatpush1.msra.mxu0 0.0
    %5725 = vmatprep.subr.mxu0 0.0
    %5726 = vmatpush1.msra.mxu0 0.0
    %5727 = vmatprep.subr.mxu0 0.0
    %5728 = vmatpush1.msra.mxu0 0.0
    %5729 = vmatprep.subr.mxu0 0.0
    %5730 = vmatpush1.msra.mxu0 0.0
    %5731 = vmatprep.mubr.f32.mxu0 0.0
    %v5732 = vand.u32 %v5511, 4294901760
    %v5733 = vsub.f32 %v5511, %v5732
    %5734 = vmatmul.mubr.f32.gmra.mrb[0].mxu0 %v5733
    %v5735 = vpop.f32.mrb[0].mxu0
    %v5736 = vadd.f32 %v5662, %v5735
    %v5737 = vpop.f32.mrb[0].mxu0
    %5738 = vdwg.mxu0
    %5739 = vmatprep.subr.mxu0 0.0
    %v5740 = vand.u32 %v33, 4294901760
    %5741 = vmatpush1.msra.mxu0 %v5740
    %5742 = vmatprep.subr.mxu0 0.0
    %5743 = vmatpush1.msra.mxu0 0.0
    %5744 = vmatprep.subr.mxu0 0.0
    %5745 = vmatpush1.msra.mxu0 0.0
    %5746 = vmatprep.subr.mxu0 0.0
    %5747 = vmatpush1.msra.mxu0 0.0
    %5748 = vmatprep.subr.mxu0 0.0
    %5749 = vmatpush1.msra.mxu0 0.0
    %5750 = vmatprep.subr.mxu0 0.0
    %5751 = vmatpush1.msra.mxu0 0.0
    %5752 = vmatprep.subr.mxu0 0.0
    %5753 = vmatpush1.msra.mxu0 0.0
    %5754 = vmatprep.subr.mxu0 0.0
    %5755 = vmatpush1.msra.mxu0 0.0
    %5756 = vmatprep.subr.mxu0 0.0
    %5757 = vmatpush1.msra.mxu0 0.0
    %5758 = vmatprep.subr.mxu0 0.0
    %5759 = vmatpush1.msra.mxu0 0.0
    %5760 = vmatprep.subr.mxu0 0.0
    %5761 = vmatpush1.msra.mxu0 0.0
    %5762 = vmatprep.subr.mxu0 0.0
    %5763 = vmatpush1.msra.mxu0 0.0
    %5764 = vmatprep.subr.mxu0 0.0
    %5765 = vmatpush1.msra.mxu0 0.0
    %5766 = vmatprep.subr.mxu0 0.0
    %5767 = vmatpush1.msra.mxu0 0.0
    %5768 = vmatprep.subr.mxu0 0.0
    %5769 = vmatpush1.msra.mxu0 0.0
    %5770 = vmatprep.subr.mxu0 0.0
    %5771 = vmatpush1.msra.mxu0 0.0
    %5772 = vmatprep.subr.mxu0 0.0
    %5773 = vmatpush1.msra.mxu0 0.0
    %5774 = vmatprep.subr.mxu0 0.0
    %5775 = vmatpush1.msra.mxu0 0.0
    %5776 = vmatprep.subr.mxu0 0.0
    %5777 = vmatpush1.msra.mxu0 0.0
    %5778 = vmatprep.subr.mxu0 0.0
    %5779 = vmatpush1.msra.mxu0 0.0
    %5780 = vmatprep.subr.mxu0 0.0
    %5781 = vmatpush1.msra.mxu0 0.0
    %5782 = vmatprep.subr.mxu0 0.0
    %5783 = vmatpush1.msra.mxu0 0.0
    %5784 = vmatprep.subr.mxu0 0.0
    %5785 = vmatpush1.msra.mxu0 0.0
    %5786 = vmatprep.subr.mxu0 0.0
    %5787 = vmatpush1.msra.mxu0 0.0
    %5788 = vmatprep.subr.mxu0 0.0
    %5789 = vmatpush1.msra.mxu0 0.0
    %5790 = vmatprep.subr.mxu0 0.0
    %5791 = vmatpush1.msra.mxu0 0.0
    %5792 = vmatprep.subr.mxu0 0.0
    %5793 = vmatpush1.msra.mxu0 0.0
    %5794 = vmatprep.subr.mxu0 0.0
    %5795 = vmatpush1.msra.mxu0 0.0
    %5796 = vmatprep.subr.mxu0 0.0
    %5797 = vmatpush1.msra.mxu0 0.0
    %5798 = vmatprep.subr.mxu0 0.0
    %5799 = vmatpush1.msra.mxu0 0.0
    %5800 = vmatprep.subr.mxu0 0.0
    %5801 = vmatpush1.msra.mxu0 0.0
    %5802 = vmatprep.subr.mxu0 0.0
    %5803 = vmatpush1.msra.mxu0 0.0
    %5804 = vmatprep.mubr.f32.mxu0 0.0
    %v5805 = vand.u32 %v5511, 4294901760
    %v5806 = vsub.f32 %v5511, %v5805
    %v5807 = vand.u32 %v5806, 4294901760
    %5808 = vmatmul.mubr.f32.gmra.mrb[0].mxu0 %v5807
    %v5809 = vpop.f32.mrb[0].mxu0
    %v5810 = vadd.f32 %v5736, %v5809
    %v5811 = vpop.f32.mrb[0].mxu0
    %5812 = vdwg.mxu0
    %5813 = vmatprep.subr.mxu0 0.0
    %v5814 = vand.u32 %v33, 4294901760
    %v5815 = vsub.f32 %v33, %v5814
    %v5816 = vand.u32 %v5815, 4294901760
    %5817 = vmatpush1.msra.mxu0 %v5816
    %5818 = vmatprep.subr.mxu0 0.0
    %5819 = vmatpush1.msra.mxu0 0.0
    %5820 = vmatprep.subr.mxu0 0.0
    %5821 = vmatpush1.msra.mxu0 0.0
    %5822 = vmatprep.subr.mxu0 0.0
    %5823 = vmatpush1.msra.mxu0 0.0
    %5824 = vmatprep.subr.mxu0 0.0
    %5825 = vmatpush1.msra.mxu0 0.0
    %5826 = vmatprep.subr.mxu0 0.0
    %5827 = vmatpush1.msra.mxu0 0.0
    %5828 = vmatprep.subr.mxu0 0.0
    %5829 = vmatpush1.msra.mxu0 0.0
    %5830 = vmatprep.subr.mxu0 0.0
    %5831 = vmatpush1.msra.mxu0 0.0
    %5832 = vmatprep.subr.mxu0 0.0
    %5833 = vmatpush1.msra.mxu0 0.0
    %5834 = vmatprep.subr.mxu0 0.0
    %5835 = vmatpush1.msra.mxu0 0.0
    %5836 = vmatprep.subr.mxu0 0.0
    %5837 = vmatpush1.msra.mxu0 0.0
    %5838 = vmatprep.subr.mxu0 0.0
    %5839 = vmatpush1.msra.mxu0 0.0
    %5840 = vmatprep.subr.mxu0 0.0
    %5841 = vmatpush1.msra.mxu0 0.0
    %5842 = vmatprep.subr.mxu0 0.0
    %5843 = vmatpush1.msra.mxu0 0.0
    %5844 = vmatprep.subr.mxu0 0.0
    %5845 = vmatpush1.msra.mxu0 0.0
    %5846 = vmatprep.subr.mxu0 0.0
    %5847 = vmatpush1.msra.mxu0 0.0
    %5848 = vmatprep.subr.mxu0 0.0
    %5849 = vmatpush1.msra.mxu0 0.0
    %5850 = vmatprep.subr.mxu0 0.0
    %5851 = vmatpush1.msra.mxu0 0.0
    %5852 = vmatprep.subr.mxu0 0.0
    %5853 = vmatpush1.msra.mxu0 0.0
    %5854 = vmatprep.subr.mxu0 0.0
    %5855 = vmatpush1.msra.mxu0 0.0
    %5856 = vmatprep.subr.mxu0 0.0
    %5857 = vmatpush1.msra.mxu0 0.0
    %5858 = vmatprep.subr.mxu0 0.0
    %5859 = vmatpush1.msra.mxu0 0.0
    %5860 = vmatprep.subr.mxu0 0.0
    %5861 = vmatpush1.msra.mxu0 0.0
    %5862 = vmatprep.subr.mxu0 0.0
    %5863 = vmatpush1.msra.mxu0 0.0
    %5864 = vmatprep.subr.mxu0 0.0
    %5865 = vmatpush1.msra.mxu0 0.0
    %5866 = vmatprep.subr.mxu0 0.0
    %5867 = vmatpush1.msra.mxu0 0.0
    %5868 = vmatprep.subr.mxu0 0.0
    %5869 = vmatpush1.msra.mxu0 0.0
    %5870 = vmatprep.subr.mxu0 0.0
    %5871 = vmatpush1.msra.mxu0 0.0
    %5872 = vmatprep.subr.mxu0 0.0
    %5873 = vmatpush1.msra.mxu0 0.0
    %5874 = vmatprep.subr.mxu0 0.0
    %5875 = vmatpush1.msra.mxu0 0.0
    %5876 = vmatprep.subr.mxu0 0.0
    %5877 = vmatpush1.msra.mxu0 0.0
    %5878 = vmatprep.subr.mxu0 0.0
    %5879 = vmatpush1.msra.mxu0 0.0
    %5880 = vmatprep.mubr.f32.mxu0 0.0
    %v5881 = vand.u32 %v5511, 4294901760
    %5882 = vmatmul.mubr.f32.gmra.mrb[0].mxu0 %v5881
    %v5883 = vpop.f32.mrb[0].mxu0
    %v5884 = vadd.f32 %v5810, %v5883
    %v5885 = vpop.f32.mrb[0].mxu0
    %5886 = vdwg.mxu0
    %5887 = vmatprep.subr.mxu0 0.0
    %v5888 = vand.u32 %v33, 4294901760
    %5889 = vmatpush1.msra.mxu0 %v5888
    %5890 = vmatprep.subr.mxu0 0.0
    %5891 = vmatpush1.msra.mxu0 0.0
    %5892 = vmatprep.subr.mxu0 0.0
    %5893 = vmatpush1.msra.mxu0 0.0
    %5894 = vmatprep.subr.mxu0 0.0
    %5895 = vmatpush1.msra.mxu0 0.0
    %5896 = vmatprep.subr.mxu0 0.0
    %5897 = vmatpush1.msra.mxu0 0.0
    %5898 = vmatprep.subr.mxu0 0.0
    %5899 = vmatpush1.msra.mxu0 0.0
    %5900 = vmatprep.subr.mxu0 0.0
    %5901 = vmatpush1.msra.mxu0 0.0
    %5902 = vmatprep.subr.mxu0 0.0
    %5903 = vmatpush1.msra.mxu0 0.0
    %5904 = vmatprep.subr.mxu0 0.0
    %5905 = vmatpush1.msra.mxu0 0.0
    %5906 = vmatprep.subr.mxu0 0.0
    %5907 = vmatpush1.msra.mxu0 0.0
    %5908 = vmatprep.subr.mxu0 0.0
    %5909 = vmatpush1.msra.mxu0 0.0
    %5910 = vmatprep.subr.mxu0 0.0
    %5911 = vmatpush1.msra.mxu0 0.0
    %5912 = vmatprep.subr.mxu0 0.0
    %5913 = vmatpush1.msra.mxu0 0.0
    %5914 = vmatprep.subr.mxu0 0.0
    %5915 = vmatpush1.msra.mxu0 0.0
    %5916 = vmatprep.subr.mxu0 0.0
    %5917 = vmatpush1.msra.mxu0 0.0
    %5918 = vmatprep.subr.mxu0 0.0
    %5919 = vmatpush1.msra.mxu0 0.0
    %5920 = vmatprep.subr.mxu0 0.0
    %5921 = vmatpush1.msra.mxu0 0.0
    %5922 = vmatprep.subr.mxu0 0.0
    %5923 = vmatpush1.msra.mxu0 0.0
    %5924 = vmatprep.subr.mxu0 0.0
    %5925 = vmatpush1.msra.mxu0 0.0
    %5926 = vmatprep.subr.mxu0 0.0
    %5927 = vmatpush1.msra.mxu0 0.0
    %5928 = vmatprep.subr.mxu0 0.0
    %5929 = vmatpush1.msra.mxu0 0.0
    %5930 = vmatprep.subr.mxu0 0.0
    %5931 = vmatpush1.msra.mxu0 0.0
    %5932 = vmatprep.subr.mxu0 0.0
    %5933 = vmatpush1.msra.mxu0 0.0
    %5934 = vmatprep.subr.mxu0 0.0
    %5935 = vmatpush1.msra.mxu0 0.0
    %5936 = vmatprep.subr.mxu0 0.0
    %5937 = vmatpush1.msra.mxu0 0.0
    %5938 = vmatprep.subr.mxu0 0.0
    %5939 = vmatpush1.msra.mxu0 0.0
    %5940 = vmatprep.subr.mxu0 0.0
    %5941 = vmatpush1.msra.mxu0 0.0
    %5942 = vmatprep.subr.mxu0 0.0
    %5943 = vmatpush1.msra.mxu0 0.0
    %5944 = vmatprep.subr.mxu0 0.0
    %5945 = vmatpush1.msra.mxu0 0.0
    %5946 = vmatprep.subr.mxu0 0.0
    %5947 = vmatpush1.msra.mxu0 0.0
    %5948 = vmatprep.subr.mxu0 0.0
    %5949 = vmatpush1.msra.mxu0 0.0
    %5950 = vmatprep.subr.mxu0 0.0
    %5951 = vmatpush1.msra.mxu0 0.0
    %5952 = vmatprep.mubr.f32.mxu0 0.0
    %v5953 = vand.u32 %v5511, 4294901760
    %5954 = vmatmul.mubr.f32.gmra.mrb[0].mxu0 %v5953
    %v5955 = vpop.f32.mrb[0].mxu0
    %v5956 = vadd.f32 %v5884, %v5955
    %v5957 = vpop.f32.mrb[0].mxu0
    %5958 = vdwg.mxu0
    %v5959 = vadd.f32 %v5509, %v5474
    %v5960 = vlog2.pop %v5956
    %v5961 = vmul.f32 %v5960, 0.6931472
    %v5962 = vadd.f32 %v5959, %v5961
    %v5963 = vsel %vm69, %v5962, -inf
    %5964 = vmax.xlane.f32.xlu0 %v5963
    %v5965 = vpop.xlane.xlu0 %5964
    %v5966 = vsub.f32 %v5962, %v5965
    %v5967 = vmul.f32 %v5966, 1.442695
    %v5968 = vpow.pop %v5967
    %v5969 = vsel %vm69, %v5968, 0.0
    %5970 = vadd.xlane.f32.xlu0 %v5969
    %v5971 = vpop.xlane.xlu0 %5970
    %v5972 = vlog2.pop %v5971
    %v5973 = vmul.f32 %v5972, 0.6931472
    %v5974 = vadd.f32 %v5965, %v5973
    %vm5975 = vcmask 101472
    %5976 = vst.msk [vmem:[#allocation5] sm:$0xf] %vm5975, %v5974
    %s5977 = sld [smem:[#allocation2 + $0x680]]
    %s5978 = scalar_lea.vmem %s1, %s5977
    %v5979 = vld [vmem:[%s5978] sm:$0x1]
    %s5980 = sld [smem:[#allocation2 + $0x681]]
    %s5981 = scalar_lea.vmem %s1, %s5980
    %v5982 = vld [vmem:[%s5981] sm:$0x1]
    %s5983 = sld [smem:[#allocation2 + $0x682]]
    %s5984 = scalar_lea.vmem %s1, %s5983
    %v5985 = vld [vmem:[%s5984] sm:$0x1]
    %s5986 = sld [smem:[#allocation2 + $0x683]]
    %s5987 = scalar_lea.vmem %s1, %s5986
    %v5988 = vld [vmem:[%s5987] sm:$0x1]
    %v5990 = vrot.slane %v5982, 7
    %v5993 = vrot.slane %v5985, 6
    %v5996 = vrot.slane %v5988, 5
    %v5998 = vsel %vm56, %v5979, %v5990
    %v5999 = vsel %vm58, %v5998, %v5993
    %v6000 = vsel %vm60, %v5999, %v5996
    %v6002 = vsel %vm108, %v5968, 0
    %6004 = vmatprep.subr.mxu0 0.0
    %v6005 = vand.u32 %v33, 4294901760
    %6006 = vmatpush1.msra.mxu0 %v6005
    %6007 = vmatprep.subr.mxu0 0.0
    %6008 = vmatpush1.msra.mxu0 0.0
    %6009 = vmatprep.subr.mxu0 0.0
    %6010 = vmatpush1.msra.mxu0 0.0
    %6011 = vmatprep.subr.mxu0 0.0
    %6012 = vmatpush1.msra.mxu0 0.0
    %6013 = vmatprep.subr.mxu0 0.0
    %6014 = vmatpush1.msra.mxu0 0.0
    %6015 = vmatprep.subr.mxu0 0.0
    %6016 = vmatpush1.msra.mxu0 0.0
    %6017 = vmatprep.subr.mxu0 0.0
    %6018 = vmatpush1.msra.mxu0 0.0
    %6019 = vmatprep.subr.mxu0 0.0
    %6020 = vmatpush1.msra.mxu0 0.0
    %6021 = vmatprep.subr.mxu0 0.0
    %6022 = vmatpush1.msra.mxu0 0.0
    %6023 = vmatprep.subr.mxu0 0.0
    %6024 = vmatpush1.msra.mxu0 0.0
    %6025 = vmatprep.subr.mxu0 0.0
    %6026 = vmatpush1.msra.mxu0 0.0
    %6027 = vmatprep.subr.mxu0 0.0
    %6028 = vmatpush1.msra.mxu0 0.0
    %6029 = vmatprep.subr.mxu0 0.0
    %6030 = vmatpush1.msra.mxu0 0.0
    %6031 = vmatprep.subr.mxu0 0.0
    %6032 = vmatpush1.msra.mxu0 0.0
    %6033 = vmatprep.subr.mxu0 0.0
    %6034 = vmatpush1.msra.mxu0 0.0
    %6035 = vmatprep.subr.mxu0 0.0
    %6036 = vmatpush1.msra.mxu0 0.0
    %6037 = vmatprep.subr.mxu0 0.0
    %6038 = vmatpush1.msra.mxu0 0.0
    %6039 = vmatprep.subr.mxu0 0.0
    %6040 = vmatpush1.msra.mxu0 0.0
    %6041 = vmatprep.subr.mxu0 0.0
    %6042 = vmatpush1.msra.mxu0 0.0
    %6043 = vmatprep.subr.mxu0 0.0
    %6044 = vmatpush1.msra.mxu0 0.0
    %6045 = vmatprep.subr.mxu0 0.0
    %6046 = vmatpush1.msra.mxu0 0.0
    %6047 = vmatprep.subr.mxu0 0.0
    %6048 = vmatpush1.msra.mxu0 0.0
    %6049 = vmatprep.subr.mxu0 0.0
    %6050 = vmatpush1.msra.mxu0 0.0
    %6051 = vmatprep.subr.mxu0 0.0
    %6052 = vmatpush1.msra.mxu0 0.0
    %6053 = vmatprep.subr.mxu0 0.0
    %6054 = vmatpush1.msra.mxu0 0.0
    %6055 = vmatprep.subr.mxu0 0.0
    %6056 = vmatpush1.msra.mxu0 0.0
    %6057 = vmatprep.subr.mxu0 0.0
    %6058 = vmatpush1.msra.mxu0 0.0
    %6059 = vmatprep.subr.mxu0 0.0
    %6060 = vmatpush1.msra.mxu0 0.0
    %6061 = vmatprep.subr.mxu0 0.0
    %6062 = vmatpush1.msra.mxu0 0.0
    %6063 = vmatprep.subr.mxu0 0.0
    %6064 = vmatpush1.msra.mxu0 0.0
    %6065 = vmatprep.subr.mxu0 0.0
    %6066 = vmatpush1.msra.mxu0 0.0
    %6067 = vmatprep.subr.mxu0 0.0
    %6068 = vmatpush1.msra.mxu0 0.0
    %6069 = vmatprep.mubr.f32.mxu0 0.0
    %v6070 = vand.u32 %v6002, 4294901760
    %v6071 = vsub.f32 %v6002, %v6070
    %v6072 = vand.u32 %v6071, 4294901760
    %v6073 = vsub.f32 %v6071, %v6072
    %v6074 = vand.u32 %v6073, 4294901760
    %6075 = vmatmul.mubr.f32.gmra.mrb[0].mxu0 %v6074
    %v6076 = vpop.f32.mrb[0].mxu0
    %v6077 = vadd.f32 0.0, %v6076
    %v6078 = vpop.f32.mrb[0].mxu0
    %6079 = vdwg.mxu0
    %6080 = vmatprep.subr.mxu0 0.0
    %v6081 = vand.u32 %v33, 4294901760
    %v6082 = vsub.f32 %v33, %v6081
    %v6083 = vand.u32 %v6082, 4294901760
    %v6084 = vsub.f32 %v6082, %v6083
    %v6085 = vand.u32 %v6084, 4294901760
    %6086 = vmatpush1.msra.mxu0 %v6085
    %6087 = vmatprep.subr.mxu0 0.0
    %6088 = vmatpush1.msra.mxu0 0.0
    %6089 = vmatprep.subr.mxu0 0.0
    %6090 = vmatpush1.msra.mxu0 0.0
    %6091 = vmatprep.subr.mxu0 0.0
    %6092 = vmatpush1.msra.mxu0 0.0
    %6093 = vmatprep.subr.mxu0 0.0
    %6094 = vmatpush1.msra.mxu0 0.0
    %6095 = vmatprep.subr.mxu0 0.0
    %6096 = vmatpush1.msra.mxu0 0.0
    %6097 = vmatprep.subr.mxu0 0.0
    %6098 = vmatpush1.msra.mxu0 0.0
    %6099 = vmatprep.subr.mxu0 0.0
    %6100 = vmatpush1.msra.mxu0 0.0
    %6101 = vmatprep.subr.mxu0 0.0
    %6102 = vmatpush1.msra.mxu0 0.0
    %6103 = vmatprep.subr.mxu0 0.0
    %6104 = vmatpush1.msra.mxu0 0.0
    %6105 = vmatprep.subr.mxu0 0.0
    %6106 = vmatpush1.msra.mxu0 0.0
    %6107 = vmatprep.subr.mxu0 0.0
    %6108 = vmatpush1.msra.mxu0 0.0
    %6109 = vmatprep.subr.mxu0 0.0
    %6110 = vmatpush1.msra.mxu0 0.0
    %6111 = vmatprep.subr.mxu0 0.0
    %6112 = vmatpush1.msra.mxu0 0.0
    %6113 = vmatprep.subr.mxu0 0.0
    %6114 = vmatpush1.msra.mxu0 0.0
    %6115 = vmatprep.subr.mxu0 0.0
    %6116 = vmatpush1.msra.mxu0 0.0
    %6117 = vmatprep.subr.mxu0 0.0
    %6118 = vmatpush1.msra.mxu0 0.0
    %6119 = vmatprep.subr.mxu0 0.0
    %6120 = vmatpush1.msra.mxu0 0.0
    %6121 = vmatprep.subr.mxu0 0.0
    %6122 = vmatpush1.msra.mxu0 0.0
    %6123 = vmatprep.subr.mxu0 0.0
    %6124 = vmatpush1.msra.mxu0 0.0
    %6125 = vmatprep.subr.mxu0 0.0
    %6126 = vmatpush1.msra.mxu0 0.0
    %6127 = vmatprep.subr.mxu0 0.0
    %6128 = vmatpush1.msra.mxu0 0.0
    %6129 = vmatprep.subr.mxu0 0.0
    %6130 = vmatpush1.msra.mxu0 0.0
    %6131 = vmatprep.subr.mxu0 0.0
    %6132 = vmatpush1.msra.mxu0 0.0
    %6133 = vmatprep.subr.mxu0 0.0
    %6134 = vmatpush1.msra.mxu0 0.0
    %6135 = vmatprep.subr.mxu0 0.0
    %6136 = vmatpush1.msra.mxu0 0.0
    %6137 = vmatprep.subr.mxu0 0.0
    %6138 = vmatpush1.msra.mxu0 0.0
    %6139 = vmatprep.subr.mxu0 0.0
    %6140 = vmatpush1.msra.mxu0 0.0
    %6141 = vmatprep.subr.mxu0 0.0
    %6142 = vmatpush1.msra.mxu0 0.0
    %6143 = vmatprep.subr.mxu0 0.0
    %6144 = vmatpush1.msra.mxu0 0.0
    %6145 = vmatprep.subr.mxu0 0.0
    %6146 = vmatpush1.msra.mxu0 0.0
    %6147 = vmatprep.subr.mxu0 0.0
    %6148 = vmatpush1.msra.mxu0 0.0
    %6149 = vmatprep.mubr.f32.mxu0 0.0
    %v6150 = vand.u32 %v6002, 4294901760
    %6151 = vmatmul.mubr.f32.gmra.mrb[0].mxu0 %v6150
    %v6152 = vpop.f32.mrb[0].mxu0
    %v6153 = vadd.f32 %v6077, %v6152
    %v6154 = vpop.f32.mrb[0].mxu0
    %6155 = vdwg.mxu0
    %6156 = vmatprep.subr.mxu0 0.0
    %v6157 = vand.u32 %v33, 4294901760
    %v6158 = vsub.f32 %v33, %v6157
    %6159 = vmatpush1.msra.mxu0 %v6158
    %6160 = vmatprep.subr.mxu0 0.0
    %6161 = vmatpush1.msra.mxu0 0.0
    %6162 = vmatprep.subr.mxu0 0.0
    %6163 = vmatpush1.msra.mxu0 0.0
    %6164 = vmatprep.subr.mxu0 0.0
    %6165 = vmatpush1.msra.mxu0 0.0
    %6166 = vmatprep.subr.mxu0 0.0
    %6167 = vmatpush1.msra.mxu0 0.0
    %6168 = vmatprep.subr.mxu0 0.0
    %6169 = vmatpush1.msra.mxu0 0.0
    %6170 = vmatprep.subr.mxu0 0.0
    %6171 = vmatpush1.msra.mxu0 0.0
    %6172 = vmatprep.subr.mxu0 0.0
    %6173 = vmatpush1.msra.mxu0 0.0
    %6174 = vmatprep.subr.mxu0 0.0
    %6175 = vmatpush1.msra.mxu0 0.0
    %6176 = vmatprep.subr.mxu0 0.0
    %6177 = vmatpush1.msra.mxu0 0.0
    %6178 = vmatprep.subr.mxu0 0.0
    %6179 = vmatpush1.msra.mxu0 0.0
    %6180 = vmatprep.subr.mxu0 0.0
    %6181 = vmatpush1.msra.mxu0 0.0
    %6182 = vmatprep.subr.mxu0 0.0
    %6183 = vmatpush1.msra.mxu0 0.0
    %6184 = vmatprep.subr.mxu0 0.0
    %6185 = vmatpush1.msra.mxu0 0.0
    %6186 = vmatprep.subr.mxu0 0.0
    %6187 = vmatpush1.msra.mxu0 0.0
    %6188 = vmatprep.subr.mxu0 0.0
    %6189 = vmatpush1.msra.mxu0 0.0
    %6190 = vmatprep.subr.mxu0 0.0
    %6191 = vmatpush1.msra.mxu0 0.0
    %6192 = vmatprep.subr.mxu0 0.0
    %6193 = vmatpush1.msra.mxu0 0.0
    %6194 = vmatprep.subr.mxu0 0.0
    %6195 = vmatpush1.msra.mxu0 0.0
    %6196 = vmatprep.subr.mxu0 0.0
    %6197 = vmatpush1.msra.mxu0 0.0
    %6198 = vmatprep.subr.mxu0 0.0
    %6199 = vmatpush1.msra.mxu0 0.0
    %6200 = vmatprep.subr.mxu0 0.0
    %6201 = vmatpush1.msra.mxu0 0.0
    %6202 = vmatprep.subr.mxu0 0.0
    %6203 = vmatpush1.msra.mxu0 0.0
    %6204 = vmatprep.subr.mxu0 0.0
    %6205 = vmatpush1.msra.mxu0 0.0
    %6206 = vmatprep.subr.mxu0 0.0
    %6207 = vmatpush1.msra.mxu0 0.0
    %6208 = vmatprep.subr.mxu0 0.0
    %6209 = vmatpush1.msra.mxu0 0.0
    %6210 = vmatprep.subr.mxu0 0.0
    %6211 = vmatpush1.msra.mxu0 0.0
    %6212 = vmatprep.subr.mxu0 0.0
    %6213 = vmatpush1.msra.mxu0 0.0
    %6214 = vmatprep.subr.mxu0 0.0
    %6215 = vmatpush1.msra.mxu0 0.0
    %6216 = vmatprep.subr.mxu0 0.0
    %6217 = vmatpush1.msra.mxu0 0.0
    %6218 = vmatprep.subr.mxu0 0.0
    %6219 = vmatpush1.msra.mxu0 0.0
    %6220 = vmatprep.subr.mxu0 0.0
    %6221 = vmatpush1.msra.mxu0 0.0
    %6222 = vmatprep.mubr.f32.mxu0 0.0
    %v6223 = vand.u32 %v6002, 4294901760
    %v6224 = vsub.f32 %v6002, %v6223
    %6225 = vmatmul.mubr.f32.gmra.mrb[0].mxu0 %v6224
    %v6226 = vpop.f32.mrb[0].mxu0
    %v6227 = vadd.f32 %v6153, %v6226
    %v6228 = vpop.f32.mrb[0].mxu0
    %6229 = vdwg.mxu0
    %6230 = vmatprep.subr.mxu0 0.0
    %v6231 = vand.u32 %v33, 4294901760
    %6232 = vmatpush1.msra.mxu0 %v6231
    %6233 = vmatprep.subr.mxu0 0.0
    %6234 = vmatpush1.msra.mxu0 0.0
    %6235 = vmatprep.subr.mxu0 0.0
    %6236 = vmatpush1.msra.mxu0 0.0
    %6237 = vmatprep.subr.mxu0 0.0
    %6238 = vmatpush1.msra.mxu0 0.0
    %6239 = vmatprep.subr.mxu0 0.0
    %6240 = vmatpush1.msra.mxu0 0.0
    %6241 = vmatprep.subr.mxu0 0.0
    %6242 = vmatpush1.msra.mxu0 0.0
    %6243 = vmatprep.subr.mxu0 0.0
    %6244 = vmatpush1.msra.mxu0 0.0
    %6245 = vmatprep.subr.mxu0 0.0
    %6246 = vmatpush1.msra.mxu0 0.0
    %6247 = vmatprep.subr.mxu0 0.0
    %6248 = vmatpush1.msra.mxu0 0.0
    %6249 = vmatprep.subr.mxu0 0.0
    %6250 = vmatpush1.msra.mxu0 0.0
    %6251 = vmatprep.subr.mxu0 0.0
    %6252 = vmatpush1.msra.mxu0 0.0
    %6253 = vmatprep.subr.mxu0 0.0
    %6254 = vmatpush1.msra.mxu0 0.0
    %6255 = vmatprep.subr.mxu0 0.0
    %6256 = vmatpush1.msra.mxu0 0.0
    %6257 = vmatprep.subr.mxu0 0.0
    %6258 = vmatpush1.msra.mxu0 0.0
    %6259 = vmatprep.subr.mxu0 0.0
    %6260 = vmatpush1.msra.mxu0 0.0
    %6261 = vmatprep.subr.mxu0 0.0
    %6262 = vmatpush1.msra.mxu0 0.0
    %6263 = vmatprep.subr.mxu0 0.0
    %6264 = vmatpush1.msra.mxu0 0.0
    %6265 = vmatprep.subr.mxu0 0.0
    %6266 = vmatpush1.msra.mxu0 0.0
    %6267 = vmatprep.subr.mxu0 0.0
    %6268 = vmatpush1.msra.mxu0 0.0
    %6269 = vmatprep.subr.mxu0 0.0
    %6270 = vmatpush1.msra.mxu0 0.0
    %6271 = vmatprep.subr.mxu0 0.0
    %6272 = vmatpush1.msra.mxu0 0.0
    %6273 = vmatprep.subr.mxu0 0.0
    %6274 = vmatpush1.msra.mxu0 0.0
    %6275 = vmatprep.subr.mxu0 0.0
    %6276 = vmatpush1.msra.mxu0 0.0
    %6277 = vmatprep.subr.mxu0 0.0
    %6278 = vmatpush1.msra.mxu0 0.0
    %6279 = vmatprep.subr.mxu0 0.0
    %6280 = vmatpush1.msra.mxu0 0.0
    %6281 = vmatprep.subr.mxu0 0.0
    %6282 = vmatpush1.msra.mxu0 0.0
    %6283 = vmatprep.subr.mxu0 0.0
    %6284 = vmatpush1.msra.mxu0 0.0
    %6285 = vmatprep.subr.mxu0 0.0
    %6286 = vmatpush1.msra.mxu0 0.0
    %6287 = vmatprep.subr.mxu0 0.0
    %6288 = vmatpush1.msra.mxu0 0.0
    %6289 = vmatprep.subr.mxu0 0.0
    %6290 = vmatpush1.msra.mxu0 0.0
    %6291 = vmatprep.subr.mxu0 0.0
    %6292 = vmatpush1.msra.mxu0 0.0
    %6293 = vmatprep.subr.mxu0 0.0
    %6294 = vmatpush1.msra.mxu0 0.0
    %6295 = vmatprep.mubr.f32.mxu0 0.0
    %v6296 = vand.u32 %v6002, 4294901760
    %v6297 = vsub.f32 %v6002, %v6296
    %v6298 = vand.u32 %v6297, 4294901760
    %6299 = vmatmul.mubr.f32.gmra.mrb[0].mxu0 %v6298
    %v6300 = vpop.f32.mrb[0].mxu0
    %v6301 = vadd.f32 %v6227, %v6300
    %v6302 = vpop.f32.mrb[0].mxu0
    %6303 = vdwg.mxu0
    %6304 = vmatprep.subr.mxu0 0.0
    %v6305 = vand.u32 %v33, 4294901760
    %v6306 = vsub.f32 %v33, %v6305
    %v6307 = vand.u32 %v6306, 4294901760
    %6308 = vmatpush1.msra.mxu0 %v6307
    %6309 = vmatprep.subr.mxu0 0.0
    %6310 = vmatpush1.msra.mxu0 0.0
    %6311 = vmatprep.subr.mxu0 0.0
    %6312 = vmatpush1.msra.mxu0 0.0
    %6313 = vmatprep.subr.mxu0 0.0
    %6314 = vmatpush1.msra.mxu0 0.0
    %6315 = vmatprep.subr.mxu0 0.0
    %6316 = vmatpush1.msra.mxu0 0.0
    %6317 = vmatprep.subr.mxu0 0.0
    %6318 = vmatpush1.msra.mxu0 0.0
    %6319 = vmatprep.subr.mxu0 0.0
    %6320 = vmatpush1.msra.mxu0 0.0
    %6321 = vmatprep.subr.mxu0 0.0
    %6322 = vmatpush1.msra.mxu0 0.0
    %6323 = vmatprep.subr.mxu0 0.0
    %6324 = vmatpush1.msra.mxu0 0.0
    %6325 = vmatprep.subr.mxu0 0.0
    %6326 = vmatpush1.msra.mxu0 0.0
    %6327 = vmatprep.subr.mxu0 0.0
    %6328 = vmatpush1.msra.mxu0 0.0
    %6329 = vmatprep.subr.mxu0 0.0
    %6330 = vmatpush1.msra.mxu0 0.0
    %6331 = vmatprep.subr.mxu0 0.0
    %6332 = vmatpush1.msra.mxu0 0.0
    %6333 = vmatprep.subr.mxu0 0.0
    %6334 = vmatpush1.msra.mxu0 0.0
    %6335 = vmatprep.subr.mxu0 0.0
    %6336 = vmatpush1.msra.mxu0 0.0
    %6337 = vmatprep.subr.mxu0 0.0
    %6338 = vmatpush1.msra.mxu0 0.0
    %6339 = vmatprep.subr.mxu0 0.0
    %6340 = vmatpush1.msra.mxu0 0.0
    %6341 = vmatprep.subr.mxu0 0.0
    %6342 = vmatpush1.msra.mxu0 0.0
    %6343 = vmatprep.subr.mxu0 0.0
    %6344 = vmatpush1.msra.mxu0 0.0
    %6345 = vmatprep.subr.mxu0 0.0
    %6346 = vmatpush1.msra.mxu0 0.0
    %6347 = vmatprep.subr.mxu0 0.0
    %6348 = vmatpush1.msra.mxu0 0.0
    %6349 = vmatprep.subr.mxu0 0.0
    %6350 = vmatpush1.msra.mxu0 0.0
    %6351 = vmatprep.subr.mxu0 0.0
    %6352 = vmatpush1.msra.mxu0 0.0
    %6353 = vmatprep.subr.mxu0 0.0
    %6354 = vmatpush1.msra.mxu0 0.0
    %6355 = vmatprep.subr.mxu0 0.0
    %6356 = vmatpush1.msra.mxu0 0.0
    %6357 = vmatprep.subr.mxu0 0.0
    %6358 = vmatpush1.msra.mxu0 0.0
    %6359 = vmatprep.subr.mxu0 0.0
    %6360 = vmatpush1.msra.mxu0 0.0
    %6361 = vmatprep.subr.mxu0 0.0
    %6362 = vmatpush1.msra.mxu0 0.0
    %6363 = vmatprep.subr.mxu0 0.0
    %6364 = vmatpush1.msra.mxu0 0.0
    %6365 = vmatprep.subr.mxu0 0.0
    %6366 = vmatpush1.msra.mxu0 0.0
    %6367 = vmatprep.subr.mxu0 0.0
    %6368 = vmatpush1.msra.mxu0 0.0
    %6369 = vmatprep.subr.mxu0 0.0
    %6370 = vmatpush1.msra.mxu0 0.0
    %6371 = vmatprep.mubr.f32.mxu0 0.0
    %v6372 = vand.u32 %v6002, 4294901760
    %6373 = vmatmul.mubr.f32.gmra.mrb[0].mxu0 %v6372
    %v6374 = vpop.f32.mrb[0].mxu0
    %v6375 = vadd.f32 %v6301, %v6374
    %v6376 = vpop.f32.mrb[0].mxu0
    %6377 = vdwg.mxu0
    %6378 = vmatprep.subr.mxu0 0.0
    %v6379 = vand.u32 %v33, 4294901760
    %6380 = vmatpush1.msra.mxu0 %v6379
    %6381 = vmatprep.subr.mxu0 0.0
    %6382 = vmatpush1.msra.mxu0 0.0
    %6383 = vmatprep.subr.mxu0 0.0
    %6384 = vmatpush1.msra.mxu0 0.0
    %6385 = vmatprep.subr.mxu0 0.0
    %6386 = vmatpush1.msra.mxu0 0.0
    %6387 = vmatprep.subr.mxu0 0.0
    %6388 = vmatpush1.msra.mxu0 0.0
    %6389 = vmatprep.subr.mxu0 0.0
    %6390 = vmatpush1.msra.mxu0 0.0
    %6391 = vmatprep.subr.mxu0 0.0
    %6392 = vmatpush1.msra.mxu0 0.0
    %6393 = vmatprep.subr.mxu0 0.0
    %6394 = vmatpush1.msra.mxu0 0.0
    %6395 = vmatprep.subr.mxu0 0.0
    %6396 = vmatpush1.msra.mxu0 0.0
    %6397 = vmatprep.subr.mxu0 0.0
    %6398 = vmatpush1.msra.mxu0 0.0
    %6399 = vmatprep.subr.mxu0 0.0
    %6400 = vmatpush1.msra.mxu0 0.0
    %6401 = vmatprep.subr.mxu0 0.0
    %6402 = vmatpush1.msra.mxu0 0.0
    %6403 = vmatprep.subr.mxu0 0.0
    %6404 = vmatpush1.msra.mxu0 0.0
    %6405 = vmatprep.subr.mxu0 0.0
    %6406 = vmatpush1.msra.mxu0 0.0
    %6407 = vmatprep.subr.mxu0 0.0
    %6408 = vmatpush1.msra.mxu0 0.0
    %6409 = vmatprep.subr.mxu0 0.0
    %6410 = vmatpush1.msra.mxu0 0.0
    %6411 = vmatprep.subr.mxu0 0.0
    %6412 = vmatpush1.msra.mxu0 0.0
    %6413 = vmatprep.subr.mxu0 0.0
    %6414 = vmatpush1.msra.mxu0 0.0
    %6415 = vmatprep.subr.mxu0 0.0
    %6416 = vmatpush1.msra.mxu0 0.0
    %6417 = vmatprep.subr.mxu0 0.0
    %6418 = vmatpush1.msra.mxu0 0.0
    %6419 = vmatprep.subr.mxu0 0.0
    %6420 = vmatpush1.msra.mxu0 0.0
    %6421 = vmatprep.subr.mxu0 0.0
    %6422 = vmatpush1.msra.mxu0 0.0
    %6423 = vmatprep.subr.mxu0 0.0
    %6424 = vmatpush1.msra.mxu0 0.0
    %6425 = vmatprep.subr.mxu0 0.0
    %6426 = vmatpush1.msra.mxu0 0.0
    %6427 = vmatprep.subr.mxu0 0.0
    %6428 = vmatpush1.msra.mxu0 0.0
    %6429 = vmatprep.subr.mxu0 0.0
    %6430 = vmatpush1.msra.mxu0 0.0
    %6431 = vmatprep.subr.mxu0 0.0
    %6432 = vmatpush1.msra.mxu0 0.0
    %6433 = vmatprep.subr.mxu0 0.0
    %6434 = vmatpush1.msra.mxu0 0.0
    %6435 = vmatprep.subr.mxu0 0.0
    %6436 = vmatpush1.msra.mxu0 0.0
    %6437 = vmatprep.subr.mxu0 0.0
    %6438 = vmatpush1.msra.mxu0 0.0
    %6439 = vmatprep.subr.mxu0 0.0
    %6440 = vmatpush1.msra.mxu0 0.0
    %6441 = vmatprep.subr.mxu0 0.0
    %6442 = vmatpush1.msra.mxu0 0.0
    %6443 = vmatprep.mubr.f32.mxu0 0.0
    %v6444 = vand.u32 %v6002, 4294901760
    %6445 = vmatmul.mubr.f32.gmra.mrb[0].mxu0 %v6444
    %v6446 = vpop.f32.mrb[0].mxu0
    %v6447 = vadd.f32 %v6375, %v6446
    %v6448 = vpop.f32.mrb[0].mxu0
    %6449 = vdwg.mxu0
    %v6450 = vadd.f32 %v6000, %v5965
    %v6451 = vlog2.pop %v6447
    %v6452 = vmul.f32 %v6451, 0.6931472
    %v6453 = vadd.f32 %v6450, %v6452
    %v6454 = vsel %vm69, %v6453, -inf
    %6455 = vmax.xlane.f32.xlu0 %v6454
    %v6456 = vpop.xlane.xlu0 %6455
    %v6457 = vsub.f32 %v6453, %v6456
    %v6458 = vmul.f32 %v6457, 1.442695
    %v6459 = vpow.pop %v6458
    %v6460 = vsel %vm69, %v6459, 0.0
    %6461 = vadd.xlane.f32.xlu0 %v6460
    %v6462 = vpop.xlane.xlu0 %6461
    %v6463 = vlog2.pop %v6462
    %v6464 = vmul.f32 %v6463, 0.6931472
    %v6465 = vadd.f32 %v6456, %v6464
    %vm6466 = vcmask 109672
    %6467 = vst.msk [vmem:[#allocation5] sm:$0xf] %vm6466, %v6465
    %s6468 = sld [smem:[#allocation2 + $0x700]]
    %s6469 = scalar_lea.vmem %s1, %s6468
    %v6470 = vld [vmem:[%s6469] sm:$0x1]
    %s6471 = sld [smem:[#allocation2 + $0x701]]
    %s6472 = scalar_lea.vmem %s1, %s6471
    %v6473 = vld [vmem:[%s6472] sm:$0x1]
    %s6474 = sld [smem:[#allocation2 + $0x702]]
    %s6475 = scalar_lea.vmem %s1, %s6474
    %v6476 = vld [vmem:[%s6475] sm:$0x1]
    %s6477 = sld [smem:[#allocation2 + $0x703]]
    %s6478 = scalar_lea.vmem %s1, %s6477
    %v6479 = vld [vmem:[%s6478] sm:$0x1]
    %v6481 = vrot.slane %v6473, 7
    %v6484 = vrot.slane %v6476, 6
    %v6487 = vrot.slane %v6479, 5
    %v6489 = vsel %vm56, %v6470, %v6481
    %v6490 = vsel %vm58, %v6489, %v6484
    %v6491 = vsel %vm60, %v6490, %v6487
    %v6493 = vsel %vm108, %v6459, 0
    %6495 = vmatprep.subr.mxu0 0.0
    %v6496 = vand.u32 %v33, 4294901760
    %6497 = vmatpush1.msra.mxu0 %v6496
    %6498 = vmatprep.subr.mxu0 0.0
    %6499 = vmatpush1.msra.mxu0 0.0
    %6500 = vmatprep.subr.mxu0 0.0
    %6501 = vmatpush1.msra.mxu0 0.0
    %6502 = vmatprep.subr.mxu0 0.0
    %6503 = vmatpush1.msra.mxu0 0.0
    %6504 = vmatprep.subr.mxu0 0.0
    %6505 = vmatpush1.msra.mxu0 0.0
    %6506 = vmatprep.subr.mxu0 0.0
    %6507 = vmatpush1.msra.mxu0 0.0
    %6508 = vmatprep.subr.mxu0 0.0
    %6509 = vmatpush1.msra.mxu0 0.0
    %6510 = vmatprep.subr.mxu0 0.0
    %6511 = vmatpush1.msra.mxu0 0.0
    %6512 = vmatprep.subr.mxu0 0.0
    %6513 = vmatpush1.msra.mxu0 0.0
    %6514 = vmatprep.subr.mxu0 0.0
    %6515 = vmatpush1.msra.mxu0 0.0
    %6516 = vmatprep.subr.mxu0 0.0
    %6517 = vmatpush1.msra.mxu0 0.0
    %6518 = vmatprep.subr.mxu0 0.0
    %6519 = vmatpush1.msra.mxu0 0.0
    %6520 = vmatprep.subr.mxu0 0.0
    %6521 = vmatpush1.msra.mxu0 0.0
    %6522 = vmatprep.subr.mxu0 0.0
    %6523 = vmatpush1.msra.mxu0 0.0
    %6524 = vmatprep.subr.mxu0 0.0
    %6525 = vmatpush1.msra.mxu0 0.0
    %6526 = vmatprep.subr.mxu0 0.0
    %6527 = vmatpush1.msra.mxu0 0.0
    %6528 = vmatprep.subr.mxu0 0.0
    %6529 = vmatpush1.msra.mxu0 0.0
    %6530 = vmatprep.subr.mxu0 0.0
    %6531 = vmatpush1.msra.mxu0 0.0
    %6532 = vmatprep.subr.mxu0 0.0
    %6533 = vmatpush1.msra.mxu0 0.0
    %6534 = vmatprep.subr.mxu0 0.0
    %6535 = vmatpush1.msra.mxu0 0.0
    %6536 = vmatprep.subr.mxu0 0.0
    %6537 = vmatpush1.msra.mxu0 0.0
    %6538 = vmatprep.subr.mxu0 0.0
    %6539 = vmatpush1.msra.mxu0 0.0
    %6540 = vmatprep.subr.mxu0 0.0
    %6541 = vmatpush1.msra.mxu0 0.0
    %6542 = vmatprep.subr.mxu0 0.0
    %6543 = vmatpush1.msra.mxu0 0.0
    %6544 = vmatprep.subr.mxu0 0.0
    %6545 = vmatpush1.msra.mxu0 0.0
    %6546 = vmatprep.subr.mxu0 0.0
    %6547 = vmatpush1.msra.mxu0 0.0
    %6548 = vmatprep.subr.mxu0 0.0
    %6549 = vmatpush1.msra.mxu0 0.0
    %6550 = vmatprep.subr.mxu0 0.0
    %6551 = vmatpush1.msra.mxu0 0.0
    %6552 = vmatprep.subr.mxu0 0.0
    %6553 = vmatpush1.msra.mxu0 0.0
    %6554 = vmatprep.subr.mxu0 0.0
    %6555 = vmatpush1.msra.mxu0 0.0
    %6556 = vmatprep.subr.mxu0 0.0
    %6557 = vmatpush1.msra.mxu0 0.0
    %6558 = vmatprep.subr.mxu0 0.0
    %6559 = vmatpush1.msra.mxu0 0.0
    %6560 = vmatprep.mubr.f32.mxu0 0.0
    %v6561 = vand.u32 %v6493, 4294901760
    %v6562 = vsub.f32 %v6493, %v6561
    %v6563 = vand.u32 %v6562, 4294901760
    %v6564 = vsub.f32 %v6562, %v6563
    %v6565 = vand.u32 %v6564, 4294901760
    %6566 = vmatmul.mubr.f32.gmra.mrb[0].mxu0 %v6565
    %v6567 = vpop.f32.mrb[0].mxu0
    %v6568 = vadd.f32 0.0, %v6567
    %v6569 = vpop.f32.mrb[0].mxu0
    %6570 = vdwg.mxu0
    %6571 = vmatprep.subr.mxu0 0.0
    %v6572 = vand.u32 %v33, 4294901760
    %v6573 = vsub.f32 %v33, %v6572
    %v6574 = vand.u32 %v6573, 4294901760
    %v6575 = vsub.f32 %v6573, %v6574
    %v6576 = vand.u32 %v6575, 4294901760
    %6577 = vmatpush1.msra.mxu0 %v6576
    %6578 = vmatprep.subr.mxu0 0.0
    %6579 = vmatpush1.msra.mxu0 0.0
    %6580 = vmatprep.subr.mxu0 0.0
    %6581 = vmatpush1.msra.mxu0 0.0
    %6582 = vmatprep.subr.mxu0 0.0
    %6583 = vmatpush1.msra.mxu0 0.0
    %6584 = vmatprep.subr.mxu0 0.0
    %6585 = vmatpush1.msra.mxu0 0.0
    %6586 = vmatprep.subr.mxu0 0.0
    %6587 = vmatpush1.msra.mxu0 0.0
    %6588 = vmatprep.subr.mxu0 0.0
    %6589 = vmatpush1.msra.mxu0 0.0
    %6590 = vmatprep.subr.mxu0 0.0
    %6591 = vmatpush1.msra.mxu0 0.0
    %6592 = vmatprep.subr.mxu0 0.0
    %6593 = vmatpush1.msra.mxu0 0.0
    %6594 = vmatprep.subr.mxu0 0.0
    %6595 = vmatpush1.msra.mxu0 0.0
    %6596 = vmatprep.subr.mxu0 0.0
    %6597 = vmatpush1.msra.mxu0 0.0
    %6598 = vmatprep.subr.mxu0 0.0
    %6599 = vmatpush1.msra.mxu0 0.0
    %6600 = vmatprep.subr.mxu0 0.0
    %6601 = vmatpush1.msra.mxu0 0.0
    %6602 = vmatprep.subr.mxu0 0.0
    %6603 = vmatpush1.msra.mxu0 0.0
    %6604 = vmatprep.subr.mxu0 0.0
    %6605 = vmatpush1.msra.mxu0 0.0
    %6606 = vmatprep.subr.mxu0 0.0
    %6607 = vmatpush1.msra.mxu0 0.0
    %6608 = vmatprep.subr.mxu0 0.0
    %6609 = vmatpush1.msra.mxu0 0.0
    %6610 = vmatprep.subr.mxu0 0.0
    %6611 = vmatpush1.msra.mxu0 0.0
    %6612 = vmatprep.subr.mxu0 0.0
    %6613 = vmatpush1.msra.mxu0 0.0
    %6614 = vmatprep.subr.mxu0 0.0
    %6615 = vmatpush1.msra.mxu0 0.0
    %6616 = vmatprep.subr.mxu0 0.0
    %6617 = vmatpush1.msra.mxu0 0.0
    %6618 = vmatprep.subr.mxu0 0.0
    %6619 = vmatpush1.msra.mxu0 0.0
    %6620 = vmatprep.subr.mxu0 0.0
    %6621 = vmatpush1.msra.mxu0 0.0
    %6622 = vmatprep.subr.mxu0 0.0
    %6623 = vmatpush1.msra.mxu0 0.0
    %6624 = vmatprep.subr.mxu0 0.0
    %6625 = vmatpush1.msra.mxu0 0.0
    %6626 = vmatprep.subr.mxu0 0.0
    %6627 = vmatpush1.msra.mxu0 0.0
    %6628 = vmatprep.subr.mxu0 0.0
    %6629 = vmatpush1.msra.mxu0 0.0
    %6630 = vmatprep.subr.mxu0 0.0
    %6631 = vmatpush1.msra.mxu0 0.0
    %6632 = vmatprep.subr.mxu0 0.0
    %6633 = vmatpush1.msra.mxu0 0.0
    %6634 = vmatprep.subr.mxu0 0.0
    %6635 = vmatpush1.msra.mxu0 0.0
    %6636 = vmatprep.subr.mxu0 0.0
    %6637 = vmatpush1.msra.mxu0 0.0
    %6638 = vmatprep.subr.mxu0 0.0
    %6639 = vmatpush1.msra.mxu0 0.0
    %6640 = vmatprep.mubr.f32.mxu0 0.0
    %v6641 = vand.u32 %v6493, 4294901760
    %6642 = vmatmul.mubr.f32.gmra.mrb[0].mxu0 %v6641
    %v6643 = vpop.f32.mrb[0].mxu0
    %v6644 = vadd.f32 %v6568, %v6643
    %v6645 = vpop.f32.mrb[0].mxu0
    %6646 = vdwg.mxu0
    %6647 = vmatprep.subr.mxu0 0.0
    %v6648 = vand.u32 %v33, 4294901760
    %v6649 = vsub.f32 %v33, %v6648
    %6650 = vmatpush1.msra.mxu0 %v6649
    %6651 = vmatprep.subr.mxu0 0.0
    %6652 = vmatpush1.msra.mxu0 0.0
    %6653 = vmatprep.subr.mxu0 0.0
    %6654 = vmatpush1.msra.mxu0 0.0
    %6655 = vmatprep.subr.mxu0 0.0
    %6656 = vmatpush1.msra.mxu0 0.0
    %6657 = vmatprep.subr.mxu0 0.0
    %6658 = vmatpush1.msra.mxu0 0.0
    %6659 = vmatprep.subr.mxu0 0.0
    %6660 = vmatpush1.msra.mxu0 0.0
    %6661 = vmatprep.subr.mxu0 0.0
    %6662 = vmatpush1.msra.mxu0 0.0
    %6663 = vmatprep.subr.mxu0 0.0
    %6664 = vmatpush1.msra.mxu0 0.0
    %6665 = vmatprep.subr.mxu0 0.0
    %6666 = vmatpush1.msra.mxu0 0.0
    %6667 = vmatprep.subr.mxu0 0.0
    %6668 = vmatpush1.msra.mxu0 0.0
    %6669 = vmatprep.subr.mxu0 0.0
    %6670 = vmatpush1.msra.mxu0 0.0
    %6671 = vmatprep.subr.mxu0 0.0
    %6672 = vmatpush1.msra.mxu0 0.0
    %6673 = vmatprep.subr.mxu0 0.0
    %6674 = vmatpush1.msra.mxu0 0.0
    %6675 = vmatprep.subr.mxu0 0.0
    %6676 = vmatpush1.msra.mxu0 0.0
    %6677 = vmatprep.subr.mxu0 0.0
    %6678 = vmatpush1.msra.mxu0 0.0
    %6679 = vmatprep.subr.mxu0 0.0
    %6680 = vmatpush1.msra.mxu0 0.0
    %6681 = vmatprep.subr.mxu0 0.0
    %6682 = vmatpush1.msra.mxu0 0.0
    %6683 = vmatprep.subr.mxu0 0.0
    %6684 = vmatpush1.msra.mxu0 0.0
    %6685 = vmatprep.subr.mxu0 0.0
    %6686 = vmatpush1.msra.mxu0 0.0
    %6687 = vmatprep.subr.mxu0 0.0
    %6688 = vmatpush1.msra.mxu0 0.0
    %6689 = vmatprep.subr.mxu0 0.0
    %6690 = vmatpush1.msra.mxu0 0.0
    %6691 = vmatprep.subr.mxu0 0.0
    %6692 = vmatpush1.msra.mxu0 0.0
    %6693 = vmatprep.subr.mxu0 0.0
    %6694 = vmatpush1.msra.mxu0 0.0
    %6695 = vmatprep.subr.mxu0 0.0
    %6696 = vmatpush1.msra.mxu0 0.0
    %6697 = vmatprep.subr.mxu0 0.0
    %6698 = vmatpush1.msra.mxu0 0.0
    %6699 = vmatprep.subr.mxu0 0.0
    %6700 = vmatpush1.msra.mxu0 0.0
    %6701 = vmatprep.subr.mxu0 0.0
    %6702 = vmatpush1.msra.mxu0 0.0
    %6703 = vmatprep.subr.mxu0 0.0
    %6704 = vmatpush1.msra.mxu0 0.0
    %6705 = vmatprep.subr.mxu0 0.0
    %6706 = vmatpush1.msra.mxu0 0.0
    %6707 = vmatprep.subr.mxu0 0.0
    %6708 = vmatpush1.msra.mxu0 0.0
    %6709 = vmatprep.subr.mxu0 0.0
    %6710 = vmatpush1.msra.mxu0 0.0
    %6711 = vmatprep.subr.mxu0 0.0
    %6712 = vmatpush1.msra.mxu0 0.0
    %6713 = vmatprep.mubr.f32.mxu0 0.0
    %v6714 = vand.u32 %v6493, 4294901760
    %v6715 = vsub.f32 %v6493, %v6714
    %6716 = vmatmul.mubr.f32.gmra.mrb[0].mxu0 %v6715
    %v6717 = vpop.f32.mrb[0].mxu0
    %v6718 = vadd.f32 %v6644, %v6717
    %v6719 = vpop.f32.mrb[0].mxu0
    %6720 = vdwg.mxu0
    %6721 = vmatprep.subr.mxu0 0.0
    %v6722 = vand.u32 %v33, 4294901760
    %6723 = vmatpush1.msra.mxu0 %v6722
    %6724 = vmatprep.subr.mxu0 0.0
    %6725 = vmatpush1.msra.mxu0 0.0
    %6726 = vmatprep.subr.mxu0 0.0
    %6727 = vmatpush1.msra.mxu0 0.0
    %6728 = vmatprep.subr.mxu0 0.0
    %6729 = vmatpush1.msra.mxu0 0.0
    %6730 = vmatprep.subr.mxu0 0.0
    %6731 = vmatpush1.msra.mxu0 0.0
    %6732 = vmatprep.subr.mxu0 0.0
    %6733 = vmatpush1.msra.mxu0 0.0
    %6734 = vmatprep.subr.mxu0 0.0
    %6735 = vmatpush1.msra.mxu0 0.0
    %6736 = vmatprep.subr.mxu0 0.0
    %6737 = vmatpush1.msra.mxu0 0.0
    %6738 = vmatprep.subr.mxu0 0.0
    %6739 = vmatpush1.msra.mxu0 0.0
    %6740 = vmatprep.subr.mxu0 0.0
    %6741 = vmatpush1.msra.mxu0 0.0
    %6742 = vmatprep.subr.mxu0 0.0
    %6743 = vmatpush1.msra.mxu0 0.0
    %6744 = vmatprep.subr.mxu0 0.0
    %6745 = vmatpush1.msra.mxu0 0.0
    %6746 = vmatprep.subr.mxu0 0.0
    %6747 = vmatpush1.msra.mxu0 0.0
    %6748 = vmatprep.subr.mxu0 0.0
    %6749 = vmatpush1.msra.mxu0 0.0
    %6750 = vmatprep.subr.mxu0 0.0
    %6751 = vmatpush1.msra.mxu0 0.0
    %6752 = vmatprep.subr.mxu0 0.0
    %6753 = vmatpush1.msra.mxu0 0.0
    %6754 = vmatprep.subr.mxu0 0.0
    %6755 = vmatpush1.msra.mxu0 0.0
    %6756 = vmatprep.subr.mxu0 0.0
    %6757 = vmatpush1.msra.mxu0 0.0
    %6758 = vmatprep.subr.mxu0 0.0
    %6759 = vmatpush1.msra.mxu0 0.0
    %6760 = vmatprep.subr.mxu0 0.0
    %6761 = vmatpush1.msra.mxu0 0.0
    %6762 = vmatprep.subr.mxu0 0.0
    %6763 = vmatpush1.msra.mxu0 0.0
    %6764 = vmatprep.subr.mxu0 0.0
    %6765 = vmatpush1.msra.mxu0 0.0
    %6766 = vmatprep.subr.mxu0 0.0
    %6767 = vmatpush1.msra.mxu0 0.0
    %6768 = vmatprep.subr.mxu0 0.0
    %6769 = vmatpush1.msra.mxu0 0.0
    %6770 = vmatprep.subr.mxu0 0.0
    %6771 = vmatpush1.msra.mxu0 0.0
    %6772 = vmatprep.subr.mxu0 0.0
    %6773 = vmatpush1.msra.mxu0 0.0
    %6774 = vmatprep.subr.mxu0 0.0
    %6775 = vmatpush1.msra.mxu0 0.0
    %6776 = vmatprep.subr.mxu0 0.0
    %6777 = vmatpush1.msra.mxu0 0.0
    %6778 = vmatprep.subr.mxu0 0.0
    %6779 = vmatpush1.msra.mxu0 0.0
    %6780 = vmatprep.subr.mxu0 0.0
    %6781 = vmatpush1.msra.mxu0 0.0
    %6782 = vmatprep.subr.mxu0 0.0
    %6783 = vmatpush1.msra.mxu0 0.0
    %6784 = vmatprep.subr.mxu0 0.0
    %6785 = vmatpush1.msra.mxu0 0.0
    %6786 = vmatprep.mubr.f32.mxu0 0.0
    %v6787 = vand.u32 %v6493, 4294901760
    %v6788 = vsub.f32 %v6493, %v6787
    %v6789 = vand.u32 %v6788, 4294901760
    %6790 = vmatmul.mubr.f32.gmra.mrb[0].mxu0 %v6789
    %v6791 = vpop.f32.mrb[0].mxu0
    %v6792 = vadd.f32 %v6718, %v6791
    %v6793 = vpop.f32.mrb[0].mxu0
    %6794 = vdwg.mxu0
    %6795 = vmatprep.subr.mxu0 0.0
    %v6796 = vand.u32 %v33, 4294901760
    %v6797 = vsub.f32 %v33, %v6796
    %v6798 = vand.u32 %v6797, 4294901760
    %6799 = vmatpush1.msra.mxu0 %v6798
    %6800 = vmatprep.subr.mxu0 0.0
    %6801 = vmatpush1.msra.mxu0 0.0
    %6802 = vmatprep.subr.mxu0 0.0
    %6803 = vmatpush1.msra.mxu0 0.0
    %6804 = vmatprep.subr.mxu0 0.0
    %6805 = vmatpush1.msra.mxu0 0.0
    %6806 = vmatprep.subr.mxu0 0.0
    %6807 = vmatpush1.msra.mxu0 0.0
    %6808 = vmatprep.subr.mxu0 0.0
    %6809 = vmatpush1.msra.mxu0 0.0
    %6810 = vmatprep.subr.mxu0 0.0
    %6811 = vmatpush1.msra.mxu0 0.0
    %6812 = vmatprep.subr.mxu0 0.0
    %6813 = vmatpush1.msra.mxu0 0.0
    %6814 = vmatprep.subr.mxu0 0.0
    %6815 = vmatpush1.msra.mxu0 0.0
    %6816 = vmatprep.subr.mxu0 0.0
    %6817 = vmatpush1.msra.mxu0 0.0
    %6818 = vmatprep.subr.mxu0 0.0
    %6819 = vmatpush1.msra.mxu0 0.0
    %6820 = vmatprep.subr.mxu0 0.0
    %6821 = vmatpush1.msra.mxu0 0.0
    %6822 = vmatprep.subr.mxu0 0.0
    %6823 = vmatpush1.msra.mxu0 0.0
    %6824 = vmatprep.subr.mxu0 0.0
    %6825 = vmatpush1.msra.mxu0 0.0
    %6826 = vmatprep.subr.mxu0 0.0
    %6827 = vmatpush1.msra.mxu0 0.0
    %6828 = vmatprep.subr.mxu0 0.0
    %6829 = vmatpush1.msra.mxu0 0.0
    %6830 = vmatprep.subr.mxu0 0.0
    %6831 = vmatpush1.msra.mxu0 0.0
    %6832 = vmatprep.subr.mxu0 0.0
    %6833 = vmatpush1.msra.mxu0 0.0
    %6834 = vmatprep.subr.mxu0 0.0
    %6835 = vmatpush1.msra.mxu0 0.0
    %6836 = vmatprep.subr.mxu0 0.0
    %6837 = vmatpush1.msra.mxu0 0.0
    %6838 = vmatprep.subr.mxu0 0.0
    %6839 = vmatpush1.msra.mxu0 0.0
    %6840 = vmatprep.subr.mxu0 0.0
    %6841 = vmatpush1.msra.mxu0 0.0
    %6842 = vmatprep.subr.mxu0 0.0
    %6843 = vmatpush1.msra.mxu0 0.0
    %6844 = vmatprep.subr.mxu0 0.0
    %6845 = vmatpush1.msra.mxu0 0.0
    %6846 = vmatprep.subr.mxu0 0.0
    %6847 = vmatpush1.msra.mxu0 0.0
    %6848 = vmatprep.subr.mxu0 0.0
    %6849 = vmatpush1.msra.mxu0 0.0
    %6850 = vmatprep.subr.mxu0 0.0
    %6851 = vmatpush1.msra.mxu0 0.0
    %6852 = vmatprep.subr.mxu0 0.0
    %6853 = vmatpush1.msra.mxu0 0.0
    %6854 = vmatprep.subr.mxu0 0.0
    %6855 = vmatpush1.msra.mxu0 0.0
    %6856 = vmatprep.subr.mxu0 0.0
    %6857 = vmatpush1.msra.mxu0 0.0
    %6858 = vmatprep.subr.mxu0 0.0
    %6859 = vmatpush1.msra.mxu0 0.0
    %6860 = vmatprep.subr.mxu0 0.0
    %6861 = vmatpush1.msra.mxu0 0.0
    %6862 = vmatprep.mubr.f32.mxu0 0.0
    %v6863 = vand.u32 %v6493, 4294901760
    %6864 = vmatmul.mubr.f32.gmra.mrb[0].mxu0 %v6863
    %v6865 = vpop.f32.mrb[0].mxu0
    %v6866 = vadd.f32 %v6792, %v6865
    %v6867 = vpop.f32.mrb[0].mxu0
    %6868 = vdwg.mxu0
    %6869 = vmatprep.subr.mxu0 0.0
    %v6870 = vand.u32 %v33, 4294901760
    %6871 = vmatpush1.msra.mxu0 %v6870
    %6872 = vmatprep.subr.mxu0 0.0
    %6873 = vmatpush1.msra.mxu0 0.0
    %6874 = vmatprep.subr.mxu0 0.0
    %6875 = vmatpush1.msra.mxu0 0.0
    %6876 = vmatprep.subr.mxu0 0.0
    %6877 = vmatpush1.msra.mxu0 0.0
    %6878 = vmatprep.subr.mxu0 0.0
    %6879 = vmatpush1.msra.mxu0 0.0
    %6880 = vmatprep.subr.mxu0 0.0
    %6881 = vmatpush1.msra.mxu0 0.0
    %6882 = vmatprep.subr.mxu0 0.0
    %6883 = vmatpush1.msra.mxu0 0.0
    %6884 = vmatprep.subr.mxu0 0.0
    %6885 = vmatpush1.msra.mxu0 0.0
    %6886 = vmatprep.subr.mxu0 0.0
    %6887 = vmatpush1.msra.mxu0 0.0
    %6888 = vmatprep.subr.mxu0 0.0
    %6889 = vmatpush1.msra.mxu0 0.0
    %6890 = vmatprep.subr.mxu0 0.0
    %6891 = vmatpush1.msra.mxu0 0.0
    %6892 = vmatprep.subr.mxu0 0.0
    %6893 = vmatpush1.msra.mxu0 0.0
    %6894 = vmatprep.subr.mxu0 0.0
    %6895 = vmatpush1.msra.mxu0 0.0
    %6896 = vmatprep.subr.mxu0 0.0
    %6897 = vmatpush1.msra.mxu0 0.0
    %6898 = vmatprep.subr.mxu0 0.0
    %6899 = vmatpush1.msra.mxu0 0.0
    %6900 = vmatprep.subr.mxu0 0.0
    %6901 = vmatpush1.msra.mxu0 0.0
    %6902 = vmatprep.subr.mxu0 0.0
    %6903 = vmatpush1.msra.mxu0 0.0
    %6904 = vmatprep.subr.mxu0 0.0
    %6905 = vmatpush1.msra.mxu0 0.0
    %6906 = vmatprep.subr.mxu0 0.0
    %6907 = vmatpush1.msra.mxu0 0.0
    %6908 = vmatprep.subr.mxu0 0.0
    %6909 = vmatpush1.msra.mxu0 0.0
    %6910 = vmatprep.subr.mxu0 0.0
    %6911 = vmatpush1.msra.mxu0 0.0
    %6912 = vmatprep.subr.mxu0 0.0
    %6913 = vmatpush1.msra.mxu0 0.0
    %6914 = vmatprep.subr.mxu0 0.0
    %6915 = vmatpush1.msra.mxu0 0.0
    %6916 = vmatprep.subr.mxu0 0.0
    %6917 = vmatpush1.msra.mxu0 0.0
    %6918 = vmatprep.subr.mxu0 0.0
    %6919 = vmatpush1.msra.mxu0 0.0
    %6920 = vmatprep.subr.mxu0 0.0
    %6921 = vmatpush1.msra.mxu0 0.0
    %6922 = vmatprep.subr.mxu0 0.0
    %6923 = vmatpush1.msra.mxu0 0.0
    %6924 = vmatprep.subr.mxu0 0.0
    %6925 = vmatpush1.msra.mxu0 0.0
    %6926 = vmatprep.subr.mxu0 0.0
    %6927 = vmatpush1.msra.mxu0 0.0
    %6928 = vmatprep.subr.mxu0 0.0
    %6929 = vmatpush1.msra.mxu0 0.0
    %6930 = vmatprep.subr.mxu0 0.0
    %6931 = vmatpush1.msra.mxu0 0.0
    %6932 = vmatprep.subr.mxu0 0.0
    %6933 = vmatpush1.msra.mxu0 0.0
    %6934 = vmatprep.mubr.f32.mxu0 0.0
    %v6935 = vand.u32 %v6493, 4294901760
    %6936 = vmatmul.mubr.f32.gmra.mrb[0].mxu0 %v6935
    %v6937 = vpop.f32.mrb[0].mxu0
    %v6938 = vadd.f32 %v6866, %v6937
    %v6939 = vpop.f32.mrb[0].mxu0
    %6940 = vdwg.mxu0
    %v6941 = vadd.f32 %v6491, %v6456
    %v6942 = vlog2.pop %v6938
    %v6943 = vmul.f32 %v6942, 0.6931472
    %v6944 = vadd.f32 %v6941, %v6943
    %v6945 = vsel %vm69, %v6944, -inf
    %6946 = vmax.xlane.f32.xlu0 %v6945
    %v6947 = vpop.xlane.xlu0 %6946
    %v6948 = vsub.f32 %v6944, %v6947
    %v6949 = vmul.f32 %v6948, 1.442695
    %v6950 = vpow.pop %v6949
    %v6951 = vsel %vm69, %v6950, 0.0
    %6952 = vadd.xlane.f32.xlu0 %v6951
    %v6953 = vpop.xlane.xlu0 %6952
    %v6954 = vlog2.pop %v6953
    %v6955 = vmul.f32 %v6954, 0.6931472
    %v6956 = vadd.f32 %v6947, %v6955
    %vm6957 = vcmask 117872
    %6958 = vst.msk [vmem:[#allocation5] sm:$0xf] %vm6957, %v6956
    %s6959 = sld [smem:[#allocation2 + $0x780]]
    %s6960 = scalar_lea.vmem %s1, %s6959
    %v6961 = vld [vmem:[%s6960] sm:$0x1]
    %s6962 = sld [smem:[#allocation2 + $0x781]]
    %s6963 = scalar_lea.vmem %s1, %s6962
    %v6964 = vld [vmem:[%s6963] sm:$0x1]
    %s6965 = sld [smem:[#allocation2 + $0x782]]
    %s6966 = scalar_lea.vmem %s1, %s6965
    %v6967 = vld [vmem:[%s6966] sm:$0x1]
    %s6968 = sld [smem:[#allocation2 + $0x783]]
    %s6969 = scalar_lea.vmem %s1, %s6968
    %v6970 = vld [vmem:[%s6969] sm:$0x1]
    %v6972 = vrot.slane %v6964, 7
    %v6975 = vrot.slane %v6967, 6
    %v6978 = vrot.slane %v6970, 5
    %v6980 = vsel %vm56, %v6961, %v6972
    %v6981 = vsel %vm58, %v6980, %v6975
    %v6982 = vsel %vm60, %v6981, %v6978
    %v6984 = vsel %vm108, %v6950, 0
    %6986 = vmatprep.subr.mxu0 0.0
    %v6987 = vand.u32 %v33, 4294901760
    %6988 = vmatpush1.msra.mxu0 %v6987
    %6989 = vmatprep.subr.mxu0 0.0
    %6990 = vmatpush1.msra.mxu0 0.0
    %6991 = vmatprep.subr.mxu0 0.0
    %6992 = vmatpush1.msra.mxu0 0.0
    %6993 = vmatprep.subr.mxu0 0.0
    %6994 = vmatpush1.msra.mxu0 0.0
    %6995 = vmatprep.subr.mxu0 0.0
    %6996 = vmatpush1.msra.mxu0 0.0
    %6997 = vmatprep.subr.mxu0 0.0
    %6998 = vmatpush1.msra.mxu0 0.0
    %6999 = vmatprep.subr.mxu0 0.0
    %7000 = vmatpush1.msra.mxu0 0.0
    %7001 = vmatprep.subr.mxu0 0.0
    %7002 = vmatpush1.msra.mxu0 0.0
    %7003 = vmatprep.subr.mxu0 0.0
    %7004 = vmatpush1.msra.mxu0 0.0
    %7005 = vmatprep.subr.mxu0 0.0
    %7006 = vmatpush1.msra.mxu0 0.0
    %7007 = vmatprep.subr.mxu0 0.0
    %7008 = vmatpush1.msra.mxu0 0.0
    %7009 = vmatprep.subr.mxu0 0.0
    %7010 = vmatpush1.msra.mxu0 0.0
    %7011 = vmatprep.subr.mxu0 0.0
    %7012 = vmatpush1.msra.mxu0 0.0
    %7013 = vmatprep.subr.mxu0 0.0
    %7014 = vmatpush1.msra.mxu0 0.0
    %7015 = vmatprep.subr.mxu0 0.0
    %7016 = vmatpush1.msra.mxu0 0.0
    %7017 = vmatprep.subr.mxu0 0.0
    %7018 = vmatpush1.msra.mxu0 0.0
    %7019 = vmatprep.subr.mxu0 0.0
    %7020 = vmatpush1.msra.mxu0 0.0
    %7021 = vmatprep.subr.mxu0 0.0
    %7022 = vmatpush1.msra.mxu0 0.0
    %7023 = vmatprep.subr.mxu0 0.0
    %7024 = vmatpush1.msra.mxu0 0.0
    %7025 = vmatprep.subr.mxu0 0.0
    %7026 = vmatpush1.msra.mxu0 0.0
    %7027 = vmatprep.subr.mxu0 0.0
    %7028 = vmatpush1.msra.mxu0 0.0
    %7029 = vmatprep.subr.mxu0 0.0
    %7030 = vmatpush1.msra.mxu0 0.0
    %7031 = vmatprep.subr.mxu0 0.0
    %7032 = vmatpush1.msra.mxu0 0.0
    %7033 = vmatprep.subr.mxu0 0.0
    %7034 = vmatpush1.msra.mxu0 0.0
    %7035 = vmatprep.subr.mxu0 0.0
    %7036 = vmatpush1.msra.mxu0 0.0
    %7037 = vmatprep.subr.mxu0 0.0
    %7038 = vmatpush1.msra.mxu0 0.0
    %7039 = vmatprep.subr.mxu0 0.0
    %7040 = vmatpush1.msra.mxu0 0.0
    %7041 = vmatprep.subr.mxu0 0.0
    %7042 = vmatpush1.msra.mxu0 0.0
    %7043 = vmatprep.subr.mxu0 0.0
    %7044 = vmatpush1.msra.mxu0 0.0
    %7045 = vmatprep.subr.mxu0 0.0
    %7046 = vmatpush1.msra.mxu0 0.0
    %7047 = vmatprep.subr.mxu0 0.0
    %7048 = vmatpush1.msra.mxu0 0.0
    %7049 = vmatprep.subr.mxu0 0.0
    %7050 = vmatpush1.msra.mxu0 0.0
    %7051 = vmatprep.mubr.f32.mxu0 0.0
    %v7052 = vand.u32 %v6984, 4294901760
    %v7053 = vsub.f32 %v6984, %v7052
    %v7054 = vand.u32 %v7053, 4294901760
    %v7055 = vsub.f32 %v7053, %v7054
    %v7056 = vand.u32 %v7055, 4294901760
    %7057 = vmatmul.mubr.f32.gmra.mrb[0].mxu0 %v7056
    %v7058 = vpop.f32.mrb[0].mxu0
    %v7059 = vadd.f32 0.0, %v7058
    %v7060 = vpop.f32.mrb[0].mxu0
    %7061 = vdwg.mxu0
    %7062 = vmatprep.subr.mxu0 0.0
    %v7063 = vand.u32 %v33, 4294901760
    %v7064 = vsub.f32 %v33, %v7063
    %v7065 = vand.u32 %v7064, 4294901760
    %v7066 = vsub.f32 %v7064, %v7065
    %v7067 = vand.u32 %v7066, 4294901760
    %7068 = vmatpush1.msra.mxu0 %v7067
    %7069 = vmatprep.subr.mxu0 0.0
    %7070 = vmatpush1.msra.mxu0 0.0
    %7071 = vmatprep.subr.mxu0 0.0
    %7072 = vmatpush1.msra.mxu0 0.0
    %7073 = vmatprep.subr.mxu0 0.0
    %7074 = vmatpush1.msra.mxu0 0.0
    %7075 = vmatprep.subr.mxu0 0.0
    %7076 = vmatpush1.msra.mxu0 0.0
    %7077 = vmatprep.subr.mxu0 0.0
    %7078 = vmatpush1.msra.mxu0 0.0
    %7079 = vmatprep.subr.mxu0 0.0
    %7080 = vmatpush1.msra.mxu0 0.0
    %7081 = vmatprep.subr.mxu0 0.0
    %7082 = vmatpush1.msra.mxu0 0.0
    %7083 = vmatprep.subr.mxu0 0.0
    %7084 = vmatpush1.msra.mxu0 0.0
    %7085 = vmatprep.subr.mxu0 0.0
    %7086 = vmatpush1.msra.mxu0 0.0
    %7087 = vmatprep.subr.mxu0 0.0
    %7088 = vmatpush1.msra.mxu0 0.0
    %7089 = vmatprep.subr.mxu0 0.0
    %7090 = vmatpush1.msra.mxu0 0.0
    %7091 = vmatprep.subr.mxu0 0.0
    %7092 = vmatpush1.msra.mxu0 0.0
    %7093 = vmatprep.subr.mxu0 0.0
    %7094 = vmatpush1.msra.mxu0 0.0
    %7095 = vmatprep.subr.mxu0 0.0
    %7096 = vmatpush1.msra.mxu0 0.0
    %7097 = vmatprep.subr.mxu0 0.0
    %7098 = vmatpush1.msra.mxu0 0.0
    %7099 = vmatprep.subr.mxu0 0.0
    %7100 = vmatpush1.msra.mxu0 0.0
    %7101 = vmatprep.subr.mxu0 0.0
    %7102 = vmatpush1.msra.mxu0 0.0
    %7103 = vmatprep.subr.mxu0 0.0
    %7104 = vmatpush1.msra.mxu0 0.0
    %7105 = vmatprep.subr.mxu0 0.0
    %7106 = vmatpush1.msra.mxu0 0.0
    %7107 = vmatprep.subr.mxu0 0.0
    %7108 = vmatpush1.msra.mxu0 0.0
    %7109 = vmatprep.subr.mxu0 0.0
    %7110 = vmatpush1.msra.mxu0 0.0
    %7111 = vmatprep.subr.mxu0 0.0
    %7112 = vmatpush1.msra.mxu0 0.0
    %7113 = vmatprep.subr.mxu0 0.0
    %7114 = vmatpush1.msra.mxu0 0.0
    %7115 = vmatprep.subr.mxu0 0.0
    %7116 = vmatpush1.msra.mxu0 0.0
    %7117 = vmatprep.subr.mxu0 0.0
    %7118 = vmatpush1.msra.mxu0 0.0
    %7119 = vmatprep.subr.mxu0 0.0
    %7120 = vmatpush1.msra.mxu0 0.0
    %7121 = vmatprep.subr.mxu0 0.0
    %7122 = vmatpush1.msra.mxu0 0.0
    %7123 = vmatprep.subr.mxu0 0.0
    %7124 = vmatpush1.msra.mxu0 0.0
    %7125 = vmatprep.subr.mxu0 0.0
    %7126 = vmatpush1.msra.mxu0 0.0
    %7127 = vmatprep.subr.mxu0 0.0
    %7128 = vmatpush1.msra.mxu0 0.0
    %7129 = vmatprep.subr.mxu0 0.0
    %7130 = vmatpush1.msra.mxu0 0.0
    %7131 = vmatprep.mubr.f32.mxu0 0.0
    %v7132 = vand.u32 %v6984, 4294901760
    %7133 = vmatmul.mubr.f32.gmra.mrb[0].mxu0 %v7132
    %v7134 = vpop.f32.mrb[0].mxu0
    %v7135 = vadd.f32 %v7059, %v7134
    %v7136 = vpop.f32.mrb[0].mxu0
    %7137 = vdwg.mxu0
    %7138 = vmatprep.subr.mxu0 0.0
    %v7139 = vand.u32 %v33, 4294901760
    %v7140 = vsub.f32 %v33, %v7139
    %7141 = vmatpush1.msra.mxu0 %v7140
    %7142 = vmatprep.subr.mxu0 0.0
    %7143 = vmatpush1.msra.mxu0 0.0
    %7144 = vmatprep.subr.mxu0 0.0
    %7145 = vmatpush1.msra.mxu0 0.0
    %7146 = vmatprep.subr.mxu0 0.0
    %7147 = vmatpush1.msra.mxu0 0.0
    %7148 = vmatprep.subr.mxu0 0.0
    %7149 = vmatpush1.msra.mxu0 0.0
    %7150 = vmatprep.subr.mxu0 0.0
    %7151 = vmatpush1.msra.mxu0 0.0
    %7152 = vmatprep.subr.mxu0 0.0
    %7153 = vmatpush1.msra.mxu0 0.0
    %7154 = vmatprep.subr.mxu0 0.0
    %7155 = vmatpush1.msra.mxu0 0.0
    %7156 = vmatprep.subr.mxu0 0.0
    %7157 = vmatpush1.msra.mxu0 0.0
    %7158 = vmatprep.subr.mxu0 0.0
    %7159 = vmatpush1.msra.mxu0 0.0
    %7160 = vmatprep.subr.mxu0 0.0
    %7161 = vmatpush1.msra.mxu0 0.0
    %7162 = vmatprep.subr.mxu0 0.0
    %7163 = vmatpush1.msra.mxu0 0.0
    %7164 = vmatprep.subr.mxu0 0.0
    %7165 = vmatpush1.msra.mxu0 0.0
    %7166 = vmatprep.subr.mxu0 0.0
    %7167 = vmatpush1.msra.mxu0 0.0
    %7168 = vmatprep.subr.mxu0 0.0
    %7169 = vmatpush1.msra.mxu0 0.0
    %7170 = vmatprep.subr.mxu0 0.0
    %7171 = vmatpush1.msra.mxu0 0.0
    %7172 = vmatprep.subr.mxu0 0.0
    %7173 = vmatpush1.msra.mxu0 0.0
    %7174 = vmatprep.subr.mxu0 0.0
    %7175 = vmatpush1.msra.mxu0 0.0
    %7176 = vmatprep.subr.mxu0 0.0
    %7177 = vmatpush1.msra.mxu0 0.0
    %7178 = vmatprep.subr.mxu0 0.0
    %7179 = vmatpush1.msra.mxu0 0.0
    %7180 = vmatprep.subr.mxu0 0.0
    %7181 = vmatpush1.msra.mxu0 0.0
    %7182 = vmatprep.subr.mxu0 0.0
    %7183 = vmatpush1.msra.mxu0 0.0
    %7184 = vmatprep.subr.mxu0 0.0
    %7185 = vmatpush1.msra.mxu0 0.0
    %7186 = vmatprep.subr.mxu0 0.0
    %7187 = vmatpush1.msra.mxu0 0.0
    %7188 = vmatprep.subr.mxu0 0.0
    %7189 = vmatpush1.msra.mxu0 0.0
    %7190 = vmatprep.subr.mxu0 0.0
    %7191 = vmatpush1.msra.mxu0 0.0
    %7192 = vmatprep.subr.mxu0 0.0
    %7193 = vmatpush1.msra.mxu0 0.0
    %7194 = vmatprep.subr.mxu0 0.0
    %7195 = vmatpush1.msra.mxu0 0.0
    %7196 = vmatprep.subr.mxu0 0.0
    %7197 = vmatpush1.msra.mxu0 0.0
    %7198 = vmatprep.subr.mxu0 0.0
    %7199 = vmatpush1.msra.mxu0 0.0
    %7200 = vmatprep.subr.mxu0 0.0
    %7201 = vmatpush1.msra.mxu0 0.0
    %7202 = vmatprep.subr.mxu0 0.0
    %7203 = vmatpush1.msra.mxu0 0.0
    %7204 = vmatprep.mubr.f32.mxu0 0.0
    %v7205 = vand.u32 %v6984, 4294901760
    %v7206 = vsub.f32 %v6984, %v7205
    %7207 = vmatmul.mubr.f32.gmra.mrb[0].mxu0 %v7206
    %v7208 = vpop.f32.mrb[0].mxu0
    %v7209 = vadd.f32 %v7135, %v7208
    %v7210 = vpop.f32.mrb[0].mxu0
    %7211 = vdwg.mxu0
    %7212 = vmatprep.subr.mxu0 0.0
    %v7213 = vand.u32 %v33, 4294901760
    %7214 = vmatpush1.msra.mxu0 %v7213
    %7215 = vmatprep.subr.mxu0 0.0
    %7216 = vmatpush1.msra.mxu0 0.0
    %7217 = vmatprep.subr.mxu0 0.0
    %7218 = vmatpush1.msra.mxu0 0.0
    %7219 = vmatprep.subr.mxu0 0.0
    %7220 = vmatpush1.msra.mxu0 0.0
    %7221 = vmatprep.subr.mxu0 0.0
    %7222 = vmatpush1.msra.mxu0 0.0
    %7223 = vmatprep.subr.mxu0 0.0
    %7224 = vmatpush1.msra.mxu0 0.0
    %7225 = vmatprep.subr.mxu0 0.0
    %7226 = vmatpush1.msra.mxu0 0.0
    %7227 = vmatprep.subr.mxu0 0.0
    %7228 = vmatpush1.msra.mxu0 0.0
    %7229 = vmatprep.subr.mxu0 0.0
    %7230 = vmatpush1.msra.mxu0 0.0
    %7231 = vmatprep.subr.mxu0 0.0
    %7232 = vmatpush1.msra.mxu0 0.0
    %7233 = vmatprep.subr.mxu0 0.0
    %7234 = vmatpush1.msra.mxu0 0.0
    %7235 = vmatprep.subr.mxu0 0.0
    %7236 = vmatpush1.msra.mxu0 0.0
    %7237 = vmatprep.subr.mxu0 0.0
    %7238 = vmatpush1.msra.mxu0 0.0
    %7239 = vmatprep.subr.mxu0 0.0
    %7240 = vmatpush1.msra.mxu0 0.0
    %7241 = vmatprep.subr.mxu0 0.0
    %7242 = vmatpush1.msra.mxu0 0.0
    %7243 = vmatprep.subr.mxu0 0.0
    %7244 = vmatpush1.msra.mxu0 0.0
    %7245 = vmatprep.subr.mxu0 0.0
    %7246 = vmatpush1.msra.mxu0 0.0
    %7247 = vmatprep.subr.mxu0 0.0
    %7248 = vmatpush1.msra.mxu0 0.0
    %7249 = vmatprep.subr.mxu0 0.0
    %7250 = vmatpush1.msra.mxu0 0.0
    %7251 = vmatprep.subr.mxu0 0.0
    %7252 = vmatpush1.msra.mxu0 0.0
    %7253 = vmatprep.subr.mxu0 0.0
    %7254 = vmatpush1.msra.mxu0 0.0
    %7255 = vmatprep.subr.mxu0 0.0
    %7256 = vmatpush1.msra.mxu0 0.0
    %7257 = vmatprep.subr.mxu0 0.0
    %7258 = vmatpush1.msra.mxu0 0.0
    %7259 = vmatprep.subr.mxu0 0.0
    %7260 = vmatpush1.msra.mxu0 0.0
    %7261 = vmatprep.subr.mxu0 0.0
    %7262 = vmatpush1.msra.mxu0 0.0
    %7263 = vmatprep.subr.mxu0 0.0
    %7264 = vmatpush1.msra.mxu0 0.0
    %7265 = vmatprep.subr.mxu0 0.0
    %7266 = vmatpush1.msra.mxu0 0.0
    %7267 = vmatprep.subr.mxu0 0.0
    %7268 = vmatpush1.msra.mxu0 0.0
    %7269 = vmatprep.subr.mxu0 0.0
    %7270 = vmatpush1.msra.mxu0 0.0
    %7271 = vmatprep.subr.mxu0 0.0
    %7272 = vmatpush1.msra.mxu0 0.0
    %7273 = vmatprep.subr.mxu0 0.0
    %7274 = vmatpush1.msra.mxu0 0.0
    %7275 = vmatprep.subr.mxu0 0.0
    %7276 = vmatpush1.msra.mxu0 0.0
    %7277 = vmatprep.mubr.f32.mxu0 0.0
    %v7278 = vand.u32 %v6984, 4294901760
    %v7279 = vsub.f32 %v6984, %v7278
    %v7280 = vand.u32 %v7279, 4294901760
    %7281 = vmatmul.mubr.f32.gmra.mrb[0].mxu0 %v7280
    %v7282 = vpop.f32.mrb[0].mxu0
    %v7283 = vadd.f32 %v7209, %v7282
    %v7284 = vpop.f32.mrb[0].mxu0
    %7285 = vdwg.mxu0
    %7286 = vmatprep.subr.mxu0 0.0
    %v7287 = vand.u32 %v33, 4294901760
    %v7288 = vsub.f32 %v33, %v7287
    %v7289 = vand.u32 %v7288, 4294901760
    %7290 = vmatpush1.msra.mxu0 %v7289
    %7291 = vmatprep.subr.mxu0 0.0
    %7292 = vmatpush1.msra.mxu0 0.0
    %7293 = vmatprep.subr.mxu0 0.0
    %7294 = vmatpush1.msra.mxu0 0.0
    %7295 = vmatprep.subr.mxu0 0.0
    %7296 = vmatpush1.msra.mxu0 0.0
    %7297 = vmatprep.subr.mxu0 0.0
    %7298 = vmatpush1.msra.mxu0 0.0
    %7299 = vmatprep.subr.mxu0 0.0
    %7300 = vmatpush1.msra.mxu0 0.0
    %7301 = vmatprep.subr.mxu0 0.0
    %7302 = vmatpush1.msra.mxu0 0.0
    %7303 = vmatprep.subr.mxu0 0.0
    %7304 = vmatpush1.msra.mxu0 0.0
    %7305 = vmatprep.subr.mxu0 0.0
    %7306 = vmatpush1.msra.mxu0 0.0
    %7307 = vmatprep.subr.mxu0 0.0
    %7308 = vmatpush1.msra.mxu0 0.0
    %7309 = vmatprep.subr.mxu0 0.0
    %7310 = vmatpush1.msra.mxu0 0.0
    %7311 = vmatprep.subr.mxu0 0.0
    %7312 = vmatpush1.msra.mxu0 0.0
    %7313 = vmatprep.subr.mxu0 0.0
    %7314 = vmatpush1.msra.mxu0 0.0
    %7315 = vmatprep.subr.mxu0 0.0
    %7316 = vmatpush1.msra.mxu0 0.0
    %7317 = vmatprep.subr.mxu0 0.0
    %7318 = vmatpush1.msra.mxu0 0.0
    %7319 = vmatprep.subr.mxu0 0.0
    %7320 = vmatpush1.msra.mxu0 0.0
    %7321 = vmatprep.subr.mxu0 0.0
    %7322 = vmatpush1.msra.mxu0 0.0
    %7323 = vmatprep.subr.mxu0 0.0
    %7324 = vmatpush1.msra.mxu0 0.0
    %7325 = vmatprep.subr.mxu0 0.0
    %7326 = vmatpush1.msra.mxu0 0.0
    %7327 = vmatprep.subr.mxu0 0.0
    %7328 = vmatpush1.msra.mxu0 0.0
    %7329 = vmatprep.subr.mxu0 0.0
    %7330 = vmatpush1.msra.mxu0 0.0
    %7331 = vmatprep.subr.mxu0 0.0
    %7332 = vmatpush1.msra.mxu0 0.0
    %7333 = vmatprep.subr.mxu0 0.0
    %7334 = vmatpush1.msra.mxu0 0.0
    %7335 = vmatprep.subr.mxu0 0.0
    %7336 = vmatpush1.msra.mxu0 0.0
    %7337 = vmatprep.subr.mxu0 0.0
    %7338 = vmatpush1.msra.mxu0 0.0
    %7339 = vmatprep.subr.mxu0 0.0
    %7340 = vmatpush1.msra.mxu0 0.0
    %7341 = vmatprep.subr.mxu0 0.0
    %7342 = vmatpush1.msra.mxu0 0.0
    %7343 = vmatprep.subr.mxu0 0.0
    %7344 = vmatpush1.msra.mxu0 0.0
    %7345 = vmatprep.subr.mxu0 0.0
    %7346 = vmatpush1.msra.mxu0 0.0
    %7347 = vmatprep.subr.mxu0 0.0
    %7348 = vmatpush1.msra.mxu0 0.0
    %7349 = vmatprep.subr.mxu0 0.0
    %7350 = vmatpush1.msra.mxu0 0.0
    %7351 = vmatprep.subr.mxu0 0.0
    %7352 = vmatpush1.msra.mxu0 0.0
    %7353 = vmatprep.mubr.f32.mxu0 0.0
    %v7354 = vand.u32 %v6984, 4294901760
    %7355 = vmatmul.mubr.f32.gmra.mrb[0].mxu0 %v7354
    %v7356 = vpop.f32.mrb[0].mxu0
    %v7357 = vadd.f32 %v7283, %v7356
    %v7358 = vpop.f32.mrb[0].mxu0
    %7359 = vdwg.mxu0
    %7360 = vmatprep.subr.mxu0 0.0
    %v7361 = vand.u32 %v33, 4294901760
    %7362 = vmatpush1.msra.mxu0 %v7361
    %7363 = vmatprep.subr.mxu0 0.0
    %7364 = vmatpush1.msra.mxu0 0.0
    %7365 = vmatprep.subr.mxu0 0.0
    %7366 = vmatpush1.msra.mxu0 0.0
    %7367 = vmatprep.subr.mxu0 0.0
    %7368 = vmatpush1.msra.mxu0 0.0
    %7369 = vmatprep.subr.mxu0 0.0
    %7370 = vmatpush1.msra.mxu0 0.0
    %7371 = vmatprep.subr.mxu0 0.0
    %7372 = vmatpush1.msra.mxu0 0.0
    %7373 = vmatprep.subr.mxu0 0.0
    %7374 = vmatpush1.msra.mxu0 0.0
    %7375 = vmatprep.subr.mxu0 0.0
    %7376 = vmatpush1.msra.mxu0 0.0
    %7377 = vmatprep.subr.mxu0 0.0
    %7378 = vmatpush1.msra.mxu0 0.0
    %7379 = vmatprep.subr.mxu0 0.0
    %7380 = vmatpush1.msra.mxu0 0.0
    %7381 = vmatprep.subr.mxu0 0.0
    %7382 = vmatpush1.msra.mxu0 0.0
    %7383 = vmatprep.subr.mxu0 0.0
    %7384 = vmatpush1.msra.mxu0 0.0
    %7385 = vmatprep.subr.mxu0 0.0
    %7386 = vmatpush1.msra.mxu0 0.0
    %7387 = vmatprep.subr.mxu0 0.0
    %7388 = vmatpush1.msra.mxu0 0.0
    %7389 = vmatprep.subr.mxu0 0.0
    %7390 = vmatpush1.msra.mxu0 0.0
    %7391 = vmatprep.subr.mxu0 0.0
    %7392 = vmatpush1.msra.mxu0 0.0
    %7393 = vmatprep.subr.mxu0 0.0
    %7394 = vmatpush1.msra.mxu0 0.0
    %7395 = vmatprep.subr.mxu0 0.0
    %7396 = vmatpush1.msra.mxu0 0.0
    %7397 = vmatprep.subr.mxu0 0.0
    %7398 = vmatpush1.msra.mxu0 0.0
    %7399 = vmatprep.subr.mxu0 0.0
    %7400 = vmatpush1.msra.mxu0 0.0
    %7401 = vmatprep.subr.mxu0 0.0
    %7402 = vmatpush1.msra.mxu0 0.0
    %7403 = vmatprep.subr.mxu0 0.0
    %7404 = vmatpush1.msra.mxu0 0.0
    %7405 = vmatprep.subr.mxu0 0.0
    %7406 = vmatpush1.msra.mxu0 0.0
    %7407 = vmatprep.subr.mxu0 0.0
    %7408 = vmatpush1.msra.mxu0 0.0
    %7409 = vmatprep.subr.mxu0 0.0
    %7410 = vmatpush1.msra.mxu0 0.0
    %7411 = vmatprep.subr.mxu0 0.0
    %7412 = vmatpush1.msra.mxu0 0.0
    %7413 = vmatprep.subr.mxu0 0.0
    %7414 = vmatpush1.msra.mxu0 0.0
    %7415 = vmatprep.subr.mxu0 0.0
    %7416 = vmatpush1.msra.mxu0 0.0
    %7417 = vmatprep.subr.mxu0 0.0
    %7418 = vmatpush1.msra.mxu0 0.0
    %7419 = vmatprep.subr.mxu0 0.0
    %7420 = vmatpush1.msra.mxu0 0.0
    %7421 = vmatprep.subr.mxu0 0.0
    %7422 = vmatpush1.msra.mxu0 0.0
    %7423 = vmatprep.subr.mxu0 0.0
    %7424 = vmatpush1.msra.mxu0 0.0
    %7425 = vmatprep.mubr.f32.mxu0 0.0
    %v7426 = vand.u32 %v6984, 4294901760
    %7427 = vmatmul.mubr.f32.gmra.mrb[0].mxu0 %v7426
    %v7428 = vpop.f32.mrb[0].mxu0
    %v7429 = vadd.f32 %v7357, %v7428
    %v7430 = vpop.f32.mrb[0].mxu0
    %7431 = vdwg.mxu0
    %v7432 = vadd.f32 %v6982, %v6947
    %v7433 = vlog2.pop %v7429
    %v7434 = vmul.f32 %v7433, 0.6931472
    %v7435 = vadd.f32 %v7432, %v7434
    %v7436 = vsel %vm69, %v7435, -inf
    %7437 = vmax.xlane.f32.xlu0 %v7436
    %v7438 = vpop.xlane.xlu0 %7437
    %v7439 = vsub.f32 %v7435, %v7438
    %v7440 = vmul.f32 %v7439, 1.442695
    %v7441 = vpow.pop %v7440
    %v7442 = vsel %vm69, %v7441, 0.0
    %7443 = vadd.xlane.f32.xlu0 %v7442
    %v7444 = vpop.xlane.xlu0 %7443
    %v7445 = vlog2.pop %v7444
    %v7446 = vmul.f32 %v7445, 0.6931472
    %v7447 = vadd.f32 %v7438, %v7446
    %vm7448 = vcmask 126072
    %7449 = vst.msk [vmem:[#allocation5] sm:$0xf] %vm7448, %v7447
    // Predicated region
    $region22: #{tpu_custom_call.1} parent=1 // pred_check
      _
    $region23: #{tpu_custom_call.1} parent=1 // pred_check_branch
      %7451 = sbr.rel (0) target = $region25
    $region24: #{tpu_custom_call.1} parent=1 // pred_region
      %s7453 = ssub.s32 64, 64
      %7454 = vsyncadd [#allocation3], %s7453
      %s7456 = sshll.u32 [#allocation5], 4
      %s7457 = int_to_ptr.vmem [resolvable:$true] %s7456
      %7459 = dma.vmem_to_hbm [thread:$0]  %s7457, 64, %s4, [#allocation3]
    $region25: #{tpu_custom_call.1} parent=1 // pred_fallthru
      _
    // Predicated region
    $region26: #{tpu_custom_call.1} parent=1 // pred_check
      _
    $region27: #{tpu_custom_call.1} parent=1 // pred_check_branch
      %7461 = sbr.rel (0) target = $region29
    $region28: #{tpu_custom_call.1} parent=1 // pred_region
      %7462 = dma.done [#allocation3], 64
    $region29: #{tpu_custom_call.1} parent=1 // pred_fallthru
      _
    %7463 = vsyncpa [#allocation3], 1
    %7464 = vsyncpa [#allocation4], 1

</llo_original>
